<compile_context>
chip_gen: v7x
topology: tpu7x:2x2x1
jax: 0.10.0
libtpu: 0.0.40
codegen_flags: <defaults>
</compile_context>

<pallas_src>
import functools

import jax
import jax.numpy as jnp
from jax.experimental import pallas as pl
from jax.experimental.pallas import tpu as pltpu


# bfloat16: native MXU operand dtype on v6e/v7x (f32 accumulation is kept).
# Set to jnp.float32 on v5e only if strict f32 numerics are required.
MXU_DTYPE = jnp.bfloat16

# Images folded into one grid step (batch folded into the matmul M dim).
# Keep 1 on v7x (one grid step per TensorCore); set 2 on single-TC v5e/v6e to
# amortize per-step overhead and MXU fill/drain.
B_TILE = 1


# --------------------------------------------------------------------------
# Fused Pallas kernel: entire MiniYOLOv8 forward for B_TILE images.
# --------------------------------------------------------------------------
def _fused_forward_kernel(x_ref,
                          w1_ref, b1_ref, w2_ref, b2_ref, w3_ref, b3_ref,
                          w4_ref, b4_ref, w5_ref, b5_ref,
                          o_ref,
                          p0, p1, p2, p3,
                          *, mxu_dtype):
    """One grid step == B_TILE images.

    x_ref : (B, Cin, H*W)     lane-dense input (reshape of NCHW, no transpose)
    wN/bN : im2col-flattened weights (9*Cin, Cout) in MXU_DTYPE / biases
            (1, Cout) f32; w5 is the 1x1 conv weight (128, Cout_final).
    o_ref : (B, Cout_final, H*W)   lane-dense output
    p0..p3: halo-padded (B, H+2, W+2, C) MXU_DTYPE VMEM scratch activations.
    """
    B = x_ref.shape[0]
    H = p0.shape[1] - 2
    W = p0.shape[2] - 2
    cout_final = o_ref.shape[1]

    def pad_store(pad_ref, interior):
        # Zero only the 1-pixel border strips (interior is fully overwritten).
        C = pad_ref.shape[-1]
        zrow = jnp.zeros((B, 1, W + 2, C), pad_ref.dtype)
        zcol = jnp.zeros((B, H + 2, 1, C), pad_ref.dtype)
        pad_ref[:, 0:1, :, :] = zrow
        pad_ref[:, H + 1:H + 2, :, :] = zrow
        pad_ref[:, :, 0:1, :] = zcol
        pad_ref[:, :, W + 1:W + 2, :] = zcol
        pad_ref[:, 1:H + 1, 1:W + 1, :] = interior.astype(pad_ref.dtype)

    def conv3x3_relu(pad_ref, w_ref, b_ref):
        # Single im2col matmul: concat the 9 shifted windows along lanes so the
        # MXU contraction depth is 9*Cin. Everything is already in MXU_DTYPE.
        src = pad_ref[...]                                   # (B, H+2, W+2, Cin)
        cin_l = src.shape[-1]
        taps = [src[:, ky:ky + H, kx:kx + W, :].reshape(B * H * W, cin_l)
                for ky in range(3) for kx in range(3)]
        patches = jnp.concatenate(taps, axis=-1)             # (B*H*W, 9*Cin)
        y = jnp.dot(patches, w_ref[...].astype(mxu_dtype),
                    preferred_element_type=jnp.float32)      # (B*H*W, Cout) f32
        y = y + b_ref[...].astype(jnp.float32)
        return jnp.maximum(y, 0.0)

    cin = x_ref.shape[1]
    c1 = w1_ref.shape[-1]
    c2 = w2_ref.shape[-1]
    c3 = w3_ref.shape[-1]

    # Stage the input with its 1-pixel halo. Cast to MXU dtype first, then the
    # tiny (Cin, H*W) -> (H*W, Cin) transpose rides the XLU.
    x = x_ref[...].astype(mxu_dtype)                         # (B, Cin, H*W)
    x = jnp.transpose(x, (0, 2, 1)).reshape(B, H, W, cin)    # (B, H, W, Cin)
    pad_store(p0, x)

    # Backbone: 3 x (conv3x3 + ReLU); activations never leave VMEM.
    pad_store(p1, conv3x3_relu(p0, w1_ref, b1_ref)
              .astype(mxu_dtype).reshape(B, H, W, c1))
    pad_store(p2, conv3x3_relu(p1, w2_ref, b2_ref)
              .astype(mxu_dtype).reshape(B, H, W, c2))
    pad_store(p3, conv3x3_relu(p2, w3_ref, b3_ref)
              .astype(mxu_dtype).reshape(B, H, W, c3))

    # Head: conv3x3 + ReLU, then 1x1 conv (no activation).
    y4 = conv3x3_relu(p3, w4_ref, b4_ref)                    # (B*H*W, 128) f32
    y5 = jnp.dot(y4.astype(mxu_dtype), w5_ref[...].astype(mxu_dtype),
                 preferred_element_type=jnp.float32)
    y5 = y5 + b5_ref[...].astype(jnp.float32)                # (B*H*W, Cout)

    # Lane-dense store: (B, H*W, Cout) -> (B, Cout, H*W); H*W = 256 lanes.
    y5 = jnp.transpose(y5.reshape(B, H * W, cout_final), (0, 2, 1))
    o_ref[...] = y5.astype(o_ref.dtype)


# --------------------------------------------------------------------------
# Wrapper: NCHW in / NCHW out, single pallas_call, no wrapper transposes.
# --------------------------------------------------------------------------
def _full_spec(arr):
    """Whole-array VMEM block with a constant index map (stays resident)."""
    return pl.BlockSpec(arr.shape, lambda n, _nd=arr.ndim: (0,) * _nd)


@jax.jit
def mini_yolov8_forward(x_nchw, params):
    N, cin, H, W = x_nchw.shape
    x = x_nchw.reshape(N, cin, H * W)                        # free reshape

    (w1, b1), (w2, b2), (w3, b3) = params["backbone"]
    (w4, b4), (w5, b5) = params["head"]

    # (3,3,Cin,Cout) -> (9*Cin, Cout); row index = (ky*3+kx)*Cin + c, matching
    # the in-kernel tap-concat order. Weights are cast to MXU dtype once here.
    flatw = lambda w: w.reshape(-1, w.shape[-1]).astype(MXU_DTYPE)
    cout_final = w5.shape[-1]

    weight_args = (flatw(w1), b1.reshape(1, -1),
                   flatw(w2), b2.reshape(1, -1),
                   flatw(w3), b3.reshape(1, -1),
                   flatw(w4), b4.reshape(1, -1),
                   w5.astype(MXU_DTYPE), b5.reshape(1, -1))

    b_tile = B_TILE if (N % B_TILE == 0) else 1
    kernel = functools.partial(_fused_forward_kernel, mxu_dtype=MXU_DTYPE)

    out = pl.pallas_call(
        kernel,
        out_shape=jax.ShapeDtypeStruct((N, cout_final, H * W), x_nchw.dtype),
        grid=(N // b_tile,),
        in_specs=[pl.BlockSpec((b_tile, cin, H * W), lambda n: (n, 0, 0))]
                 + [_full_spec(a) for a in weight_args],
        out_specs=pl.BlockSpec((b_tile, cout_final, H * W),
                               lambda n: (n, 0, 0)),
        scratch_shapes=[
            pltpu.VMEM((b_tile, H + 2, W + 2, cin), MXU_DTYPE),            # p0
            pltpu.VMEM((b_tile, H + 2, W + 2, w1.shape[-1]), MXU_DTYPE),   # p1
            pltpu.VMEM((b_tile, H + 2, W + 2, w2.shape[-1]), MXU_DTYPE),   # p2
            pltpu.VMEM((b_tile, H + 2, W + 2, w3.shape[-1]), MXU_DTYPE),   # p3
        ],
        compiler_params=pltpu.CompilerParams(
            dimension_semantics=("parallel",)),
    )(x, *weight_args)

    return out.reshape(N, cout_final, H, W)                  # free reshape


# --------------------------------------------------------------------------
# Parameter init (deterministic, synthetic) — same scheme as nn.Conv2d default.
# --------------------------------------------------------------------------
def init_params(key, num_classes):
    def conv_params(key, kh, kw, cin, cout):
        kw_key, kb_key = jax.random.split(key)
        fan_in = kh * kw * cin
        bound = 1.0 / jnp.sqrt(fan_in)
        if kh == 1 and kw == 1:
            w = jax.random.uniform(kw_key, (cin, cout), jnp.float32,
                                   -bound, bound)
        else:
            w = jax.random.uniform(kw_key, (kh, kw, cin, cout), jnp.float32,
                                   -bound, bound)
        b = jax.random.uniform(kb_key, (cout,), jnp.float32, -bound, bound)
        return w, b

    keys = jax.random.split(key, 5)
    return {
        "backbone": [
            conv_params(keys[0], 3, 3, 3, 16),
            conv_params(keys[1], 3, 3, 16, 32),
            conv_params(keys[2], 3, 3, 32, 64),
        ],
        "head": [
            conv_params(keys[3], 3, 3, 64, 128),
            conv_params(keys[4], 1, 1, 128, num_classes + 4),
        ],
    }


# --------------------------------------------------------------------------
# Pure-JAX reference (for an in-script numerical sanity check).
# --------------------------------------------------------------------------
@jax.jit
def reference_forward(x_nchw, params):
    x = jnp.transpose(x_nchw, (0, 2, 3, 1))
    dn = ("NHWC", "HWIO", "NHWC")
    for w, b in params["backbone"]:
        x = jax.lax.conv_general_dilated(x, w, (1, 1), "SAME",
                                         dimension_numbers=dn)
        x = jnp.maximum(x + b, 0.0)
    w, b = params["head"][0]
    x = jax.lax.conv_general_dilated(x, w, (1, 1), "SAME",
                                     dimension_numbers=dn)
    x = jnp.maximum(x + b, 0.0)
    w, b = params["head"][1]
    x = jnp.einsum("nhwc,cd->nhwd", x, w) + b
    return jnp.transpose(x, (0, 3, 1, 2))


if __name__ == "__main__":
    num_classes = 4
    key = jax.random.PRNGKey(0)
    pkey, xkey = jax.random.split(key)

    params = init_params(pkey, num_classes)
    # Matches nn.Conv2d(3, ...): NCHW, 3 input channels, 16x16 spatial.
    x = jax.random.normal(xkey, (2, 3, 16, 16), jnp.float32)

    out = jax.block_until_ready(mini_yolov8_forward(x, params))

    assert out.shape == (2, num_classes + 4, 16, 16), out.shape
    assert out.dtype == jnp.float32
    assert bool(jnp.all(jnp.isfinite(out)))

    # Numerical sanity check against a plain-XLA f32 reference. Tolerance is
    # dtype-aware (bf16 MXU operands by default).
    ref = jax.block_until_ready(reference_forward(x, params))
    err = float(jnp.max(jnp.abs(out - ref)))
    scale = float(jnp.max(jnp.abs(ref))) + 1e-6
    tol = 1e-1 if MXU_DTYPE == jnp.bfloat16 else 2e-3
    assert err <= tol * scale + 1e-4, (err, scale)

    print("KERNEL_OK")
</pallas_src>

<mosaic_0001>
module attributes {stable_mosaic.version = 11 : i64} {
  func.func @_fused_forward_kernel(%arg0: i32, %arg1: memref<1x3x256xf32, #tpu.memory_space<vmem>>, %arg2: memref<27x16xbf16, #tpu.memory_space<vmem>>, %arg3: memref<1x16xf32, #tpu.memory_space<vmem>>, %arg4: memref<144x32xbf16, #tpu.memory_space<vmem>>, %arg5: memref<1x32xf32, #tpu.memory_space<vmem>>, %arg6: memref<288x64xbf16, #tpu.memory_space<vmem>>, %arg7: memref<1x64xf32, #tpu.memory_space<vmem>>, %arg8: memref<576x128xbf16, #tpu.memory_space<vmem>>, %arg9: memref<1x128xf32, #tpu.memory_space<vmem>>, %arg10: memref<128x8xbf16, #tpu.memory_space<vmem>>, %arg11: memref<1x8xf32, #tpu.memory_space<vmem>>, %arg12: memref<1x8x256xf32, #tpu.memory_space<vmem>>, %arg13: memref<1x18x18x3xbf16, #tpu.memory_space<vmem>>, %arg14: memref<1x18x18x16xbf16, #tpu.memory_space<vmem>>, %arg15: memref<1x18x18x32xbf16, #tpu.memory_space<vmem>>, %arg16: memref<1x18x18x64xbf16, #tpu.memory_space<vmem>>) attributes {dimension_semantics = [#tpu.dimension_semantics<parallel>], iteration_bounds = array<i64: 2>, scalar_prefetch = 0 : i64, scratch_operands = 4 : i64, tpu.core_type = #tpu.core_type<tc>, window_params = [{transform_indices = @transform_0, window_bounds = array<i64: 1, 3, 256>}, {pipeline_mode = #tpu.pipeline_mode<synchronous>, transform_indices = @transform_1, window_bounds = array<i64: 27, 16>}, {pipeline_mode = #tpu.pipeline_mode<synchronous>, transform_indices = @transform_2, window_bounds = array<i64: 1, 16>}, {pipeline_mode = #tpu.pipeline_mode<synchronous>, transform_indices = @transform_3, window_bounds = array<i64: 144, 32>}, {pipeline_mode = #tpu.pipeline_mode<synchronous>, transform_indices = @transform_4, window_bounds = array<i64: 1, 32>}, {pipeline_mode = #tpu.pipeline_mode<synchronous>, transform_indices = @transform_5, window_bounds = array<i64: 288, 64>}, {pipeline_mode = #tpu.pipeline_mode<synchronous>, transform_indices = @transform_6, window_bounds = array<i64: 1, 64>}, {pipeline_mode = #tpu.pipeline_mode<synchronous>, transform_indices = @transform_7, window_bounds = array<i64: 576, 128>}, {pipeline_mode = #tpu.pipeline_mode<synchronous>, transform_indices = @transform_8, window_bounds = array<i64: 1, 128>}, {pipeline_mode = #tpu.pipeline_mode<synchronous>, transform_indices = @transform_9, window_bounds = array<i64: 128, 8>}, {pipeline_mode = #tpu.pipeline_mode<synchronous>, transform_indices = @transform_10, window_bounds = array<i64: 1, 8>}, {transform_indices = @transform_11, window_bounds = array<i64: 1, 8, 256>}]} {
    %c0 = arith.constant 0 : index
    %c0_0 = arith.constant 0 : index
    %c0_1 = arith.constant 0 : index
    %0 = vector.load %arg1[%c0, %c0_0, %c0_1] : memref<1x3x256xf32, #tpu.memory_space<vmem>>, vector<1x3x256xf32>
    %1 = arith.truncf %0 : vector<1x3x256xf32> to vector<1x3x256xbf16>
    %2 = tpu.transpose %1, [0, 2, 1] : vector<1x3x256xbf16> -> vector<1x256x3xbf16>
    %3 = vector.shape_cast %2 : vector<1x256x3xbf16> to vector<1x16x16x3xbf16>
    %cst = arith.constant 0.000000e+00 : bf16
    %4 = vector.broadcast %cst : bf16 to vector<1x1x18x3xbf16>
    %cst_2 = arith.constant 0.000000e+00 : bf16
    %5 = vector.broadcast %cst_2 : bf16 to vector<1x18x1x3xbf16>
    %c0_3 = arith.constant 0 : index
    %c0_4 = arith.constant 0 : index
    %c0_5 = arith.constant 0 : index
    %c0_6 = arith.constant 0 : index
    %6 = vector.load %arg13[%c0_3, %c0_4, %c0_5, %c0_6] : memref<1x18x18x3xbf16, #tpu.memory_space<vmem>>, vector<1x1x18x3xbf16>
    tpu.vector_store %arg13[%c0_3, %c0_4, %c0_5, %c0_6], %4 {strides = array<i32>} : memref<1x18x18x3xbf16, #tpu.memory_space<vmem>>, vector<1x1x18x3xbf16>,
    %c0_7 = arith.constant 0 : index
    %c17 = arith.constant 17 : index
    %c0_8 = arith.constant 0 : index
    %c0_9 = arith.constant 0 : index
    %7 = vector.load %arg13[%c0_7, %c17, %c0_8, %c0_9] : memref<1x18x18x3xbf16, #tpu.memory_space<vmem>>, vector<1x1x18x3xbf16>
    tpu.vector_store %arg13[%c0_7, %c17, %c0_8, %c0_9], %4 {strides = array<i32>} : memref<1x18x18x3xbf16, #tpu.memory_space<vmem>>, vector<1x1x18x3xbf16>,
    %c0_10 = arith.constant 0 : index
    %c0_11 = arith.constant 0 : index
    %c0_12 = arith.constant 0 : index
    %c0_13 = arith.constant 0 : index
    %8 = vector.load %arg13[%c0_10, %c0_11, %c0_12, %c0_13] : memref<1x18x18x3xbf16, #tpu.memory_space<vmem>>, vector<1x18x1x3xbf16>
    tpu.vector_store %arg13[%c0_10, %c0_11, %c0_12, %c0_13], %5 {strides = array<i32>} : memref<1x18x18x3xbf16, #tpu.memory_space<vmem>>, vector<1x18x1x3xbf16>,
    %c0_14 = arith.constant 0 : index
    %c0_15 = arith.constant 0 : index
    %c17_16 = arith.constant 17 : index
    %c0_17 = arith.constant 0 : index
    %9 = vector.load %arg13[%c0_14, %c0_15, %c17_16, %c0_17] : memref<1x18x18x3xbf16, #tpu.memory_space<vmem>>, vector<1x18x1x3xbf16>
    tpu.vector_store %arg13[%c0_14, %c0_15, %c17_16, %c0_17], %5 {strides = array<i32>} : memref<1x18x18x3xbf16, #tpu.memory_space<vmem>>, vector<1x18x1x3xbf16>,
    %c0_18 = arith.constant 0 : index
    %c1 = arith.constant 1 : index
    %c1_19 = arith.constant 1 : index
    %c0_20 = arith.constant 0 : index
    %10 = vector.load %arg13[%c0_18, %c1, %c1_19, %c0_20] : memref<1x18x18x3xbf16, #tpu.memory_space<vmem>>, vector<1x16x16x3xbf16>
    tpu.vector_store %arg13[%c0_18, %c1, %c1_19, %c0_20], %3 {strides = array<i32>} : memref<1x18x18x3xbf16, #tpu.memory_space<vmem>>, vector<1x16x16x3xbf16>,
    %c0_21 = arith.constant 0 : index
    %c0_22 = arith.constant 0 : index
    %c0_23 = arith.constant 0 : index
    %c0_24 = arith.constant 0 : index
    %11 = vector.load %arg13[%c0_21, %c0_22, %c0_23, %c0_24] : memref<1x18x18x3xbf16, #tpu.memory_space<vmem>>, vector<1x18x18x3xbf16>
    %12 = vector.extract_strided_slice %11 {offsets = [0, 0, 0, 0], sizes = [1, 16, 16, 3], strides = [1, 1, 1, 1]} : vector<1x18x18x3xbf16> to vector<1x16x16x3xbf16>
    %13 = vector.shape_cast %12 : vector<1x16x16x3xbf16> to vector<256x3xbf16>
    %14 = vector.extract_strided_slice %11 {offsets = [0, 0, 1, 0], sizes = [1, 16, 16, 3], strides = [1, 1, 1, 1]} : vector<1x18x18x3xbf16> to vector<1x16x16x3xbf16>
    %15 = vector.shape_cast %14 : vector<1x16x16x3xbf16> to vector<256x3xbf16>
    %16 = vector.extract_strided_slice %11 {offsets = [0, 0, 2, 0], sizes = [1, 16, 16, 3], strides = [1, 1, 1, 1]} : vector<1x18x18x3xbf16> to vector<1x16x16x3xbf16>
    %17 = vector.shape_cast %16 : vector<1x16x16x3xbf16> to vector<256x3xbf16>
    %18 = vector.extract_strided_slice %11 {offsets = [0, 1, 0, 0], sizes = [1, 16, 16, 3], strides = [1, 1, 1, 1]} : vector<1x18x18x3xbf16> to vector<1x16x16x3xbf16>
    %19 = vector.shape_cast %18 : vector<1x16x16x3xbf16> to vector<256x3xbf16>
    %20 = vector.extract_strided_slice %11 {offsets = [0, 1, 1, 0], sizes = [1, 16, 16, 3], strides = [1, 1, 1, 1]} : vector<1x18x18x3xbf16> to vector<1x16x16x3xbf16>
    %21 = vector.shape_cast %20 : vector<1x16x16x3xbf16> to vector<256x3xbf16>
    %22 = vector.extract_strided_slice %11 {offsets = [0, 1, 2, 0], sizes = [1, 16, 16, 3], strides = [1, 1, 1, 1]} : vector<1x18x18x3xbf16> to vector<1x16x16x3xbf16>
    %23 = vector.shape_cast %22 : vector<1x16x16x3xbf16> to vector<256x3xbf16>
    %24 = vector.extract_strided_slice %11 {offsets = [0, 2, 0, 0], sizes = [1, 16, 16, 3], strides = [1, 1, 1, 1]} : vector<1x18x18x3xbf16> to vector<1x16x16x3xbf16>
    %25 = vector.shape_cast %24 : vector<1x16x16x3xbf16> to vector<256x3xbf16>
    %26 = vector.extract_strided_slice %11 {offsets = [0, 2, 1, 0], sizes = [1, 16, 16, 3], strides = [1, 1, 1, 1]} : vector<1x18x18x3xbf16> to vector<1x16x16x3xbf16>
    %27 = vector.shape_cast %26 : vector<1x16x16x3xbf16> to vector<256x3xbf16>
    %28 = vector.extract_strided_slice %11 {offsets = [0, 2, 2, 0], sizes = [1, 16, 16, 3], strides = [1, 1, 1, 1]} : vector<1x18x18x3xbf16> to vector<1x16x16x3xbf16>
    %29 = vector.shape_cast %28 : vector<1x16x16x3xbf16> to vector<256x3xbf16>
    %30 = tpu.concatenate %13, %15, %17, %19, %21, %23, %25, %27, %29 in 1 : vector<256x3xbf16>, vector<256x3xbf16>, vector<256x3xbf16>, vector<256x3xbf16>, vector<256x3xbf16>, vector<256x3xbf16>, vector<256x3xbf16>, vector<256x3xbf16>, vector<256x3xbf16> -> vector<256x27xbf16>
    %c0_25 = arith.constant 0 : index
    %c0_26 = arith.constant 0 : index
    %31 = vector.load %arg2[%c0_25, %c0_26] : memref<27x16xbf16, #tpu.memory_space<vmem>>, vector<27x16xbf16>
    %cst_27 = arith.constant dense<0.000000e+00> : vector<256x16xf32>
    %32 = tpu.matmul %30, %31, %cst_27 {dimension_numbers = #tpu.dot_dimension_numbers<[1], [0], [0], [1], [0, 0, 1, 1], [], []>} : vector<256x27xbf16>, vector<27x16xbf16>, vector<256x16xf32> -> vector<256x16xf32>
    %c0_28 = arith.constant 0 : index
    %c0_29 = arith.constant 0 : index
    %33 = vector.load %arg3[%c0_28, %c0_29] : memref<1x16xf32, #tpu.memory_space<vmem>>, vector<1x16xf32>
    %34 = vector.broadcast %33 : vector<1x16xf32> to vector<256x16xf32>
    %35 = arith.addf %32, %34 : vector<256x16xf32>
    %cst_30 = arith.constant 0.000000e+00 : f32
    %36 = vector.broadcast %cst_30 : f32 to vector<256x16xf32>
    %37 = arith.maximumf %35, %36 : vector<256x16xf32>
    %38 = arith.truncf %37 : vector<256x16xf32> to vector<256x16xbf16>
    %39 = vector.shape_cast %38 : vector<256x16xbf16> to vector<1x16x16x16xbf16>
    %cst_31 = arith.constant 0.000000e+00 : bf16
    %40 = vector.broadcast %cst_31 : bf16 to vector<1x1x18x16xbf16>
    %cst_32 = arith.constant 0.000000e+00 : bf16
    %41 = vector.broadcast %cst_32 : bf16 to vector<1x18x1x16xbf16>
    %c0_33 = arith.constant 0 : index
    %c0_34 = arith.constant 0 : index
    %c0_35 = arith.constant 0 : index
    %c0_36 = arith.constant 0 : index
    %42 = vector.load %arg14[%c0_33, %c0_34, %c0_35, %c0_36] : memref<1x18x18x16xbf16, #tpu.memory_space<vmem>>, vector<1x1x18x16xbf16>
    tpu.vector_store %arg14[%c0_33, %c0_34, %c0_35, %c0_36], %40 {strides = array<i32>} : memref<1x18x18x16xbf16, #tpu.memory_space<vmem>>, vector<1x1x18x16xbf16>,
    %c0_37 = arith.constant 0 : index
    %c17_38 = arith.constant 17 : index
    %c0_39 = arith.constant 0 : index
    %c0_40 = arith.constant 0 : index
    %43 = vector.load %arg14[%c0_37, %c17_38, %c0_39, %c0_40] : memref<1x18x18x16xbf16, #tpu.memory_space<vmem>>, vector<1x1x18x16xbf16>
    tpu.vector_store %arg14[%c0_37, %c17_38, %c0_39, %c0_40], %40 {strides = array<i32>} : memref<1x18x18x16xbf16, #tpu.memory_space<vmem>>, vector<1x1x18x16xbf16>,
    %c0_41 = arith.constant 0 : index
    %c0_42 = arith.constant 0 : index
    %c0_43 = arith.constant 0 : index
    %c0_44 = arith.constant 0 : index
    %44 = vector.load %arg14[%c0_41, %c0_42, %c0_43, %c0_44] : memref<1x18x18x16xbf16, #tpu.memory_space<vmem>>, vector<1x18x1x16xbf16>
    tpu.vector_store %arg14[%c0_41, %c0_42, %c0_43, %c0_44], %41 {strides = array<i32>} : memref<1x18x18x16xbf16, #tpu.memory_space<vmem>>, vector<1x18x1x16xbf16>,
    %c0_45 = arith.constant 0 : index
    %c0_46 = arith.constant 0 : index
    %c17_47 = arith.constant 17 : index
    %c0_48 = arith.constant 0 : index
    %45 = vector.load %arg14[%c0_45, %c0_46, %c17_47, %c0_48] : memref<1x18x18x16xbf16, #tpu.memory_space<vmem>>, vector<1x18x1x16xbf16>
    tpu.vector_store %arg14[%c0_45, %c0_46, %c17_47, %c0_48], %41 {strides = array<i32>} : memref<1x18x18x16xbf16, #tpu.memory_space<vmem>>, vector<1x18x1x16xbf16>,
    %c0_49 = arith.constant 0 : index
    %c1_50 = arith.constant 1 : index
    %c1_51 = arith.constant 1 : index
    %c0_52 = arith.constant 0 : index
    %46 = vector.load %arg14[%c0_49, %c1_50, %c1_51, %c0_52] : memref<1x18x18x16xbf16, #tpu.memory_space<vmem>>, vector<1x16x16x16xbf16>
    tpu.vector_store %arg14[%c0_49, %c1_50, %c1_51, %c0_52], %39 {strides = array<i32>} : memref<1x18x18x16xbf16, #tpu.memory_space<vmem>>, vector<1x16x16x16xbf16>,
    %c0_53 = arith.constant 0 : index
    %c0_54 = arith.constant 0 : index
    %c0_55 = arith.constant 0 : index
    %c0_56 = arith.constant 0 : index
    %47 = vector.load %arg14[%c0_53, %c0_54, %c0_55, %c0_56] : memref<1x18x18x16xbf16, #tpu.memory_space<vmem>>, vector<1x18x18x16xbf16>
    %48 = vector.extract_strided_slice %47 {offsets = [0, 0, 0, 0], sizes = [1, 16, 16, 16], strides = [1, 1, 1, 1]} : vector<1x18x18x16xbf16> to vector<1x16x16x16xbf16>
    %49 = vector.shape_cast %48 : vector<1x16x16x16xbf16> to vector<256x16xbf16>
    %50 = vector.extract_strided_slice %47 {offsets = [0, 0, 1, 0], sizes = [1, 16, 16, 16], strides = [1, 1, 1, 1]} : vector<1x18x18x16xbf16> to vector<1x16x16x16xbf16>
    %51 = vector.shape_cast %50 : vector<1x16x16x16xbf16> to vector<256x16xbf16>
    %52 = vector.extract_strided_slice %47 {offsets = [0, 0, 2, 0], sizes = [1, 16, 16, 16], strides = [1, 1, 1, 1]} : vector<1x18x18x16xbf16> to vector<1x16x16x16xbf16>
    %53 = vector.shape_cast %52 : vector<1x16x16x16xbf16> to vector<256x16xbf16>
    %54 = vector.extract_strided_slice %47 {offsets = [0, 1, 0, 0], sizes = [1, 16, 16, 16], strides = [1, 1, 1, 1]} : vector<1x18x18x16xbf16> to vector<1x16x16x16xbf16>
    %55 = vector.shape_cast %54 : vector<1x16x16x16xbf16> to vector<256x16xbf16>
    %56 = vector.extract_strided_slice %47 {offsets = [0, 1, 1, 0], sizes = [1, 16, 16, 16], strides = [1, 1, 1, 1]} : vector<1x18x18x16xbf16> to vector<1x16x16x16xbf16>
    %57 = vector.shape_cast %56 : vector<1x16x16x16xbf16> to vector<256x16xbf16>
    %58 = vector.extract_strided_slice %47 {offsets = [0, 1, 2, 0], sizes = [1, 16, 16, 16], strides = [1, 1, 1, 1]} : vector<1x18x18x16xbf16> to vector<1x16x16x16xbf16>
    %59 = vector.shape_cast %58 : vector<1x16x16x16xbf16> to vector<256x16xbf16>
    %60 = vector.extract_strided_slice %47 {offsets = [0, 2, 0, 0], sizes = [1, 16, 16, 16], strides = [1, 1, 1, 1]} : vector<1x18x18x16xbf16> to vector<1x16x16x16xbf16>
    %61 = vector.shape_cast %60 : vector<1x16x16x16xbf16> to vector<256x16xbf16>
    %62 = vector.extract_strided_slice %47 {offsets = [0, 2, 1, 0], sizes = [1, 16, 16, 16], strides = [1, 1, 1, 1]} : vector<1x18x18x16xbf16> to vector<1x16x16x16xbf16>
    %63 = vector.shape_cast %62 : vector<1x16x16x16xbf16> to vector<256x16xbf16>
    %64 = vector.extract_strided_slice %47 {offsets = [0, 2, 2, 0], sizes = [1, 16, 16, 16], strides = [1, 1, 1, 1]} : vector<1x18x18x16xbf16> to vector<1x16x16x16xbf16>
    %65 = vector.shape_cast %64 : vector<1x16x16x16xbf16> to vector<256x16xbf16>
    %66 = tpu.concatenate %49, %51, %53, %55, %57, %59, %61, %63, %65 in 1 : vector<256x16xbf16>, vector<256x16xbf16>, vector<256x16xbf16>, vector<256x16xbf16>, vector<256x16xbf16>, vector<256x16xbf16>, vector<256x16xbf16>, vector<256x16xbf16>, vector<256x16xbf16> -> vector<256x144xbf16>
    %c0_57 = arith.constant 0 : index
    %c0_58 = arith.constant 0 : index
    %67 = vector.load %arg4[%c0_57, %c0_58] : memref<144x32xbf16, #tpu.memory_space<vmem>>, vector<144x32xbf16>
    %cst_59 = arith.constant dense<0.000000e+00> : vector<256x32xf32>
    %68 = tpu.matmul %66, %67, %cst_59 {dimension_numbers = #tpu.dot_dimension_numbers<[1], [0], [0], [1], [0, 0, 1, 1], [], []>} : vector<256x144xbf16>, vector<144x32xbf16>, vector<256x32xf32> -> vector<256x32xf32>
    %c0_60 = arith.constant 0 : index
    %c0_61 = arith.constant 0 : index
    %69 = vector.load %arg5[%c0_60, %c0_61] : memref<1x32xf32, #tpu.memory_space<vmem>>, vector<1x32xf32>
    %70 = vector.broadcast %69 : vector<1x32xf32> to vector<256x32xf32>
    %71 = arith.addf %68, %70 : vector<256x32xf32>
    %cst_62 = arith.constant 0.000000e+00 : f32
    %72 = vector.broadcast %cst_62 : f32 to vector<256x32xf32>
    %73 = arith.maximumf %71, %72 : vector<256x32xf32>
    %74 = arith.truncf %73 : vector<256x32xf32> to vector<256x32xbf16>
    %75 = vector.shape_cast %74 : vector<256x32xbf16> to vector<1x16x16x32xbf16>
    %cst_63 = arith.constant 0.000000e+00 : bf16
    %76 = vector.broadcast %cst_63 : bf16 to vector<1x1x18x32xbf16>
    %cst_64 = arith.constant 0.000000e+00 : bf16
    %77 = vector.broadcast %cst_64 : bf16 to vector<1x18x1x32xbf16>
    %c0_65 = arith.constant 0 : index
    %c0_66 = arith.constant 0 : index
    %c0_67 = arith.constant 0 : index
    %c0_68 = arith.constant 0 : index
    %78 = vector.load %arg15[%c0_65, %c0_66, %c0_67, %c0_68] : memref<1x18x18x32xbf16, #tpu.memory_space<vmem>>, vector<1x1x18x32xbf16>
    tpu.vector_store %arg15[%c0_65, %c0_66, %c0_67, %c0_68], %76 {strides = array<i32>} : memref<1x18x18x32xbf16, #tpu.memory_space<vmem>>, vector<1x1x18x32xbf16>,
    %c0_69 = arith.constant 0 : index
    %c17_70 = arith.constant 17 : index
    %c0_71 = arith.constant 0 : index
    %c0_72 = arith.constant 0 : index
    %79 = vector.load %arg15[%c0_69, %c17_70, %c0_71, %c0_72] : memref<1x18x18x32xbf16, #tpu.memory_space<vmem>>, vector<1x1x18x32xbf16>
    tpu.vector_store %arg15[%c0_69, %c17_70, %c0_71, %c0_72], %76 {strides = array<i32>} : memref<1x18x18x32xbf16, #tpu.memory_space<vmem>>, vector<1x1x18x32xbf16>,
    %c0_73 = arith.constant 0 : index
    %c0_74 = arith.constant 0 : index
    %c0_75 = arith.constant 0 : index
    %c0_76 = arith.constant 0 : index
    %80 = vector.load %arg15[%c0_73, %c0_74, %c0_75, %c0_76] : memref<1x18x18x32xbf16, #tpu.memory_space<vmem>>, vector<1x18x1x32xbf16>
    tpu.vector_store %arg15[%c0_73, %c0_74, %c0_75, %c0_76], %77 {strides = array<i32>} : memref<1x18x18x32xbf16, #tpu.memory_space<vmem>>, vector<1x18x1x32xbf16>,
    %c0_77 = arith.constant 0 : index
    %c0_78 = arith.constant 0 : index
    %c17_79 = arith.constant 17 : index
    %c0_80 = arith.constant 0 : index
    %81 = vector.load %arg15[%c0_77, %c0_78, %c17_79, %c0_80] : memref<1x18x18x32xbf16, #tpu.memory_space<vmem>>, vector<1x18x1x32xbf16>
    tpu.vector_store %arg15[%c0_77, %c0_78, %c17_79, %c0_80], %77 {strides = array<i32>} : memref<1x18x18x32xbf16, #tpu.memory_space<vmem>>, vector<1x18x1x32xbf16>,
    %c0_81 = arith.constant 0 : index
    %c1_82 = arith.constant 1 : index
    %c1_83 = arith.constant 1 : index
    %c0_84 = arith.constant 0 : index
    %82 = vector.load %arg15[%c0_81, %c1_82, %c1_83, %c0_84] : memref<1x18x18x32xbf16, #tpu.memory_space<vmem>>, vector<1x16x16x32xbf16>
    tpu.vector_store %arg15[%c0_81, %c1_82, %c1_83, %c0_84], %75 {strides = array<i32>} : memref<1x18x18x32xbf16, #tpu.memory_space<vmem>>, vector<1x16x16x32xbf16>,
    %c0_85 = arith.constant 0 : index
    %c0_86 = arith.constant 0 : index
    %c0_87 = arith.constant 0 : index
    %c0_88 = arith.constant 0 : index
    %83 = vector.load %arg15[%c0_85, %c0_86, %c0_87, %c0_88] : memref<1x18x18x32xbf16, #tpu.memory_space<vmem>>, vector<1x18x18x32xbf16>
    %84 = vector.extract_strided_slice %83 {offsets = [0, 0, 0, 0], sizes = [1, 16, 16, 32], strides = [1, 1, 1, 1]} : vector<1x18x18x32xbf16> to vector<1x16x16x32xbf16>
    %85 = vector.shape_cast %84 : vector<1x16x16x32xbf16> to vector<256x32xbf16>
    %86 = vector.extract_strided_slice %83 {offsets = [0, 0, 1, 0], sizes = [1, 16, 16, 32], strides = [1, 1, 1, 1]} : vector<1x18x18x32xbf16> to vector<1x16x16x32xbf16>
    %87 = vector.shape_cast %86 : vector<1x16x16x32xbf16> to vector<256x32xbf16>
    %88 = vector.extract_strided_slice %83 {offsets = [0, 0, 2, 0], sizes = [1, 16, 16, 32], strides = [1, 1, 1, 1]} : vector<1x18x18x32xbf16> to vector<1x16x16x32xbf16>
    %89 = vector.shape_cast %88 : vector<1x16x16x32xbf16> to vector<256x32xbf16>
    %90 = vector.extract_strided_slice %83 {offsets = [0, 1, 0, 0], sizes = [1, 16, 16, 32], strides = [1, 1, 1, 1]} : vector<1x18x18x32xbf16> to vector<1x16x16x32xbf16>
    %91 = vector.shape_cast %90 : vector<1x16x16x32xbf16> to vector<256x32xbf16>
    %92 = vector.extract_strided_slice %83 {offsets = [0, 1, 1, 0], sizes = [1, 16, 16, 32], strides = [1, 1, 1, 1]} : vector<1x18x18x32xbf16> to vector<1x16x16x32xbf16>
    %93 = vector.shape_cast %92 : vector<1x16x16x32xbf16> to vector<256x32xbf16>
    %94 = vector.extract_strided_slice %83 {offsets = [0, 1, 2, 0], sizes = [1, 16, 16, 32], strides = [1, 1, 1, 1]} : vector<1x18x18x32xbf16> to vector<1x16x16x32xbf16>
    %95 = vector.shape_cast %94 : vector<1x16x16x32xbf16> to vector<256x32xbf16>
    %96 = vector.extract_strided_slice %83 {offsets = [0, 2, 0, 0], sizes = [1, 16, 16, 32], strides = [1, 1, 1, 1]} : vector<1x18x18x32xbf16> to vector<1x16x16x32xbf16>
    %97 = vector.shape_cast %96 : vector<1x16x16x32xbf16> to vector<256x32xbf16>
    %98 = vector.extract_strided_slice %83 {offsets = [0, 2, 1, 0], sizes = [1, 16, 16, 32], strides = [1, 1, 1, 1]} : vector<1x18x18x32xbf16> to vector<1x16x16x32xbf16>
    %99 = vector.shape_cast %98 : vector<1x16x16x32xbf16> to vector<256x32xbf16>
    %100 = vector.extract_strided_slice %83 {offsets = [0, 2, 2, 0], sizes = [1, 16, 16, 32], strides = [1, 1, 1, 1]} : vector<1x18x18x32xbf16> to vector<1x16x16x32xbf16>
    %101 = vector.shape_cast %100 : vector<1x16x16x32xbf16> to vector<256x32xbf16>
    %102 = tpu.concatenate %85, %87, %89, %91, %93, %95, %97, %99, %101 in 1 : vector<256x32xbf16>, vector<256x32xbf16>, vector<256x32xbf16>, vector<256x32xbf16>, vector<256x32xbf16>, vector<256x32xbf16>, vector<256x32xbf16>, vector<256x32xbf16>, vector<256x32xbf16> -> vector<256x288xbf16>
    %c0_89 = arith.constant 0 : index
    %c0_90 = arith.constant 0 : index
    %103 = vector.load %arg6[%c0_89, %c0_90] : memref<288x64xbf16, #tpu.memory_space<vmem>>, vector<288x64xbf16>
    %cst_91 = arith.constant dense<0.000000e+00> : vector<256x64xf32>
    %104 = tpu.matmul %102, %103, %cst_91 {dimension_numbers = #tpu.dot_dimension_numbers<[1], [0], [0], [1], [0, 0, 1, 1], [], []>} : vector<256x288xbf16>, vector<288x64xbf16>, vector<256x64xf32> -> vector<256x64xf32>
    %c0_92 = arith.constant 0 : index
    %c0_93 = arith.constant 0 : index
    %105 = vector.load %arg7[%c0_92, %c0_93] : memref<1x64xf32, #tpu.memory_space<vmem>>, vector<1x64xf32>
    %106 = vector.broadcast %105 : vector<1x64xf32> to vector<256x64xf32>
    %107 = arith.addf %104, %106 : vector<256x64xf32>
    %cst_94 = arith.constant 0.000000e+00 : f32
    %108 = vector.broadcast %cst_94 : f32 to vector<256x64xf32>
    %109 = arith.maximumf %107, %108 : vector<256x64xf32>
    %110 = arith.truncf %109 : vector<256x64xf32> to vector<256x64xbf16>
    %111 = vector.shape_cast %110 : vector<256x64xbf16> to vector<1x16x16x64xbf16>
    %cst_95 = arith.constant 0.000000e+00 : bf16
    %112 = vector.broadcast %cst_95 : bf16 to vector<1x1x18x64xbf16>
    %cst_96 = arith.constant 0.000000e+00 : bf16
    %113 = vector.broadcast %cst_96 : bf16 to vector<1x18x1x64xbf16>
    %c0_97 = arith.constant 0 : index
    %c0_98 = arith.constant 0 : index
    %c0_99 = arith.constant 0 : index
    %c0_100 = arith.constant 0 : index
    %114 = vector.load %arg16[%c0_97, %c0_98, %c0_99, %c0_100] : memref<1x18x18x64xbf16, #tpu.memory_space<vmem>>, vector<1x1x18x64xbf16>
    tpu.vector_store %arg16[%c0_97, %c0_98, %c0_99, %c0_100], %112 {strides = array<i32>} : memref<1x18x18x64xbf16, #tpu.memory_space<vmem>>, vector<1x1x18x64xbf16>,
    %c0_101 = arith.constant 0 : index
    %c17_102 = arith.constant 17 : index
    %c0_103 = arith.constant 0 : index
    %c0_104 = arith.constant 0 : index
    %115 = vector.load %arg16[%c0_101, %c17_102, %c0_103, %c0_104] : memref<1x18x18x64xbf16, #tpu.memory_space<vmem>>, vector<1x1x18x64xbf16>
    tpu.vector_store %arg16[%c0_101, %c17_102, %c0_103, %c0_104], %112 {strides = array<i32>} : memref<1x18x18x64xbf16, #tpu.memory_space<vmem>>, vector<1x1x18x64xbf16>,
    %c0_105 = arith.constant 0 : index
    %c0_106 = arith.constant 0 : index
    %c0_107 = arith.constant 0 : index
    %c0_108 = arith.constant 0 : index
    %116 = vector.load %arg16[%c0_105, %c0_106, %c0_107, %c0_108] : memref<1x18x18x64xbf16, #tpu.memory_space<vmem>>, vector<1x18x1x64xbf16>
    tpu.vector_store %arg16[%c0_105, %c0_106, %c0_107, %c0_108], %113 {strides = array<i32>} : memref<1x18x18x64xbf16, #tpu.memory_space<vmem>>, vector<1x18x1x64xbf16>,
    %c0_109 = arith.constant 0 : index
    %c0_110 = arith.constant 0 : index
    %c17_111 = arith.constant 17 : index
    %c0_112 = arith.constant 0 : index
    %117 = vector.load %arg16[%c0_109, %c0_110, %c17_111, %c0_112] : memref<1x18x18x64xbf16, #tpu.memory_space<vmem>>, vector<1x18x1x64xbf16>
    tpu.vector_store %arg16[%c0_109, %c0_110, %c17_111, %c0_112], %113 {strides = array<i32>} : memref<1x18x18x64xbf16, #tpu.memory_space<vmem>>, vector<1x18x1x64xbf16>,
    %c0_113 = arith.constant 0 : index
    %c1_114 = arith.constant 1 : index
    %c1_115 = arith.constant 1 : index
    %c0_116 = arith.constant 0 : index
    %118 = vector.load %arg16[%c0_113, %c1_114, %c1_115, %c0_116] : memref<1x18x18x64xbf16, #tpu.memory_space<vmem>>, vector<1x16x16x64xbf16>
    tpu.vector_store %arg16[%c0_113, %c1_114, %c1_115, %c0_116], %111 {strides = array<i32>} : memref<1x18x18x64xbf16, #tpu.memory_space<vmem>>, vector<1x16x16x64xbf16>,
    %c0_117 = arith.constant 0 : index
    %c0_118 = arith.constant 0 : index
    %c0_119 = arith.constant 0 : index
    %c0_120 = arith.constant 0 : index
    %119 = vector.load %arg16[%c0_117, %c0_118, %c0_119, %c0_120] : memref<1x18x18x64xbf16, #tpu.memory_space<vmem>>, vector<1x18x18x64xbf16>
    %120 = vector.extract_strided_slice %119 {offsets = [0, 0, 0, 0], sizes = [1, 16, 16, 64], strides = [1, 1, 1, 1]} : vector<1x18x18x64xbf16> to vector<1x16x16x64xbf16>
    %121 = vector.shape_cast %120 : vector<1x16x16x64xbf16> to vector<256x64xbf16>
    %122 = vector.extract_strided_slice %119 {offsets = [0, 0, 1, 0], sizes = [1, 16, 16, 64], strides = [1, 1, 1, 1]} : vector<1x18x18x64xbf16> to vector<1x16x16x64xbf16>
    %123 = vector.shape_cast %122 : vector<1x16x16x64xbf16> to vector<256x64xbf16>
    %124 = vector.extract_strided_slice %119 {offsets = [0, 0, 2, 0], sizes = [1, 16, 16, 64], strides = [1, 1, 1, 1]} : vector<1x18x18x64xbf16> to vector<1x16x16x64xbf16>
    %125 = vector.shape_cast %124 : vector<1x16x16x64xbf16> to vector<256x64xbf16>
    %126 = vector.extract_strided_slice %119 {offsets = [0, 1, 0, 0], sizes = [1, 16, 16, 64], strides = [1, 1, 1, 1]} : vector<1x18x18x64xbf16> to vector<1x16x16x64xbf16>
    %127 = vector.shape_cast %126 : vector<1x16x16x64xbf16> to vector<256x64xbf16>
    %128 = vector.extract_strided_slice %119 {offsets = [0, 1, 1, 0], sizes = [1, 16, 16, 64], strides = [1, 1, 1, 1]} : vector<1x18x18x64xbf16> to vector<1x16x16x64xbf16>
    %129 = vector.shape_cast %128 : vector<1x16x16x64xbf16> to vector<256x64xbf16>
    %130 = vector.extract_strided_slice %119 {offsets = [0, 1, 2, 0], sizes = [1, 16, 16, 64], strides = [1, 1, 1, 1]} : vector<1x18x18x64xbf16> to vector<1x16x16x64xbf16>
    %131 = vector.shape_cast %130 : vector<1x16x16x64xbf16> to vector<256x64xbf16>
    %132 = vector.extract_strided_slice %119 {offsets = [0, 2, 0, 0], sizes = [1, 16, 16, 64], strides = [1, 1, 1, 1]} : vector<1x18x18x64xbf16> to vector<1x16x16x64xbf16>
    %133 = vector.shape_cast %132 : vector<1x16x16x64xbf16> to vector<256x64xbf16>
    %134 = vector.extract_strided_slice %119 {offsets = [0, 2, 1, 0], sizes = [1, 16, 16, 64], strides = [1, 1, 1, 1]} : vector<1x18x18x64xbf16> to vector<1x16x16x64xbf16>
    %135 = vector.shape_cast %134 : vector<1x16x16x64xbf16> to vector<256x64xbf16>
    %136 = vector.extract_strided_slice %119 {offsets = [0, 2, 2, 0], sizes = [1, 16, 16, 64], strides = [1, 1, 1, 1]} : vector<1x18x18x64xbf16> to vector<1x16x16x64xbf16>
    %137 = vector.shape_cast %136 : vector<1x16x16x64xbf16> to vector<256x64xbf16>
    %138 = tpu.concatenate %121, %123, %125, %127, %129, %131, %133, %135, %137 in 1 : vector<256x64xbf16>, vector<256x64xbf16>, vector<256x64xbf16>, vector<256x64xbf16>, vector<256x64xbf16>, vector<256x64xbf16>, vector<256x64xbf16>, vector<256x64xbf16>, vector<256x64xbf16> -> vector<256x576xbf16>
    %c0_121 = arith.constant 0 : index
    %c0_122 = arith.constant 0 : index
    %139 = vector.load %arg8[%c0_121, %c0_122] : memref<576x128xbf16, #tpu.memory_space<vmem>>, vector<576x128xbf16>
    %cst_123 = arith.constant dense<0.000000e+00> : vector<256x128xf32>
    %140 = tpu.matmul %138, %139, %cst_123 {dimension_numbers = #tpu.dot_dimension_numbers<[1], [0], [0], [1], [0, 0, 1, 1], [], []>} : vector<256x576xbf16>, vector<576x128xbf16>, vector<256x128xf32> -> vector<256x128xf32>
    %c0_124 = arith.constant 0 : index
    %c0_125 = arith.constant 0 : index
    %141 = vector.load %arg9[%c0_124, %c0_125] : memref<1x128xf32, #tpu.memory_space<vmem>>, vector<1x128xf32>
    %142 = vector.broadcast %141 : vector<1x128xf32> to vector<256x128xf32>
    %143 = arith.addf %140, %142 : vector<256x128xf32>
    %cst_126 = arith.constant 0.000000e+00 : f32
    %144 = vector.broadcast %cst_126 : f32 to vector<256x128xf32>
    %145 = arith.maximumf %143, %144 : vector<256x128xf32>
    %146 = arith.truncf %145 : vector<256x128xf32> to vector<256x128xbf16>
    %c0_127 = arith.constant 0 : index
    %c0_128 = arith.constant 0 : index
    %147 = vector.load %arg10[%c0_127, %c0_128] : memref<128x8xbf16, #tpu.memory_space<vmem>>, vector<128x8xbf16>
    %cst_129 = arith.constant dense<0.000000e+00> : vector<256x8xf32>
    %148 = tpu.matmul %146, %147, %cst_129 {dimension_numbers = #tpu.dot_dimension_numbers<[1], [0], [0], [1], [0, 0, 1, 1], [], []>} : vector<256x128xbf16>, vector<128x8xbf16>, vector<256x8xf32> -> vector<256x8xf32>
    %c0_130 = arith.constant 0 : index
    %c0_131 = arith.constant 0 : index
    %149 = vector.load %arg11[%c0_130, %c0_131] : memref<1x8xf32, #tpu.memory_space<vmem>>, vector<1x8xf32>
    %150 = vector.broadcast %149 : vector<1x8xf32> to vector<256x8xf32>
    %151 = arith.addf %148, %150 : vector<256x8xf32>
    %152 = vector.shape_cast %151 : vector<256x8xf32> to vector<1x256x8xf32>
    %153 = tpu.transpose %152, [0, 2, 1] : vector<1x256x8xf32> -> vector<1x8x256xf32>
    %c0_132 = arith.constant 0 : index
    %c0_133 = arith.constant 0 : index
    %c0_134 = arith.constant 0 : index
    %154 = vector.load %arg12[%c0_132, %c0_133, %c0_134] : memref<1x8x256xf32, #tpu.memory_space<vmem>>, vector<1x8x256xf32>
    tpu.vector_store %arg12[%c0_132, %c0_133, %c0_134], %153 {strides = array<i32>} : memref<1x8x256xf32, #tpu.memory_space<vmem>>, vector<1x8x256xf32>,
    return
  }
  func.func @transform_0(%arg0: i32) -> (i32, i32, i32) {
    %c0_i32 = arith.constant 0 : i32
    %c0_i32_0 = arith.constant 0 : i32
    %c0_i32_1 = arith.constant 0 : i32
    return %arg0, %c0_i32, %c0_i32_0 : i32, i32, i32
  }
  func.func @transform_1(%arg0: i32) -> (i32, i32) {
    %c0_i32 = arith.constant 0 : i32
    %c0_i32_0 = arith.constant 0 : i32
    %c0_i32_1 = arith.constant 0 : i32
    return %c0_i32, %c0_i32_0 : i32, i32
  }
  func.func @transform_2(%arg0: i32) -> (i32, i32) {
    %c0_i32 = arith.constant 0 : i32
    %c0_i32_0 = arith.constant 0 : i32
    %c0_i32_1 = arith.constant 0 : i32
    return %c0_i32, %c0_i32_0 : i32, i32
  }
  func.func @transform_3(%arg0: i32) -> (i32, i32) {
    %c0_i32 = arith.constant 0 : i32
    %c0_i32_0 = arith.constant 0 : i32
    %c0_i32_1 = arith.constant 0 : i32
    return %c0_i32, %c0_i32_0 : i32, i32
  }
  func.func @transform_4(%arg0: i32) -> (i32, i32) {
    %c0_i32 = arith.constant 0 : i32
    %c0_i32_0 = arith.constant 0 : i32
    %c0_i32_1 = arith.constant 0 : i32
    return %c0_i32, %c0_i32_0 : i32, i32
  }
  func.func @transform_5(%arg0: i32) -> (i32, i32) {
    %c0_i32 = arith.constant 0 : i32
    %c0_i32_0 = arith.constant 0 : i32
    %c0_i32_1 = arith.constant 0 : i32
    return %c0_i32, %c0_i32_0 : i32, i32
  }
  func.func @transform_6(%arg0: i32) -> (i32, i32) {
    %c0_i32 = arith.constant 0 : i32
    %c0_i32_0 = arith.constant 0 : i32
    %c0_i32_1 = arith.constant 0 : i32
    return %c0_i32, %c0_i32_0 : i32, i32
  }
  func.func @transform_7(%arg0: i32) -> (i32, i32) {
    %c0_i32 = arith.constant 0 : i32
    %c0_i32_0 = arith.constant 0 : i32
    %c0_i32_1 = arith.constant 0 : i32
    return %c0_i32, %c0_i32_0 : i32, i32
  }
  func.func @transform_8(%arg0: i32) -> (i32, i32) {
    %c0_i32 = arith.constant 0 : i32
    %c0_i32_0 = arith.constant 0 : i32
    %c0_i32_1 = arith.constant 0 : i32
    return %c0_i32, %c0_i32_0 : i32, i32
  }
  func.func @transform_9(%arg0: i32) -> (i32, i32) {
    %c0_i32 = arith.constant 0 : i32
    %c0_i32_0 = arith.constant 0 : i32
    %c0_i32_1 = arith.constant 0 : i32
    return %c0_i32, %c0_i32_0 : i32, i32
  }
  func.func @transform_10(%arg0: i32) -> (i32, i32) {
    %c0_i32 = arith.constant 0 : i32
    %c0_i32_0 = arith.constant 0 : i32
    %c0_i32_1 = arith.constant 0 : i32
    return %c0_i32, %c0_i32_0 : i32, i32
  }
  func.func @transform_11(%arg0: i32) -> (i32, i32, i32) {
    %c0_i32 = arith.constant 0 : i32
    %c0_i32_0 = arith.constant 0 : i32
    %c0_i32_1 = arith.constant 0 : i32
    return %arg0, %c0_i32, %c0_i32_0 : i32, i32, i32
  }
}

</mosaic_0001>

<llo_original>
// kernel: mini_yolov8_forward.1
$region0: #{mini_yolov8_forward.1}
  #allocation0 [shape = 'u32[]', space=smem, size = 0x4, offset = 0x4, fixed_abs, tag = 'smem constant byte address 0x4 - core index']
  #allocation1 [shape = 'u32[144,128]{1,0:T(1,128)}', space=vmem, size = 0x12000, scoped, tag = 'internal scratch']
  #allocation2 [shape = 'bf16[1,18,18,3]{3,2,1,0:T(8,128)(2,1)}', space=vmem, size = 0x1b000, scoped, tag = 'scratch operand']
  #allocation3 [shape = 'bf16[1,18,18,16]{3,2,1,0:T(8,128)(2,1)}', space=vmem, size = 0x1b000, scoped, tag = 'scratch operand']
  #allocation4 [shape = 'bf16[1,18,18,32]{3,2,1,0:T(8,128)(2,1)}', space=vmem, size = 0x1b000, scoped, tag = 'scratch operand']
  #allocation5 [shape = 'bf16[1,18,18,64]{3,2,1,0:T(8,128)(2,1)}', space=vmem, size = 0x1b000, scoped, tag = 'scratch operand']
  %s0 = inlined_call_operand.vmem [shape: f32[2,3,256], index: 0, kind: input, shape index: {}]
  %s1 = inlined_call_operand.vmem [shape: bf16[27,16], index: 1, kind: input, shape index: {}]
  %s2 = inlined_call_operand.vmem [shape: f32[1,16], index: 2, kind: input, shape index: {}]
  %s3 = inlined_call_operand.vmem [shape: bf16[144,32], index: 3, kind: input, shape index: {}]
  %s4 = inlined_call_operand.vmem [shape: f32[1,32], index: 4, kind: input, shape index: {}]
  %s5 = inlined_call_operand.vmem [shape: bf16[288,64], index: 5, kind: input, shape index: {}]
  %s6 = inlined_call_operand.vmem [shape: f32[1,64], index: 6, kind: input, shape index: {}]
  %s7 = inlined_call_operand.vmem [shape: bf16[576,128], index: 7, kind: input, shape index: {}]
  %s8 = inlined_call_operand.vmem [shape: f32[1,128], index: 8, kind: input, shape index: {}]
  %s9 = inlined_call_operand.vmem [shape: bf16[128,8], index: 9, kind: input, shape index: {}]
  %s10 = inlined_call_operand.vmem [shape: f32[1,8], index: 10, kind: input, shape index: {}]
  %s11 = inlined_call_operand.vmem [shape: f32[2,8,256], index: 11, kind: output, shape index: {}]
  %s12 = sld [smem:[#allocation0]]
  $region77: #{mini_yolov8_forward.1} parent=0
    _
  %s14 = ssub.s32 1, %s12
  %s15 = scalar_select 0, %s14, %s12
  loop: start=0, step=1, limit=4
  $region2: #{mini_yolov8_forward.1} parent=0 // loop_pre_header
    _
  $region3: #{mini_yolov8_forward.1} parent=0 // loop_header
    %s17 = sphi 0, %s21
    %p18 = scmp.ge.s32.totalorder %s17, 4
    %s27 = sphi 0, %s29
    %s30 = sphi 0, %s27
    %s31 = sphi 0, %s30
    %s47 = sphi 0, %s31
    %s51 = sphi 0, %s51
    %s53 = sphi 0, %s51
    %s54 = sphi 0, %s53
    %s68 = sphi 0, %s54
    %s72 = sphi 0, %s72
    %s74 = sphi 0, %s72
    %s75 = sphi 0, %s74
    %s89 = sphi 0, %s75
    %s93 = sphi 0, %s93
    %s95 = sphi 0, %s93
    %s96 = sphi 0, %s95
    %s110 = sphi 0, %s96
    %s114 = sphi 0, %s114
    %s116 = sphi 0, %s114
    %s117 = sphi 0, %s116
    %s131 = sphi 0, %s117
    %s135 = sphi 0, %s135
    %s137 = sphi 0, %s135
    %s138 = sphi 0, %s137
    %s152 = sphi 0, %s138
    %s156 = sphi 0, %s156
    %s158 = sphi 0, %s156
    %s159 = sphi 0, %s158
    %s173 = sphi 0, %s159
    %s177 = sphi 0, %s177
    %s179 = sphi 0, %s177
    %s180 = sphi 0, %s179
    %s194 = sphi 0, %s180
    %s198 = sphi 0, %s198
    %s200 = sphi 0, %s198
    %s201 = sphi 0, %s200
    %s215 = sphi 0, %s201
    %s219 = sphi 0, %s219
    %s221 = sphi 0, %s219
    %s222 = sphi 0, %s221
    %s236 = sphi 0, %s222
    %s240 = sphi 0, %s240
    %s242 = sphi 0, %s240
    %s243 = sphi 0, %s242
    %s257 = sphi 0, %s243
    %s263 = sphi 0, %s265
    %s266 = sphi 0, %s263
    %s267 = sphi 0, %s266
    %s283 = sphi 0, %s267
  $region4: #{mini_yolov8_forward.1} parent=0 // loop_header_branch
    %20 = sbr.rel (%p18) target = $region8
  $region5: #{mini_yolov8_forward.1} parent=0 // loop_body
    %s22 = ssub.s32 %s17, 1
    %s23 = ssub.s32 %s17, 2
    %s24 = sadd.s32 %s17, 1
    %s25 = ssub.s32 %s17, %s24
    %p26 = scmp.eq.s32.totalorder %s25, 0
    %s28 = sadd.s32 %s27, 1
    %s29 = scalar_select %p26, %s27, %s28
    %p32 = pneg %p26
    %p33 = scmp.eq.s32.totalorder %s17, 1
    %p34 = por %p32, %p33
    %p35 = scmp.ne.s32.totalorder %s27, %s30
    %p36 = scmp.eq.s32.totalorder %s17, 0
    %p37 = por %p35, %p36
    %p38 = scmp.ne.s32.totalorder %s27, %s30
    %p39 = scmp.eq.s32.totalorder %s22, 1
    %p40 = por %p38, %p39
    %p41 = scmp.ne.s32.totalorder %s30, %s31
    %p42 = scmp.eq.s32.totalorder %s22, 0
    %p43 = por %p41, %p42
    %p44 = scmp.ne.s32.totalorder %s30, %s31
    %p45 = scmp.eq.s32.totalorder %s23, 1
    %p46 = por %p44, %p45
    %p48 = scmp.ne.s32.totalorder %s31, %s47
    %p49 = scmp.eq.s32.totalorder %s23, 0
    %p50 = por %p48, %p49
    %s52 = sadd.s32 %s51, 1
    %p55 = scmp.eq.s32.totalorder %s17, 1
    %p56 = scmp.ne.s32.totalorder %s51, %s53
    %p57 = scmp.eq.s32.totalorder %s17, 0
    %p58 = por %p56, %p57
    %p59 = scmp.ne.s32.totalorder %s51, %s53
    %p60 = scmp.eq.s32.totalorder %s22, 1
    %p61 = por %p59, %p60
    %p62 = scmp.ne.s32.totalorder %s53, %s54
    %p63 = scmp.eq.s32.totalorder %s22, 0
    %p64 = por %p62, %p63
    %p65 = scmp.ne.s32.totalorder %s53, %s54
    %p66 = scmp.eq.s32.totalorder %s23, 1
    %p67 = por %p65, %p66
    %p69 = scmp.ne.s32.totalorder %s54, %s68
    %p70 = scmp.eq.s32.totalorder %s23, 0
    %p71 = por %p69, %p70
    %s73 = sadd.s32 %s72, 1
    %p76 = scmp.eq.s32.totalorder %s17, 1
    %p77 = scmp.ne.s32.totalorder %s72, %s74
    %p78 = scmp.eq.s32.totalorder %s17, 0
    %p79 = por %p77, %p78
    %p80 = scmp.ne.s32.totalorder %s72, %s74
    %p81 = scmp.eq.s32.totalorder %s22, 1
    %p82 = por %p80, %p81
    %p83 = scmp.ne.s32.totalorder %s74, %s75
    %p84 = scmp.eq.s32.totalorder %s22, 0
    %p85 = por %p83, %p84
    %p86 = scmp.ne.s32.totalorder %s74, %s75
    %p87 = scmp.eq.s32.totalorder %s23, 1
    %p88 = por %p86, %p87
    %p90 = scmp.ne.s32.totalorder %s75, %s89
    %p91 = scmp.eq.s32.totalorder %s23, 0
    %p92 = por %p90, %p91
    %s94 = sadd.s32 %s93, 1
    %p97 = scmp.eq.s32.totalorder %s17, 1
    %p98 = scmp.ne.s32.totalorder %s93, %s95
    %p99 = scmp.eq.s32.totalorder %s17, 0
    %p100 = por %p98, %p99
    %p101 = scmp.ne.s32.totalorder %s93, %s95
    %p102 = scmp.eq.s32.totalorder %s22, 1
    %p103 = por %p101, %p102
    %p104 = scmp.ne.s32.totalorder %s95, %s96
    %p105 = scmp.eq.s32.totalorder %s22, 0
    %p106 = por %p104, %p105
    %p107 = scmp.ne.s32.totalorder %s95, %s96
    %p108 = scmp.eq.s32.totalorder %s23, 1
    %p109 = por %p107, %p108
    %p111 = scmp.ne.s32.totalorder %s96, %s110
    %p112 = scmp.eq.s32.totalorder %s23, 0
    %p113 = por %p111, %p112
    %s115 = sadd.s32 %s114, 1
    %p118 = scmp.eq.s32.totalorder %s17, 1
    %p119 = scmp.ne.s32.totalorder %s114, %s116
    %p120 = scmp.eq.s32.totalorder %s17, 0
    %p121 = por %p119, %p120
    %p122 = scmp.ne.s32.totalorder %s114, %s116
    %p123 = scmp.eq.s32.totalorder %s22, 1
    %p124 = por %p122, %p123
    %p125 = scmp.ne.s32.totalorder %s116, %s117
    %p126 = scmp.eq.s32.totalorder %s22, 0
    %p127 = por %p125, %p126
    %p128 = scmp.ne.s32.totalorder %s116, %s117
    %p129 = scmp.eq.s32.totalorder %s23, 1
    %p130 = por %p128, %p129
    %p132 = scmp.ne.s32.totalorder %s117, %s131
    %p133 = scmp.eq.s32.totalorder %s23, 0
    %p134 = por %p132, %p133
    %s136 = sadd.s32 %s135, 1
    %p139 = scmp.eq.s32.totalorder %s17, 1
    %p140 = scmp.ne.s32.totalorder %s135, %s137
    %p141 = scmp.eq.s32.totalorder %s17, 0
    %p142 = por %p140, %p141
    %p143 = scmp.ne.s32.totalorder %s135, %s137
    %p144 = scmp.eq.s32.totalorder %s22, 1
    %p145 = por %p143, %p144
    %p146 = scmp.ne.s32.totalorder %s137, %s138
    %p147 = scmp.eq.s32.totalorder %s22, 0
    %p148 = por %p146, %p147
    %p149 = scmp.ne.s32.totalorder %s137, %s138
    %p150 = scmp.eq.s32.totalorder %s23, 1
    %p151 = por %p149, %p150
    %p153 = scmp.ne.s32.totalorder %s138, %s152
    %p154 = scmp.eq.s32.totalorder %s23, 0
    %p155 = por %p153, %p154
    %s157 = sadd.s32 %s156, 1
    %p160 = scmp.eq.s32.totalorder %s17, 1
    %p161 = scmp.ne.s32.totalorder %s156, %s158
    %p162 = scmp.eq.s32.totalorder %s17, 0
    %p163 = por %p161, %p162
    %p164 = scmp.ne.s32.totalorder %s156, %s158
    %p165 = scmp.eq.s32.totalorder %s22, 1
    %p166 = por %p164, %p165
    %p167 = scmp.ne.s32.totalorder %s158, %s159
    %p168 = scmp.eq.s32.totalorder %s22, 0
    %p169 = por %p167, %p168
    %p170 = scmp.ne.s32.totalorder %s158, %s159
    %p171 = scmp.eq.s32.totalorder %s23, 1
    %p172 = por %p170, %p171
    %p174 = scmp.ne.s32.totalorder %s159, %s173
    %p175 = scmp.eq.s32.totalorder %s23, 0
    %p176 = por %p174, %p175
    %s178 = sadd.s32 %s177, 1
    %p181 = scmp.eq.s32.totalorder %s17, 1
    %p182 = scmp.ne.s32.totalorder %s177, %s179
    %p183 = scmp.eq.s32.totalorder %s17, 0
    %p184 = por %p182, %p183
    %p185 = scmp.ne.s32.totalorder %s177, %s179
    %p186 = scmp.eq.s32.totalorder %s22, 1
    %p187 = por %p185, %p186
    %p188 = scmp.ne.s32.totalorder %s179, %s180
    %p189 = scmp.eq.s32.totalorder %s22, 0
    %p190 = por %p188, %p189
    %p191 = scmp.ne.s32.totalorder %s179, %s180
    %p192 = scmp.eq.s32.totalorder %s23, 1
    %p193 = por %p191, %p192
    %p195 = scmp.ne.s32.totalorder %s180, %s194
    %p196 = scmp.eq.s32.totalorder %s23, 0
    %p197 = por %p195, %p196
    %s199 = sadd.s32 %s198, 1
    %p202 = scmp.eq.s32.totalorder %s17, 1
    %p203 = scmp.ne.s32.totalorder %s198, %s200
    %p204 = scmp.eq.s32.totalorder %s17, 0
    %p205 = por %p203, %p204
    %p206 = scmp.ne.s32.totalorder %s198, %s200
    %p207 = scmp.eq.s32.totalorder %s22, 1
    %p208 = por %p206, %p207
    %p209 = scmp.ne.s32.totalorder %s200, %s201
    %p210 = scmp.eq.s32.totalorder %s22, 0
    %p211 = por %p209, %p210
    %p212 = scmp.ne.s32.totalorder %s200, %s201
    %p213 = scmp.eq.s32.totalorder %s23, 1
    %p214 = por %p212, %p213
    %p216 = scmp.ne.s32.totalorder %s201, %s215
    %p217 = scmp.eq.s32.totalorder %s23, 0
    %p218 = por %p216, %p217
    %s220 = sadd.s32 %s219, 1
    %p223 = scmp.eq.s32.totalorder %s17, 1
    %p224 = scmp.ne.s32.totalorder %s219, %s221
    %p225 = scmp.eq.s32.totalorder %s17, 0
    %p226 = por %p224, %p225
    %p227 = scmp.ne.s32.totalorder %s219, %s221
    %p228 = scmp.eq.s32.totalorder %s22, 1
    %p229 = por %p227, %p228
    %p230 = scmp.ne.s32.totalorder %s221, %s222
    %p231 = scmp.eq.s32.totalorder %s22, 0
    %p232 = por %p230, %p231
    %p233 = scmp.ne.s32.totalorder %s221, %s222
    %p234 = scmp.eq.s32.totalorder %s23, 1
    %p235 = por %p233, %p234
    %p237 = scmp.ne.s32.totalorder %s222, %s236
    %p238 = scmp.eq.s32.totalorder %s23, 0
    %p239 = por %p237, %p238
    %s241 = sadd.s32 %s240, 1
    %p244 = scmp.eq.s32.totalorder %s17, 1
    %p245 = scmp.ne.s32.totalorder %s240, %s242
    %p246 = scmp.eq.s32.totalorder %s17, 0
    %p247 = por %p245, %p246
    %p248 = scmp.ne.s32.totalorder %s240, %s242
    %p249 = scmp.eq.s32.totalorder %s22, 1
    %p250 = por %p248, %p249
    %p251 = scmp.ne.s32.totalorder %s242, %s243
    %p252 = scmp.eq.s32.totalorder %s22, 0
    %p253 = por %p251, %p252
    %p254 = scmp.ne.s32.totalorder %s242, %s243
    %p255 = scmp.eq.s32.totalorder %s23, 1
    %p256 = por %p254, %p255
    %p258 = scmp.ne.s32.totalorder %s243, %s257
    %p259 = scmp.eq.s32.totalorder %s23, 0
    %p260 = por %p258, %p259
    %s261 = ssub.s32 %s17, %s24
    %p262 = scmp.eq.s32.totalorder %s261, 0
    %s264 = sadd.s32 %s263, 1
    %s265 = scalar_select %p262, %s263, %s264
    %p268 = pneg %p262
    %p269 = scmp.eq.s32.totalorder %s17, 1
    %p270 = por %p268, %p269
    %p271 = scmp.ne.s32.totalorder %s263, %s266
    %p272 = scmp.eq.s32.totalorder %s17, 0
    %p273 = por %p271, %p272
    %p274 = scmp.ne.s32.totalorder %s263, %s266
    %p275 = scmp.eq.s32.totalorder %s22, 1
    %p276 = por %p274, %p275
    %p277 = scmp.ne.s32.totalorder %s266, %s267
    %p278 = scmp.eq.s32.totalorder %s22, 0
    %p279 = por %p277, %p278
    %p280 = scmp.ne.s32.totalorder %s266, %s267
    %p281 = scmp.eq.s32.totalorder %s23, 1
    %p282 = por %p280, %p281
    %p284 = scmp.ne.s32.totalorder %s267, %s283
    %p285 = scmp.eq.s32.totalorder %s23, 0
    %p286 = por %p284, %p285
    %p287 = scmp.le.s32.totalorder 1, %s17
    %p288 = scmp.lt.s32.totalorder %s17, 3
    %p289 = pnand %p287, %p288
    %p290 = pneg %p289
    // Predicated region
    $region9: #{mini_yolov8_forward.1} parent=5 // pred_check
      _
    $region10: #{mini_yolov8_forward.1} parent=5 // pred_check_branch
      %292 = sbr.rel (%p289) target = $region12
    $region11: #{mini_yolov8_forward.1} parent=5 // pred_region
      %s293 = ssub.s32 %s17, 1
      // Predicated region
      $region13: #{mini_yolov8_forward.1} parent=11 // pred_check
        %p294 = pneg %p64
      $region14: #{mini_yolov8_forward.1} parent=11 // pred_check_branch
        %296 = sbr.rel (%p294) target = $region16
      $region15: #{mini_yolov8_forward.1} parent=11 // pred_region
        _
      $region16: #{mini_yolov8_forward.1} parent=11 // pred_fallthru
        _
      // Predicated region
      $region17: #{mini_yolov8_forward.1} parent=11 // pred_check
        %p297 = pneg %p85
      $region18: #{mini_yolov8_forward.1} parent=11 // pred_check_branch
        %299 = sbr.rel (%p297) target = $region20
      $region19: #{mini_yolov8_forward.1} parent=11 // pred_region
        _
      $region20: #{mini_yolov8_forward.1} parent=11 // pred_fallthru
        _
      // Predicated region
      $region21: #{mini_yolov8_forward.1} parent=11 // pred_check
        %p300 = pneg %p106
      $region22: #{mini_yolov8_forward.1} parent=11 // pred_check_branch
        %302 = sbr.rel (%p300) target = $region24
      $region23: #{mini_yolov8_forward.1} parent=11 // pred_region
        _
      $region24: #{mini_yolov8_forward.1} parent=11 // pred_fallthru
        _
      // Predicated region
      $region25: #{mini_yolov8_forward.1} parent=11 // pred_check
        %p303 = pneg %p127
      $region26: #{mini_yolov8_forward.1} parent=11 // pred_check_branch
        %305 = sbr.rel (%p303) target = $region28
      $region27: #{mini_yolov8_forward.1} parent=11 // pred_region
        _
      $region28: #{mini_yolov8_forward.1} parent=11 // pred_fallthru
        _
      // Predicated region
      $region29: #{mini_yolov8_forward.1} parent=11 // pred_check
        %p306 = pneg %p148
      $region30: #{mini_yolov8_forward.1} parent=11 // pred_check_branch
        %308 = sbr.rel (%p306) target = $region32
      $region31: #{mini_yolov8_forward.1} parent=11 // pred_region
        _
      $region32: #{mini_yolov8_forward.1} parent=11 // pred_fallthru
        _
      // Predicated region
      $region33: #{mini_yolov8_forward.1} parent=11 // pred_check
        %p309 = pneg %p169
      $region34: #{mini_yolov8_forward.1} parent=11 // pred_check_branch
        %311 = sbr.rel (%p309) target = $region36
      $region35: #{mini_yolov8_forward.1} parent=11 // pred_region
        _
      $region36: #{mini_yolov8_forward.1} parent=11 // pred_fallthru
        _
      // Predicated region
      $region37: #{mini_yolov8_forward.1} parent=11 // pred_check
        %p312 = pneg %p190
      $region38: #{mini_yolov8_forward.1} parent=11 // pred_check_branch
        %314 = sbr.rel (%p312) target = $region40
      $region39: #{mini_yolov8_forward.1} parent=11 // pred_region
        _
      $region40: #{mini_yolov8_forward.1} parent=11 // pred_fallthru
        _
      // Predicated region
      $region41: #{mini_yolov8_forward.1} parent=11 // pred_check
        %p315 = pneg %p211
      $region42: #{mini_yolov8_forward.1} parent=11 // pred_check_branch
        %317 = sbr.rel (%p315) target = $region44
      $region43: #{mini_yolov8_forward.1} parent=11 // pred_region
        _
      $region44: #{mini_yolov8_forward.1} parent=11 // pred_fallthru
        _
      // Predicated region
      $region45: #{mini_yolov8_forward.1} parent=11 // pred_check
        %p318 = pneg %p232
      $region46: #{mini_yolov8_forward.1} parent=11 // pred_check_branch
        %320 = sbr.rel (%p318) target = $region48
      $region47: #{mini_yolov8_forward.1} parent=11 // pred_region
        _
      $region48: #{mini_yolov8_forward.1} parent=11 // pred_fallthru
        _
      // Predicated region
      $region49: #{mini_yolov8_forward.1} parent=11 // pred_check
        %p321 = pneg %p253
      $region50: #{mini_yolov8_forward.1} parent=11 // pred_check_branch
        %323 = sbr.rel (%p321) target = $region52
      $region51: #{mini_yolov8_forward.1} parent=11 // pred_region
        _
      $region52: #{mini_yolov8_forward.1} parent=11 // pred_fallthru
        _
    $region12: #{mini_yolov8_forward.1} parent=5 // pred_fallthru
      _
    %p324 = scmp.lt.s32.totalorder %s17, 2
    // Predicated region
    $region53: #{mini_yolov8_forward.1} parent=5 // pred_check
      %p325 = pneg %p324
    $region54: #{mini_yolov8_forward.1} parent=5 // pred_check_branch
      %327 = sbr.rel (%p325) target = $region56
    $region55: #{mini_yolov8_forward.1} parent=5 // pred_region
      // Predicated region
      $region57: #{mini_yolov8_forward.1} parent=55 // pred_check
        %p328 = pneg %p37
      $region58: #{mini_yolov8_forward.1} parent=55 // pred_check_branch
        %330 = sbr.rel (%p328) target = $region60
      $region59: #{mini_yolov8_forward.1} parent=55 // pred_region
        %p331 = scmp.lt.s32.totalorder %s17, 1
        %s332 = scalar_select %p331, %s17, 1
        %s333 = smul.addr %s332, 2
        %s334 = smul.addr %s333, 4
        %s335 = scalar_lea.vmem %s0, %s334
      $region60: #{mini_yolov8_forward.1} parent=55 // pred_fallthru
        _
    $region56: #{mini_yolov8_forward.1} parent=5 // pred_fallthru
      _
    %p336 = scmp.le.s32.totalorder 1, %s17
    %p337 = scmp.lt.s32.totalorder %s17, 3
    %p338 = pnand %p336, %p337
    %p339 = pneg %p338
    // Predicated region
    $region61: #{mini_yolov8_forward.1} parent=5 // pred_check
      _
    $region62: #{mini_yolov8_forward.1} parent=5 // pred_check_branch
      %341 = sbr.rel (%p338) target = $region64
    $region63: #{mini_yolov8_forward.1} parent=5 // pred_region
      %s342 = ssub.s32 %s17, 1
      %p343 = scmp.lt.s32.totalorder %s22, 1
      %s344 = scalar_select %p343, %s22, 1
      %s345 = smul.addr %s344, 2
      %s346 = smul.addr %s345, 4
      %s347 = scalar_lea.vmem %s0, %s346
      %p348 = pneg %p43
      %p349 = pneg %p40
      %p350 = pneg %p64
      %p351 = pneg %p61
      %p352 = pneg %p85
      %p353 = pneg %p82
      %p354 = pneg %p106
      %p355 = pneg %p103
      %p356 = pneg %p127
      %p357 = pneg %p124
      %p358 = pneg %p148
      %p359 = pneg %p145
      %p360 = pneg %p169
      %p361 = pneg %p166
      %p362 = pneg %p190
      %p363 = pneg %p187
      %p364 = pneg %p211
      %p365 = pneg %p208
      %p366 = pneg %p232
      %p367 = pneg %p229
      %p368 = pneg %p253
      %p369 = pneg %p250
      %p370 = pneg %p279
      %p371 = pneg %p276
      %p372 = scmp.lt.s32.totalorder %s22, 1
      %s373 = scalar_select %p372, %s22, 1
      %s374 = smul.addr %s373, 2
      %s375 = smul.addr %s374, 8
      %s376 = scalar_lea.vmem %s11, %s375
      %p377 = scmp.lt.s32.totalorder %s22, 1
      %s378 = scalar_select %p377, %s22, 1
      %s379 = smul.addr %s378, 2
      %s380 = smul.addr %s379, 4
      %s381 = scalar_lea.vmem %s0, %s380
      %p382 = scmp.lt.s32.totalorder %s22, 1
      %s383 = scalar_select %p382, %s22, 1
      %s384 = smul.addr %s383, 2
      %s385 = smul.addr %s384, 8
      %s386 = scalar_lea.vmem %s11, %s385
      %v388 = vld [vmem:[%s381] sm:$0x77]
      %v390 = vcombine.high %v388, %v388
      %v392 = vpack.c.bf16 %v388, %v388
      %v393 = vpack.c.bf16 %v390, %v390
      %394 = vxpose.xlu0.c.b16.start [1/8] %v392, 128
      %395 = vxpose.xlu0.c.b16.cont [2/8] 0, 128
      %396 = vxpose.xlu0.c.b16.cont [3/8] 0, 128
      %397 = vxpose.xlu0.c.b16.cont [4/8] 0, 128
      %398 = vxpose.xlu0.c.b16.cont [5/8] 0, 128
      %399 = vxpose.xlu0.c.b16.cont [6/8] 0, 128
      %400 = vxpose.xlu0.c.b16.cont [7/8] 0, 128
      %401 = vxpose.xlu0.c.b16.end [8/8] 0, 128
      %v402 = vpop.trf.xlu0
      %v403 = vpop.trf.xlu0
      %v404 = vpop.trf.xlu0
      %v405 = vpop.trf.xlu0
      %v406 = vpop.trf.xlu0
      %v407 = vpop.trf.xlu0
      %v408 = vpop.trf.xlu0
      %v409 = vpop.trf.xlu0
      %410 = vxpose.xlu0.c.b16.start [1/8] %v393, 128
      %411 = vxpose.xlu0.c.b16.cont [2/8] 0, 128
      %412 = vxpose.xlu0.c.b16.cont [3/8] 0, 128
      %413 = vxpose.xlu0.c.b16.cont [4/8] 0, 128
      %414 = vxpose.xlu0.c.b16.cont [5/8] 0, 128
      %415 = vxpose.xlu0.c.b16.cont [6/8] 0, 128
      %416 = vxpose.xlu0.c.b16.cont [7/8] 0, 128
      %417 = vxpose.xlu0.c.b16.end [8/8] 0, 128
      %v418 = vpop.trf.xlu0
      %v419 = vpop.trf.xlu0
      %v420 = vpop.trf.xlu0
      %v421 = vpop.trf.xlu0
      %v422 = vpop.trf.xlu0
      %v423 = vpop.trf.xlu0
      %v424 = vpop.trf.xlu0
      %v425 = vpop.trf.xlu0
      %vm426 = vcmask 19456
      %427 = vst.msk [vmem:[#allocation2] sm:$0xf] %vm426, 0
      %428 = vst.msk [vmem:[#allocation2 + $0x4] sm:$0xf] %vm426, 0
      %vm429 = vcmask 16384
      %430 = vst.msk [vmem:[#allocation2 + $0x8] sm:$0x1] %vm429, 0
      %s431 = scalar_lea.vmem [#allocation2], 204
      %432 = vst.msk [vmem:[%s431] sm:$0xf] %vm426, 0
      %433 = vst.msk [vmem:[%s431 + $0x4] sm:$0xf] %vm426, 0
      %434 = vst.msk [vmem:[%s431 + $0x8] sm:$0x1] %vm429, 0
      %vm435 = vcmask 16384
      %vm436 = vsmask.f32 256
      %vm437 = vmand %vm435, %vm436
      %v438 = vld [vmem:[#allocation2] sm:$0x1]
      %v439 = vsel %vm437, 0, %v438
      %440 = vst [vmem:[#allocation2] sm:$0x1] %v439
      %v441 = vld [vmem:[#allocation2 + $0xc] sm:$0x1]
      %v442 = vsel %vm437, 0, %v441
      %443 = vst [vmem:[#allocation2 + $0xc] sm:$0x1] %v442
      %v444 = vld [vmem:[#allocation2 + $0x18] sm:$0x1]
      %v445 = vsel %vm437, 0, %v444
      %446 = vst [vmem:[#allocation2 + $0x18] sm:$0x1] %v445
      %v447 = vld [vmem:[#allocation2 + $0x24] sm:$0x1]
      %v448 = vsel %vm437, 0, %v447
      %449 = vst [vmem:[#allocation2 + $0x24] sm:$0x1] %v448
      %v450 = vld [vmem:[#allocation2 + $0x30] sm:$0x1]
      %v451 = vsel %vm437, 0, %v450
      %452 = vst [vmem:[#allocation2 + $0x30] sm:$0x1] %v451
      %v453 = vld [vmem:[#allocation2 + $0x3c] sm:$0x1]
      %v454 = vsel %vm437, 0, %v453
      %455 = vst [vmem:[#allocation2 + $0x3c] sm:$0x1] %v454
      %v456 = vld [vmem:[#allocation2 + $0x48] sm:$0x1]
      %v457 = vsel %vm437, 0, %v456
      %458 = vst [vmem:[#allocation2 + $0x48] sm:$0x1] %v457
      %v459 = vld [vmem:[#allocation2 + $0x54] sm:$0x1]
      %v460 = vsel %vm437, 0, %v459
      %461 = vst [vmem:[#allocation2 + $0x54] sm:$0x1] %v460
      %v462 = vld [vmem:[#allocation2 + $0x60] sm:$0x1]
      %v463 = vsel %vm437, 0, %v462
      %464 = vst [vmem:[#allocation2 + $0x60] sm:$0x1] %v463
      %v465 = vld [vmem:[#allocation2 + $0x6c] sm:$0x1]
      %v466 = vsel %vm437, 0, %v465
      %467 = vst [vmem:[#allocation2 + $0x6c] sm:$0x1] %v466
      %v468 = vld [vmem:[#allocation2 + $0x78] sm:$0x1]
      %v469 = vsel %vm437, 0, %v468
      %470 = vst [vmem:[#allocation2 + $0x78] sm:$0x1] %v469
      %v471 = vld [vmem:[#allocation2 + $0x84] sm:$0x1]
      %v472 = vsel %vm437, 0, %v471
      %473 = vst [vmem:[#allocation2 + $0x84] sm:$0x1] %v472
      %v474 = vld [vmem:[#allocation2 + $0x90] sm:$0x1]
      %v475 = vsel %vm437, 0, %v474
      %476 = vst [vmem:[#allocation2 + $0x90] sm:$0x1] %v475
      %v477 = vld [vmem:[#allocation2 + $0x9c] sm:$0x1]
      %v478 = vsel %vm437, 0, %v477
      %479 = vst [vmem:[#allocation2 + $0x9c] sm:$0x1] %v478
      %v480 = vld [vmem:[#allocation2 + $0xa8] sm:$0x1]
      %v481 = vsel %vm437, 0, %v480
      %482 = vst [vmem:[#allocation2 + $0xa8] sm:$0x1] %v481
      %v483 = vld [vmem:[#allocation2 + $0xb4] sm:$0x1]
      %v484 = vsel %vm437, 0, %v483
      %485 = vst [vmem:[#allocation2 + $0xb4] sm:$0x1] %v484
      %v486 = vld [vmem:[#allocation2 + $0xc0] sm:$0x1]
      %v487 = vsel %vm437, 0, %v486
      %488 = vst [vmem:[#allocation2 + $0xc0] sm:$0x1] %v487
      %v489 = vld [vmem:[#allocation2 + $0xcc] sm:$0x1]
      %v490 = vsel %vm437, 0, %v489
      %491 = vst [vmem:[#allocation2 + $0xcc] sm:$0x1] %v490
      %vm492 = vsmask.f32 7938
      %vm493 = vmand %vm435, %vm492
      %v494 = vld [vmem:[#allocation2 + $0x8] sm:$0x1]
      %v495 = vsel %vm493, 0, %v494
      %496 = vst [vmem:[#allocation2 + $0x8] sm:$0x1] %v495
      %v497 = vld [vmem:[#allocation2 + $0x14] sm:$0x1]
      %v498 = vsel %vm493, 0, %v497
      %499 = vst [vmem:[#allocation2 + $0x14] sm:$0x1] %v498
      %v500 = vld [vmem:[#allocation2 + $0x20] sm:$0x1]
      %v501 = vsel %vm493, 0, %v500
      %502 = vst [vmem:[#allocation2 + $0x20] sm:$0x1] %v501
      %v503 = vld [vmem:[#allocation2 + $0x2c] sm:$0x1]
      %v504 = vsel %vm493, 0, %v503
      %505 = vst [vmem:[#allocation2 + $0x2c] sm:$0x1] %v504
      %v506 = vld [vmem:[#allocation2 + $0x38] sm:$0x1]
      %v507 = vsel %vm493, 0, %v506
      %508 = vst [vmem:[#allocation2 + $0x38] sm:$0x1] %v507
      %v509 = vld [vmem:[#allocation2 + $0x44] sm:$0x1]
      %v510 = vsel %vm493, 0, %v509
      %511 = vst [vmem:[#allocation2 + $0x44] sm:$0x1] %v510
      %v512 = vld [vmem:[#allocation2 + $0x50] sm:$0x1]
      %v513 = vsel %vm493, 0, %v512
      %514 = vst [vmem:[#allocation2 + $0x50] sm:$0x1] %v513
      %v515 = vld [vmem:[#allocation2 + $0x5c] sm:$0x1]
      %v516 = vsel %vm493, 0, %v515
      %517 = vst [vmem:[#allocation2 + $0x5c] sm:$0x1] %v516
      %v518 = vld [vmem:[#allocation2 + $0x68] sm:$0x1]
      %v519 = vsel %vm493, 0, %v518
      %520 = vst [vmem:[#allocation2 + $0x68] sm:$0x1] %v519
      %v521 = vld [vmem:[#allocation2 + $0x74] sm:$0x1]
      %v522 = vsel %vm493, 0, %v521
      %523 = vst [vmem:[#allocation2 + $0x74] sm:$0x1] %v522
      %v524 = vld [vmem:[#allocation2 + $0x80] sm:$0x1]
      %v525 = vsel %vm493, 0, %v524
      %526 = vst [vmem:[#allocation2 + $0x80] sm:$0x1] %v525
      %v527 = vld [vmem:[#allocation2 + $0x8c] sm:$0x1]
      %v528 = vsel %vm493, 0, %v527
      %529 = vst [vmem:[#allocation2 + $0x8c] sm:$0x1] %v528
      %v530 = vld [vmem:[#allocation2 + $0x98] sm:$0x1]
      %v531 = vsel %vm493, 0, %v530
      %532 = vst [vmem:[#allocation2 + $0x98] sm:$0x1] %v531
      %v533 = vld [vmem:[#allocation2 + $0xa4] sm:$0x1]
      %v534 = vsel %vm493, 0, %v533
      %535 = vst [vmem:[#allocation2 + $0xa4] sm:$0x1] %v534
      %v536 = vld [vmem:[#allocation2 + $0xb0] sm:$0x1]
      %v537 = vsel %vm493, 0, %v536
      %538 = vst [vmem:[#allocation2 + $0xb0] sm:$0x1] %v537
      %v539 = vld [vmem:[#allocation2 + $0xbc] sm:$0x1]
      %v540 = vsel %vm493, 0, %v539
      %541 = vst [vmem:[#allocation2 + $0xbc] sm:$0x1] %v540
      %v542 = vld [vmem:[#allocation2 + $0xc8] sm:$0x1]
      %v543 = vsel %vm493, 0, %v542
      %544 = vst [vmem:[#allocation2 + $0xc8] sm:$0x1] %v543
      %v545 = vld [vmem:[#allocation2 + $0xd4] sm:$0x1]
      %v546 = vsel %vm493, 0, %v545
      %547 = vst [vmem:[#allocation2 + $0xd4] sm:$0x1] %v546
      %v564 = vunpack.c.l.b16 %v402
      %v565 = vunpack.c.h.b16 %v402
      %v566 = vunpack.c.l.b16 %v403
      %v567 = vunpack.c.h.b16 %v403
      %v568 = vunpack.c.l.b16 %v404
      %v569 = vunpack.c.h.b16 %v404
      %v570 = vunpack.c.l.b16 %v405
      %v571 = vunpack.c.h.b16 %v405
      %v572 = vunpack.c.l.b16 %v406
      %v573 = vunpack.c.h.b16 %v406
      %v574 = vunpack.c.l.b16 %v407
      %v575 = vunpack.c.h.b16 %v407
      %v576 = vunpack.c.l.b16 %v408
      %v577 = vunpack.c.h.b16 %v408
      %v578 = vunpack.c.l.b16 %v409
      %v579 = vunpack.c.h.b16 %v409
      %v580 = vunpack.c.l.b16 %v418
      %v581 = vunpack.c.h.b16 %v418
      %v582 = vunpack.c.l.b16 %v419
      %v583 = vunpack.c.h.b16 %v419
      %v584 = vunpack.c.l.b16 %v420
      %v585 = vunpack.c.h.b16 %v420
      %v586 = vunpack.c.l.b16 %v421
      %v587 = vunpack.c.h.b16 %v421
      %v588 = vunpack.c.l.b16 %v422
      %v589 = vunpack.c.h.b16 %v422
      %v590 = vunpack.c.l.b16 %v423
      %v591 = vunpack.c.h.b16 %v423
      %v592 = vunpack.c.l.b16 %v424
      %v593 = vunpack.c.h.b16 %v424
      %v594 = vunpack.c.l.b16 %v425
      %v595 = vunpack.c.h.b16 %v425
      %v596 = vpack.c.b16 %v564, %v564
      %v597 = vpack.c.b16 %v565, %v565
      %v598 = vpack.c.b16 %v566, %v566
      %v599 = vpack.c.b16 %v567, %v567
      %v600 = vpack.c.b16 %v568, %v568
      %v601 = vpack.c.b16 %v569, %v569
      %v602 = vpack.c.b16 %v570, %v570
      %v603 = vpack.c.b16 %v571, %v571
      %v604 = vpack.c.b16 %v572, %v572
      %v605 = vpack.c.b16 %v573, %v573
      %v606 = vpack.c.b16 %v574, %v574
      %v607 = vpack.c.b16 %v575, %v575
      %v608 = vpack.c.b16 %v576, %v576
      %v609 = vpack.c.b16 %v577, %v577
      %v610 = vpack.c.b16 %v578, %v578
      %v611 = vpack.c.b16 %v579, %v579
      %v612 = vpack.c.b16 %v580, %v580
      %v613 = vpack.c.b16 %v581, %v581
      %v614 = vpack.c.b16 %v582, %v582
      %v615 = vpack.c.b16 %v583, %v583
      %v616 = vpack.c.b16 %v584, %v584
      %v617 = vpack.c.b16 %v585, %v585
      %v618 = vpack.c.b16 %v586, %v586
      %v619 = vpack.c.b16 %v587, %v587
      %v620 = vpack.c.b16 %v588, %v588
      %v621 = vpack.c.b16 %v589, %v589
      %v622 = vpack.c.b16 %v590, %v590
      %v623 = vpack.c.b16 %v591, %v591
      %v624 = vpack.c.b16 %v592, %v592
      %v625 = vpack.c.b16 %v593, %v593
      %v626 = vpack.c.b16 %v594, %v594
      %v627 = vpack.c.b16 %v595, %v595
      %vm628 = vsmask.f32 4368
      %vm629 = vmor %vm436, %vm628
      %v631 = vshrl.u32 %v596, 16
      %v633 = vrot.slane %v631, 7
      %v634 = vshll.u32 %v596, 16
      %v636 = vor.u32 %v633, %v634
      %v637 = vrot.slane %v633, 4
      %v639 = vshrl.u32 %v597, 16
      %v641 = vrot.slane %v639, 7
      %v642 = vshll.u32 %v597, 16
      %v644 = vor.u32 %v641, %v642
      %v645 = vsel %vm629, %v637, %v644
      %v646 = vrot.slane %v641, 4
      %v648 = vshrl.u32 %v598, 16
      %v650 = vrot.slane %v648, 7
      %v651 = vshll.u32 %v598, 16
      %v653 = vor.u32 %v650, %v651
      %v654 = vrot.slane %v650, 4
      %v656 = vshrl.u32 %v599, 16
      %v658 = vrot.slane %v656, 7
      %v659 = vshll.u32 %v599, 16
      %v661 = vor.u32 %v658, %v659
      %v662 = vsel %vm629, %v654, %v661
      %v663 = vrot.slane %v658, 4
      %v665 = vshrl.u32 %v600, 16
      %v667 = vrot.slane %v665, 7
      %v668 = vshll.u32 %v600, 16
      %v670 = vor.u32 %v667, %v668
      %v671 = vrot.slane %v667, 4
      %v673 = vshrl.u32 %v601, 16
      %v675 = vrot.slane %v673, 7
      %v676 = vshll.u32 %v601, 16
      %v678 = vor.u32 %v675, %v676
      %v679 = vsel %vm629, %v671, %v678
      %v680 = vrot.slane %v675, 4
      %v682 = vshrl.u32 %v602, 16
      %v684 = vrot.slane %v682, 7
      %v685 = vshll.u32 %v602, 16
      %v687 = vor.u32 %v684, %v685
      %v688 = vrot.slane %v684, 4
      %v690 = vshrl.u32 %v603, 16
      %v692 = vrot.slane %v690, 7
      %v693 = vshll.u32 %v603, 16
      %v695 = vor.u32 %v692, %v693
      %v696 = vsel %vm629, %v688, %v695
      %v697 = vrot.slane %v692, 4
      %v699 = vshrl.u32 %v604, 16
      %v701 = vrot.slane %v699, 7
      %v702 = vshll.u32 %v604, 16
      %v704 = vor.u32 %v701, %v702
      %v705 = vrot.slane %v701, 4
      %v707 = vshrl.u32 %v605, 16
      %v709 = vrot.slane %v707, 7
      %v710 = vshll.u32 %v605, 16
      %v712 = vor.u32 %v709, %v710
      %v713 = vsel %vm629, %v705, %v712
      %v714 = vrot.slane %v709, 4
      %v716 = vshrl.u32 %v606, 16
      %v718 = vrot.slane %v716, 7
      %v719 = vshll.u32 %v606, 16
      %v721 = vor.u32 %v718, %v719
      %v722 = vrot.slane %v718, 4
      %v724 = vshrl.u32 %v607, 16
      %v726 = vrot.slane %v724, 7
      %v727 = vshll.u32 %v607, 16
      %v729 = vor.u32 %v726, %v727
      %v730 = vsel %vm629, %v722, %v729
      %v731 = vrot.slane %v726, 4
      %v733 = vshrl.u32 %v608, 16
      %v735 = vrot.slane %v733, 7
      %v736 = vshll.u32 %v608, 16
      %v738 = vor.u32 %v735, %v736
      %v739 = vrot.slane %v735, 4
      %v741 = vshrl.u32 %v609, 16
      %v743 = vrot.slane %v741, 7
      %v744 = vshll.u32 %v609, 16
      %v746 = vor.u32 %v743, %v744
      %v747 = vsel %vm629, %v739, %v746
      %v748 = vrot.slane %v743, 4
      %v750 = vshrl.u32 %v610, 16
      %v752 = vrot.slane %v750, 7
      %v753 = vshll.u32 %v610, 16
      %v755 = vor.u32 %v752, %v753
      %v756 = vrot.slane %v752, 4
      %v758 = vshrl.u32 %v611, 16
      %v760 = vrot.slane %v758, 7
      %v761 = vshll.u32 %v611, 16
      %v763 = vor.u32 %v760, %v761
      %v764 = vsel %vm629, %v756, %v763
      %v765 = vrot.slane %v760, 4
      %v767 = vshrl.u32 %v612, 16
      %v769 = vrot.slane %v767, 7
      %v770 = vshll.u32 %v612, 16
      %v772 = vor.u32 %v769, %v770
      %v773 = vrot.slane %v769, 4
      %v775 = vshrl.u32 %v613, 16
      %v777 = vrot.slane %v775, 7
      %v778 = vshll.u32 %v613, 16
      %v780 = vor.u32 %v777, %v778
      %v781 = vsel %vm629, %v773, %v780
      %v782 = vrot.slane %v777, 4
      %v784 = vshrl.u32 %v614, 16
      %v786 = vrot.slane %v784, 7
      %v787 = vshll.u32 %v614, 16
      %v789 = vor.u32 %v786, %v787
      %v790 = vrot.slane %v786, 4
      %v792 = vshrl.u32 %v615, 16
      %v794 = vrot.slane %v792, 7
      %v795 = vshll.u32 %v615, 16
      %v797 = vor.u32 %v794, %v795
      %v798 = vsel %vm629, %v790, %v797
      %v799 = vrot.slane %v794, 4
      %v801 = vshrl.u32 %v616, 16
      %v803 = vrot.slane %v801, 7
      %v804 = vshll.u32 %v616, 16
      %v806 = vor.u32 %v803, %v804
      %v807 = vrot.slane %v803, 4
      %v809 = vshrl.u32 %v617, 16
      %v811 = vrot.slane %v809, 7
      %v812 = vshll.u32 %v617, 16
      %v814 = vor.u32 %v811, %v812
      %v815 = vsel %vm629, %v807, %v814
      %v816 = vrot.slane %v811, 4
      %v818 = vshrl.u32 %v618, 16
      %v820 = vrot.slane %v818, 7
      %v821 = vshll.u32 %v618, 16
      %v823 = vor.u32 %v820, %v821
      %v824 = vrot.slane %v820, 4
      %v826 = vshrl.u32 %v619, 16
      %v828 = vrot.slane %v826, 7
      %v829 = vshll.u32 %v619, 16
      %v831 = vor.u32 %v828, %v829
      %v832 = vsel %vm629, %v824, %v831
      %v833 = vrot.slane %v828, 4
      %v835 = vshrl.u32 %v620, 16
      %v837 = vrot.slane %v835, 7
      %v838 = vshll.u32 %v620, 16
      %v840 = vor.u32 %v837, %v838
      %v841 = vrot.slane %v837, 4
      %v843 = vshrl.u32 %v621, 16
      %v845 = vrot.slane %v843, 7
      %v846 = vshll.u32 %v621, 16
      %v848 = vor.u32 %v845, %v846
      %v849 = vsel %vm629, %v841, %v848
      %v850 = vrot.slane %v845, 4
      %v852 = vshrl.u32 %v622, 16
      %v854 = vrot.slane %v852, 7
      %v855 = vshll.u32 %v622, 16
      %v857 = vor.u32 %v854, %v855
      %v858 = vrot.slane %v854, 4
      %v860 = vshrl.u32 %v623, 16
      %v862 = vrot.slane %v860, 7
      %v863 = vshll.u32 %v623, 16
      %v865 = vor.u32 %v862, %v863
      %v866 = vsel %vm629, %v858, %v865
      %v867 = vrot.slane %v862, 4
      %v869 = vshrl.u32 %v624, 16
      %v871 = vrot.slane %v869, 7
      %v872 = vshll.u32 %v624, 16
      %v874 = vor.u32 %v871, %v872
      %v875 = vrot.slane %v871, 4
      %v877 = vshrl.u32 %v625, 16
      %v879 = vrot.slane %v877, 7
      %v880 = vshll.u32 %v625, 16
      %v882 = vor.u32 %v879, %v880
      %v883 = vsel %vm629, %v875, %v882
      %v884 = vrot.slane %v879, 4
      %v886 = vshrl.u32 %v626, 16
      %v888 = vrot.slane %v886, 7
      %v889 = vshll.u32 %v626, 16
      %v891 = vor.u32 %v888, %v889
      %v892 = vrot.slane %v888, 4
      %v894 = vshrl.u32 %v627, 16
      %v896 = vrot.slane %v894, 7
      %v897 = vshll.u32 %v627, 16
      %v899 = vor.u32 %v896, %v897
      %v900 = vsel %vm629, %v892, %v899
      %v901 = vrot.slane %v896, 4
      %s950 = scalar_lea.vmem [#allocation2], 12
      %vm951 = vcmask 19456
      %vm952 = vmand %vm951, %vm492
      %v953 = vld [vmem:[%s950] sm:$0xf]
      %v954 = vsel %vm952, %v636, %v953
      %955 = vst [vmem:[%s950] sm:$0xf] %v954
      %956 = vst.msk [vmem:[%s950 + $0x4] sm:$0xf] %vm426, %v645
      %v957 = vld [vmem:[%s950 + $0x8] sm:$0x1]
      %v958 = vsel %vm437, %v646, %v957
      %959 = vst [vmem:[%s950 + $0x8] sm:$0x1] %v958
      %v960 = vld [vmem:[%s950 + $0xc] sm:$0xf]
      %v961 = vsel %vm952, %v653, %v960
      %962 = vst [vmem:[%s950 + $0xc] sm:$0xf] %v961
      %963 = vst.msk [vmem:[%s950 + $0x10] sm:$0xf] %vm426, %v662
      %v964 = vld [vmem:[%s950 + $0x14] sm:$0x1]
      %v965 = vsel %vm437, %v663, %v964
      %966 = vst [vmem:[%s950 + $0x14] sm:$0x1] %v965
      %v967 = vld [vmem:[%s950 + $0x18] sm:$0xf]
      %v968 = vsel %vm952, %v670, %v967
      %969 = vst [vmem:[%s950 + $0x18] sm:$0xf] %v968
      %970 = vst.msk [vmem:[%s950 + $0x1c] sm:$0xf] %vm426, %v679
      %v971 = vld [vmem:[%s950 + $0x20] sm:$0x1]
      %v972 = vsel %vm437, %v680, %v971
      %973 = vst [vmem:[%s950 + $0x20] sm:$0x1] %v972
      %v974 = vld [vmem:[%s950 + $0x24] sm:$0xf]
      %v975 = vsel %vm952, %v687, %v974
      %976 = vst [vmem:[%s950 + $0x24] sm:$0xf] %v975
      %977 = vst.msk [vmem:[%s950 + $0x28] sm:$0xf] %vm426, %v696
      %v978 = vld [vmem:[%s950 + $0x2c] sm:$0x1]
      %v979 = vsel %vm437, %v697, %v978
      %980 = vst [vmem:[%s950 + $0x2c] sm:$0x1] %v979
      %v981 = vld [vmem:[%s950 + $0x30] sm:$0xf]
      %v982 = vsel %vm952, %v704, %v981
      %983 = vst [vmem:[%s950 + $0x30] sm:$0xf] %v982
      %984 = vst.msk [vmem:[%s950 + $0x34] sm:$0xf] %vm426, %v713
      %v985 = vld [vmem:[%s950 + $0x38] sm:$0x1]
      %v986 = vsel %vm437, %v714, %v985
      %987 = vst [vmem:[%s950 + $0x38] sm:$0x1] %v986
      %v988 = vld [vmem:[%s950 + $0x3c] sm:$0xf]
      %v989 = vsel %vm952, %v721, %v988
      %990 = vst [vmem:[%s950 + $0x3c] sm:$0xf] %v989
      %991 = vst.msk [vmem:[%s950 + $0x40] sm:$0xf] %vm426, %v730
      %v992 = vld [vmem:[%s950 + $0x44] sm:$0x1]
      %v993 = vsel %vm437, %v731, %v992
      %994 = vst [vmem:[%s950 + $0x44] sm:$0x1] %v993
      %v995 = vld [vmem:[%s950 + $0x48] sm:$0xf]
      %v996 = vsel %vm952, %v738, %v995
      %997 = vst [vmem:[%s950 + $0x48] sm:$0xf] %v996
      %998 = vst.msk [vmem:[%s950 + $0x4c] sm:$0xf] %vm426, %v747
      %v999 = vld [vmem:[%s950 + $0x50] sm:$0x1]
      %v1000 = vsel %vm437, %v748, %v999
      %1001 = vst [vmem:[%s950 + $0x50] sm:$0x1] %v1000
      %v1002 = vld [vmem:[%s950 + $0x54] sm:$0xf]
      %v1003 = vsel %vm952, %v755, %v1002
      %1004 = vst [vmem:[%s950 + $0x54] sm:$0xf] %v1003
      %1005 = vst.msk [vmem:[%s950 + $0x58] sm:$0xf] %vm426, %v764
      %v1006 = vld [vmem:[%s950 + $0x5c] sm:$0x1]
      %v1007 = vsel %vm437, %v765, %v1006
      %1008 = vst [vmem:[%s950 + $0x5c] sm:$0x1] %v1007
      %v1009 = vld [vmem:[%s950 + $0x60] sm:$0xf]
      %v1010 = vsel %vm952, %v772, %v1009
      %1011 = vst [vmem:[%s950 + $0x60] sm:$0xf] %v1010
      %1012 = vst.msk [vmem:[%s950 + $0x64] sm:$0xf] %vm426, %v781
      %v1013 = vld [vmem:[%s950 + $0x68] sm:$0x1]
      %v1014 = vsel %vm437, %v782, %v1013
      %1015 = vst [vmem:[%s950 + $0x68] sm:$0x1] %v1014
      %v1016 = vld [vmem:[%s950 + $0x6c] sm:$0xf]
      %v1017 = vsel %vm952, %v789, %v1016
      %1018 = vst [vmem:[%s950 + $0x6c] sm:$0xf] %v1017
      %1019 = vst.msk [vmem:[%s950 + $0x70] sm:$0xf] %vm426, %v798
      %v1020 = vld [vmem:[%s950 + $0x74] sm:$0x1]
      %v1021 = vsel %vm437, %v799, %v1020
      %1022 = vst [vmem:[%s950 + $0x74] sm:$0x1] %v1021
      %v1023 = vld [vmem:[%s950 + $0x78] sm:$0xf]
      %v1024 = vsel %vm952, %v806, %v1023
      %1025 = vst [vmem:[%s950 + $0x78] sm:$0xf] %v1024
      %1026 = vst.msk [vmem:[%s950 + $0x7c] sm:$0xf] %vm426, %v815
      %v1027 = vld [vmem:[%s950 + $0x80] sm:$0x1]
      %v1028 = vsel %vm437, %v816, %v1027
      %1029 = vst [vmem:[%s950 + $0x80] sm:$0x1] %v1028
      %v1030 = vld [vmem:[%s950 + $0x84] sm:$0xf]
      %v1031 = vsel %vm952, %v823, %v1030
      %1032 = vst [vmem:[%s950 + $0x84] sm:$0xf] %v1031
      %1033 = vst.msk [vmem:[%s950 + $0x88] sm:$0xf] %vm426, %v832
      %v1034 = vld [vmem:[%s950 + $0x8c] sm:$0x1]
      %v1035 = vsel %vm437, %v833, %v1034
      %1036 = vst [vmem:[%s950 + $0x8c] sm:$0x1] %v1035
      %v1037 = vld [vmem:[%s950 + $0x90] sm:$0xf]
      %v1038 = vsel %vm952, %v840, %v1037
      %1039 = vst [vmem:[%s950 + $0x90] sm:$0xf] %v1038
      %1040 = vst.msk [vmem:[%s950 + $0x94] sm:$0xf] %vm426, %v849
      %v1041 = vld [vmem:[%s950 + $0x98] sm:$0x1]
      %v1042 = vsel %vm437, %v850, %v1041
      %1043 = vst [vmem:[%s950 + $0x98] sm:$0x1] %v1042
      %v1044 = vld [vmem:[%s950 + $0x9c] sm:$0xf]
      %v1045 = vsel %vm952, %v857, %v1044
      %1046 = vst [vmem:[%s950 + $0x9c] sm:$0xf] %v1045
      %1047 = vst.msk [vmem:[%s950 + $0xa0] sm:$0xf] %vm426, %v866
      %v1048 = vld [vmem:[%s950 + $0xa4] sm:$0x1]
      %v1049 = vsel %vm437, %v867, %v1048
      %1050 = vst [vmem:[%s950 + $0xa4] sm:$0x1] %v1049
      %v1051 = vld [vmem:[%s950 + $0xa8] sm:$0xf]
      %v1052 = vsel %vm952, %v874, %v1051
      %1053 = vst [vmem:[%s950 + $0xa8] sm:$0xf] %v1052
      %1054 = vst.msk [vmem:[%s950 + $0xac] sm:$0xf] %vm426, %v883
      %v1055 = vld [vmem:[%s950 + $0xb0] sm:$0x1]
      %v1056 = vsel %vm437, %v884, %v1055
      %1057 = vst [vmem:[%s950 + $0xb0] sm:$0x1] %v1056
      %v1058 = vld [vmem:[%s950 + $0xb4] sm:$0xf]
      %v1059 = vsel %vm952, %v891, %v1058
      %1060 = vst [vmem:[%s950 + $0xb4] sm:$0xf] %v1059
      %1061 = vst.msk [vmem:[%s950 + $0xb8] sm:$0xf] %vm426, %v900
      %v1062 = vld [vmem:[%s950 + $0xbc] sm:$0x1]
      %v1063 = vsel %vm437, %v901, %v1062
      %1064 = vst [vmem:[%s950 + $0xbc] sm:$0x1] %v1063
      %v1065 = vld [vmem:[#allocation2] sm:$0xf]
      %v1066 = vld [vmem:[#allocation2 + $0x4] sm:$0xf]
      %v1067 = vld [vmem:[#allocation2 + $0x8] sm:$0x1]
      %v1068 = vld [vmem:[#allocation2 + $0xc] sm:$0xf]
      %v1069 = vld [vmem:[#allocation2 + $0x10] sm:$0xf]
      %v1070 = vld [vmem:[#allocation2 + $0x14] sm:$0x1]
      %v1071 = vld [vmem:[#allocation2 + $0x18] sm:$0xf]
      %v1072 = vld [vmem:[#allocation2 + $0x1c] sm:$0xf]
      %v1073 = vld [vmem:[#allocation2 + $0x20] sm:$0x1]
      %v1074 = vld [vmem:[#allocation2 + $0x24] sm:$0xf]
      %v1075 = vld [vmem:[#allocation2 + $0x28] sm:$0xf]
      %v1076 = vld [vmem:[#allocation2 + $0x2c] sm:$0x1]
      %v1077 = vld [vmem:[#allocation2 + $0x30] sm:$0xf]
      %v1078 = vld [vmem:[#allocation2 + $0x34] sm:$0xf]
      %v1079 = vld [vmem:[#allocation2 + $0x38] sm:$0x1]
      %v1080 = vld [vmem:[#allocation2 + $0x3c] sm:$0xf]
      %v1081 = vld [vmem:[#allocation2 + $0x40] sm:$0xf]
      %v1082 = vld [vmem:[#allocation2 + $0x44] sm:$0x1]
      %v1083 = vld [vmem:[#allocation2 + $0x48] sm:$0xf]
      %v1084 = vld [vmem:[#allocation2 + $0x4c] sm:$0xf]
      %v1085 = vld [vmem:[#allocation2 + $0x50] sm:$0x1]
      %v1086 = vld [vmem:[#allocation2 + $0x54] sm:$0xf]
      %v1087 = vld [vmem:[#allocation2 + $0x58] sm:$0xf]
      %v1088 = vld [vmem:[#allocation2 + $0x5c] sm:$0x1]
      %v1089 = vld [vmem:[#allocation2 + $0x60] sm:$0xf]
      %v1090 = vld [vmem:[#allocation2 + $0x64] sm:$0xf]
      %v1091 = vld [vmem:[#allocation2 + $0x68] sm:$0x1]
      %v1092 = vld [vmem:[#allocation2 + $0x6c] sm:$0xf]
      %v1093 = vld [vmem:[#allocation2 + $0x70] sm:$0xf]
      %v1094 = vld [vmem:[#allocation2 + $0x74] sm:$0x1]
      %v1095 = vld [vmem:[#allocation2 + $0x78] sm:$0xf]
      %v1096 = vld [vmem:[#allocation2 + $0x7c] sm:$0xf]
      %v1097 = vld [vmem:[#allocation2 + $0x80] sm:$0x1]
      %v1098 = vld [vmem:[#allocation2 + $0x84] sm:$0xf]
      %v1099 = vld [vmem:[#allocation2 + $0x88] sm:$0xf]
      %v1100 = vld [vmem:[#allocation2 + $0x8c] sm:$0x1]
      %v1101 = vld [vmem:[#allocation2 + $0x90] sm:$0xf]
      %v1102 = vld [vmem:[#allocation2 + $0x94] sm:$0xf]
      %v1103 = vld [vmem:[#allocation2 + $0x98] sm:$0x1]
      %v1104 = vld [vmem:[#allocation2 + $0x9c] sm:$0xf]
      %v1105 = vld [vmem:[#allocation2 + $0xa0] sm:$0xf]
      %v1106 = vld [vmem:[#allocation2 + $0xa4] sm:$0x1]
      %v1107 = vld [vmem:[#allocation2 + $0xa8] sm:$0xf]
      %v1108 = vld [vmem:[#allocation2 + $0xac] sm:$0xf]
      %v1109 = vld [vmem:[#allocation2 + $0xb0] sm:$0x1]
      %v1110 = vld [vmem:[#allocation2 + $0xb4] sm:$0xf]
      %v1111 = vld [vmem:[#allocation2 + $0xb8] sm:$0xf]
      %v1112 = vld [vmem:[#allocation2 + $0xbc] sm:$0x1]
      %v1113 = vld [vmem:[#allocation2 + $0xc0] sm:$0xf]
      %v1114 = vld [vmem:[#allocation2 + $0xc4] sm:$0xf]
      %v1115 = vld [vmem:[#allocation2 + $0xc8] sm:$0x1]
      %v1116 = vld [vmem:[#allocation2 + $0xcc] sm:$0xf]
      %v1117 = vld [vmem:[#allocation2 + $0xd0] sm:$0xf]
      %v1118 = vld [vmem:[#allocation2 + $0xd4] sm:$0x1]
      %vm1119 = vsmask.f32 3328
      %vm1120 = vsmask.f32 7440
      %vm1121 = vmor %vm1119, %vm1120
      %v1123 = vshrl.u32 %v1065, 16
      %v1125 = vrot.slane %v1123, 4
      %v1126 = vshll.u32 %v1065, 16
      %v1128 = vrot.slane %v1126, 5
      %v1129 = vor.u32 %v1125, %v1128
      %v1130 = vrot.slane %v1129, 4
      %v1132 = vshll.u32 %v1066, 16
      %v1134 = vrot.slane %v1132, 5
      %v1135 = vsel %vm1121, %v1130, %v1134
      %v1136 = vshrl.u32 %v1066, 16
      %v1138 = vrot.slane %v1136, 4
      %v1139 = vor.u32 %v1138, %v1134
      %v1140 = vrot.slane %v1139, 4
      %v1142 = vshll.u32 %v1067, 16
      %v1144 = vrot.slane %v1142, 5
      %v1145 = vsel %vm1121, %v1140, %v1144
      %v1147 = vshrl.u32 %v1068, 16
      %v1149 = vrot.slane %v1147, 4
      %v1150 = vshll.u32 %v1068, 16
      %v1152 = vrot.slane %v1150, 5
      %v1153 = vor.u32 %v1149, %v1152
      %v1154 = vrot.slane %v1153, 4
      %v1156 = vshll.u32 %v1069, 16
      %v1158 = vrot.slane %v1156, 5
      %v1159 = vsel %vm1121, %v1154, %v1158
      %v1160 = vshrl.u32 %v1069, 16
      %v1162 = vrot.slane %v1160, 4
      %v1163 = vor.u32 %v1162, %v1158
      %v1164 = vrot.slane %v1163, 4
      %v1166 = vshll.u32 %v1070, 16
      %v1168 = vrot.slane %v1166, 5
      %v1169 = vsel %vm1121, %v1164, %v1168
      %v1171 = vshrl.u32 %v1071, 16
      %v1173 = vrot.slane %v1171, 4
      %v1174 = vshll.u32 %v1071, 16
      %v1176 = vrot.slane %v1174, 5
      %v1177 = vor.u32 %v1173, %v1176
      %v1178 = vrot.slane %v1177, 4
      %v1180 = vshll.u32 %v1072, 16
      %v1182 = vrot.slane %v1180, 5
      %v1183 = vsel %vm1121, %v1178, %v1182
      %v1184 = vshrl.u32 %v1072, 16
      %v1186 = vrot.slane %v1184, 4
      %v1187 = vor.u32 %v1186, %v1182
      %v1188 = vrot.slane %v1187, 4
      %v1190 = vshll.u32 %v1073, 16
      %v1192 = vrot.slane %v1190, 5
      %v1193 = vsel %vm1121, %v1188, %v1192
      %v1195 = vshrl.u32 %v1074, 16
      %v1197 = vrot.slane %v1195, 4
      %v1198 = vshll.u32 %v1074, 16
      %v1200 = vrot.slane %v1198, 5
      %v1201 = vor.u32 %v1197, %v1200
      %v1202 = vrot.slane %v1201, 4
      %v1204 = vshll.u32 %v1075, 16
      %v1206 = vrot.slane %v1204, 5
      %v1207 = vsel %vm1121, %v1202, %v1206
      %v1208 = vshrl.u32 %v1075, 16
      %v1210 = vrot.slane %v1208, 4
      %v1211 = vor.u32 %v1210, %v1206
      %v1212 = vrot.slane %v1211, 4
      %v1214 = vshll.u32 %v1076, 16
      %v1216 = vrot.slane %v1214, 5
      %v1217 = vsel %vm1121, %v1212, %v1216
      %v1219 = vshrl.u32 %v1077, 16
      %v1221 = vrot.slane %v1219, 4
      %v1222 = vshll.u32 %v1077, 16
      %v1224 = vrot.slane %v1222, 5
      %v1225 = vor.u32 %v1221, %v1224
      %v1226 = vrot.slane %v1225, 4
      %v1228 = vshll.u32 %v1078, 16
      %v1230 = vrot.slane %v1228, 5
      %v1231 = vsel %vm1121, %v1226, %v1230
      %v1232 = vshrl.u32 %v1078, 16
      %v1234 = vrot.slane %v1232, 4
      %v1235 = vor.u32 %v1234, %v1230
      %v1236 = vrot.slane %v1235, 4
      %v1238 = vshll.u32 %v1079, 16
      %v1240 = vrot.slane %v1238, 5
      %v1241 = vsel %vm1121, %v1236, %v1240
      %v1243 = vshrl.u32 %v1080, 16
      %v1245 = vrot.slane %v1243, 4
      %v1246 = vshll.u32 %v1080, 16
      %v1248 = vrot.slane %v1246, 5
      %v1249 = vor.u32 %v1245, %v1248
      %v1250 = vrot.slane %v1249, 4
      %v1252 = vshll.u32 %v1081, 16
      %v1254 = vrot.slane %v1252, 5
      %v1255 = vsel %vm1121, %v1250, %v1254
      %v1256 = vshrl.u32 %v1081, 16
      %v1258 = vrot.slane %v1256, 4
      %v1259 = vor.u32 %v1258, %v1254
      %v1260 = vrot.slane %v1259, 4
      %v1262 = vshll.u32 %v1082, 16
      %v1264 = vrot.slane %v1262, 5
      %v1265 = vsel %vm1121, %v1260, %v1264
      %v1267 = vshrl.u32 %v1083, 16
      %v1269 = vrot.slane %v1267, 4
      %v1270 = vshll.u32 %v1083, 16
      %v1272 = vrot.slane %v1270, 5
      %v1273 = vor.u32 %v1269, %v1272
      %v1274 = vrot.slane %v1273, 4
      %v1276 = vshll.u32 %v1084, 16
      %v1278 = vrot.slane %v1276, 5
      %v1279 = vsel %vm1121, %v1274, %v1278
      %v1280 = vshrl.u32 %v1084, 16
      %v1282 = vrot.slane %v1280, 4
      %v1283 = vor.u32 %v1282, %v1278
      %v1284 = vrot.slane %v1283, 4
      %v1286 = vshll.u32 %v1085, 16
      %v1288 = vrot.slane %v1286, 5
      %v1289 = vsel %vm1121, %v1284, %v1288
      %v1291 = vshrl.u32 %v1086, 16
      %v1293 = vrot.slane %v1291, 4
      %v1294 = vshll.u32 %v1086, 16
      %v1296 = vrot.slane %v1294, 5
      %v1297 = vor.u32 %v1293, %v1296
      %v1298 = vrot.slane %v1297, 4
      %v1300 = vshll.u32 %v1087, 16
      %v1302 = vrot.slane %v1300, 5
      %v1303 = vsel %vm1121, %v1298, %v1302
      %v1304 = vshrl.u32 %v1087, 16
      %v1306 = vrot.slane %v1304, 4
      %v1307 = vor.u32 %v1306, %v1302
      %v1308 = vrot.slane %v1307, 4
      %v1310 = vshll.u32 %v1088, 16
      %v1312 = vrot.slane %v1310, 5
      %v1313 = vsel %vm1121, %v1308, %v1312
      %v1315 = vshrl.u32 %v1089, 16
      %v1317 = vrot.slane %v1315, 4
      %v1318 = vshll.u32 %v1089, 16
      %v1320 = vrot.slane %v1318, 5
      %v1321 = vor.u32 %v1317, %v1320
      %v1322 = vrot.slane %v1321, 4
      %v1324 = vshll.u32 %v1090, 16
      %v1326 = vrot.slane %v1324, 5
      %v1327 = vsel %vm1121, %v1322, %v1326
      %v1328 = vshrl.u32 %v1090, 16
      %v1330 = vrot.slane %v1328, 4
      %v1331 = vor.u32 %v1330, %v1326
      %v1332 = vrot.slane %v1331, 4
      %v1334 = vshll.u32 %v1091, 16
      %v1336 = vrot.slane %v1334, 5
      %v1337 = vsel %vm1121, %v1332, %v1336
      %v1339 = vshrl.u32 %v1092, 16
      %v1341 = vrot.slane %v1339, 4
      %v1342 = vshll.u32 %v1092, 16
      %v1344 = vrot.slane %v1342, 5
      %v1345 = vor.u32 %v1341, %v1344
      %v1346 = vrot.slane %v1345, 4
      %v1348 = vshll.u32 %v1093, 16
      %v1350 = vrot.slane %v1348, 5
      %v1351 = vsel %vm1121, %v1346, %v1350
      %v1352 = vshrl.u32 %v1093, 16
      %v1354 = vrot.slane %v1352, 4
      %v1355 = vor.u32 %v1354, %v1350
      %v1356 = vrot.slane %v1355, 4
      %v1358 = vshll.u32 %v1094, 16
      %v1360 = vrot.slane %v1358, 5
      %v1361 = vsel %vm1121, %v1356, %v1360
      %v1363 = vshrl.u32 %v1095, 16
      %v1365 = vrot.slane %v1363, 4
      %v1366 = vshll.u32 %v1095, 16
      %v1368 = vrot.slane %v1366, 5
      %v1369 = vor.u32 %v1365, %v1368
      %v1370 = vrot.slane %v1369, 4
      %v1372 = vshll.u32 %v1096, 16
      %v1374 = vrot.slane %v1372, 5
      %v1375 = vsel %vm1121, %v1370, %v1374
      %v1376 = vshrl.u32 %v1096, 16
      %v1378 = vrot.slane %v1376, 4
      %v1379 = vor.u32 %v1378, %v1374
      %v1380 = vrot.slane %v1379, 4
      %v1382 = vshll.u32 %v1097, 16
      %v1384 = vrot.slane %v1382, 5
      %v1385 = vsel %vm1121, %v1380, %v1384
      %v1387 = vshrl.u32 %v1098, 16
      %v1389 = vrot.slane %v1387, 4
      %v1390 = vshll.u32 %v1098, 16
      %v1392 = vrot.slane %v1390, 5
      %v1393 = vor.u32 %v1389, %v1392
      %v1394 = vrot.slane %v1393, 4
      %v1396 = vshll.u32 %v1099, 16
      %v1398 = vrot.slane %v1396, 5
      %v1399 = vsel %vm1121, %v1394, %v1398
      %v1400 = vshrl.u32 %v1099, 16
      %v1402 = vrot.slane %v1400, 4
      %v1403 = vor.u32 %v1402, %v1398
      %v1404 = vrot.slane %v1403, 4
      %v1406 = vshll.u32 %v1100, 16
      %v1408 = vrot.slane %v1406, 5
      %v1409 = vsel %vm1121, %v1404, %v1408
      %v1411 = vshrl.u32 %v1101, 16
      %v1413 = vrot.slane %v1411, 4
      %v1414 = vshll.u32 %v1101, 16
      %v1416 = vrot.slane %v1414, 5
      %v1417 = vor.u32 %v1413, %v1416
      %v1418 = vrot.slane %v1417, 4
      %v1420 = vshll.u32 %v1102, 16
      %v1422 = vrot.slane %v1420, 5
      %v1423 = vsel %vm1121, %v1418, %v1422
      %v1424 = vshrl.u32 %v1102, 16
      %v1426 = vrot.slane %v1424, 4
      %v1427 = vor.u32 %v1426, %v1422
      %v1428 = vrot.slane %v1427, 4
      %v1430 = vshll.u32 %v1103, 16
      %v1432 = vrot.slane %v1430, 5
      %v1433 = vsel %vm1121, %v1428, %v1432
      %v1435 = vshrl.u32 %v1104, 16
      %v1437 = vrot.slane %v1435, 4
      %v1438 = vshll.u32 %v1104, 16
      %v1440 = vrot.slane %v1438, 5
      %v1441 = vor.u32 %v1437, %v1440
      %v1442 = vrot.slane %v1441, 4
      %v1444 = vshll.u32 %v1105, 16
      %v1446 = vrot.slane %v1444, 5
      %v1447 = vsel %vm1121, %v1442, %v1446
      %v1448 = vshrl.u32 %v1105, 16
      %v1450 = vrot.slane %v1448, 4
      %v1451 = vor.u32 %v1450, %v1446
      %v1452 = vrot.slane %v1451, 4
      %v1454 = vshll.u32 %v1106, 16
      %v1456 = vrot.slane %v1454, 5
      %v1457 = vsel %vm1121, %v1452, %v1456
      %v1459 = vshrl.u32 %v1107, 16
      %v1461 = vrot.slane %v1459, 4
      %v1462 = vshll.u32 %v1107, 16
      %v1464 = vrot.slane %v1462, 5
      %v1465 = vor.u32 %v1461, %v1464
      %v1466 = vrot.slane %v1465, 4
      %v1468 = vshll.u32 %v1108, 16
      %v1470 = vrot.slane %v1468, 5
      %v1471 = vsel %vm1121, %v1466, %v1470
      %v1472 = vshrl.u32 %v1108, 16
      %v1474 = vrot.slane %v1472, 4
      %v1475 = vor.u32 %v1474, %v1470
      %v1476 = vrot.slane %v1475, 4
      %v1478 = vshll.u32 %v1109, 16
      %v1480 = vrot.slane %v1478, 5
      %v1481 = vsel %vm1121, %v1476, %v1480
      %v1483 = vshrl.u32 %v1110, 16
      %v1485 = vrot.slane %v1483, 4
      %v1486 = vshll.u32 %v1110, 16
      %v1488 = vrot.slane %v1486, 5
      %v1489 = vor.u32 %v1485, %v1488
      %v1490 = vrot.slane %v1489, 4
      %v1492 = vshll.u32 %v1111, 16
      %v1494 = vrot.slane %v1492, 5
      %v1495 = vsel %vm1121, %v1490, %v1494
      %v1496 = vshrl.u32 %v1111, 16
      %v1498 = vrot.slane %v1496, 4
      %v1499 = vor.u32 %v1498, %v1494
      %v1500 = vrot.slane %v1499, 4
      %v1502 = vshll.u32 %v1112, 16
      %v1504 = vrot.slane %v1502, 5
      %v1505 = vsel %vm1121, %v1500, %v1504
      %vm1554 = vcmask 1042432
      %vm1555 = vcmask 1046532
      %vm1556 = vmor %vm1554, %vm1555
      %v1557 = vrot.slane %v1065, 5
      %v1558 = vrot.slane %v1557, 4
      %v1559 = vrot.slane %v1066, 5
      %v1560 = vsel %vm1556, %v1558, %v1559
      %v1561 = vrot.slane %v1559, 4
      %v1562 = vrot.slane %v1067, 5
      %v1563 = vsel %vm1556, %v1561, %v1562
      %v1564 = vrot.slane %v1068, 5
      %v1565 = vrot.slane %v1564, 4
      %v1566 = vrot.slane %v1069, 5
      %v1567 = vsel %vm1556, %v1565, %v1566
      %v1568 = vrot.slane %v1566, 4
      %v1569 = vrot.slane %v1070, 5
      %v1570 = vsel %vm1556, %v1568, %v1569
      %v1571 = vrot.slane %v1071, 5
      %v1572 = vrot.slane %v1571, 4
      %v1573 = vrot.slane %v1072, 5
      %v1574 = vsel %vm1556, %v1572, %v1573
      %v1575 = vrot.slane %v1573, 4
      %v1576 = vrot.slane %v1073, 5
      %v1577 = vsel %vm1556, %v1575, %v1576
      %v1578 = vrot.slane %v1074, 5
      %v1579 = vrot.slane %v1578, 4
      %v1580 = vrot.slane %v1075, 5
      %v1581 = vsel %vm1556, %v1579, %v1580
      %v1582 = vrot.slane %v1580, 4
      %v1583 = vrot.slane %v1076, 5
      %v1584 = vsel %vm1556, %v1582, %v1583
      %v1585 = vrot.slane %v1077, 5
      %v1586 = vrot.slane %v1585, 4
      %v1587 = vrot.slane %v1078, 5
      %v1588 = vsel %vm1556, %v1586, %v1587
      %v1589 = vrot.slane %v1587, 4
      %v1590 = vrot.slane %v1079, 5
      %v1591 = vsel %vm1556, %v1589, %v1590
      %v1592 = vrot.slane %v1080, 5
      %v1593 = vrot.slane %v1592, 4
      %v1594 = vrot.slane %v1081, 5
      %v1595 = vsel %vm1556, %v1593, %v1594
      %v1596 = vrot.slane %v1594, 4
      %v1597 = vrot.slane %v1082, 5
      %v1598 = vsel %vm1556, %v1596, %v1597
      %v1599 = vrot.slane %v1083, 5
      %v1600 = vrot.slane %v1599, 4
      %v1601 = vrot.slane %v1084, 5
      %v1602 = vsel %vm1556, %v1600, %v1601
      %v1603 = vrot.slane %v1601, 4
      %v1604 = vrot.slane %v1085, 5
      %v1605 = vsel %vm1556, %v1603, %v1604
      %v1606 = vrot.slane %v1086, 5
      %v1607 = vrot.slane %v1606, 4
      %v1608 = vrot.slane %v1087, 5
      %v1609 = vsel %vm1556, %v1607, %v1608
      %v1610 = vrot.slane %v1608, 4
      %v1611 = vrot.slane %v1088, 5
      %v1612 = vsel %vm1556, %v1610, %v1611
      %v1613 = vrot.slane %v1089, 5
      %v1614 = vrot.slane %v1613, 4
      %v1615 = vrot.slane %v1090, 5
      %v1616 = vsel %vm1556, %v1614, %v1615
      %v1617 = vrot.slane %v1615, 4
      %v1618 = vrot.slane %v1091, 5
      %v1619 = vsel %vm1556, %v1617, %v1618
      %v1620 = vrot.slane %v1092, 5
      %v1621 = vrot.slane %v1620, 4
      %v1622 = vrot.slane %v1093, 5
      %v1623 = vsel %vm1556, %v1621, %v1622
      %v1624 = vrot.slane %v1622, 4
      %v1625 = vrot.slane %v1094, 5
      %v1626 = vsel %vm1556, %v1624, %v1625
      %v1627 = vrot.slane %v1095, 5
      %v1628 = vrot.slane %v1627, 4
      %v1629 = vrot.slane %v1096, 5
      %v1630 = vsel %vm1556, %v1628, %v1629
      %v1631 = vrot.slane %v1629, 4
      %v1632 = vrot.slane %v1097, 5
      %v1633 = vsel %vm1556, %v1631, %v1632
      %v1634 = vrot.slane %v1098, 5
      %v1635 = vrot.slane %v1634, 4
      %v1636 = vrot.slane %v1099, 5
      %v1637 = vsel %vm1556, %v1635, %v1636
      %v1638 = vrot.slane %v1636, 4
      %v1639 = vrot.slane %v1100, 5
      %v1640 = vsel %vm1556, %v1638, %v1639
      %v1641 = vrot.slane %v1101, 5
      %v1642 = vrot.slane %v1641, 4
      %v1643 = vrot.slane %v1102, 5
      %v1644 = vsel %vm1556, %v1642, %v1643
      %v1645 = vrot.slane %v1643, 4
      %v1646 = vrot.slane %v1103, 5
      %v1647 = vsel %vm1556, %v1645, %v1646
      %v1648 = vrot.slane %v1104, 5
      %v1649 = vrot.slane %v1648, 4
      %v1650 = vrot.slane %v1105, 5
      %v1651 = vsel %vm1556, %v1649, %v1650
      %v1652 = vrot.slane %v1650, 4
      %v1653 = vrot.slane %v1106, 5
      %v1654 = vsel %vm1556, %v1652, %v1653
      %v1655 = vrot.slane %v1107, 5
      %v1656 = vrot.slane %v1655, 4
      %v1657 = vrot.slane %v1108, 5
      %v1658 = vsel %vm1556, %v1656, %v1657
      %v1659 = vrot.slane %v1657, 4
      %v1660 = vrot.slane %v1109, 5
      %v1661 = vsel %vm1556, %v1659, %v1660
      %v1662 = vrot.slane %v1110, 5
      %v1663 = vrot.slane %v1662, 4
      %v1664 = vrot.slane %v1111, 5
      %v1665 = vsel %vm1556, %v1663, %v1664
      %v1666 = vrot.slane %v1664, 4
      %v1667 = vrot.slane %v1112, 5
      %v1668 = vsel %vm1556, %v1666, %v1667
      %v1670 = vshrl.u32 %v1113, 16
      %v1672 = vrot.slane %v1670, 4
      %v1673 = vshll.u32 %v1113, 16
      %v1675 = vrot.slane %v1673, 5
      %v1676 = vor.u32 %v1672, %v1675
      %v1677 = vrot.slane %v1676, 4
      %v1679 = vshll.u32 %v1114, 16
      %v1681 = vrot.slane %v1679, 5
      %v1682 = vsel %vm1121, %v1677, %v1681
      %v1683 = vshrl.u32 %v1114, 16
      %v1685 = vrot.slane %v1683, 4
      %v1686 = vor.u32 %v1685, %v1681
      %v1687 = vrot.slane %v1686, 4
      %v1689 = vshll.u32 %v1115, 16
      %v1691 = vrot.slane %v1689, 5
      %v1692 = vsel %vm1121, %v1687, %v1691
      %v1696 = vrot.slane %v1113, 5
      %v1697 = vrot.slane %v1696, 4
      %v1698 = vrot.slane %v1114, 5
      %v1699 = vsel %vm1556, %v1697, %v1698
      %v1700 = vrot.slane %v1698, 4
      %v1701 = vrot.slane %v1115, 5
      %v1702 = vsel %vm1556, %v1700, %v1701
      %v1704 = vshrl.u32 %v1116, 16
      %v1706 = vrot.slane %v1704, 4
      %v1707 = vshll.u32 %v1116, 16
      %v1709 = vrot.slane %v1707, 5
      %v1710 = vor.u32 %v1706, %v1709
      %v1711 = vrot.slane %v1710, 4
      %v1713 = vshll.u32 %v1117, 16
      %v1715 = vrot.slane %v1713, 5
      %v1716 = vsel %vm1121, %v1711, %v1715
      %v1717 = vshrl.u32 %v1117, 16
      %v1719 = vrot.slane %v1717, 4
      %v1720 = vor.u32 %v1719, %v1715
      %v1721 = vrot.slane %v1720, 4
      %v1723 = vshll.u32 %v1118, 16
      %v1725 = vrot.slane %v1723, 5
      %v1726 = vsel %vm1121, %v1721, %v1725
      %v1730 = vrot.slane %v1116, 5
      %v1731 = vrot.slane %v1730, 4
      %v1732 = vrot.slane %v1117, 5
      %v1733 = vsel %vm1556, %v1731, %v1732
      %v1734 = vrot.slane %v1732, 4
      %v1735 = vrot.slane %v1118, 5
      %v1736 = vsel %vm1556, %v1734, %v1735
      %v1737 = vunpack.c.l.b16 %v1065
      %v1738 = vunpack.c.l.b16 %v1066
      %v1739 = vunpack.c.l.b16 %v1068
      %v1740 = vunpack.c.l.b16 %v1069
      %v1741 = vunpack.c.l.b16 %v1071
      %v1742 = vunpack.c.l.b16 %v1072
      %v1743 = vunpack.c.l.b16 %v1074
      %v1744 = vunpack.c.l.b16 %v1075
      %v1745 = vunpack.c.l.b16 %v1077
      %v1746 = vunpack.c.l.b16 %v1078
      %v1747 = vunpack.c.l.b16 %v1080
      %v1748 = vunpack.c.l.b16 %v1081
      %v1749 = vunpack.c.l.b16 %v1083
      %v1750 = vunpack.c.l.b16 %v1084
      %v1751 = vunpack.c.l.b16 %v1086
      %v1752 = vunpack.c.l.b16 %v1087
      %v1753 = vunpack.c.l.b16 %v1089
      %v1754 = vunpack.c.l.b16 %v1090
      %v1755 = vunpack.c.l.b16 %v1092
      %v1756 = vunpack.c.l.b16 %v1093
      %v1757 = vunpack.c.l.b16 %v1095
      %v1758 = vunpack.c.l.b16 %v1096
      %v1759 = vunpack.c.l.b16 %v1098
      %v1760 = vunpack.c.l.b16 %v1099
      %v1761 = vunpack.c.l.b16 %v1101
      %v1762 = vunpack.c.l.b16 %v1102
      %v1763 = vunpack.c.l.b16 %v1104
      %v1764 = vunpack.c.l.b16 %v1105
      %v1765 = vunpack.c.l.b16 %v1107
      %v1766 = vunpack.c.l.b16 %v1108
      %v1767 = vunpack.c.l.b16 %v1110
      %v1768 = vunpack.c.l.b16 %v1111
      %v1769 = vpack.c.b16 %v1738, %v1737
      %v1770 = vpack.c.b16 %v1740, %v1739
      %v1771 = vpack.c.b16 %v1742, %v1741
      %v1772 = vpack.c.b16 %v1744, %v1743
      %v1773 = vpack.c.b16 %v1746, %v1745
      %v1774 = vpack.c.b16 %v1748, %v1747
      %v1775 = vpack.c.b16 %v1750, %v1749
      %v1776 = vpack.c.b16 %v1752, %v1751
      %v1777 = vpack.c.b16 %v1754, %v1753
      %v1778 = vpack.c.b16 %v1756, %v1755
      %v1779 = vpack.c.b16 %v1758, %v1757
      %v1780 = vpack.c.b16 %v1760, %v1759
      %v1781 = vpack.c.b16 %v1762, %v1761
      %v1782 = vpack.c.b16 %v1764, %v1763
      %v1783 = vpack.c.b16 %v1766, %v1765
      %v1784 = vpack.c.b16 %v1768, %v1767
      %v1785 = vunpack.c.l.b16 %v1135
      %v1786 = vunpack.c.l.b16 %v1145
      %v1787 = vunpack.c.l.b16 %v1159
      %v1788 = vunpack.c.l.b16 %v1169
      %v1789 = vunpack.c.l.b16 %v1183
      %v1790 = vunpack.c.l.b16 %v1193
      %v1791 = vunpack.c.l.b16 %v1207
      %v1792 = vunpack.c.l.b16 %v1217
      %v1793 = vunpack.c.l.b16 %v1231
      %v1794 = vunpack.c.l.b16 %v1241
      %v1795 = vunpack.c.l.b16 %v1255
      %v1796 = vunpack.c.l.b16 %v1265
      %v1797 = vunpack.c.l.b16 %v1279
      %v1798 = vunpack.c.l.b16 %v1289
      %v1799 = vunpack.c.l.b16 %v1303
      %v1800 = vunpack.c.l.b16 %v1313
      %v1801 = vunpack.c.l.b16 %v1327
      %v1802 = vunpack.c.l.b16 %v1337
      %v1803 = vunpack.c.l.b16 %v1351
      %v1804 = vunpack.c.l.b16 %v1361
      %v1805 = vunpack.c.l.b16 %v1375
      %v1806 = vunpack.c.l.b16 %v1385
      %v1807 = vunpack.c.l.b16 %v1399
      %v1808 = vunpack.c.l.b16 %v1409
      %v1809 = vunpack.c.l.b16 %v1423
      %v1810 = vunpack.c.l.b16 %v1433
      %v1811 = vunpack.c.l.b16 %v1447
      %v1812 = vunpack.c.l.b16 %v1457
      %v1813 = vunpack.c.l.b16 %v1471
      %v1814 = vunpack.c.l.b16 %v1481
      %v1815 = vunpack.c.l.b16 %v1495
      %v1816 = vunpack.c.l.b16 %v1505
      %v1817 = vpack.c.b16 %v1786, %v1785
      %v1818 = vpack.c.b16 %v1788, %v1787
      %v1819 = vpack.c.b16 %v1790, %v1789
      %v1820 = vpack.c.b16 %v1792, %v1791
      %v1821 = vpack.c.b16 %v1794, %v1793
      %v1822 = vpack.c.b16 %v1796, %v1795
      %v1823 = vpack.c.b16 %v1798, %v1797
      %v1824 = vpack.c.b16 %v1800, %v1799
      %v1825 = vpack.c.b16 %v1802, %v1801
      %v1826 = vpack.c.b16 %v1804, %v1803
      %v1827 = vpack.c.b16 %v1806, %v1805
      %v1828 = vpack.c.b16 %v1808, %v1807
      %v1829 = vpack.c.b16 %v1810, %v1809
      %v1830 = vpack.c.b16 %v1812, %v1811
      %v1831 = vpack.c.b16 %v1814, %v1813
      %v1832 = vpack.c.b16 %v1816, %v1815
      %1833 = vrot.lane.b32.xlu0 %v1817, 3
      %v1834 = vpop.permute.xlu0 %1833
      %1835 = vrot.lane.b32.xlu0 %v1818, 3
      %v1836 = vpop.permute.xlu0 %1835
      %1837 = vrot.lane.b32.xlu0 %v1819, 3
      %v1838 = vpop.permute.xlu0 %1837
      %1839 = vrot.lane.b32.xlu0 %v1820, 3
      %v1840 = vpop.permute.xlu0 %1839
      %1841 = vrot.lane.b32.xlu0 %v1821, 3
      %v1842 = vpop.permute.xlu0 %1841
      %1843 = vrot.lane.b32.xlu0 %v1822, 3
      %v1844 = vpop.permute.xlu0 %1843
      %1845 = vrot.lane.b32.xlu0 %v1823, 3
      %v1846 = vpop.permute.xlu0 %1845
      %1847 = vrot.lane.b32.xlu0 %v1824, 3
      %v1848 = vpop.permute.xlu0 %1847
      %1849 = vrot.lane.b32.xlu0 %v1825, 3
      %v1850 = vpop.permute.xlu0 %1849
      %1851 = vrot.lane.b32.xlu0 %v1826, 3
      %v1852 = vpop.permute.xlu0 %1851
      %1853 = vrot.lane.b32.xlu0 %v1827, 3
      %v1854 = vpop.permute.xlu0 %1853
      %1855 = vrot.lane.b32.xlu0 %v1828, 3
      %v1856 = vpop.permute.xlu0 %1855
      %1857 = vrot.lane.b32.xlu0 %v1829, 3
      %v1858 = vpop.permute.xlu0 %1857
      %1859 = vrot.lane.b32.xlu0 %v1830, 3
      %v1860 = vpop.permute.xlu0 %1859
      %1861 = vrot.lane.b32.xlu0 %v1831, 3
      %v1862 = vpop.permute.xlu0 %1861
      %1863 = vrot.lane.b32.xlu0 %v1832, 3
      %v1864 = vpop.permute.xlu0 %1863
      %v1865 = vunpack.c.l.b16 %v1560
      %v1866 = vunpack.c.l.b16 %v1563
      %v1867 = vunpack.c.l.b16 %v1567
      %v1868 = vunpack.c.l.b16 %v1570
      %v1869 = vunpack.c.l.b16 %v1574
      %v1870 = vunpack.c.l.b16 %v1577
      %v1871 = vunpack.c.l.b16 %v1581
      %v1872 = vunpack.c.l.b16 %v1584
      %v1873 = vunpack.c.l.b16 %v1588
      %v1874 = vunpack.c.l.b16 %v1591
      %v1875 = vunpack.c.l.b16 %v1595
      %v1876 = vunpack.c.l.b16 %v1598
      %v1877 = vunpack.c.l.b16 %v1602
      %v1878 = vunpack.c.l.b16 %v1605
      %v1879 = vunpack.c.l.b16 %v1609
      %v1880 = vunpack.c.l.b16 %v1612
      %v1881 = vunpack.c.l.b16 %v1616
      %v1882 = vunpack.c.l.b16 %v1619
      %v1883 = vunpack.c.l.b16 %v1623
      %v1884 = vunpack.c.l.b16 %v1626
      %v1885 = vunpack.c.l.b16 %v1630
      %v1886 = vunpack.c.l.b16 %v1633
      %v1887 = vunpack.c.l.b16 %v1637
      %v1888 = vunpack.c.l.b16 %v1640
      %v1889 = vunpack.c.l.b16 %v1644
      %v1890 = vunpack.c.l.b16 %v1647
      %v1891 = vunpack.c.l.b16 %v1651
      %v1892 = vunpack.c.l.b16 %v1654
      %v1893 = vunpack.c.l.b16 %v1658
      %v1894 = vunpack.c.l.b16 %v1661
      %v1895 = vunpack.c.l.b16 %v1665
      %v1896 = vunpack.c.l.b16 %v1668
      %v1897 = vpack.c.b16 %v1866, %v1865
      %v1898 = vpack.c.b16 %v1868, %v1867
      %v1899 = vpack.c.b16 %v1870, %v1869
      %v1900 = vpack.c.b16 %v1872, %v1871
      %v1901 = vpack.c.b16 %v1874, %v1873
      %v1902 = vpack.c.b16 %v1876, %v1875
      %v1903 = vpack.c.b16 %v1878, %v1877
      %v1904 = vpack.c.b16 %v1880, %v1879
      %v1905 = vpack.c.b16 %v1882, %v1881
      %v1906 = vpack.c.b16 %v1884, %v1883
      %v1907 = vpack.c.b16 %v1886, %v1885
      %v1908 = vpack.c.b16 %v1888, %v1887
      %v1909 = vpack.c.b16 %v1890, %v1889
      %v1910 = vpack.c.b16 %v1892, %v1891
      %v1911 = vpack.c.b16 %v1894, %v1893
      %v1912 = vpack.c.b16 %v1896, %v1895
      %1913 = vrot.lane.b32.xlu0 %v1897, 6
      %v1914 = vpop.permute.xlu0 %1913
      %1915 = vrot.lane.b32.xlu0 %v1898, 6
      %v1916 = vpop.permute.xlu0 %1915
      %1917 = vrot.lane.b32.xlu0 %v1899, 6
      %v1918 = vpop.permute.xlu0 %1917
      %1919 = vrot.lane.b32.xlu0 %v1900, 6
      %v1920 = vpop.permute.xlu0 %1919
      %1921 = vrot.lane.b32.xlu0 %v1901, 6
      %v1922 = vpop.permute.xlu0 %1921
      %1923 = vrot.lane.b32.xlu0 %v1902, 6
      %v1924 = vpop.permute.xlu0 %1923
      %1925 = vrot.lane.b32.xlu0 %v1903, 6
      %v1926 = vpop.permute.xlu0 %1925
      %1927 = vrot.lane.b32.xlu0 %v1904, 6
      %v1928 = vpop.permute.xlu0 %1927
      %1929 = vrot.lane.b32.xlu0 %v1905, 6
      %v1930 = vpop.permute.xlu0 %1929
      %1931 = vrot.lane.b32.xlu0 %v1906, 6
      %v1932 = vpop.permute.xlu0 %1931
      %1933 = vrot.lane.b32.xlu0 %v1907, 6
      %v1934 = vpop.permute.xlu0 %1933
      %1935 = vrot.lane.b32.xlu0 %v1908, 6
      %v1936 = vpop.permute.xlu0 %1935
      %1937 = vrot.lane.b32.xlu0 %v1909, 6
      %v1938 = vpop.permute.xlu0 %1937
      %1939 = vrot.lane.b32.xlu0 %v1910, 6
      %v1940 = vpop.permute.xlu0 %1939
      %1941 = vrot.lane.b32.xlu0 %v1911, 6
      %v1942 = vpop.permute.xlu0 %1941
      %1943 = vrot.lane.b32.xlu0 %v1912, 6
      %v1944 = vpop.permute.xlu0 %1943
      %v1945 = vunpack.c.l.b16 %v1113
      %v1946 = vunpack.c.l.b16 %v1114
      %v1947 = vpack.c.b16 %v1946, %v1945
      %1948 = vrot.lane.b32.xlu0 %v1770, 9
      %v1949 = vpop.permute.xlu0 %1948
      %1950 = vrot.lane.b32.xlu0 %v1771, 9
      %v1951 = vpop.permute.xlu0 %1950
      %1952 = vrot.lane.b32.xlu0 %v1772, 9
      %v1953 = vpop.permute.xlu0 %1952
      %1954 = vrot.lane.b32.xlu0 %v1773, 9
      %v1955 = vpop.permute.xlu0 %1954
      %1956 = vrot.lane.b32.xlu0 %v1774, 9
      %v1957 = vpop.permute.xlu0 %1956
      %1958 = vrot.lane.b32.xlu0 %v1775, 9
      %v1959 = vpop.permute.xlu0 %1958
      %1960 = vrot.lane.b32.xlu0 %v1776, 9
      %v1961 = vpop.permute.xlu0 %1960
      %1962 = vrot.lane.b32.xlu0 %v1777, 9
      %v1963 = vpop.permute.xlu0 %1962
      %1964 = vrot.lane.b32.xlu0 %v1778, 9
      %v1965 = vpop.permute.xlu0 %1964
      %1966 = vrot.lane.b32.xlu0 %v1779, 9
      %v1967 = vpop.permute.xlu0 %1966
      %1968 = vrot.lane.b32.xlu0 %v1780, 9
      %v1969 = vpop.permute.xlu0 %1968
      %1970 = vrot.lane.b32.xlu0 %v1781, 9
      %v1971 = vpop.permute.xlu0 %1970
      %1972 = vrot.lane.b32.xlu0 %v1782, 9
      %v1973 = vpop.permute.xlu0 %1972
      %1974 = vrot.lane.b32.xlu0 %v1783, 9
      %v1975 = vpop.permute.xlu0 %1974
      %1976 = vrot.lane.b32.xlu0 %v1784, 9
      %v1977 = vpop.permute.xlu0 %1976
      %1978 = vrot.lane.b32.xlu0 %v1947, 9
      %v1979 = vpop.permute.xlu0 %1978
      %v1980 = vunpack.c.l.b16 %v1682
      %v1981 = vunpack.c.l.b16 %v1692
      %v1982 = vpack.c.b16 %v1981, %v1980
      %1983 = vrot.lane.b32.xlu0 %v1818, 12
      %v1984 = vpop.permute.xlu0 %1983
      %1985 = vrot.lane.b32.xlu0 %v1819, 12
      %v1986 = vpop.permute.xlu0 %1985
      %1987 = vrot.lane.b32.xlu0 %v1820, 12
      %v1988 = vpop.permute.xlu0 %1987
      %1989 = vrot.lane.b32.xlu0 %v1821, 12
      %v1990 = vpop.permute.xlu0 %1989
      %1991 = vrot.lane.b32.xlu0 %v1822, 12
      %v1992 = vpop.permute.xlu0 %1991
      %1993 = vrot.lane.b32.xlu0 %v1823, 12
      %v1994 = vpop.permute.xlu0 %1993
      %1995 = vrot.lane.b32.xlu0 %v1824, 12
      %v1996 = vpop.permute.xlu0 %1995
      %1997 = vrot.lane.b32.xlu0 %v1825, 12
      %v1998 = vpop.permute.xlu0 %1997
      %1999 = vrot.lane.b32.xlu0 %v1826, 12
      %v2000 = vpop.permute.xlu0 %1999
      %2001 = vrot.lane.b32.xlu0 %v1827, 12
      %v2002 = vpop.permute.xlu0 %2001
      %2003 = vrot.lane.b32.xlu0 %v1828, 12
      %v2004 = vpop.permute.xlu0 %2003
      %2005 = vrot.lane.b32.xlu0 %v1829, 12
      %v2006 = vpop.permute.xlu0 %2005
      %2007 = vrot.lane.b32.xlu0 %v1830, 12
      %v2008 = vpop.permute.xlu0 %2007
      %2009 = vrot.lane.b32.xlu0 %v1831, 12
      %v2010 = vpop.permute.xlu0 %2009
      %2011 = vrot.lane.b32.xlu0 %v1832, 12
      %v2012 = vpop.permute.xlu0 %2011
      %2013 = vrot.lane.b32.xlu0 %v1982, 12
      %v2014 = vpop.permute.xlu0 %2013
      %v2015 = vunpack.c.l.b16 %v1699
      %v2016 = vunpack.c.l.b16 %v1702
      %v2017 = vpack.c.b16 %v2016, %v2015
      %2018 = vrot.lane.b32.xlu0 %v1898, 15
      %v2019 = vpop.permute.xlu0 %2018
      %2020 = vrot.lane.b32.xlu0 %v1899, 15
      %v2021 = vpop.permute.xlu0 %2020
      %2022 = vrot.lane.b32.xlu0 %v1900, 15
      %v2023 = vpop.permute.xlu0 %2022
      %2024 = vrot.lane.b32.xlu0 %v1901, 15
      %v2025 = vpop.permute.xlu0 %2024
      %2026 = vrot.lane.b32.xlu0 %v1902, 15
      %v2027 = vpop.permute.xlu0 %2026
      %2028 = vrot.lane.b32.xlu0 %v1903, 15
      %v2029 = vpop.permute.xlu0 %2028
      %2030 = vrot.lane.b32.xlu0 %v1904, 15
      %v2031 = vpop.permute.xlu0 %2030
      %2032 = vrot.lane.b32.xlu0 %v1905, 15
      %v2033 = vpop.permute.xlu0 %2032
      %2034 = vrot.lane.b32.xlu0 %v1906, 15
      %v2035 = vpop.permute.xlu0 %2034
      %2036 = vrot.lane.b32.xlu0 %v1907, 15
      %v2037 = vpop.permute.xlu0 %2036
      %2038 = vrot.lane.b32.xlu0 %v1908, 15
      %v2039 = vpop.permute.xlu0 %2038
      %2040 = vrot.lane.b32.xlu0 %v1909, 15
      %v2041 = vpop.permute.xlu0 %2040
      %2042 = vrot.lane.b32.xlu0 %v1910, 15
      %v2043 = vpop.permute.xlu0 %2042
      %2044 = vrot.lane.b32.xlu0 %v1911, 15
      %v2045 = vpop.permute.xlu0 %2044
      %2046 = vrot.lane.b32.xlu0 %v1912, 15
      %v2047 = vpop.permute.xlu0 %2046
      %2048 = vrot.lane.b32.xlu0 %v2017, 15
      %v2049 = vpop.permute.xlu0 %2048
      %v2050 = vunpack.c.l.b16 %v1116
      %v2051 = vunpack.c.l.b16 %v1117
      %v2052 = vpack.c.b16 %v2051, %v2050
      %2053 = vrot.lane.b32.xlu0 %v1771, 18
      %v2054 = vpop.permute.xlu0 %2053
      %2055 = vrot.lane.b32.xlu0 %v1772, 18
      %v2056 = vpop.permute.xlu0 %2055
      %2057 = vrot.lane.b32.xlu0 %v1773, 18
      %v2058 = vpop.permute.xlu0 %2057
      %2059 = vrot.lane.b32.xlu0 %v1774, 18
      %v2060 = vpop.permute.xlu0 %2059
      %2061 = vrot.lane.b32.xlu0 %v1775, 18
      %v2062 = vpop.permute.xlu0 %2061
      %2063 = vrot.lane.b32.xlu0 %v1776, 18
      %v2064 = vpop.permute.xlu0 %2063
      %2065 = vrot.lane.b32.xlu0 %v1777, 18
      %v2066 = vpop.permute.xlu0 %2065
      %2067 = vrot.lane.b32.xlu0 %v1778, 18
      %v2068 = vpop.permute.xlu0 %2067
      %2069 = vrot.lane.b32.xlu0 %v1779, 18
      %v2070 = vpop.permute.xlu0 %2069
      %2071 = vrot.lane.b32.xlu0 %v1780, 18
      %v2072 = vpop.permute.xlu0 %2071
      %2073 = vrot.lane.b32.xlu0 %v1781, 18
      %v2074 = vpop.permute.xlu0 %2073
      %2075 = vrot.lane.b32.xlu0 %v1782, 18
      %v2076 = vpop.permute.xlu0 %2075
      %2077 = vrot.lane.b32.xlu0 %v1783, 18
      %v2078 = vpop.permute.xlu0 %2077
      %2079 = vrot.lane.b32.xlu0 %v1784, 18
      %v2080 = vpop.permute.xlu0 %2079
      %2081 = vrot.lane.b32.xlu0 %v1947, 18
      %v2082 = vpop.permute.xlu0 %2081
      %2083 = vrot.lane.b32.xlu0 %v2052, 18
      %v2084 = vpop.permute.xlu0 %2083
      %v2085 = vunpack.c.l.b16 %v1716
      %v2086 = vunpack.c.l.b16 %v1726
      %v2087 = vpack.c.b16 %v2086, %v2085
      %2088 = vrot.lane.b32.xlu0 %v1819, 21
      %v2089 = vpop.permute.xlu0 %2088
      %2090 = vrot.lane.b32.xlu0 %v1820, 21
      %v2091 = vpop.permute.xlu0 %2090
      %2092 = vrot.lane.b32.xlu0 %v1821, 21
      %v2093 = vpop.permute.xlu0 %2092
      %2094 = vrot.lane.b32.xlu0 %v1822, 21
      %v2095 = vpop.permute.xlu0 %2094
      %2096 = vrot.lane.b32.xlu0 %v1823, 21
      %v2097 = vpop.permute.xlu0 %2096
      %2098 = vrot.lane.b32.xlu0 %v1824, 21
      %v2099 = vpop.permute.xlu0 %2098
      %2100 = vrot.lane.b32.xlu0 %v1825, 21
      %v2101 = vpop.permute.xlu0 %2100
      %2102 = vrot.lane.b32.xlu0 %v1826, 21
      %v2103 = vpop.permute.xlu0 %2102
      %2104 = vrot.lane.b32.xlu0 %v1827, 21
      %v2105 = vpop.permute.xlu0 %2104
      %2106 = vrot.lane.b32.xlu0 %v1828, 21
      %v2107 = vpop.permute.xlu0 %2106
      %2108 = vrot.lane.b32.xlu0 %v1829, 21
      %v2109 = vpop.permute.xlu0 %2108
      %2110 = vrot.lane.b32.xlu0 %v1830, 21
      %v2111 = vpop.permute.xlu0 %2110
      %2112 = vrot.lane.b32.xlu0 %v1831, 21
      %v2113 = vpop.permute.xlu0 %2112
      %2114 = vrot.lane.b32.xlu0 %v1832, 21
      %v2115 = vpop.permute.xlu0 %2114
      %2116 = vrot.lane.b32.xlu0 %v1982, 21
      %v2117 = vpop.permute.xlu0 %2116
      %2118 = vrot.lane.b32.xlu0 %v2087, 21
      %v2119 = vpop.permute.xlu0 %2118
      %v2120 = vunpack.c.l.b16 %v1733
      %v2121 = vunpack.c.l.b16 %v1736
      %v2122 = vpack.c.b16 %v2121, %v2120
      %2123 = vrot.lane.b32.xlu0 %v1899, 24
      %v2124 = vpop.permute.xlu0 %2123
      %2125 = vrot.lane.b32.xlu0 %v1900, 24
      %v2126 = vpop.permute.xlu0 %2125
      %2127 = vrot.lane.b32.xlu0 %v1901, 24
      %v2128 = vpop.permute.xlu0 %2127
      %2129 = vrot.lane.b32.xlu0 %v1902, 24
      %v2130 = vpop.permute.xlu0 %2129
      %2131 = vrot.lane.b32.xlu0 %v1903, 24
      %v2132 = vpop.permute.xlu0 %2131
      %2133 = vrot.lane.b32.xlu0 %v1904, 24
      %v2134 = vpop.permute.xlu0 %2133
      %2135 = vrot.lane.b32.xlu0 %v1905, 24
      %v2136 = vpop.permute.xlu0 %2135
      %2137 = vrot.lane.b32.xlu0 %v1906, 24
      %v2138 = vpop.permute.xlu0 %2137
      %2139 = vrot.lane.b32.xlu0 %v1907, 24
      %v2140 = vpop.permute.xlu0 %2139
      %2141 = vrot.lane.b32.xlu0 %v1908, 24
      %v2142 = vpop.permute.xlu0 %2141
      %2143 = vrot.lane.b32.xlu0 %v1909, 24
      %v2144 = vpop.permute.xlu0 %2143
      %2145 = vrot.lane.b32.xlu0 %v1910, 24
      %v2146 = vpop.permute.xlu0 %2145
      %2147 = vrot.lane.b32.xlu0 %v1911, 24
      %v2148 = vpop.permute.xlu0 %2147
      %2149 = vrot.lane.b32.xlu0 %v1912, 24
      %v2150 = vpop.permute.xlu0 %2149
      %2151 = vrot.lane.b32.xlu0 %v2017, 24
      %v2152 = vpop.permute.xlu0 %2151
      %2153 = vrot.lane.b32.xlu0 %v2122, 24
      %v2154 = vpop.permute.xlu0 %2153
      %vm2155 = vcmask 23552
      %v2158 = vsel %vm2155, %v1769, %v1834
      %v2161 = vsel %vm2155, %v1770, %v1836
      %v2164 = vsel %vm2155, %v1771, %v1838
      %v2167 = vsel %vm2155, %v1772, %v1840
      %v2170 = vsel %vm2155, %v1773, %v1842
      %v2173 = vsel %vm2155, %v1774, %v1844
      %v2176 = vsel %vm2155, %v1775, %v1846
      %v2179 = vsel %vm2155, %v1776, %v1848
      %v2182 = vsel %vm2155, %v1777, %v1850
      %v2185 = vsel %vm2155, %v1778, %v1852
      %v2188 = vsel %vm2155, %v1779, %v1854
      %v2191 = vsel %vm2155, %v1780, %v1856
      %v2194 = vsel %vm2155, %v1781, %v1858
      %v2197 = vsel %vm2155, %v1782, %v1860
      %v2200 = vsel %vm2155, %v1783, %v1862
      %v2203 = vsel %vm2155, %v1784, %v1864
      %vm2204 = vcmask 48128
      %v2206 = vsel %vm2204, %v2158, %v1914
      %v2208 = vsel %vm2204, %v2161, %v1916
      %v2210 = vsel %vm2204, %v2164, %v1918
      %v2212 = vsel %vm2204, %v2167, %v1920
      %v2214 = vsel %vm2204, %v2170, %v1922
      %v2216 = vsel %vm2204, %v2173, %v1924
      %v2218 = vsel %vm2204, %v2176, %v1926
      %v2220 = vsel %vm2204, %v2179, %v1928
      %v2222 = vsel %vm2204, %v2182, %v1930
      %v2224 = vsel %vm2204, %v2185, %v1932
      %v2226 = vsel %vm2204, %v2188, %v1934
      %v2228 = vsel %vm2204, %v2191, %v1936
      %v2230 = vsel %vm2204, %v2194, %v1938
      %v2232 = vsel %vm2204, %v2197, %v1940
      %v2234 = vsel %vm2204, %v2200, %v1942
      %v2236 = vsel %vm2204, %v2203, %v1944
      %vm2237 = vcmask 72704
      %v2239 = vsel %vm2237, %v2206, %v1949
      %v2241 = vsel %vm2237, %v2208, %v1951
      %v2243 = vsel %vm2237, %v2210, %v1953
      %v2245 = vsel %vm2237, %v2212, %v1955
      %v2247 = vsel %vm2237, %v2214, %v1957
      %v2249 = vsel %vm2237, %v2216, %v1959
      %v2251 = vsel %vm2237, %v2218, %v1961
      %v2253 = vsel %vm2237, %v2220, %v1963
      %v2255 = vsel %vm2237, %v2222, %v1965
      %v2257 = vsel %vm2237, %v2224, %v1967
      %v2259 = vsel %vm2237, %v2226, %v1969
      %v2261 = vsel %vm2237, %v2228, %v1971
      %v2263 = vsel %vm2237, %v2230, %v1973
      %v2265 = vsel %vm2237, %v2232, %v1975
      %v2267 = vsel %vm2237, %v2234, %v1977
      %v2269 = vsel %vm2237, %v2236, %v1979
      %vm2270 = vcmask 97280
      %v2272 = vsel %vm2270, %v2239, %v1984
      %v2274 = vsel %vm2270, %v2241, %v1986
      %v2276 = vsel %vm2270, %v2243, %v1988
      %v2278 = vsel %vm2270, %v2245, %v1990
      %v2280 = vsel %vm2270, %v2247, %v1992
      %v2282 = vsel %vm2270, %v2249, %v1994
      %v2284 = vsel %vm2270, %v2251, %v1996
      %v2286 = vsel %vm2270, %v2253, %v1998
      %v2288 = vsel %vm2270, %v2255, %v2000
      %v2290 = vsel %vm2270, %v2257, %v2002
      %v2292 = vsel %vm2270, %v2259, %v2004
      %v2294 = vsel %vm2270, %v2261, %v2006
      %v2296 = vsel %vm2270, %v2263, %v2008
      %v2298 = vsel %vm2270, %v2265, %v2010
      %v2300 = vsel %vm2270, %v2267, %v2012
      %v2302 = vsel %vm2270, %v2269, %v2014
      %vm2303 = vcmask 121856
      %v2305 = vsel %vm2303, %v2272, %v2019
      %v2307 = vsel %vm2303, %v2274, %v2021
      %v2309 = vsel %vm2303, %v2276, %v2023
      %v2311 = vsel %vm2303, %v2278, %v2025
      %v2313 = vsel %vm2303, %v2280, %v2027
      %v2315 = vsel %vm2303, %v2282, %v2029
      %v2317 = vsel %vm2303, %v2284, %v2031
      %v2319 = vsel %vm2303, %v2286, %v2033
      %v2321 = vsel %vm2303, %v2288, %v2035
      %v2323 = vsel %vm2303, %v2290, %v2037
      %v2325 = vsel %vm2303, %v2292, %v2039
      %v2327 = vsel %vm2303, %v2294, %v2041
      %v2329 = vsel %vm2303, %v2296, %v2043
      %v2331 = vsel %vm2303, %v2298, %v2045
      %v2333 = vsel %vm2303, %v2300, %v2047
      %v2335 = vsel %vm2303, %v2302, %v2049
      %vm2336 = vcmask 146432
      %v2338 = vsel %vm2336, %v2305, %v2054
      %v2340 = vsel %vm2336, %v2307, %v2056
      %v2342 = vsel %vm2336, %v2309, %v2058
      %v2344 = vsel %vm2336, %v2311, %v2060
      %v2346 = vsel %vm2336, %v2313, %v2062
      %v2348 = vsel %vm2336, %v2315, %v2064
      %v2350 = vsel %vm2336, %v2317, %v2066
      %v2352 = vsel %vm2336, %v2319, %v2068
      %v2354 = vsel %vm2336, %v2321, %v2070
      %v2356 = vsel %vm2336, %v2323, %v2072
      %v2358 = vsel %vm2336, %v2325, %v2074
      %v2360 = vsel %vm2336, %v2327, %v2076
      %v2362 = vsel %vm2336, %v2329, %v2078
      %v2364 = vsel %vm2336, %v2331, %v2080
      %v2366 = vsel %vm2336, %v2333, %v2082
      %v2368 = vsel %vm2336, %v2335, %v2084
      %vm2369 = vcmask 171008
      %v2371 = vsel %vm2369, %v2338, %v2089
      %v2373 = vsel %vm2369, %v2340, %v2091
      %v2375 = vsel %vm2369, %v2342, %v2093
      %v2377 = vsel %vm2369, %v2344, %v2095
      %v2379 = vsel %vm2369, %v2346, %v2097
      %v2381 = vsel %vm2369, %v2348, %v2099
      %v2383 = vsel %vm2369, %v2350, %v2101
      %v2385 = vsel %vm2369, %v2352, %v2103
      %v2387 = vsel %vm2369, %v2354, %v2105
      %v2389 = vsel %vm2369, %v2356, %v2107
      %v2391 = vsel %vm2369, %v2358, %v2109
      %v2393 = vsel %vm2369, %v2360, %v2111
      %v2395 = vsel %vm2369, %v2362, %v2113
      %v2397 = vsel %vm2369, %v2364, %v2115
      %v2399 = vsel %vm2369, %v2366, %v2117
      %v2401 = vsel %vm2369, %v2368, %v2119
      %vm2402 = vcmask 195584
      %v2404 = vsel %vm2402, %v2371, %v2124
      %v2406 = vsel %vm2402, %v2373, %v2126
      %v2408 = vsel %vm2402, %v2375, %v2128
      %v2410 = vsel %vm2402, %v2377, %v2130
      %v2412 = vsel %vm2402, %v2379, %v2132
      %v2414 = vsel %vm2402, %v2381, %v2134
      %v2416 = vsel %vm2402, %v2383, %v2136
      %v2418 = vsel %vm2402, %v2385, %v2138
      %v2420 = vsel %vm2402, %v2387, %v2140
      %v2422 = vsel %vm2402, %v2389, %v2142
      %v2424 = vsel %vm2402, %v2391, %v2144
      %v2426 = vsel %vm2402, %v2393, %v2146
      %v2428 = vsel %vm2402, %v2395, %v2148
      %v2430 = vsel %vm2402, %v2397, %v2150
      %v2432 = vsel %vm2402, %v2399, %v2152
      %v2434 = vsel %vm2402, %v2401, %v2154
      %v2435 = vld [vmem:[%s1] sm:$0xf]
      %v2436 = vld [vmem:[%s1 + $0x4] sm:$0xf]
      %v2437 = vld [vmem:[%s1 + $0x8] sm:$0xf]
      %v2438 = vld [vmem:[%s1 + $0xc] sm:$0x3]
      %v2439 = vld [vmem:[%s2] sm:$0x1]
      %v2441 = vlaneseq
      %v2442 = vshrl.u32 %v2441, 7
      %v2443 = vsub.s32 0, %v2442
      %v2444 = vrot.slane %v2439, %v2443
      %v2450 = vunpack.c.l.b16 %v2435
      %v2451 = vunpack.c.l.b16 %v2436
      %v2452 = vunpack.c.l.b16 %v2437
      %v2453 = vunpack.c.l.b16 %v2438
      %v2454 = vpack.c.b16 %v2451, %v2450
      %v2455 = vpack.c.b16 %v2453, %v2452
      %vm2457 = vcmask 220160
      %v2458 = vsel %vm2457, %v2404, 0
      %v2460 = vsel %vm2457, %v2406, 0
      %v2462 = vsel %vm2457, %v2408, 0
      %v2464 = vsel %vm2457, %v2410, 0
      %v2466 = vsel %vm2457, %v2412, 0
      %v2468 = vsel %vm2457, %v2414, 0
      %v2470 = vsel %vm2457, %v2416, 0
      %v2472 = vsel %vm2457, %v2418, 0
      %v2474 = vsel %vm2457, %v2420, 0
      %v2476 = vsel %vm2457, %v2422, 0
      %v2478 = vsel %vm2457, %v2424, 0
      %v2480 = vsel %vm2457, %v2426, 0
      %v2482 = vsel %vm2457, %v2428, 0
      %v2484 = vsel %vm2457, %v2430, 0
      %v2486 = vsel %vm2457, %v2432, 0
      %v2488 = vsel %vm2457, %v2434, 0
      %vm2490 = vcmask 1044480
      %vm2491 = vcmask 1045504
      %v2492 = vsel %vm2490, 4294967295, 65535
      %v2493 = vsel %vm2491, %v2492, 0
      %v2495 = vand.u32 %v2455, %v2493
      %2497 = vmatprep.subr.bf16.mxu0 0
      %2498 = vmatpush1.bf16.msra.mxu0 %v2454
      %2499 = vmatprep.subr.bf16.mxu0 0
      %2500 = vmatpush1.bf16.msra.mxu0 %v2495
      %2501 = vmatprep.subr.bf16.mxu0 0
      %2502 = vmatpush1.bf16.msra.mxu0 0
      %2503 = vmatprep.subr.bf16.mxu0 0
      %2504 = vmatpush1.bf16.msra.mxu0 0
      %2505 = vmatprep.subr.bf16.mxu0 0
      %2506 = vmatpush1.bf16.msra.mxu0 0
      %2507 = vmatprep.subr.bf16.mxu0 0
      %2508 = vmatpush1.bf16.msra.mxu0 0
      %2509 = vmatprep.subr.bf16.mxu0 0
      %2510 = vmatpush1.bf16.msra.mxu0 0
      %2511 = vmatprep.subr.bf16.mxu0 0
      %2512 = vmatpush1.bf16.msra.mxu0 0
      %2513 = vmatprep.subr.bf16.mxu0 0
      %2514 = vmatpush1.bf16.msra.mxu0 0
      %2515 = vmatprep.subr.bf16.mxu0 0
      %2516 = vmatpush1.bf16.msra.mxu0 0
      %2517 = vmatprep.subr.bf16.mxu0 0
      %2518 = vmatpush1.bf16.msra.mxu0 0
      %2519 = vmatprep.subr.bf16.mxu0 0
      %2520 = vmatpush1.bf16.msra.mxu0 0
      %2521 = vmatprep.subr.bf16.mxu0 0
      %2522 = vmatpush1.bf16.msra.mxu0 0
      %2523 = vmatprep.subr.bf16.mxu0 0
      %2524 = vmatpush1.bf16.msra.mxu0 0
      %2525 = vmatprep.subr.bf16.mxu0 0
      %2526 = vmatpush1.bf16.msra.mxu0 0
      %2527 = vmatprep.subr.bf16.mxu0 0
      %2528 = vmatpush1.bf16.msra.mxu0 0
      %2529 = vmatprep.mubr.bf16.mxu0 0
      %2530 = vmatmul.mubr.bf16.gmra.mrb[0].mxu0 %v2458
      %v2531 = vpop.f32.mrb[0].mxu0
      %v2532 = vadd.f32 %v2444, %v2531
      %v2533 = vpop.f32.mrb[0].mxu0
      %v2534 = vpop.f32.mrb[0].mxu0
      %v2535 = vadd.f32 %v2444, %v2534
      %v2536 = vpop.f32.mrb[0].mxu0
      %2537 = vmatprep.mubr.bf16.mxu0 0
      %2538 = vmatmul.mubr.bf16.gmra.mrb[0].mxu0 %v2460
      %v2539 = vpop.f32.mrb[0].mxu0
      %v2540 = vadd.f32 %v2444, %v2539
      %v2541 = vpop.f32.mrb[0].mxu0
      %v2542 = vpop.f32.mrb[0].mxu0
      %v2543 = vadd.f32 %v2444, %v2542
      %v2544 = vpop.f32.mrb[0].mxu0
      %2545 = vmatprep.mubr.bf16.mxu0 0
      %2546 = vmatmul.mubr.bf16.gmra.mrb[0].mxu0 %v2462
      %v2547 = vpop.f32.mrb[0].mxu0
      %v2548 = vadd.f32 %v2444, %v2547
      %v2549 = vpop.f32.mrb[0].mxu0
      %v2550 = vpop.f32.mrb[0].mxu0
      %v2551 = vadd.f32 %v2444, %v2550
      %v2552 = vpop.f32.mrb[0].mxu0
      %2553 = vmatprep.mubr.bf16.mxu0 0
      %2554 = vmatmul.mubr.bf16.gmra.mrb[0].mxu0 %v2464
      %v2555 = vpop.f32.mrb[0].mxu0
      %v2556 = vadd.f32 %v2444, %v2555
      %v2557 = vpop.f32.mrb[0].mxu0
      %v2558 = vpop.f32.mrb[0].mxu0
      %v2559 = vadd.f32 %v2444, %v2558
      %v2560 = vpop.f32.mrb[0].mxu0
      %2561 = vmatprep.mubr.bf16.mxu0 0
      %2562 = vmatmul.mubr.bf16.gmra.mrb[0].mxu0 %v2466
      %v2563 = vpop.f32.mrb[0].mxu0
      %v2564 = vadd.f32 %v2444, %v2563
      %v2565 = vpop.f32.mrb[0].mxu0
      %v2566 = vpop.f32.mrb[0].mxu0
      %v2567 = vadd.f32 %v2444, %v2566
      %v2568 = vpop.f32.mrb[0].mxu0
      %2569 = vmatprep.mubr.bf16.mxu0 0
      %2570 = vmatmul.mubr.bf16.gmra.mrb[0].mxu0 %v2468
      %v2571 = vpop.f32.mrb[0].mxu0
      %v2572 = vadd.f32 %v2444, %v2571
      %v2573 = vpop.f32.mrb[0].mxu0
      %v2574 = vpop.f32.mrb[0].mxu0
      %v2575 = vadd.f32 %v2444, %v2574
      %v2576 = vpop.f32.mrb[0].mxu0
      %2577 = vmatprep.mubr.bf16.mxu0 0
      %2578 = vmatmul.mubr.bf16.gmra.mrb[0].mxu0 %v2470
      %v2579 = vpop.f32.mrb[0].mxu0
      %v2580 = vadd.f32 %v2444, %v2579
      %v2581 = vpop.f32.mrb[0].mxu0
      %v2582 = vpop.f32.mrb[0].mxu0
      %v2583 = vadd.f32 %v2444, %v2582
      %v2584 = vpop.f32.mrb[0].mxu0
      %2585 = vmatprep.mubr.bf16.mxu0 0
      %2586 = vmatmul.mubr.bf16.gmra.mrb[0].mxu0 %v2472
      %v2587 = vpop.f32.mrb[0].mxu0
      %v2588 = vadd.f32 %v2444, %v2587
      %v2589 = vpop.f32.mrb[0].mxu0
      %v2590 = vpop.f32.mrb[0].mxu0
      %v2591 = vadd.f32 %v2444, %v2590
      %v2592 = vpop.f32.mrb[0].mxu0
      %2593 = vmatprep.mubr.bf16.mxu0 0
      %2594 = vmatmul.mubr.bf16.gmra.mrb[0].mxu0 %v2474
      %v2595 = vpop.f32.mrb[0].mxu0
      %v2596 = vadd.f32 %v2444, %v2595
      %v2597 = vpop.f32.mrb[0].mxu0
      %v2598 = vpop.f32.mrb[0].mxu0
      %v2599 = vadd.f32 %v2444, %v2598
      %v2600 = vpop.f32.mrb[0].mxu0
      %2601 = vmatprep.mubr.bf16.mxu0 0
      %2602 = vmatmul.mubr.bf16.gmra.mrb[0].mxu0 %v2476
      %v2603 = vpop.f32.mrb[0].mxu0
      %v2604 = vadd.f32 %v2444, %v2603
      %v2605 = vpop.f32.mrb[0].mxu0
      %v2606 = vpop.f32.mrb[0].mxu0
      %v2607 = vadd.f32 %v2444, %v2606
      %v2608 = vpop.f32.mrb[0].mxu0
      %2609 = vmatprep.mubr.bf16.mxu0 0
      %2610 = vmatmul.mubr.bf16.gmra.mrb[0].mxu0 %v2478
      %v2611 = vpop.f32.mrb[0].mxu0
      %v2612 = vadd.f32 %v2444, %v2611
      %v2613 = vpop.f32.mrb[0].mxu0
      %v2614 = vpop.f32.mrb[0].mxu0
      %v2615 = vadd.f32 %v2444, %v2614
      %v2616 = vpop.f32.mrb[0].mxu0
      %2617 = vmatprep.mubr.bf16.mxu0 0
      %2618 = vmatmul.mubr.bf16.gmra.mrb[0].mxu0 %v2480
      %v2619 = vpop.f32.mrb[0].mxu0
      %v2620 = vadd.f32 %v2444, %v2619
      %v2621 = vpop.f32.mrb[0].mxu0
      %v2622 = vpop.f32.mrb[0].mxu0
      %v2623 = vadd.f32 %v2444, %v2622
      %v2624 = vpop.f32.mrb[0].mxu0
      %2625 = vmatprep.mubr.bf16.mxu0 0
      %2626 = vmatmul.mubr.bf16.gmra.mrb[0].mxu0 %v2482
      %v2627 = vpop.f32.mrb[0].mxu0
      %v2628 = vadd.f32 %v2444, %v2627
      %v2629 = vpop.f32.mrb[0].mxu0
      %v2630 = vpop.f32.mrb[0].mxu0
      %v2631 = vadd.f32 %v2444, %v2630
      %v2632 = vpop.f32.mrb[0].mxu0
      %2633 = vmatprep.mubr.bf16.mxu0 0
      %2634 = vmatmul.mubr.bf16.gmra.mrb[0].mxu0 %v2484
      %v2635 = vpop.f32.mrb[0].mxu0
      %v2636 = vadd.f32 %v2444, %v2635
      %v2637 = vpop.f32.mrb[0].mxu0
      %v2638 = vpop.f32.mrb[0].mxu0
      %v2639 = vadd.f32 %v2444, %v2638
      %v2640 = vpop.f32.mrb[0].mxu0
      %2641 = vmatprep.mubr.bf16.mxu0 0
      %2642 = vmatmul.mubr.bf16.gmra.mrb[0].mxu0 %v2486
      %v2643 = vpop.f32.mrb[0].mxu0
      %v2644 = vadd.f32 %v2444, %v2643
      %v2645 = vpop.f32.mrb[0].mxu0
      %v2646 = vpop.f32.mrb[0].mxu0
      %v2647 = vadd.f32 %v2444, %v2646
      %v2648 = vpop.f32.mrb[0].mxu0
      %2649 = vmatprep.mubr.bf16.mxu0 0
      %2650 = vmatmul.mubr.bf16.gmra.mrb[0].mxu0 %v2488
      %v2651 = vpop.f32.mrb[0].mxu0
      %v2652 = vadd.f32 %v2444, %v2651
      %v2653 = vpop.f32.mrb[0].mxu0
      %v2654 = vpop.f32.mrb[0].mxu0
      %v2655 = vadd.f32 %v2444, %v2654
      %v2656 = vpop.f32.mrb[0].mxu0
      %2657 = vdwg.mxu0
      %v2658 = vmax.f32 %v2532, 0.0
      %v2659 = vmax.f32 %v2535, 0.0
      %v2660 = vmax.f32 %v2540, 0.0
      %v2661 = vmax.f32 %v2543, 0.0
      %v2662 = vmax.f32 %v2548, 0.0
      %v2663 = vmax.f32 %v2551, 0.0
      %v2664 = vmax.f32 %v2556, 0.0
      %v2665 = vmax.f32 %v2559, 0.0
      %v2666 = vmax.f32 %v2564, 0.0
      %v2667 = vmax.f32 %v2567, 0.0
      %v2668 = vmax.f32 %v2572, 0.0
      %v2669 = vmax.f32 %v2575, 0.0
      %v2670 = vmax.f32 %v2580, 0.0
      %v2671 = vmax.f32 %v2583, 0.0
      %v2672 = vmax.f32 %v2588, 0.0
      %v2673 = vmax.f32 %v2591, 0.0
      %v2674 = vmax.f32 %v2596, 0.0
      %v2675 = vmax.f32 %v2599, 0.0
      %v2676 = vmax.f32 %v2604, 0.0
      %v2677 = vmax.f32 %v2607, 0.0
      %v2678 = vmax.f32 %v2612, 0.0
      %v2679 = vmax.f32 %v2615, 0.0
      %v2680 = vmax.f32 %v2620, 0.0
      %v2681 = vmax.f32 %v2623, 0.0
      %v2682 = vmax.f32 %v2628, 0.0
      %v2683 = vmax.f32 %v2631, 0.0
      %v2684 = vmax.f32 %v2636, 0.0
      %v2685 = vmax.f32 %v2639, 0.0
      %v2686 = vmax.f32 %v2644, 0.0
      %v2687 = vmax.f32 %v2647, 0.0
      %v2688 = vmax.f32 %v2652, 0.0
      %v2689 = vmax.f32 %v2655, 0.0
      %v2690 = vpack.c.bf16 %v2659, %v2658
      %v2691 = vpack.c.bf16 %v2661, %v2660
      %v2692 = vpack.c.bf16 %v2663, %v2662
      %v2693 = vpack.c.bf16 %v2665, %v2664
      %v2694 = vpack.c.bf16 %v2667, %v2666
      %v2695 = vpack.c.bf16 %v2669, %v2668
      %v2696 = vpack.c.bf16 %v2671, %v2670
      %v2697 = vpack.c.bf16 %v2673, %v2672
      %v2698 = vpack.c.bf16 %v2675, %v2674
      %v2699 = vpack.c.bf16 %v2677, %v2676
      %v2700 = vpack.c.bf16 %v2679, %v2678
      %v2701 = vpack.c.bf16 %v2681, %v2680
      %v2702 = vpack.c.bf16 %v2683, %v2682
      %v2703 = vpack.c.bf16 %v2685, %v2684
      %v2704 = vpack.c.bf16 %v2687, %v2686
      %v2705 = vpack.c.bf16 %v2689, %v2688
      %vm2706 = vcmask 125952
      %2707 = vst.msk [vmem:[#allocation3] sm:$0xf] %vm2706, 0
      %2708 = vst.msk [vmem:[#allocation3 + $0x4] sm:$0xf] %vm2706, 0
      %vm2709 = vcmask 122880
      %2710 = vst.msk [vmem:[#allocation3 + $0x8] sm:$0x1] %vm2709, 0
      %s2711 = scalar_lea.vmem [#allocation3], 204
      %2712 = vst.msk [vmem:[%s2711] sm:$0xf] %vm2706, 0
      %2713 = vst.msk [vmem:[%s2711 + $0x4] sm:$0xf] %vm2706, 0
      %2714 = vst.msk [vmem:[%s2711 + $0x8] sm:$0x1] %vm2709, 0
      %vm2715 = vcmask 122880
      %vm2716 = vmand %vm2715, %vm436
      %v2717 = vld [vmem:[#allocation3] sm:$0x1]
      %v2718 = vsel %vm2716, 0, %v2717
      %2719 = vst [vmem:[#allocation3] sm:$0x1] %v2718
      %v2720 = vld [vmem:[#allocation3 + $0xc] sm:$0x1]
      %v2721 = vsel %vm2716, 0, %v2720
      %2722 = vst [vmem:[#allocation3 + $0xc] sm:$0x1] %v2721
      %v2723 = vld [vmem:[#allocation3 + $0x18] sm:$0x1]
      %v2724 = vsel %vm2716, 0, %v2723
      %2725 = vst [vmem:[#allocation3 + $0x18] sm:$0x1] %v2724
      %v2726 = vld [vmem:[#allocation3 + $0x24] sm:$0x1]
      %v2727 = vsel %vm2716, 0, %v2726
      %2728 = vst [vmem:[#allocation3 + $0x24] sm:$0x1] %v2727
      %v2729 = vld [vmem:[#allocation3 + $0x30] sm:$0x1]
      %v2730 = vsel %vm2716, 0, %v2729
      %2731 = vst [vmem:[#allocation3 + $0x30] sm:$0x1] %v2730
      %v2732 = vld [vmem:[#allocation3 + $0x3c] sm:$0x1]
      %v2733 = vsel %vm2716, 0, %v2732
      %2734 = vst [vmem:[#allocation3 + $0x3c] sm:$0x1] %v2733
      %v2735 = vld [vmem:[#allocation3 + $0x48] sm:$0x1]
      %v2736 = vsel %vm2716, 0, %v2735
      %2737 = vst [vmem:[#allocation3 + $0x48] sm:$0x1] %v2736
      %v2738 = vld [vmem:[#allocation3 + $0x54] sm:$0x1]
      %v2739 = vsel %vm2716, 0, %v2738
      %2740 = vst [vmem:[#allocation3 + $0x54] sm:$0x1] %v2739
      %v2741 = vld [vmem:[#allocation3 + $0x60] sm:$0x1]
      %v2742 = vsel %vm2716, 0, %v2741
      %2743 = vst [vmem:[#allocation3 + $0x60] sm:$0x1] %v2742
      %v2744 = vld [vmem:[#allocation3 + $0x6c] sm:$0x1]
      %v2745 = vsel %vm2716, 0, %v2744
      %2746 = vst [vmem:[#allocation3 + $0x6c] sm:$0x1] %v2745
      %v2747 = vld [vmem:[#allocation3 + $0x78] sm:$0x1]
      %v2748 = vsel %vm2716, 0, %v2747
      %2749 = vst [vmem:[#allocation3 + $0x78] sm:$0x1] %v2748
      %v2750 = vld [vmem:[#allocation3 + $0x84] sm:$0x1]
      %v2751 = vsel %vm2716, 0, %v2750
      %2752 = vst [vmem:[#allocation3 + $0x84] sm:$0x1] %v2751
      %v2753 = vld [vmem:[#allocation3 + $0x90] sm:$0x1]
      %v2754 = vsel %vm2716, 0, %v2753
      %2755 = vst [vmem:[#allocation3 + $0x90] sm:$0x1] %v2754
      %v2756 = vld [vmem:[#allocation3 + $0x9c] sm:$0x1]
      %v2757 = vsel %vm2716, 0, %v2756
      %2758 = vst [vmem:[#allocation3 + $0x9c] sm:$0x1] %v2757
      %v2759 = vld [vmem:[#allocation3 + $0xa8] sm:$0x1]
      %v2760 = vsel %vm2716, 0, %v2759
      %2761 = vst [vmem:[#allocation3 + $0xa8] sm:$0x1] %v2760
      %v2762 = vld [vmem:[#allocation3 + $0xb4] sm:$0x1]
      %v2763 = vsel %vm2716, 0, %v2762
      %2764 = vst [vmem:[#allocation3 + $0xb4] sm:$0x1] %v2763
      %v2765 = vld [vmem:[#allocation3 + $0xc0] sm:$0x1]
      %v2766 = vsel %vm2716, 0, %v2765
      %2767 = vst [vmem:[#allocation3 + $0xc0] sm:$0x1] %v2766
      %v2768 = vld [vmem:[#allocation3 + $0xcc] sm:$0x1]
      %v2769 = vsel %vm2716, 0, %v2768
      %2770 = vst [vmem:[#allocation3 + $0xcc] sm:$0x1] %v2769
      %vm2771 = vmand %vm2715, %vm492
      %v2772 = vld [vmem:[#allocation3 + $0x8] sm:$0x1]
      %v2773 = vsel %vm2771, 0, %v2772
      %2774 = vst [vmem:[#allocation3 + $0x8] sm:$0x1] %v2773
      %v2775 = vld [vmem:[#allocation3 + $0x14] sm:$0x1]
      %v2776 = vsel %vm2771, 0, %v2775
      %2777 = vst [vmem:[#allocation3 + $0x14] sm:$0x1] %v2776
      %v2778 = vld [vmem:[#allocation3 + $0x20] sm:$0x1]
      %v2779 = vsel %vm2771, 0, %v2778
      %2780 = vst [vmem:[#allocation3 + $0x20] sm:$0x1] %v2779
      %v2781 = vld [vmem:[#allocation3 + $0x2c] sm:$0x1]
      %v2782 = vsel %vm2771, 0, %v2781
      %2783 = vst [vmem:[#allocation3 + $0x2c] sm:$0x1] %v2782
      %v2784 = vld [vmem:[#allocation3 + $0x38] sm:$0x1]
      %v2785 = vsel %vm2771, 0, %v2784
      %2786 = vst [vmem:[#allocation3 + $0x38] sm:$0x1] %v2785
      %v2787 = vld [vmem:[#allocation3 + $0x44] sm:$0x1]
      %v2788 = vsel %vm2771, 0, %v2787
      %2789 = vst [vmem:[#allocation3 + $0x44] sm:$0x1] %v2788
      %v2790 = vld [vmem:[#allocation3 + $0x50] sm:$0x1]
      %v2791 = vsel %vm2771, 0, %v2790
      %2792 = vst [vmem:[#allocation3 + $0x50] sm:$0x1] %v2791
      %v2793 = vld [vmem:[#allocation3 + $0x5c] sm:$0x1]
      %v2794 = vsel %vm2771, 0, %v2793
      %2795 = vst [vmem:[#allocation3 + $0x5c] sm:$0x1] %v2794
      %v2796 = vld [vmem:[#allocation3 + $0x68] sm:$0x1]
      %v2797 = vsel %vm2771, 0, %v2796
      %2798 = vst [vmem:[#allocation3 + $0x68] sm:$0x1] %v2797
      %v2799 = vld [vmem:[#allocation3 + $0x74] sm:$0x1]
      %v2800 = vsel %vm2771, 0, %v2799
      %2801 = vst [vmem:[#allocation3 + $0x74] sm:$0x1] %v2800
      %v2802 = vld [vmem:[#allocation3 + $0x80] sm:$0x1]
      %v2803 = vsel %vm2771, 0, %v2802
      %2804 = vst [vmem:[#allocation3 + $0x80] sm:$0x1] %v2803
      %v2805 = vld [vmem:[#allocation3 + $0x8c] sm:$0x1]
      %v2806 = vsel %vm2771, 0, %v2805
      %2807 = vst [vmem:[#allocation3 + $0x8c] sm:$0x1] %v2806
      %v2808 = vld [vmem:[#allocation3 + $0x98] sm:$0x1]
      %v2809 = vsel %vm2771, 0, %v2808
      %2810 = vst [vmem:[#allocation3 + $0x98] sm:$0x1] %v2809
      %v2811 = vld [vmem:[#allocation3 + $0xa4] sm:$0x1]
      %v2812 = vsel %vm2771, 0, %v2811
      %2813 = vst [vmem:[#allocation3 + $0xa4] sm:$0x1] %v2812
      %v2814 = vld [vmem:[#allocation3 + $0xb0] sm:$0x1]
      %v2815 = vsel %vm2771, 0, %v2814
      %2816 = vst [vmem:[#allocation3 + $0xb0] sm:$0x1] %v2815
      %v2817 = vld [vmem:[#allocation3 + $0xbc] sm:$0x1]
      %v2818 = vsel %vm2771, 0, %v2817
      %2819 = vst [vmem:[#allocation3 + $0xbc] sm:$0x1] %v2818
      %v2820 = vld [vmem:[#allocation3 + $0xc8] sm:$0x1]
      %v2821 = vsel %vm2771, 0, %v2820
      %2822 = vst [vmem:[#allocation3 + $0xc8] sm:$0x1] %v2821
      %v2823 = vld [vmem:[#allocation3 + $0xd4] sm:$0x1]
      %v2824 = vsel %vm2771, 0, %v2823
      %2825 = vst [vmem:[#allocation3 + $0xd4] sm:$0x1] %v2824
      %v2842 = vunpack.c.l.b16 %v2690
      %v2843 = vunpack.c.h.b16 %v2690
      %v2844 = vunpack.c.l.b16 %v2691
      %v2845 = vunpack.c.h.b16 %v2691
      %v2846 = vunpack.c.l.b16 %v2692
      %v2847 = vunpack.c.h.b16 %v2692
      %v2848 = vunpack.c.l.b16 %v2693
      %v2849 = vunpack.c.h.b16 %v2693
      %v2850 = vunpack.c.l.b16 %v2694
      %v2851 = vunpack.c.h.b16 %v2694
      %v2852 = vunpack.c.l.b16 %v2695
      %v2853 = vunpack.c.h.b16 %v2695
      %v2854 = vunpack.c.l.b16 %v2696
      %v2855 = vunpack.c.h.b16 %v2696
      %v2856 = vunpack.c.l.b16 %v2697
      %v2857 = vunpack.c.h.b16 %v2697
      %v2858 = vunpack.c.l.b16 %v2698
      %v2859 = vunpack.c.h.b16 %v2698
      %v2860 = vunpack.c.l.b16 %v2699
      %v2861 = vunpack.c.h.b16 %v2699
      %v2862 = vunpack.c.l.b16 %v2700
      %v2863 = vunpack.c.h.b16 %v2700
      %v2864 = vunpack.c.l.b16 %v2701
      %v2865 = vunpack.c.h.b16 %v2701
      %v2866 = vunpack.c.l.b16 %v2702
      %v2867 = vunpack.c.h.b16 %v2702
      %v2868 = vunpack.c.l.b16 %v2703
      %v2869 = vunpack.c.h.b16 %v2703
      %v2870 = vunpack.c.l.b16 %v2704
      %v2871 = vunpack.c.h.b16 %v2704
      %v2872 = vunpack.c.l.b16 %v2705
      %v2873 = vunpack.c.h.b16 %v2705
      %v2874 = vpack.c.b16 %v2842, %v2842
      %v2875 = vpack.c.b16 %v2843, %v2843
      %v2876 = vpack.c.b16 %v2844, %v2844
      %v2877 = vpack.c.b16 %v2845, %v2845
      %v2878 = vpack.c.b16 %v2846, %v2846
      %v2879 = vpack.c.b16 %v2847, %v2847
      %v2880 = vpack.c.b16 %v2848, %v2848
      %v2881 = vpack.c.b16 %v2849, %v2849
      %v2882 = vpack.c.b16 %v2850, %v2850
      %v2883 = vpack.c.b16 %v2851, %v2851
      %v2884 = vpack.c.b16 %v2852, %v2852
      %v2885 = vpack.c.b16 %v2853, %v2853
      %v2886 = vpack.c.b16 %v2854, %v2854
      %v2887 = vpack.c.b16 %v2855, %v2855
      %v2888 = vpack.c.b16 %v2856, %v2856
      %v2889 = vpack.c.b16 %v2857, %v2857
      %v2890 = vpack.c.b16 %v2858, %v2858
      %v2891 = vpack.c.b16 %v2859, %v2859
      %v2892 = vpack.c.b16 %v2860, %v2860
      %v2893 = vpack.c.b16 %v2861, %v2861
      %v2894 = vpack.c.b16 %v2862, %v2862
      %v2895 = vpack.c.b16 %v2863, %v2863
      %v2896 = vpack.c.b16 %v2864, %v2864
      %v2897 = vpack.c.b16 %v2865, %v2865
      %v2898 = vpack.c.b16 %v2866, %v2866
      %v2899 = vpack.c.b16 %v2867, %v2867
      %v2900 = vpack.c.b16 %v2868, %v2868
      %v2901 = vpack.c.b16 %v2869, %v2869
      %v2902 = vpack.c.b16 %v2870, %v2870
      %v2903 = vpack.c.b16 %v2871, %v2871
      %v2904 = vpack.c.b16 %v2872, %v2872
      %v2905 = vpack.c.b16 %v2873, %v2873
      %v2907 = vshrl.u32 %v2874, 16
      %v2909 = vrot.slane %v2907, 7
      %v2910 = vshll.u32 %v2874, 16
      %v2912 = vor.u32 %v2909, %v2910
      %v2913 = vrot.slane %v2909, 4
      %v2915 = vshrl.u32 %v2875, 16
      %v2917 = vrot.slane %v2915, 7
      %v2918 = vshll.u32 %v2875, 16
      %v2920 = vor.u32 %v2917, %v2918
      %v2921 = vsel %vm629, %v2913, %v2920
      %v2922 = vrot.slane %v2917, 4
      %v2924 = vshrl.u32 %v2876, 16
      %v2926 = vrot.slane %v2924, 7
      %v2927 = vshll.u32 %v2876, 16
      %v2929 = vor.u32 %v2926, %v2927
      %v2930 = vrot.slane %v2926, 4
      %v2932 = vshrl.u32 %v2877, 16
      %v2934 = vrot.slane %v2932, 7
      %v2935 = vshll.u32 %v2877, 16
      %v2937 = vor.u32 %v2934, %v2935
      %v2938 = vsel %vm629, %v2930, %v2937
      %v2939 = vrot.slane %v2934, 4
      %v2941 = vshrl.u32 %v2878, 16
      %v2943 = vrot.slane %v2941, 7
      %v2944 = vshll.u32 %v2878, 16
      %v2946 = vor.u32 %v2943, %v2944
      %v2947 = vrot.slane %v2943, 4
      %v2949 = vshrl.u32 %v2879, 16
      %v2951 = vrot.slane %v2949, 7
      %v2952 = vshll.u32 %v2879, 16
      %v2954 = vor.u32 %v2951, %v2952
      %v2955 = vsel %vm629, %v2947, %v2954
      %v2956 = vrot.slane %v2951, 4
      %v2958 = vshrl.u32 %v2880, 16
      %v2960 = vrot.slane %v2958, 7
      %v2961 = vshll.u32 %v2880, 16
      %v2963 = vor.u32 %v2960, %v2961
      %v2964 = vrot.slane %v2960, 4
      %v2966 = vshrl.u32 %v2881, 16
      %v2968 = vrot.slane %v2966, 7
      %v2969 = vshll.u32 %v2881, 16
      %v2971 = vor.u32 %v2968, %v2969
      %v2972 = vsel %vm629, %v2964, %v2971
      %v2973 = vrot.slane %v2968, 4
      %v2975 = vshrl.u32 %v2882, 16
      %v2977 = vrot.slane %v2975, 7
      %v2978 = vshll.u32 %v2882, 16
      %v2980 = vor.u32 %v2977, %v2978
      %v2981 = vrot.slane %v2977, 4
      %v2983 = vshrl.u32 %v2883, 16
      %v2985 = vrot.slane %v2983, 7
      %v2986 = vshll.u32 %v2883, 16
      %v2988 = vor.u32 %v2985, %v2986
      %v2989 = vsel %vm629, %v2981, %v2988
      %v2990 = vrot.slane %v2985, 4
      %v2992 = vshrl.u32 %v2884, 16
      %v2994 = vrot.slane %v2992, 7
      %v2995 = vshll.u32 %v2884, 16
      %v2997 = vor.u32 %v2994, %v2995
      %v2998 = vrot.slane %v2994, 4
      %v3000 = vshrl.u32 %v2885, 16
      %v3002 = vrot.slane %v3000, 7
      %v3003 = vshll.u32 %v2885, 16
      %v3005 = vor.u32 %v3002, %v3003
      %v3006 = vsel %vm629, %v2998, %v3005
      %v3007 = vrot.slane %v3002, 4
      %v3009 = vshrl.u32 %v2886, 16
      %v3011 = vrot.slane %v3009, 7
      %v3012 = vshll.u32 %v2886, 16
      %v3014 = vor.u32 %v3011, %v3012
      %v3015 = vrot.slane %v3011, 4
      %v3017 = vshrl.u32 %v2887, 16
      %v3019 = vrot.slane %v3017, 7
      %v3020 = vshll.u32 %v2887, 16
      %v3022 = vor.u32 %v3019, %v3020
      %v3023 = vsel %vm629, %v3015, %v3022
      %v3024 = vrot.slane %v3019, 4
      %v3026 = vshrl.u32 %v2888, 16
      %v3028 = vrot.slane %v3026, 7
      %v3029 = vshll.u32 %v2888, 16
      %v3031 = vor.u32 %v3028, %v3029
      %v3032 = vrot.slane %v3028, 4
      %v3034 = vshrl.u32 %v2889, 16
      %v3036 = vrot.slane %v3034, 7
      %v3037 = vshll.u32 %v2889, 16
      %v3039 = vor.u32 %v3036, %v3037
      %v3040 = vsel %vm629, %v3032, %v3039
      %v3041 = vrot.slane %v3036, 4
      %v3043 = vshrl.u32 %v2890, 16
      %v3045 = vrot.slane %v3043, 7
      %v3046 = vshll.u32 %v2890, 16
      %v3048 = vor.u32 %v3045, %v3046
      %v3049 = vrot.slane %v3045, 4
      %v3051 = vshrl.u32 %v2891, 16
      %v3053 = vrot.slane %v3051, 7
      %v3054 = vshll.u32 %v2891, 16
      %v3056 = vor.u32 %v3053, %v3054
      %v3057 = vsel %vm629, %v3049, %v3056
      %v3058 = vrot.slane %v3053, 4
      %v3060 = vshrl.u32 %v2892, 16
      %v3062 = vrot.slane %v3060, 7
      %v3063 = vshll.u32 %v2892, 16
      %v3065 = vor.u32 %v3062, %v3063
      %v3066 = vrot.slane %v3062, 4
      %v3068 = vshrl.u32 %v2893, 16
      %v3070 = vrot.slane %v3068, 7
      %v3071 = vshll.u32 %v2893, 16
      %v3073 = vor.u32 %v3070, %v3071
      %v3074 = vsel %vm629, %v3066, %v3073
      %v3075 = vrot.slane %v3070, 4
      %v3077 = vshrl.u32 %v2894, 16
      %v3079 = vrot.slane %v3077, 7
      %v3080 = vshll.u32 %v2894, 16
      %v3082 = vor.u32 %v3079, %v3080
      %v3083 = vrot.slane %v3079, 4
      %v3085 = vshrl.u32 %v2895, 16
      %v3087 = vrot.slane %v3085, 7
      %v3088 = vshll.u32 %v2895, 16
      %v3090 = vor.u32 %v3087, %v3088
      %v3091 = vsel %vm629, %v3083, %v3090
      %v3092 = vrot.slane %v3087, 4
      %v3094 = vshrl.u32 %v2896, 16
      %v3096 = vrot.slane %v3094, 7
      %v3097 = vshll.u32 %v2896, 16
      %v3099 = vor.u32 %v3096, %v3097
      %v3100 = vrot.slane %v3096, 4
      %v3102 = vshrl.u32 %v2897, 16
      %v3104 = vrot.slane %v3102, 7
      %v3105 = vshll.u32 %v2897, 16
      %v3107 = vor.u32 %v3104, %v3105
      %v3108 = vsel %vm629, %v3100, %v3107
      %v3109 = vrot.slane %v3104, 4
      %v3111 = vshrl.u32 %v2898, 16
      %v3113 = vrot.slane %v3111, 7
      %v3114 = vshll.u32 %v2898, 16
      %v3116 = vor.u32 %v3113, %v3114
      %v3117 = vrot.slane %v3113, 4
      %v3119 = vshrl.u32 %v2899, 16
      %v3121 = vrot.slane %v3119, 7
      %v3122 = vshll.u32 %v2899, 16
      %v3124 = vor.u32 %v3121, %v3122
      %v3125 = vsel %vm629, %v3117, %v3124
      %v3126 = vrot.slane %v3121, 4
      %v3128 = vshrl.u32 %v2900, 16
      %v3130 = vrot.slane %v3128, 7
      %v3131 = vshll.u32 %v2900, 16
      %v3133 = vor.u32 %v3130, %v3131
      %v3134 = vrot.slane %v3130, 4
      %v3136 = vshrl.u32 %v2901, 16
      %v3138 = vrot.slane %v3136, 7
      %v3139 = vshll.u32 %v2901, 16
      %v3141 = vor.u32 %v3138, %v3139
      %v3142 = vsel %vm629, %v3134, %v3141
      %v3143 = vrot.slane %v3138, 4
      %v3145 = vshrl.u32 %v2902, 16
      %v3147 = vrot.slane %v3145, 7
      %v3148 = vshll.u32 %v2902, 16
      %v3150 = vor.u32 %v3147, %v3148
      %v3151 = vrot.slane %v3147, 4
      %v3153 = vshrl.u32 %v2903, 16
      %v3155 = vrot.slane %v3153, 7
      %v3156 = vshll.u32 %v2903, 16
      %v3158 = vor.u32 %v3155, %v3156
      %v3159 = vsel %vm629, %v3151, %v3158
      %v3160 = vrot.slane %v3155, 4
      %v3162 = vshrl.u32 %v2904, 16
      %v3164 = vrot.slane %v3162, 7
      %v3165 = vshll.u32 %v2904, 16
      %v3167 = vor.u32 %v3164, %v3165
      %v3168 = vrot.slane %v3164, 4
      %v3170 = vshrl.u32 %v2905, 16
      %v3172 = vrot.slane %v3170, 7
      %v3173 = vshll.u32 %v2905, 16
      %v3175 = vor.u32 %v3172, %v3173
      %v3176 = vsel %vm629, %v3168, %v3175
      %v3177 = vrot.slane %v3172, 4
      %s3226 = scalar_lea.vmem [#allocation3], 12
      %vm3227 = vcmask 125952
      %vm3228 = vmand %vm3227, %vm492
      %v3229 = vld [vmem:[%s3226] sm:$0xf]
      %v3230 = vsel %vm3228, %v2912, %v3229
      %3231 = vst [vmem:[%s3226] sm:$0xf] %v3230
      %3232 = vst.msk [vmem:[%s3226 + $0x4] sm:$0xf] %vm2706, %v2921
      %v3233 = vld [vmem:[%s3226 + $0x8] sm:$0x1]
      %v3234 = vsel %vm2716, %v2922, %v3233
      %3235 = vst [vmem:[%s3226 + $0x8] sm:$0x1] %v3234
      %v3236 = vld [vmem:[%s3226 + $0xc] sm:$0xf]
      %v3237 = vsel %vm3228, %v2929, %v3236
      %3238 = vst [vmem:[%s3226 + $0xc] sm:$0xf] %v3237
      %3239 = vst.msk [vmem:[%s3226 + $0x10] sm:$0xf] %vm2706, %v2938
      %v3240 = vld [vmem:[%s3226 + $0x14] sm:$0x1]
      %v3241 = vsel %vm2716, %v2939, %v3240
      %3242 = vst [vmem:[%s3226 + $0x14] sm:$0x1] %v3241
      %v3243 = vld [vmem:[%s3226 + $0x18] sm:$0xf]
      %v3244 = vsel %vm3228, %v2946, %v3243
      %3245 = vst [vmem:[%s3226 + $0x18] sm:$0xf] %v3244
      %3246 = vst.msk [vmem:[%s3226 + $0x1c] sm:$0xf] %vm2706, %v2955
      %v3247 = vld [vmem:[%s3226 + $0x20] sm:$0x1]
      %v3248 = vsel %vm2716, %v2956, %v3247
      %3249 = vst [vmem:[%s3226 + $0x20] sm:$0x1] %v3248
      %v3250 = vld [vmem:[%s3226 + $0x24] sm:$0xf]
      %v3251 = vsel %vm3228, %v2963, %v3250
      %3252 = vst [vmem:[%s3226 + $0x24] sm:$0xf] %v3251
      %3253 = vst.msk [vmem:[%s3226 + $0x28] sm:$0xf] %vm2706, %v2972
      %v3254 = vld [vmem:[%s3226 + $0x2c] sm:$0x1]
      %v3255 = vsel %vm2716, %v2973, %v3254
      %3256 = vst [vmem:[%s3226 + $0x2c] sm:$0x1] %v3255
      %v3257 = vld [vmem:[%s3226 + $0x30] sm:$0xf]
      %v3258 = vsel %vm3228, %v2980, %v3257
      %3259 = vst [vmem:[%s3226 + $0x30] sm:$0xf] %v3258
      %3260 = vst.msk [vmem:[%s3226 + $0x34] sm:$0xf] %vm2706, %v2989
      %v3261 = vld [vmem:[%s3226 + $0x38] sm:$0x1]
      %v3262 = vsel %vm2716, %v2990, %v3261
      %3263 = vst [vmem:[%s3226 + $0x38] sm:$0x1] %v3262
      %v3264 = vld [vmem:[%s3226 + $0x3c] sm:$0xf]
      %v3265 = vsel %vm3228, %v2997, %v3264
      %3266 = vst [vmem:[%s3226 + $0x3c] sm:$0xf] %v3265
      %3267 = vst.msk [vmem:[%s3226 + $0x40] sm:$0xf] %vm2706, %v3006
      %v3268 = vld [vmem:[%s3226 + $0x44] sm:$0x1]
      %v3269 = vsel %vm2716, %v3007, %v3268
      %3270 = vst [vmem:[%s3226 + $0x44] sm:$0x1] %v3269
      %v3271 = vld [vmem:[%s3226 + $0x48] sm:$0xf]
      %v3272 = vsel %vm3228, %v3014, %v3271
      %3273 = vst [vmem:[%s3226 + $0x48] sm:$0xf] %v3272
      %3274 = vst.msk [vmem:[%s3226 + $0x4c] sm:$0xf] %vm2706, %v3023
      %v3275 = vld [vmem:[%s3226 + $0x50] sm:$0x1]
      %v3276 = vsel %vm2716, %v3024, %v3275
      %3277 = vst [vmem:[%s3226 + $0x50] sm:$0x1] %v3276
      %v3278 = vld [vmem:[%s3226 + $0x54] sm:$0xf]
      %v3279 = vsel %vm3228, %v3031, %v3278
      %3280 = vst [vmem:[%s3226 + $0x54] sm:$0xf] %v3279
      %3281 = vst.msk [vmem:[%s3226 + $0x58] sm:$0xf] %vm2706, %v3040
      %v3282 = vld [vmem:[%s3226 + $0x5c] sm:$0x1]
      %v3283 = vsel %vm2716, %v3041, %v3282
      %3284 = vst [vmem:[%s3226 + $0x5c] sm:$0x1] %v3283
      %v3285 = vld [vmem:[%s3226 + $0x60] sm:$0xf]
      %v3286 = vsel %vm3228, %v3048, %v3285
      %3287 = vst [vmem:[%s3226 + $0x60] sm:$0xf] %v3286
      %3288 = vst.msk [vmem:[%s3226 + $0x64] sm:$0xf] %vm2706, %v3057
      %v3289 = vld [vmem:[%s3226 + $0x68] sm:$0x1]
      %v3290 = vsel %vm2716, %v3058, %v3289
      %3291 = vst [vmem:[%s3226 + $0x68] sm:$0x1] %v3290
      %v3292 = vld [vmem:[%s3226 + $0x6c] sm:$0xf]
      %v3293 = vsel %vm3228, %v3065, %v3292
      %3294 = vst [vmem:[%s3226 + $0x6c] sm:$0xf] %v3293
      %3295 = vst.msk [vmem:[%s3226 + $0x70] sm:$0xf] %vm2706, %v3074
      %v3296 = vld [vmem:[%s3226 + $0x74] sm:$0x1]
      %v3297 = vsel %vm2716, %v3075, %v3296
      %3298 = vst [vmem:[%s3226 + $0x74] sm:$0x1] %v3297
      %v3299 = vld [vmem:[%s3226 + $0x78] sm:$0xf]
      %v3300 = vsel %vm3228, %v3082, %v3299
      %3301 = vst [vmem:[%s3226 + $0x78] sm:$0xf] %v3300
      %3302 = vst.msk [vmem:[%s3226 + $0x7c] sm:$0xf] %vm2706, %v3091
      %v3303 = vld [vmem:[%s3226 + $0x80] sm:$0x1]
      %v3304 = vsel %vm2716, %v3092, %v3303
      %3305 = vst [vmem:[%s3226 + $0x80] sm:$0x1] %v3304
      %v3306 = vld [vmem:[%s3226 + $0x84] sm:$0xf]
      %v3307 = vsel %vm3228, %v3099, %v3306
      %3308 = vst [vmem:[%s3226 + $0x84] sm:$0xf] %v3307
      %3309 = vst.msk [vmem:[%s3226 + $0x88] sm:$0xf] %vm2706, %v3108
      %v3310 = vld [vmem:[%s3226 + $0x8c] sm:$0x1]
      %v3311 = vsel %vm2716, %v3109, %v3310
      %3312 = vst [vmem:[%s3226 + $0x8c] sm:$0x1] %v3311
      %v3313 = vld [vmem:[%s3226 + $0x90] sm:$0xf]
      %v3314 = vsel %vm3228, %v3116, %v3313
      %3315 = vst [vmem:[%s3226 + $0x90] sm:$0xf] %v3314
      %3316 = vst.msk [vmem:[%s3226 + $0x94] sm:$0xf] %vm2706, %v3125
      %v3317 = vld [vmem:[%s3226 + $0x98] sm:$0x1]
      %v3318 = vsel %vm2716, %v3126, %v3317
      %3319 = vst [vmem:[%s3226 + $0x98] sm:$0x1] %v3318
      %v3320 = vld [vmem:[%s3226 + $0x9c] sm:$0xf]
      %v3321 = vsel %vm3228, %v3133, %v3320
      %3322 = vst [vmem:[%s3226 + $0x9c] sm:$0xf] %v3321
      %3323 = vst.msk [vmem:[%s3226 + $0xa0] sm:$0xf] %vm2706, %v3142
      %v3324 = vld [vmem:[%s3226 + $0xa4] sm:$0x1]
      %v3325 = vsel %vm2716, %v3143, %v3324
      %3326 = vst [vmem:[%s3226 + $0xa4] sm:$0x1] %v3325
      %v3327 = vld [vmem:[%s3226 + $0xa8] sm:$0xf]
      %v3328 = vsel %vm3228, %v3150, %v3327
      %3329 = vst [vmem:[%s3226 + $0xa8] sm:$0xf] %v3328
      %3330 = vst.msk [vmem:[%s3226 + $0xac] sm:$0xf] %vm2706, %v3159
      %v3331 = vld [vmem:[%s3226 + $0xb0] sm:$0x1]
      %v3332 = vsel %vm2716, %v3160, %v3331
      %3333 = vst [vmem:[%s3226 + $0xb0] sm:$0x1] %v3332
      %v3334 = vld [vmem:[%s3226 + $0xb4] sm:$0xf]
      %v3335 = vsel %vm3228, %v3167, %v3334
      %3336 = vst [vmem:[%s3226 + $0xb4] sm:$0xf] %v3335
      %3337 = vst.msk [vmem:[%s3226 + $0xb8] sm:$0xf] %vm2706, %v3176
      %v3338 = vld [vmem:[%s3226 + $0xbc] sm:$0x1]
      %v3339 = vsel %vm2716, %v3177, %v3338
      %3340 = vst [vmem:[%s3226 + $0xbc] sm:$0x1] %v3339
      %v3341 = vld [vmem:[#allocation3] sm:$0xf]
      %v3342 = vld [vmem:[#allocation3 + $0x4] sm:$0xf]
      %v3343 = vld [vmem:[#allocation3 + $0x8] sm:$0x1]
      %v3344 = vld [vmem:[#allocation3 + $0xc] sm:$0xf]
      %v3345 = vld [vmem:[#allocation3 + $0x10] sm:$0xf]
      %v3346 = vld [vmem:[#allocation3 + $0x14] sm:$0x1]
      %v3347 = vld [vmem:[#allocation3 + $0x18] sm:$0xf]
      %v3348 = vld [vmem:[#allocation3 + $0x1c] sm:$0xf]
      %v3349 = vld [vmem:[#allocation3 + $0x20] sm:$0x1]
      %v3350 = vld [vmem:[#allocation3 + $0x24] sm:$0xf]
      %v3351 = vld [vmem:[#allocation3 + $0x28] sm:$0xf]
      %v3352 = vld [vmem:[#allocation3 + $0x2c] sm:$0x1]
      %v3353 = vld [vmem:[#allocation3 + $0x30] sm:$0xf]
      %v3354 = vld [vmem:[#allocation3 + $0x34] sm:$0xf]
      %v3355 = vld [vmem:[#allocation3 + $0x38] sm:$0x1]
      %v3356 = vld [vmem:[#allocation3 + $0x3c] sm:$0xf]
      %v3357 = vld [vmem:[#allocation3 + $0x40] sm:$0xf]
      %v3358 = vld [vmem:[#allocation3 + $0x44] sm:$0x1]
      %v3359 = vld [vmem:[#allocation3 + $0x48] sm:$0xf]
      %v3360 = vld [vmem:[#allocation3 + $0x4c] sm:$0xf]
      %v3361 = vld [vmem:[#allocation3 + $0x50] sm:$0x1]
      %v3362 = vld [vmem:[#allocation3 + $0x54] sm:$0xf]
      %v3363 = vld [vmem:[#allocation3 + $0x58] sm:$0xf]
      %v3364 = vld [vmem:[#allocation3 + $0x5c] sm:$0x1]
      %v3365 = vld [vmem:[#allocation3 + $0x60] sm:$0xf]
      %v3366 = vld [vmem:[#allocation3 + $0x64] sm:$0xf]
      %v3367 = vld [vmem:[#allocation3 + $0x68] sm:$0x1]
      %v3368 = vld [vmem:[#allocation3 + $0x6c] sm:$0xf]
      %v3369 = vld [vmem:[#allocation3 + $0x70] sm:$0xf]
      %v3370 = vld [vmem:[#allocation3 + $0x74] sm:$0x1]
      %v3371 = vld [vmem:[#allocation3 + $0x78] sm:$0xf]
      %v3372 = vld [vmem:[#allocation3 + $0x7c] sm:$0xf]
      %v3373 = vld [vmem:[#allocation3 + $0x80] sm:$0x1]
      %v3374 = vld [vmem:[#allocation3 + $0x84] sm:$0xf]
      %v3375 = vld [vmem:[#allocation3 + $0x88] sm:$0xf]
      %v3376 = vld [vmem:[#allocation3 + $0x8c] sm:$0x1]
      %v3377 = vld [vmem:[#allocation3 + $0x90] sm:$0xf]
      %v3378 = vld [vmem:[#allocation3 + $0x94] sm:$0xf]
      %v3379 = vld [vmem:[#allocation3 + $0x98] sm:$0x1]
      %v3380 = vld [vmem:[#allocation3 + $0x9c] sm:$0xf]
      %v3381 = vld [vmem:[#allocation3 + $0xa0] sm:$0xf]
      %v3382 = vld [vmem:[#allocation3 + $0xa4] sm:$0x1]
      %v3383 = vld [vmem:[#allocation3 + $0xa8] sm:$0xf]
      %v3384 = vld [vmem:[#allocation3 + $0xac] sm:$0xf]
      %v3385 = vld [vmem:[#allocation3 + $0xb0] sm:$0x1]
      %v3386 = vld [vmem:[#allocation3 + $0xb4] sm:$0xf]
      %v3387 = vld [vmem:[#allocation3 + $0xb8] sm:$0xf]
      %v3388 = vld [vmem:[#allocation3 + $0xbc] sm:$0x1]
      %v3389 = vld [vmem:[#allocation3 + $0xc0] sm:$0xf]
      %v3390 = vld [vmem:[#allocation3 + $0xc4] sm:$0xf]
      %v3391 = vld [vmem:[#allocation3 + $0xc8] sm:$0x1]
      %v3392 = vld [vmem:[#allocation3 + $0xcc] sm:$0xf]
      %v3393 = vld [vmem:[#allocation3 + $0xd0] sm:$0xf]
      %v3394 = vld [vmem:[#allocation3 + $0xd4] sm:$0x1]
      %v3396 = vshrl.u32 %v3341, 16
      %v3398 = vrot.slane %v3396, 4
      %v3399 = vshll.u32 %v3341, 16
      %v3401 = vrot.slane %v3399, 5
      %v3402 = vor.u32 %v3398, %v3401
      %v3403 = vrot.slane %v3402, 4
      %v3405 = vshll.u32 %v3342, 16
      %v3407 = vrot.slane %v3405, 5
      %v3408 = vsel %vm1121, %v3403, %v3407
      %v3409 = vshrl.u32 %v3342, 16
      %v3411 = vrot.slane %v3409, 4
      %v3412 = vor.u32 %v3411, %v3407
      %v3413 = vrot.slane %v3412, 4
      %v3415 = vshll.u32 %v3343, 16
      %v3417 = vrot.slane %v3415, 5
      %v3418 = vsel %vm1121, %v3413, %v3417
      %v3420 = vshrl.u32 %v3344, 16
      %v3422 = vrot.slane %v3420, 4
      %v3423 = vshll.u32 %v3344, 16
      %v3425 = vrot.slane %v3423, 5
      %v3426 = vor.u32 %v3422, %v3425
      %v3427 = vrot.slane %v3426, 4
      %v3429 = vshll.u32 %v3345, 16
      %v3431 = vrot.slane %v3429, 5
      %v3432 = vsel %vm1121, %v3427, %v3431
      %v3433 = vshrl.u32 %v3345, 16
      %v3435 = vrot.slane %v3433, 4
      %v3436 = vor.u32 %v3435, %v3431
      %v3437 = vrot.slane %v3436, 4
      %v3439 = vshll.u32 %v3346, 16
      %v3441 = vrot.slane %v3439, 5
      %v3442 = vsel %vm1121, %v3437, %v3441
      %v3444 = vshrl.u32 %v3347, 16
      %v3446 = vrot.slane %v3444, 4
      %v3447 = vshll.u32 %v3347, 16
      %v3449 = vrot.slane %v3447, 5
      %v3450 = vor.u32 %v3446, %v3449
      %v3451 = vrot.slane %v3450, 4
      %v3453 = vshll.u32 %v3348, 16
      %v3455 = vrot.slane %v3453, 5
      %v3456 = vsel %vm1121, %v3451, %v3455
      %v3457 = vshrl.u32 %v3348, 16
      %v3459 = vrot.slane %v3457, 4
      %v3460 = vor.u32 %v3459, %v3455
      %v3461 = vrot.slane %v3460, 4
      %v3463 = vshll.u32 %v3349, 16
      %v3465 = vrot.slane %v3463, 5
      %v3466 = vsel %vm1121, %v3461, %v3465
      %v3468 = vshrl.u32 %v3350, 16
      %v3470 = vrot.slane %v3468, 4
      %v3471 = vshll.u32 %v3350, 16
      %v3473 = vrot.slane %v3471, 5
      %v3474 = vor.u32 %v3470, %v3473
      %v3475 = vrot.slane %v3474, 4
      %v3477 = vshll.u32 %v3351, 16
      %v3479 = vrot.slane %v3477, 5
      %v3480 = vsel %vm1121, %v3475, %v3479
      %v3481 = vshrl.u32 %v3351, 16
      %v3483 = vrot.slane %v3481, 4
      %v3484 = vor.u32 %v3483, %v3479
      %v3485 = vrot.slane %v3484, 4
      %v3487 = vshll.u32 %v3352, 16
      %v3489 = vrot.slane %v3487, 5
      %v3490 = vsel %vm1121, %v3485, %v3489
      %v3492 = vshrl.u32 %v3353, 16
      %v3494 = vrot.slane %v3492, 4
      %v3495 = vshll.u32 %v3353, 16
      %v3497 = vrot.slane %v3495, 5
      %v3498 = vor.u32 %v3494, %v3497
      %v3499 = vrot.slane %v3498, 4
      %v3501 = vshll.u32 %v3354, 16
      %v3503 = vrot.slane %v3501, 5
      %v3504 = vsel %vm1121, %v3499, %v3503
      %v3505 = vshrl.u32 %v3354, 16
      %v3507 = vrot.slane %v3505, 4
      %v3508 = vor.u32 %v3507, %v3503
      %v3509 = vrot.slane %v3508, 4
      %v3511 = vshll.u32 %v3355, 16
      %v3513 = vrot.slane %v3511, 5
      %v3514 = vsel %vm1121, %v3509, %v3513
      %v3516 = vshrl.u32 %v3356, 16
      %v3518 = vrot.slane %v3516, 4
      %v3519 = vshll.u32 %v3356, 16
      %v3521 = vrot.slane %v3519, 5
      %v3522 = vor.u32 %v3518, %v3521
      %v3523 = vrot.slane %v3522, 4
      %v3525 = vshll.u32 %v3357, 16
      %v3527 = vrot.slane %v3525, 5
      %v3528 = vsel %vm1121, %v3523, %v3527
      %v3529 = vshrl.u32 %v3357, 16
      %v3531 = vrot.slane %v3529, 4
      %v3532 = vor.u32 %v3531, %v3527
      %v3533 = vrot.slane %v3532, 4
      %v3535 = vshll.u32 %v3358, 16
      %v3537 = vrot.slane %v3535, 5
      %v3538 = vsel %vm1121, %v3533, %v3537
      %v3540 = vshrl.u32 %v3359, 16
      %v3542 = vrot.slane %v3540, 4
      %v3543 = vshll.u32 %v3359, 16
      %v3545 = vrot.slane %v3543, 5
      %v3546 = vor.u32 %v3542, %v3545
      %v3547 = vrot.slane %v3546, 4
      %v3549 = vshll.u32 %v3360, 16
      %v3551 = vrot.slane %v3549, 5
      %v3552 = vsel %vm1121, %v3547, %v3551
      %v3553 = vshrl.u32 %v3360, 16
      %v3555 = vrot.slane %v3553, 4
      %v3556 = vor.u32 %v3555, %v3551
      %v3557 = vrot.slane %v3556, 4
      %v3559 = vshll.u32 %v3361, 16
      %v3561 = vrot.slane %v3559, 5
      %v3562 = vsel %vm1121, %v3557, %v3561
      %v3564 = vshrl.u32 %v3362, 16
      %v3566 = vrot.slane %v3564, 4
      %v3567 = vshll.u32 %v3362, 16
      %v3569 = vrot.slane %v3567, 5
      %v3570 = vor.u32 %v3566, %v3569
      %v3571 = vrot.slane %v3570, 4
      %v3573 = vshll.u32 %v3363, 16
      %v3575 = vrot.slane %v3573, 5
      %v3576 = vsel %vm1121, %v3571, %v3575
      %v3577 = vshrl.u32 %v3363, 16
      %v3579 = vrot.slane %v3577, 4
      %v3580 = vor.u32 %v3579, %v3575
      %v3581 = vrot.slane %v3580, 4
      %v3583 = vshll.u32 %v3364, 16
      %v3585 = vrot.slane %v3583, 5
      %v3586 = vsel %vm1121, %v3581, %v3585
      %v3588 = vshrl.u32 %v3365, 16
      %v3590 = vrot.slane %v3588, 4
      %v3591 = vshll.u32 %v3365, 16
      %v3593 = vrot.slane %v3591, 5
      %v3594 = vor.u32 %v3590, %v3593
      %v3595 = vrot.slane %v3594, 4
      %v3597 = vshll.u32 %v3366, 16
      %v3599 = vrot.slane %v3597, 5
      %v3600 = vsel %vm1121, %v3595, %v3599
      %v3601 = vshrl.u32 %v3366, 16
      %v3603 = vrot.slane %v3601, 4
      %v3604 = vor.u32 %v3603, %v3599
      %v3605 = vrot.slane %v3604, 4
      %v3607 = vshll.u32 %v3367, 16
      %v3609 = vrot.slane %v3607, 5
      %v3610 = vsel %vm1121, %v3605, %v3609
      %v3612 = vshrl.u32 %v3368, 16
      %v3614 = vrot.slane %v3612, 4
      %v3615 = vshll.u32 %v3368, 16
      %v3617 = vrot.slane %v3615, 5
      %v3618 = vor.u32 %v3614, %v3617
      %v3619 = vrot.slane %v3618, 4
      %v3621 = vshll.u32 %v3369, 16
      %v3623 = vrot.slane %v3621, 5
      %v3624 = vsel %vm1121, %v3619, %v3623
      %v3625 = vshrl.u32 %v3369, 16
      %v3627 = vrot.slane %v3625, 4
      %v3628 = vor.u32 %v3627, %v3623
      %v3629 = vrot.slane %v3628, 4
      %v3631 = vshll.u32 %v3370, 16
      %v3633 = vrot.slane %v3631, 5
      %v3634 = vsel %vm1121, %v3629, %v3633
      %v3636 = vshrl.u32 %v3371, 16
      %v3638 = vrot.slane %v3636, 4
      %v3639 = vshll.u32 %v3371, 16
      %v3641 = vrot.slane %v3639, 5
      %v3642 = vor.u32 %v3638, %v3641
      %v3643 = vrot.slane %v3642, 4
      %v3645 = vshll.u32 %v3372, 16
      %v3647 = vrot.slane %v3645, 5
      %v3648 = vsel %vm1121, %v3643, %v3647
      %v3649 = vshrl.u32 %v3372, 16
      %v3651 = vrot.slane %v3649, 4
      %v3652 = vor.u32 %v3651, %v3647
      %v3653 = vrot.slane %v3652, 4
      %v3655 = vshll.u32 %v3373, 16
      %v3657 = vrot.slane %v3655, 5
      %v3658 = vsel %vm1121, %v3653, %v3657
      %v3660 = vshrl.u32 %v3374, 16
      %v3662 = vrot.slane %v3660, 4
      %v3663 = vshll.u32 %v3374, 16
      %v3665 = vrot.slane %v3663, 5
      %v3666 = vor.u32 %v3662, %v3665
      %v3667 = vrot.slane %v3666, 4
      %v3669 = vshll.u32 %v3375, 16
      %v3671 = vrot.slane %v3669, 5
      %v3672 = vsel %vm1121, %v3667, %v3671
      %v3673 = vshrl.u32 %v3375, 16
      %v3675 = vrot.slane %v3673, 4
      %v3676 = vor.u32 %v3675, %v3671
      %v3677 = vrot.slane %v3676, 4
      %v3679 = vshll.u32 %v3376, 16
      %v3681 = vrot.slane %v3679, 5
      %v3682 = vsel %vm1121, %v3677, %v3681
      %v3684 = vshrl.u32 %v3377, 16
      %v3686 = vrot.slane %v3684, 4
      %v3687 = vshll.u32 %v3377, 16
      %v3689 = vrot.slane %v3687, 5
      %v3690 = vor.u32 %v3686, %v3689
      %v3691 = vrot.slane %v3690, 4
      %v3693 = vshll.u32 %v3378, 16
      %v3695 = vrot.slane %v3693, 5
      %v3696 = vsel %vm1121, %v3691, %v3695
      %v3697 = vshrl.u32 %v3378, 16
      %v3699 = vrot.slane %v3697, 4
      %v3700 = vor.u32 %v3699, %v3695
      %v3701 = vrot.slane %v3700, 4
      %v3703 = vshll.u32 %v3379, 16
      %v3705 = vrot.slane %v3703, 5
      %v3706 = vsel %vm1121, %v3701, %v3705
      %v3708 = vshrl.u32 %v3380, 16
      %v3710 = vrot.slane %v3708, 4
      %v3711 = vshll.u32 %v3380, 16
      %v3713 = vrot.slane %v3711, 5
      %v3714 = vor.u32 %v3710, %v3713
      %v3715 = vrot.slane %v3714, 4
      %v3717 = vshll.u32 %v3381, 16
      %v3719 = vrot.slane %v3717, 5
      %v3720 = vsel %vm1121, %v3715, %v3719
      %v3721 = vshrl.u32 %v3381, 16
      %v3723 = vrot.slane %v3721, 4
      %v3724 = vor.u32 %v3723, %v3719
      %v3725 = vrot.slane %v3724, 4
      %v3727 = vshll.u32 %v3382, 16
      %v3729 = vrot.slane %v3727, 5
      %v3730 = vsel %vm1121, %v3725, %v3729
      %v3732 = vshrl.u32 %v3383, 16
      %v3734 = vrot.slane %v3732, 4
      %v3735 = vshll.u32 %v3383, 16
      %v3737 = vrot.slane %v3735, 5
      %v3738 = vor.u32 %v3734, %v3737
      %v3739 = vrot.slane %v3738, 4
      %v3741 = vshll.u32 %v3384, 16
      %v3743 = vrot.slane %v3741, 5
      %v3744 = vsel %vm1121, %v3739, %v3743
      %v3745 = vshrl.u32 %v3384, 16
      %v3747 = vrot.slane %v3745, 4
      %v3748 = vor.u32 %v3747, %v3743
      %v3749 = vrot.slane %v3748, 4
      %v3751 = vshll.u32 %v3385, 16
      %v3753 = vrot.slane %v3751, 5
      %v3754 = vsel %vm1121, %v3749, %v3753
      %v3756 = vshrl.u32 %v3386, 16
      %v3758 = vrot.slane %v3756, 4
      %v3759 = vshll.u32 %v3386, 16
      %v3761 = vrot.slane %v3759, 5
      %v3762 = vor.u32 %v3758, %v3761
      %v3763 = vrot.slane %v3762, 4
      %v3765 = vshll.u32 %v3387, 16
      %v3767 = vrot.slane %v3765, 5
      %v3768 = vsel %vm1121, %v3763, %v3767
      %v3769 = vshrl.u32 %v3387, 16
      %v3771 = vrot.slane %v3769, 4
      %v3772 = vor.u32 %v3771, %v3767
      %v3773 = vrot.slane %v3772, 4
      %v3775 = vshll.u32 %v3388, 16
      %v3777 = vrot.slane %v3775, 5
      %v3778 = vsel %vm1121, %v3773, %v3777
      %v3827 = vrot.slane %v3341, 5
      %v3828 = vrot.slane %v3827, 4
      %v3829 = vrot.slane %v3342, 5
      %v3830 = vsel %vm1556, %v3828, %v3829
      %v3831 = vrot.slane %v3829, 4
      %v3832 = vrot.slane %v3343, 5
      %v3833 = vsel %vm1556, %v3831, %v3832
      %v3834 = vrot.slane %v3344, 5
      %v3835 = vrot.slane %v3834, 4
      %v3836 = vrot.slane %v3345, 5
      %v3837 = vsel %vm1556, %v3835, %v3836
      %v3838 = vrot.slane %v3836, 4
      %v3839 = vrot.slane %v3346, 5
      %v3840 = vsel %vm1556, %v3838, %v3839
      %v3841 = vrot.slane %v3347, 5
      %v3842 = vrot.slane %v3841, 4
      %v3843 = vrot.slane %v3348, 5
      %v3844 = vsel %vm1556, %v3842, %v3843
      %v3845 = vrot.slane %v3843, 4
      %v3846 = vrot.slane %v3349, 5
      %v3847 = vsel %vm1556, %v3845, %v3846
      %v3848 = vrot.slane %v3350, 5
      %v3849 = vrot.slane %v3848, 4
      %v3850 = vrot.slane %v3351, 5
      %v3851 = vsel %vm1556, %v3849, %v3850
      %v3852 = vrot.slane %v3850, 4
      %v3853 = vrot.slane %v3352, 5
      %v3854 = vsel %vm1556, %v3852, %v3853
      %v3855 = vrot.slane %v3353, 5
      %v3856 = vrot.slane %v3855, 4
      %v3857 = vrot.slane %v3354, 5
      %v3858 = vsel %vm1556, %v3856, %v3857
      %v3859 = vrot.slane %v3857, 4
      %v3860 = vrot.slane %v3355, 5
      %v3861 = vsel %vm1556, %v3859, %v3860
      %v3862 = vrot.slane %v3356, 5
      %v3863 = vrot.slane %v3862, 4
      %v3864 = vrot.slane %v3357, 5
      %v3865 = vsel %vm1556, %v3863, %v3864
      %v3866 = vrot.slane %v3864, 4
      %v3867 = vrot.slane %v3358, 5
      %v3868 = vsel %vm1556, %v3866, %v3867
      %v3869 = vrot.slane %v3359, 5
      %v3870 = vrot.slane %v3869, 4
      %v3871 = vrot.slane %v3360, 5
      %v3872 = vsel %vm1556, %v3870, %v3871
      %v3873 = vrot.slane %v3871, 4
      %v3874 = vrot.slane %v3361, 5
      %v3875 = vsel %vm1556, %v3873, %v3874
      %v3876 = vrot.slane %v3362, 5
      %v3877 = vrot.slane %v3876, 4
      %v3878 = vrot.slane %v3363, 5
      %v3879 = vsel %vm1556, %v3877, %v3878
      %v3880 = vrot.slane %v3878, 4
      %v3881 = vrot.slane %v3364, 5
      %v3882 = vsel %vm1556, %v3880, %v3881
      %v3883 = vrot.slane %v3365, 5
      %v3884 = vrot.slane %v3883, 4
      %v3885 = vrot.slane %v3366, 5
      %v3886 = vsel %vm1556, %v3884, %v3885
      %v3887 = vrot.slane %v3885, 4
      %v3888 = vrot.slane %v3367, 5
      %v3889 = vsel %vm1556, %v3887, %v3888
      %v3890 = vrot.slane %v3368, 5
      %v3891 = vrot.slane %v3890, 4
      %v3892 = vrot.slane %v3369, 5
      %v3893 = vsel %vm1556, %v3891, %v3892
      %v3894 = vrot.slane %v3892, 4
      %v3895 = vrot.slane %v3370, 5
      %v3896 = vsel %vm1556, %v3894, %v3895
      %v3897 = vrot.slane %v3371, 5
      %v3898 = vrot.slane %v3897, 4
      %v3899 = vrot.slane %v3372, 5
      %v3900 = vsel %vm1556, %v3898, %v3899
      %v3901 = vrot.slane %v3899, 4
      %v3902 = vrot.slane %v3373, 5
      %v3903 = vsel %vm1556, %v3901, %v3902
      %v3904 = vrot.slane %v3374, 5
      %v3905 = vrot.slane %v3904, 4
      %v3906 = vrot.slane %v3375, 5
      %v3907 = vsel %vm1556, %v3905, %v3906
      %v3908 = vrot.slane %v3906, 4
      %v3909 = vrot.slane %v3376, 5
      %v3910 = vsel %vm1556, %v3908, %v3909
      %v3911 = vrot.slane %v3377, 5
      %v3912 = vrot.slane %v3911, 4
      %v3913 = vrot.slane %v3378, 5
      %v3914 = vsel %vm1556, %v3912, %v3913
      %v3915 = vrot.slane %v3913, 4
      %v3916 = vrot.slane %v3379, 5
      %v3917 = vsel %vm1556, %v3915, %v3916
      %v3918 = vrot.slane %v3380, 5
      %v3919 = vrot.slane %v3918, 4
      %v3920 = vrot.slane %v3381, 5
      %v3921 = vsel %vm1556, %v3919, %v3920
      %v3922 = vrot.slane %v3920, 4
      %v3923 = vrot.slane %v3382, 5
      %v3924 = vsel %vm1556, %v3922, %v3923
      %v3925 = vrot.slane %v3383, 5
      %v3926 = vrot.slane %v3925, 4
      %v3927 = vrot.slane %v3384, 5
      %v3928 = vsel %vm1556, %v3926, %v3927
      %v3929 = vrot.slane %v3927, 4
      %v3930 = vrot.slane %v3385, 5
      %v3931 = vsel %vm1556, %v3929, %v3930
      %v3932 = vrot.slane %v3386, 5
      %v3933 = vrot.slane %v3932, 4
      %v3934 = vrot.slane %v3387, 5
      %v3935 = vsel %vm1556, %v3933, %v3934
      %v3936 = vrot.slane %v3934, 4
      %v3937 = vrot.slane %v3388, 5
      %v3938 = vsel %vm1556, %v3936, %v3937
      %v3940 = vshrl.u32 %v3389, 16
      %v3942 = vrot.slane %v3940, 4
      %v3943 = vshll.u32 %v3389, 16
      %v3945 = vrot.slane %v3943, 5
      %v3946 = vor.u32 %v3942, %v3945
      %v3947 = vrot.slane %v3946, 4
      %v3949 = vshll.u32 %v3390, 16
      %v3951 = vrot.slane %v3949, 5
      %v3952 = vsel %vm1121, %v3947, %v3951
      %v3953 = vshrl.u32 %v3390, 16
      %v3955 = vrot.slane %v3953, 4
      %v3956 = vor.u32 %v3955, %v3951
      %v3957 = vrot.slane %v3956, 4
      %v3959 = vshll.u32 %v3391, 16
      %v3961 = vrot.slane %v3959, 5
      %v3962 = vsel %vm1121, %v3957, %v3961
      %v3966 = vrot.slane %v3389, 5
      %v3967 = vrot.slane %v3966, 4
      %v3968 = vrot.slane %v3390, 5
      %v3969 = vsel %vm1556, %v3967, %v3968
      %v3970 = vrot.slane %v3968, 4
      %v3971 = vrot.slane %v3391, 5
      %v3972 = vsel %vm1556, %v3970, %v3971
      %v3974 = vshrl.u32 %v3392, 16
      %v3976 = vrot.slane %v3974, 4
      %v3977 = vshll.u32 %v3392, 16
      %v3979 = vrot.slane %v3977, 5
      %v3980 = vor.u32 %v3976, %v3979
      %v3981 = vrot.slane %v3980, 4
      %v3983 = vshll.u32 %v3393, 16
      %v3985 = vrot.slane %v3983, 5
      %v3986 = vsel %vm1121, %v3981, %v3985
      %v3987 = vshrl.u32 %v3393, 16
      %v3989 = vrot.slane %v3987, 4
      %v3990 = vor.u32 %v3989, %v3985
      %v3991 = vrot.slane %v3990, 4
      %v3993 = vshll.u32 %v3394, 16
      %v3995 = vrot.slane %v3993, 5
      %v3996 = vsel %vm1121, %v3991, %v3995
      %v4000 = vrot.slane %v3392, 5
      %v4001 = vrot.slane %v4000, 4
      %v4002 = vrot.slane %v3393, 5
      %v4003 = vsel %vm1556, %v4001, %v4002
      %v4004 = vrot.slane %v4002, 4
      %v4005 = vrot.slane %v3394, 5
      %v4006 = vsel %vm1556, %v4004, %v4005
      %v4007 = vunpack.c.l.b16 %v3341
      %v4008 = vunpack.c.l.b16 %v3342
      %v4009 = vunpack.c.l.b16 %v3344
      %v4010 = vunpack.c.l.b16 %v3345
      %v4011 = vunpack.c.l.b16 %v3347
      %v4012 = vunpack.c.l.b16 %v3348
      %v4013 = vunpack.c.l.b16 %v3350
      %v4014 = vunpack.c.l.b16 %v3351
      %v4015 = vunpack.c.l.b16 %v3353
      %v4016 = vunpack.c.l.b16 %v3354
      %v4017 = vunpack.c.l.b16 %v3356
      %v4018 = vunpack.c.l.b16 %v3357
      %v4019 = vunpack.c.l.b16 %v3359
      %v4020 = vunpack.c.l.b16 %v3360
      %v4021 = vunpack.c.l.b16 %v3362
      %v4022 = vunpack.c.l.b16 %v3363
      %v4023 = vunpack.c.l.b16 %v3365
      %v4024 = vunpack.c.l.b16 %v3366
      %v4025 = vunpack.c.l.b16 %v3368
      %v4026 = vunpack.c.l.b16 %v3369
      %v4027 = vunpack.c.l.b16 %v3371
      %v4028 = vunpack.c.l.b16 %v3372
      %v4029 = vunpack.c.l.b16 %v3374
      %v4030 = vunpack.c.l.b16 %v3375
      %v4031 = vunpack.c.l.b16 %v3377
      %v4032 = vunpack.c.l.b16 %v3378
      %v4033 = vunpack.c.l.b16 %v3380
      %v4034 = vunpack.c.l.b16 %v3381
      %v4035 = vunpack.c.l.b16 %v3383
      %v4036 = vunpack.c.l.b16 %v3384
      %v4037 = vunpack.c.l.b16 %v3386
      %v4038 = vunpack.c.l.b16 %v3387
      %v4039 = vpack.c.b16 %v4008, %v4007
      %v4040 = vpack.c.b16 %v4010, %v4009
      %v4041 = vpack.c.b16 %v4012, %v4011
      %v4042 = vpack.c.b16 %v4014, %v4013
      %v4043 = vpack.c.b16 %v4016, %v4015
      %v4044 = vpack.c.b16 %v4018, %v4017
      %v4045 = vpack.c.b16 %v4020, %v4019
      %v4046 = vpack.c.b16 %v4022, %v4021
      %v4047 = vpack.c.b16 %v4024, %v4023
      %v4048 = vpack.c.b16 %v4026, %v4025
      %v4049 = vpack.c.b16 %v4028, %v4027
      %v4050 = vpack.c.b16 %v4030, %v4029
      %v4051 = vpack.c.b16 %v4032, %v4031
      %v4052 = vpack.c.b16 %v4034, %v4033
      %v4053 = vpack.c.b16 %v4036, %v4035
      %v4054 = vpack.c.b16 %v4038, %v4037
      %v4055 = vunpack.c.l.b16 %v3408
      %v4056 = vunpack.c.l.b16 %v3418
      %v4057 = vunpack.c.l.b16 %v3432
      %v4058 = vunpack.c.l.b16 %v3442
      %v4059 = vunpack.c.l.b16 %v3456
      %v4060 = vunpack.c.l.b16 %v3466
      %v4061 = vunpack.c.l.b16 %v3480
      %v4062 = vunpack.c.l.b16 %v3490
      %v4063 = vunpack.c.l.b16 %v3504
      %v4064 = vunpack.c.l.b16 %v3514
      %v4065 = vunpack.c.l.b16 %v3528
      %v4066 = vunpack.c.l.b16 %v3538
      %v4067 = vunpack.c.l.b16 %v3552
      %v4068 = vunpack.c.l.b16 %v3562
      %v4069 = vunpack.c.l.b16 %v3576
      %v4070 = vunpack.c.l.b16 %v3586
      %v4071 = vunpack.c.l.b16 %v3600
      %v4072 = vunpack.c.l.b16 %v3610
      %v4073 = vunpack.c.l.b16 %v3624
      %v4074 = vunpack.c.l.b16 %v3634
      %v4075 = vunpack.c.l.b16 %v3648
      %v4076 = vunpack.c.l.b16 %v3658
      %v4077 = vunpack.c.l.b16 %v3672
      %v4078 = vunpack.c.l.b16 %v3682
      %v4079 = vunpack.c.l.b16 %v3696
      %v4080 = vunpack.c.l.b16 %v3706
      %v4081 = vunpack.c.l.b16 %v3720
      %v4082 = vunpack.c.l.b16 %v3730
      %v4083 = vunpack.c.l.b16 %v3744
      %v4084 = vunpack.c.l.b16 %v3754
      %v4085 = vunpack.c.l.b16 %v3768
      %v4086 = vunpack.c.l.b16 %v3778
      %v4087 = vpack.c.b16 %v4056, %v4055
      %v4088 = vpack.c.b16 %v4058, %v4057
      %v4089 = vpack.c.b16 %v4060, %v4059
      %v4090 = vpack.c.b16 %v4062, %v4061
      %v4091 = vpack.c.b16 %v4064, %v4063
      %v4092 = vpack.c.b16 %v4066, %v4065
      %v4093 = vpack.c.b16 %v4068, %v4067
      %v4094 = vpack.c.b16 %v4070, %v4069
      %v4095 = vpack.c.b16 %v4072, %v4071
      %v4096 = vpack.c.b16 %v4074, %v4073
      %v4097 = vpack.c.b16 %v4076, %v4075
      %v4098 = vpack.c.b16 %v4078, %v4077
      %v4099 = vpack.c.b16 %v4080, %v4079
      %v4100 = vpack.c.b16 %v4082, %v4081
      %v4101 = vpack.c.b16 %v4084, %v4083
      %v4102 = vpack.c.b16 %v4086, %v4085
      %4103 = vrot.lane.b32.xlu0 %v4087, 16
      %v4104 = vpop.permute.xlu0 %4103
      %4105 = vrot.lane.b32.xlu0 %v4088, 16
      %v4106 = vpop.permute.xlu0 %4105
      %4107 = vrot.lane.b32.xlu0 %v4089, 16
      %v4108 = vpop.permute.xlu0 %4107
      %4109 = vrot.lane.b32.xlu0 %v4090, 16
      %v4110 = vpop.permute.xlu0 %4109
      %4111 = vrot.lane.b32.xlu0 %v4091, 16
      %v4112 = vpop.permute.xlu0 %4111
      %4113 = vrot.lane.b32.xlu0 %v4092, 16
      %v4114 = vpop.permute.xlu0 %4113
      %4115 = vrot.lane.b32.xlu0 %v4093, 16
      %v4116 = vpop.permute.xlu0 %4115
      %4117 = vrot.lane.b32.xlu0 %v4094, 16
      %v4118 = vpop.permute.xlu0 %4117
      %4119 = vrot.lane.b32.xlu0 %v4095, 16
      %v4120 = vpop.permute.xlu0 %4119
      %4121 = vrot.lane.b32.xlu0 %v4096, 16
      %v4122 = vpop.permute.xlu0 %4121
      %4123 = vrot.lane.b32.xlu0 %v4097, 16
      %v4124 = vpop.permute.xlu0 %4123
      %4125 = vrot.lane.b32.xlu0 %v4098, 16
      %v4126 = vpop.permute.xlu0 %4125
      %4127 = vrot.lane.b32.xlu0 %v4099, 16
      %v4128 = vpop.permute.xlu0 %4127
      %4129 = vrot.lane.b32.xlu0 %v4100, 16
      %v4130 = vpop.permute.xlu0 %4129
      %4131 = vrot.lane.b32.xlu0 %v4101, 16
      %v4132 = vpop.permute.xlu0 %4131
      %4133 = vrot.lane.b32.xlu0 %v4102, 16
      %v4134 = vpop.permute.xlu0 %4133
      %v4135 = vunpack.c.l.b16 %v3830
      %v4136 = vunpack.c.l.b16 %v3833
      %v4137 = vunpack.c.l.b16 %v3837
      %v4138 = vunpack.c.l.b16 %v3840
      %v4139 = vunpack.c.l.b16 %v3844
      %v4140 = vunpack.c.l.b16 %v3847
      %v4141 = vunpack.c.l.b16 %v3851
      %v4142 = vunpack.c.l.b16 %v3854
      %v4143 = vunpack.c.l.b16 %v3858
      %v4144 = vunpack.c.l.b16 %v3861
      %v4145 = vunpack.c.l.b16 %v3865
      %v4146 = vunpack.c.l.b16 %v3868
      %v4147 = vunpack.c.l.b16 %v3872
      %v4148 = vunpack.c.l.b16 %v3875
      %v4149 = vunpack.c.l.b16 %v3879
      %v4150 = vunpack.c.l.b16 %v3882
      %v4151 = vunpack.c.l.b16 %v3886
      %v4152 = vunpack.c.l.b16 %v3889
      %v4153 = vunpack.c.l.b16 %v3893
      %v4154 = vunpack.c.l.b16 %v3896
      %v4155 = vunpack.c.l.b16 %v3900
      %v4156 = vunpack.c.l.b16 %v3903
      %v4157 = vunpack.c.l.b16 %v3907
      %v4158 = vunpack.c.l.b16 %v3910
      %v4159 = vunpack.c.l.b16 %v3914
      %v4160 = vunpack.c.l.b16 %v3917
      %v4161 = vunpack.c.l.b16 %v3921
      %v4162 = vunpack.c.l.b16 %v3924
      %v4163 = vunpack.c.l.b16 %v3928
      %v4164 = vunpack.c.l.b16 %v3931
      %v4165 = vunpack.c.l.b16 %v3935
      %v4166 = vunpack.c.l.b16 %v3938
      %v4167 = vpack.c.b16 %v4136, %v4135
      %v4168 = vpack.c.b16 %v4138, %v4137
      %v4169 = vpack.c.b16 %v4140, %v4139
      %v4170 = vpack.c.b16 %v4142, %v4141
      %v4171 = vpack.c.b16 %v4144, %v4143
      %v4172 = vpack.c.b16 %v4146, %v4145
      %v4173 = vpack.c.b16 %v4148, %v4147
      %v4174 = vpack.c.b16 %v4150, %v4149
      %v4175 = vpack.c.b16 %v4152, %v4151
      %v4176 = vpack.c.b16 %v4154, %v4153
      %v4177 = vpack.c.b16 %v4156, %v4155
      %v4178 = vpack.c.b16 %v4158, %v4157
      %v4179 = vpack.c.b16 %v4160, %v4159
      %v4180 = vpack.c.b16 %v4162, %v4161
      %v4181 = vpack.c.b16 %v4164, %v4163
      %v4182 = vpack.c.b16 %v4166, %v4165
      %4183 = vrot.lane.b32.xlu0 %v4167, 32
      %v4184 = vpop.permute.xlu0 %4183
      %4185 = vrot.lane.b32.xlu0 %v4168, 32
      %v4186 = vpop.permute.xlu0 %4185
      %4187 = vrot.lane.b32.xlu0 %v4169, 32
      %v4188 = vpop.permute.xlu0 %4187
      %4189 = vrot.lane.b32.xlu0 %v4170, 32
      %v4190 = vpop.permute.xlu0 %4189
      %4191 = vrot.lane.b32.xlu0 %v4171, 32
      %v4192 = vpop.permute.xlu0 %4191
      %4193 = vrot.lane.b32.xlu0 %v4172, 32
      %v4194 = vpop.permute.xlu0 %4193
      %4195 = vrot.lane.b32.xlu0 %v4173, 32
      %v4196 = vpop.permute.xlu0 %4195
      %4197 = vrot.lane.b32.xlu0 %v4174, 32
      %v4198 = vpop.permute.xlu0 %4197
      %4199 = vrot.lane.b32.xlu0 %v4175, 32
      %v4200 = vpop.permute.xlu0 %4199
      %4201 = vrot.lane.b32.xlu0 %v4176, 32
      %v4202 = vpop.permute.xlu0 %4201
      %4203 = vrot.lane.b32.xlu0 %v4177, 32
      %v4204 = vpop.permute.xlu0 %4203
      %4205 = vrot.lane.b32.xlu0 %v4178, 32
      %v4206 = vpop.permute.xlu0 %4205
      %4207 = vrot.lane.b32.xlu0 %v4179, 32
      %v4208 = vpop.permute.xlu0 %4207
      %4209 = vrot.lane.b32.xlu0 %v4180, 32
      %v4210 = vpop.permute.xlu0 %4209
      %4211 = vrot.lane.b32.xlu0 %v4181, 32
      %v4212 = vpop.permute.xlu0 %4211
      %4213 = vrot.lane.b32.xlu0 %v4182, 32
      %v4214 = vpop.permute.xlu0 %4213
      %v4215 = vunpack.c.l.b16 %v3389
      %v4216 = vunpack.c.l.b16 %v3390
      %v4217 = vpack.c.b16 %v4216, %v4215
      %4218 = vrot.lane.b32.xlu0 %v4040, 48
      %v4219 = vpop.permute.xlu0 %4218
      %4220 = vrot.lane.b32.xlu0 %v4041, 48
      %v4221 = vpop.permute.xlu0 %4220
      %4222 = vrot.lane.b32.xlu0 %v4042, 48
      %v4223 = vpop.permute.xlu0 %4222
      %4224 = vrot.lane.b32.xlu0 %v4043, 48
      %v4225 = vpop.permute.xlu0 %4224
      %4226 = vrot.lane.b32.xlu0 %v4044, 48
      %v4227 = vpop.permute.xlu0 %4226
      %4228 = vrot.lane.b32.xlu0 %v4045, 48
      %v4229 = vpop.permute.xlu0 %4228
      %4230 = vrot.lane.b32.xlu0 %v4046, 48
      %v4231 = vpop.permute.xlu0 %4230
      %4232 = vrot.lane.b32.xlu0 %v4047, 48
      %v4233 = vpop.permute.xlu0 %4232
      %4234 = vrot.lane.b32.xlu0 %v4048, 48
      %v4235 = vpop.permute.xlu0 %4234
      %4236 = vrot.lane.b32.xlu0 %v4049, 48
      %v4237 = vpop.permute.xlu0 %4236
      %4238 = vrot.lane.b32.xlu0 %v4050, 48
      %v4239 = vpop.permute.xlu0 %4238
      %4240 = vrot.lane.b32.xlu0 %v4051, 48
      %v4241 = vpop.permute.xlu0 %4240
      %4242 = vrot.lane.b32.xlu0 %v4052, 48
      %v4243 = vpop.permute.xlu0 %4242
      %4244 = vrot.lane.b32.xlu0 %v4053, 48
      %v4245 = vpop.permute.xlu0 %4244
      %4246 = vrot.lane.b32.xlu0 %v4054, 48
      %v4247 = vpop.permute.xlu0 %4246
      %4248 = vrot.lane.b32.xlu0 %v4217, 48
      %v4249 = vpop.permute.xlu0 %4248
      %v4250 = vunpack.c.l.b16 %v3952
      %v4251 = vunpack.c.l.b16 %v3962
      %v4252 = vpack.c.b16 %v4251, %v4250
      %4253 = vrot.lane.b32.xlu0 %v4088, 64
      %v4254 = vpop.permute.xlu0 %4253
      %4255 = vrot.lane.b32.xlu0 %v4089, 64
      %v4256 = vpop.permute.xlu0 %4255
      %4257 = vrot.lane.b32.xlu0 %v4090, 64
      %v4258 = vpop.permute.xlu0 %4257
      %4259 = vrot.lane.b32.xlu0 %v4091, 64
      %v4260 = vpop.permute.xlu0 %4259
      %4261 = vrot.lane.b32.xlu0 %v4092, 64
      %v4262 = vpop.permute.xlu0 %4261
      %4263 = vrot.lane.b32.xlu0 %v4093, 64
      %v4264 = vpop.permute.xlu0 %4263
      %4265 = vrot.lane.b32.xlu0 %v4094, 64
      %v4266 = vpop.permute.xlu0 %4265
      %4267 = vrot.lane.b32.xlu0 %v4095, 64
      %v4268 = vpop.permute.xlu0 %4267
      %4269 = vrot.lane.b32.xlu0 %v4096, 64
      %v4270 = vpop.permute.xlu0 %4269
      %4271 = vrot.lane.b32.xlu0 %v4097, 64
      %v4272 = vpop.permute.xlu0 %4271
      %4273 = vrot.lane.b32.xlu0 %v4098, 64
      %v4274 = vpop.permute.xlu0 %4273
      %4275 = vrot.lane.b32.xlu0 %v4099, 64
      %v4276 = vpop.permute.xlu0 %4275
      %4277 = vrot.lane.b32.xlu0 %v4100, 64
      %v4278 = vpop.permute.xlu0 %4277
      %4279 = vrot.lane.b32.xlu0 %v4101, 64
      %v4280 = vpop.permute.xlu0 %4279
      %4281 = vrot.lane.b32.xlu0 %v4102, 64
      %v4282 = vpop.permute.xlu0 %4281
      %4283 = vrot.lane.b32.xlu0 %v4252, 64
      %v4284 = vpop.permute.xlu0 %4283
      %v4285 = vunpack.c.l.b16 %v3969
      %v4286 = vunpack.c.l.b16 %v3972
      %v4287 = vpack.c.b16 %v4286, %v4285
      %4288 = vrot.lane.b32.xlu0 %v4168, 80
      %v4289 = vpop.permute.xlu0 %4288
      %4290 = vrot.lane.b32.xlu0 %v4169, 80
      %v4291 = vpop.permute.xlu0 %4290
      %4292 = vrot.lane.b32.xlu0 %v4170, 80
      %v4293 = vpop.permute.xlu0 %4292
      %4294 = vrot.lane.b32.xlu0 %v4171, 80
      %v4295 = vpop.permute.xlu0 %4294
      %4296 = vrot.lane.b32.xlu0 %v4172, 80
      %v4297 = vpop.permute.xlu0 %4296
      %4298 = vrot.lane.b32.xlu0 %v4173, 80
      %v4299 = vpop.permute.xlu0 %4298
      %4300 = vrot.lane.b32.xlu0 %v4174, 80
      %v4301 = vpop.permute.xlu0 %4300
      %4302 = vrot.lane.b32.xlu0 %v4175, 80
      %v4303 = vpop.permute.xlu0 %4302
      %4304 = vrot.lane.b32.xlu0 %v4176, 80
      %v4305 = vpop.permute.xlu0 %4304
      %4306 = vrot.lane.b32.xlu0 %v4177, 80
      %v4307 = vpop.permute.xlu0 %4306
      %4308 = vrot.lane.b32.xlu0 %v4178, 80
      %v4309 = vpop.permute.xlu0 %4308
      %4310 = vrot.lane.b32.xlu0 %v4179, 80
      %v4311 = vpop.permute.xlu0 %4310
      %4312 = vrot.lane.b32.xlu0 %v4180, 80
      %v4313 = vpop.permute.xlu0 %4312
      %4314 = vrot.lane.b32.xlu0 %v4181, 80
      %v4315 = vpop.permute.xlu0 %4314
      %4316 = vrot.lane.b32.xlu0 %v4182, 80
      %v4317 = vpop.permute.xlu0 %4316
      %4318 = vrot.lane.b32.xlu0 %v4287, 80
      %v4319 = vpop.permute.xlu0 %4318
      %v4320 = vunpack.c.l.b16 %v3392
      %v4321 = vunpack.c.l.b16 %v3393
      %v4322 = vpack.c.b16 %v4321, %v4320
      %4323 = vrot.lane.b32.xlu0 %v4041, 96
      %v4324 = vpop.permute.xlu0 %4323
      %4325 = vrot.lane.b32.xlu0 %v4042, 96
      %v4326 = vpop.permute.xlu0 %4325
      %4327 = vrot.lane.b32.xlu0 %v4043, 96
      %v4328 = vpop.permute.xlu0 %4327
      %4329 = vrot.lane.b32.xlu0 %v4044, 96
      %v4330 = vpop.permute.xlu0 %4329
      %4331 = vrot.lane.b32.xlu0 %v4045, 96
      %v4332 = vpop.permute.xlu0 %4331
      %4333 = vrot.lane.b32.xlu0 %v4046, 96
      %v4334 = vpop.permute.xlu0 %4333
      %4335 = vrot.lane.b32.xlu0 %v4047, 96
      %v4336 = vpop.permute.xlu0 %4335
      %4337 = vrot.lane.b32.xlu0 %v4048, 96
      %v4338 = vpop.permute.xlu0 %4337
      %4339 = vrot.lane.b32.xlu0 %v4049, 96
      %v4340 = vpop.permute.xlu0 %4339
      %4341 = vrot.lane.b32.xlu0 %v4050, 96
      %v4342 = vpop.permute.xlu0 %4341
      %4343 = vrot.lane.b32.xlu0 %v4051, 96
      %v4344 = vpop.permute.xlu0 %4343
      %4345 = vrot.lane.b32.xlu0 %v4052, 96
      %v4346 = vpop.permute.xlu0 %4345
      %4347 = vrot.lane.b32.xlu0 %v4053, 96
      %v4348 = vpop.permute.xlu0 %4347
      %4349 = vrot.lane.b32.xlu0 %v4054, 96
      %v4350 = vpop.permute.xlu0 %4349
      %4351 = vrot.lane.b32.xlu0 %v4217, 96
      %v4352 = vpop.permute.xlu0 %4351
      %4353 = vrot.lane.b32.xlu0 %v4322, 96
      %v4354 = vpop.permute.xlu0 %4353
      %v4355 = vunpack.c.l.b16 %v3986
      %v4356 = vunpack.c.l.b16 %v3996
      %v4357 = vpack.c.b16 %v4356, %v4355
      %4358 = vrot.lane.b32.xlu0 %v4089, 112
      %v4359 = vpop.permute.xlu0 %4358
      %4360 = vrot.lane.b32.xlu0 %v4090, 112
      %v4361 = vpop.permute.xlu0 %4360
      %4362 = vrot.lane.b32.xlu0 %v4091, 112
      %v4363 = vpop.permute.xlu0 %4362
      %4364 = vrot.lane.b32.xlu0 %v4092, 112
      %v4365 = vpop.permute.xlu0 %4364
      %4366 = vrot.lane.b32.xlu0 %v4093, 112
      %v4367 = vpop.permute.xlu0 %4366
      %4368 = vrot.lane.b32.xlu0 %v4094, 112
      %v4369 = vpop.permute.xlu0 %4368
      %4370 = vrot.lane.b32.xlu0 %v4095, 112
      %v4371 = vpop.permute.xlu0 %4370
      %4372 = vrot.lane.b32.xlu0 %v4096, 112
      %v4373 = vpop.permute.xlu0 %4372
      %4374 = vrot.lane.b32.xlu0 %v4097, 112
      %v4375 = vpop.permute.xlu0 %4374
      %4376 = vrot.lane.b32.xlu0 %v4098, 112
      %v4377 = vpop.permute.xlu0 %4376
      %4378 = vrot.lane.b32.xlu0 %v4099, 112
      %v4379 = vpop.permute.xlu0 %4378
      %4380 = vrot.lane.b32.xlu0 %v4100, 112
      %v4381 = vpop.permute.xlu0 %4380
      %4382 = vrot.lane.b32.xlu0 %v4101, 112
      %v4383 = vpop.permute.xlu0 %4382
      %4384 = vrot.lane.b32.xlu0 %v4102, 112
      %v4385 = vpop.permute.xlu0 %4384
      %4386 = vrot.lane.b32.xlu0 %v4252, 112
      %v4387 = vpop.permute.xlu0 %4386
      %4388 = vrot.lane.b32.xlu0 %v4357, 112
      %v4389 = vpop.permute.xlu0 %4388
      %v4390 = vunpack.c.l.b16 %v4003
      %v4391 = vunpack.c.l.b16 %v4006
      %v4392 = vpack.c.b16 %v4391, %v4390
      %vm4393 = vcmask 130048
      %v4396 = vsel %vm4393, %v4039, %v4104
      %v4399 = vsel %vm4393, %v4040, %v4106
      %v4402 = vsel %vm4393, %v4041, %v4108
      %v4405 = vsel %vm4393, %v4042, %v4110
      %v4408 = vsel %vm4393, %v4043, %v4112
      %v4411 = vsel %vm4393, %v4044, %v4114
      %v4414 = vsel %vm4393, %v4045, %v4116
      %v4417 = vsel %vm4393, %v4046, %v4118
      %v4420 = vsel %vm4393, %v4047, %v4120
      %v4423 = vsel %vm4393, %v4048, %v4122
      %v4426 = vsel %vm4393, %v4049, %v4124
      %v4429 = vsel %vm4393, %v4050, %v4126
      %v4432 = vsel %vm4393, %v4051, %v4128
      %v4435 = vsel %vm4393, %v4052, %v4130
      %v4438 = vsel %vm4393, %v4053, %v4132
      %v4441 = vsel %vm4393, %v4054, %v4134
      %vm4442 = vcmask 261120
      %v4444 = vsel %vm4442, %v4396, %v4184
      %v4446 = vsel %vm4442, %v4399, %v4186
      %v4448 = vsel %vm4442, %v4402, %v4188
      %v4450 = vsel %vm4442, %v4405, %v4190
      %v4452 = vsel %vm4442, %v4408, %v4192
      %v4454 = vsel %vm4442, %v4411, %v4194
      %v4456 = vsel %vm4442, %v4414, %v4196
      %v4458 = vsel %vm4442, %v4417, %v4198
      %v4460 = vsel %vm4442, %v4420, %v4200
      %v4462 = vsel %vm4442, %v4423, %v4202
      %v4464 = vsel %vm4442, %v4426, %v4204
      %v4466 = vsel %vm4442, %v4429, %v4206
      %v4468 = vsel %vm4442, %v4432, %v4208
      %v4470 = vsel %vm4442, %v4435, %v4210
      %v4472 = vsel %vm4442, %v4438, %v4212
      %v4474 = vsel %vm4442, %v4441, %v4214
      %vm4475 = vcmask 392192
      %v4477 = vsel %vm4475, %v4444, %v4219
      %v4479 = vsel %vm4475, %v4446, %v4221
      %v4481 = vsel %vm4475, %v4448, %v4223
      %v4483 = vsel %vm4475, %v4450, %v4225
      %v4485 = vsel %vm4475, %v4452, %v4227
      %v4487 = vsel %vm4475, %v4454, %v4229
      %v4489 = vsel %vm4475, %v4456, %v4231
      %v4491 = vsel %vm4475, %v4458, %v4233
      %v4493 = vsel %vm4475, %v4460, %v4235
      %v4495 = vsel %vm4475, %v4462, %v4237
      %v4497 = vsel %vm4475, %v4464, %v4239
      %v4499 = vsel %vm4475, %v4466, %v4241
      %v4501 = vsel %vm4475, %v4468, %v4243
      %v4503 = vsel %vm4475, %v4470, %v4245
      %v4505 = vsel %vm4475, %v4472, %v4247
      %v4507 = vsel %vm4475, %v4474, %v4249
      %vm4508 = vcmask 523264
      %v4510 = vsel %vm4508, %v4477, %v4254
      %v4512 = vsel %vm4508, %v4479, %v4256
      %v4514 = vsel %vm4508, %v4481, %v4258
      %v4516 = vsel %vm4508, %v4483, %v4260
      %v4518 = vsel %vm4508, %v4485, %v4262
      %v4520 = vsel %vm4508, %v4487, %v4264
      %v4522 = vsel %vm4508, %v4489, %v4266
      %v4524 = vsel %vm4508, %v4491, %v4268
      %v4526 = vsel %vm4508, %v4493, %v4270
      %v4528 = vsel %vm4508, %v4495, %v4272
      %v4530 = vsel %vm4508, %v4497, %v4274
      %v4532 = vsel %vm4508, %v4499, %v4276
      %v4534 = vsel %vm4508, %v4501, %v4278
      %v4536 = vsel %vm4508, %v4503, %v4280
      %v4538 = vsel %vm4508, %v4505, %v4282
      %v4540 = vsel %vm4508, %v4507, %v4284
      %vm4541 = vcmask 654336
      %v4543 = vsel %vm4541, %v4510, %v4289
      %v4545 = vsel %vm4541, %v4512, %v4291
      %v4547 = vsel %vm4541, %v4514, %v4293
      %v4549 = vsel %vm4541, %v4516, %v4295
      %v4551 = vsel %vm4541, %v4518, %v4297
      %v4553 = vsel %vm4541, %v4520, %v4299
      %v4555 = vsel %vm4541, %v4522, %v4301
      %v4557 = vsel %vm4541, %v4524, %v4303
      %v4559 = vsel %vm4541, %v4526, %v4305
      %v4561 = vsel %vm4541, %v4528, %v4307
      %v4563 = vsel %vm4541, %v4530, %v4309
      %v4565 = vsel %vm4541, %v4532, %v4311
      %v4567 = vsel %vm4541, %v4534, %v4313
      %v4569 = vsel %vm4541, %v4536, %v4315
      %v4571 = vsel %vm4541, %v4538, %v4317
      %v4573 = vsel %vm4541, %v4540, %v4319
      %vm4574 = vcmask 785408
      %v4576 = vsel %vm4574, %v4543, %v4324
      %v4578 = vsel %vm4574, %v4545, %v4326
      %v4580 = vsel %vm4574, %v4547, %v4328
      %v4582 = vsel %vm4574, %v4549, %v4330
      %v4584 = vsel %vm4574, %v4551, %v4332
      %v4586 = vsel %vm4574, %v4553, %v4334
      %v4588 = vsel %vm4574, %v4555, %v4336
      %v4590 = vsel %vm4574, %v4557, %v4338
      %v4592 = vsel %vm4574, %v4559, %v4340
      %v4594 = vsel %vm4574, %v4561, %v4342
      %v4596 = vsel %vm4574, %v4563, %v4344
      %v4598 = vsel %vm4574, %v4565, %v4346
      %v4600 = vsel %vm4574, %v4567, %v4348
      %v4602 = vsel %vm4574, %v4569, %v4350
      %v4604 = vsel %vm4574, %v4571, %v4352
      %v4606 = vsel %vm4574, %v4573, %v4354
      %vm4607 = vcmask 916480
      %v4609 = vsel %vm4607, %v4576, %v4359
      %v4612 = vsel %vm4607, %v4578, %v4361
      %v4615 = vsel %vm4607, %v4580, %v4363
      %v4618 = vsel %vm4607, %v4582, %v4365
      %v4621 = vsel %vm4607, %v4584, %v4367
      %v4624 = vsel %vm4607, %v4586, %v4369
      %v4627 = vsel %vm4607, %v4588, %v4371
      %v4630 = vsel %vm4607, %v4590, %v4373
      %v4633 = vsel %vm4607, %v4592, %v4375
      %v4636 = vsel %vm4607, %v4594, %v4377
      %v4639 = vsel %vm4607, %v4596, %v4379
      %v4642 = vsel %vm4607, %v4598, %v4381
      %v4645 = vsel %vm4607, %v4600, %v4383
      %v4648 = vsel %vm4607, %v4602, %v4385
      %v4651 = vsel %vm4607, %v4604, %v4387
      %v4654 = vsel %vm4607, %v4606, %v4389
      %v4656 = vld [vmem:[%s3] sm:$0xf]
      %v4657 = vld [vmem:[%s3 + $0x4] sm:$0xf]
      %v4658 = vld [vmem:[%s3 + $0x8] sm:$0xf]
      %v4659 = vld [vmem:[%s3 + $0xc] sm:$0xf]
      %v4660 = vld [vmem:[%s3 + $0x10] sm:$0xf]
      %v4661 = vld [vmem:[%s3 + $0x14] sm:$0xf]
      %v4662 = vld [vmem:[%s3 + $0x18] sm:$0xf]
      %v4663 = vld [vmem:[%s3 + $0x1c] sm:$0xf]
      %v4664 = vld [vmem:[%s3 + $0x20] sm:$0xf]
      %v4665 = vld [vmem:[%s3 + $0x24] sm:$0xf]
      %v4666 = vld [vmem:[%s3 + $0x28] sm:$0xf]
      %v4667 = vld [vmem:[%s3 + $0x2c] sm:$0xf]
      %v4668 = vld [vmem:[%s3 + $0x30] sm:$0xf]
      %v4669 = vld [vmem:[%s3 + $0x34] sm:$0xf]
      %v4670 = vld [vmem:[%s3 + $0x38] sm:$0xf]
      %v4671 = vld [vmem:[%s3 + $0x3c] sm:$0xf]
      %v4672 = vld [vmem:[%s3 + $0x40] sm:$0xf]
      %v4673 = vld [vmem:[%s3 + $0x44] sm:$0xf]
      %v4674 = vld [vmem:[%s4] sm:$0x1]
      %v4676 = vlaneseq
      %v4677 = vshrl.u32 %v4676, 7
      %v4678 = vsub.s32 0, %v4677
      %v4679 = vrot.slane %v4674, %v4678
      %v4699 = vunpack.c.l.b16 %v4656
      %v4700 = vunpack.c.l.b16 %v4657
      %v4701 = vunpack.c.l.b16 %v4658
      %v4702 = vunpack.c.l.b16 %v4659
      %v4703 = vunpack.c.l.b16 %v4660
      %v4704 = vunpack.c.l.b16 %v4661
      %v4705 = vunpack.c.l.b16 %v4662
      %v4706 = vunpack.c.l.b16 %v4663
      %v4707 = vunpack.c.l.b16 %v4664
      %v4708 = vunpack.c.l.b16 %v4665
      %v4709 = vunpack.c.l.b16 %v4666
      %v4710 = vunpack.c.l.b16 %v4667
      %v4711 = vunpack.c.l.b16 %v4668
      %v4712 = vunpack.c.l.b16 %v4669
      %v4713 = vunpack.c.l.b16 %v4670
      %v4714 = vunpack.c.l.b16 %v4671
      %v4715 = vunpack.c.l.b16 %v4672
      %v4716 = vunpack.c.l.b16 %v4673
      %v4717 = vpack.c.b16 %v4700, %v4699
      %v4718 = vpack.c.b16 %v4702, %v4701
      %v4719 = vpack.c.b16 %v4704, %v4703
      %v4720 = vpack.c.b16 %v4706, %v4705
      %v4721 = vpack.c.b16 %v4708, %v4707
      %v4722 = vpack.c.b16 %v4710, %v4709
      %v4723 = vpack.c.b16 %v4712, %v4711
      %v4724 = vpack.c.b16 %v4714, %v4713
      %v4725 = vpack.c.b16 %v4716, %v4715
      %v4736 = vsel %vm4393, %v4169, 0
      %v4739 = vsel %vm4393, %v4170, 0
      %v4742 = vsel %vm4393, %v4171, 0
      %v4745 = vsel %vm4393, %v4172, 0
      %v4748 = vsel %vm4393, %v4173, 0
      %v4751 = vsel %vm4393, %v4174, 0
      %v4754 = vsel %vm4393, %v4175, 0
      %v4757 = vsel %vm4393, %v4176, 0
      %v4760 = vsel %vm4393, %v4177, 0
      %v4763 = vsel %vm4393, %v4178, 0
      %v4766 = vsel %vm4393, %v4179, 0
      %v4769 = vsel %vm4393, %v4180, 0
      %v4772 = vsel %vm4393, %v4181, 0
      %v4775 = vsel %vm4393, %v4182, 0
      %v4778 = vsel %vm4393, %v4287, 0
      %v4781 = vsel %vm4393, %v4392, 0
      %4783 = vmatprep.subr.bf16.mxu0 0
      %4784 = vmatpush1.bf16.msra.mxu0 %v4717
      %4785 = vmatprep.subr.bf16.mxu0 0
      %4786 = vmatpush1.bf16.msra.mxu0 %v4718
      %4787 = vmatprep.subr.bf16.mxu0 0
      %4788 = vmatpush1.bf16.msra.mxu0 %v4719
      %4789 = vmatprep.subr.bf16.mxu0 0
      %4790 = vmatpush1.bf16.msra.mxu0 %v4720
      %4791 = vmatprep.subr.bf16.mxu0 0
      %4792 = vmatpush1.bf16.msra.mxu0 %v4721
      %4793 = vmatprep.subr.bf16.mxu0 0
      %4794 = vmatpush1.bf16.msra.mxu0 %v4722
      %4795 = vmatprep.subr.bf16.mxu0 0
      %4796 = vmatpush1.bf16.msra.mxu0 %v4723
      %4797 = vmatprep.subr.bf16.mxu0 0
      %4798 = vmatpush1.bf16.msra.mxu0 %v4724
      %4799 = vmatprep.subr.bf16.mxu0 0
      %4800 = vmatpush1.bf16.msra.mxu0 %v4725
      %4801 = vmatprep.subr.bf16.mxu0 0
      %4802 = vmatpush1.bf16.msra.mxu0 0
      %4803 = vmatprep.subr.bf16.mxu0 0
      %4804 = vmatpush1.bf16.msra.mxu0 0
      %4805 = vmatprep.subr.bf16.mxu0 0
      %4806 = vmatpush1.bf16.msra.mxu0 0
      %4807 = vmatprep.subr.bf16.mxu0 0
      %4808 = vmatpush1.bf16.msra.mxu0 0
      %4809 = vmatprep.subr.bf16.mxu0 0
      %4810 = vmatpush1.bf16.msra.mxu0 0
      %4811 = vmatprep.subr.bf16.mxu0 0
      %4812 = vmatpush1.bf16.msra.mxu0 0
      %4813 = vmatprep.subr.bf16.mxu0 0
      %4814 = vmatpush1.bf16.msra.mxu0 0
      %4815 = vmatprep.mubr.bf16.mxu0 %v4736
      %4816 = vmatmul.mubr.bf16.gmra.mrb[0].mxu0 %v4609
      %v4817 = vpop.f32.mrb[0].mxu0
      %v4818 = vadd.f32 %v4679, %v4817
      %v4819 = vpop.f32.mrb[0].mxu0
      %v4820 = vpop.f32.mrb[0].mxu0
      %v4821 = vadd.f32 %v4679, %v4820
      %v4822 = vpop.f32.mrb[0].mxu0
      %4823 = vmatprep.mubr.bf16.mxu0 %v4739
      %4824 = vmatmul.mubr.bf16.gmra.mrb[0].mxu0 %v4612
      %v4825 = vpop.f32.mrb[0].mxu0
      %v4826 = vadd.f32 %v4679, %v4825
      %v4827 = vpop.f32.mrb[0].mxu0
      %v4828 = vpop.f32.mrb[0].mxu0
      %v4829 = vadd.f32 %v4679, %v4828
      %v4830 = vpop.f32.mrb[0].mxu0
      %4831 = vmatprep.mubr.bf16.mxu0 %v4742
      %4832 = vmatmul.mubr.bf16.gmra.mrb[0].mxu0 %v4615
      %v4833 = vpop.f32.mrb[0].mxu0
      %v4834 = vadd.f32 %v4679, %v4833
      %v4835 = vpop.f32.mrb[0].mxu0
      %v4836 = vpop.f32.mrb[0].mxu0
      %v4837 = vadd.f32 %v4679, %v4836
      %v4838 = vpop.f32.mrb[0].mxu0
      %4839 = vmatprep.mubr.bf16.mxu0 %v4745
      %4840 = vmatmul.mubr.bf16.gmra.mrb[0].mxu0 %v4618
      %v4841 = vpop.f32.mrb[0].mxu0
      %v4842 = vadd.f32 %v4679, %v4841
      %v4843 = vpop.f32.mrb[0].mxu0
      %v4844 = vpop.f32.mrb[0].mxu0
      %v4845 = vadd.f32 %v4679, %v4844
      %v4846 = vpop.f32.mrb[0].mxu0
      %4847 = vmatprep.mubr.bf16.mxu0 %v4748
      %4848 = vmatmul.mubr.bf16.gmra.mrb[0].mxu0 %v4621
      %v4849 = vpop.f32.mrb[0].mxu0
      %v4850 = vadd.f32 %v4679, %v4849
      %v4851 = vpop.f32.mrb[0].mxu0
      %v4852 = vpop.f32.mrb[0].mxu0
      %v4853 = vadd.f32 %v4679, %v4852
      %v4854 = vpop.f32.mrb[0].mxu0
      %4855 = vmatprep.mubr.bf16.mxu0 %v4751
      %4856 = vmatmul.mubr.bf16.gmra.mrb[0].mxu0 %v4624
      %v4857 = vpop.f32.mrb[0].mxu0
      %v4858 = vadd.f32 %v4679, %v4857
      %v4859 = vpop.f32.mrb[0].mxu0
      %v4860 = vpop.f32.mrb[0].mxu0
      %v4861 = vadd.f32 %v4679, %v4860
      %v4862 = vpop.f32.mrb[0].mxu0
      %4863 = vmatprep.mubr.bf16.mxu0 %v4754
      %4864 = vmatmul.mubr.bf16.gmra.mrb[0].mxu0 %v4627
      %v4865 = vpop.f32.mrb[0].mxu0
      %v4866 = vadd.f32 %v4679, %v4865
      %v4867 = vpop.f32.mrb[0].mxu0
      %v4868 = vpop.f32.mrb[0].mxu0
      %v4869 = vadd.f32 %v4679, %v4868
      %v4870 = vpop.f32.mrb[0].mxu0
      %4871 = vmatprep.mubr.bf16.mxu0 %v4757
      %4872 = vmatmul.mubr.bf16.gmra.mrb[0].mxu0 %v4630
      %v4873 = vpop.f32.mrb[0].mxu0
      %v4874 = vadd.f32 %v4679, %v4873
      %v4875 = vpop.f32.mrb[0].mxu0
      %v4876 = vpop.f32.mrb[0].mxu0
      %v4877 = vadd.f32 %v4679, %v4876
      %v4878 = vpop.f32.mrb[0].mxu0
      %4879 = vmatprep.mubr.bf16.mxu0 %v4760
      %4880 = vmatmul.mubr.bf16.gmra.mrb[0].mxu0 %v4633
      %v4881 = vpop.f32.mrb[0].mxu0
      %v4882 = vadd.f32 %v4679, %v4881
      %v4883 = vpop.f32.mrb[0].mxu0
      %v4884 = vpop.f32.mrb[0].mxu0
      %v4885 = vadd.f32 %v4679, %v4884
      %v4886 = vpop.f32.mrb[0].mxu0
      %4887 = vmatprep.mubr.bf16.mxu0 %v4763
      %4888 = vmatmul.mubr.bf16.gmra.mrb[0].mxu0 %v4636
      %v4889 = vpop.f32.mrb[0].mxu0
      %v4890 = vadd.f32 %v4679, %v4889
      %v4891 = vpop.f32.mrb[0].mxu0
      %v4892 = vpop.f32.mrb[0].mxu0
      %v4893 = vadd.f32 %v4679, %v4892
      %v4894 = vpop.f32.mrb[0].mxu0
      %4895 = vmatprep.mubr.bf16.mxu0 %v4766
      %4896 = vmatmul.mubr.bf16.gmra.mrb[0].mxu0 %v4639
      %v4897 = vpop.f32.mrb[0].mxu0
      %v4898 = vadd.f32 %v4679, %v4897
      %v4899 = vpop.f32.mrb[0].mxu0
      %v4900 = vpop.f32.mrb[0].mxu0
      %v4901 = vadd.f32 %v4679, %v4900
      %v4902 = vpop.f32.mrb[0].mxu0
      %4903 = vmatprep.mubr.bf16.mxu0 %v4769
      %4904 = vmatmul.mubr.bf16.gmra.mrb[0].mxu0 %v4642
      %v4905 = vpop.f32.mrb[0].mxu0
      %v4906 = vadd.f32 %v4679, %v4905
      %v4907 = vpop.f32.mrb[0].mxu0
      %v4908 = vpop.f32.mrb[0].mxu0
      %v4909 = vadd.f32 %v4679, %v4908
      %v4910 = vpop.f32.mrb[0].mxu0
      %4911 = vmatprep.mubr.bf16.mxu0 %v4772
      %4912 = vmatmul.mubr.bf16.gmra.mrb[0].mxu0 %v4645
      %v4913 = vpop.f32.mrb[0].mxu0
      %v4914 = vadd.f32 %v4679, %v4913
      %v4915 = vpop.f32.mrb[0].mxu0
      %v4916 = vpop.f32.mrb[0].mxu0
      %v4917 = vadd.f32 %v4679, %v4916
      %v4918 = vpop.f32.mrb[0].mxu0
      %4919 = vmatprep.mubr.bf16.mxu0 %v4775
      %4920 = vmatmul.mubr.bf16.gmra.mrb[0].mxu0 %v4648
      %v4921 = vpop.f32.mrb[0].mxu0
      %v4922 = vadd.f32 %v4679, %v4921
      %v4923 = vpop.f32.mrb[0].mxu0
      %v4924 = vpop.f32.mrb[0].mxu0
      %v4925 = vadd.f32 %v4679, %v4924
      %v4926 = vpop.f32.mrb[0].mxu0
      %4927 = vmatprep.mubr.bf16.mxu0 %v4778
      %4928 = vmatmul.mubr.bf16.gmra.mrb[0].mxu0 %v4651
      %v4929 = vpop.f32.mrb[0].mxu0
      %v4930 = vadd.f32 %v4679, %v4929
      %v4931 = vpop.f32.mrb[0].mxu0
      %v4932 = vpop.f32.mrb[0].mxu0
      %v4933 = vadd.f32 %v4679, %v4932
      %v4934 = vpop.f32.mrb[0].mxu0
      %4935 = vmatprep.mubr.bf16.mxu0 %v4781
      %4936 = vmatmul.mubr.bf16.gmra.mrb[0].mxu0 %v4654
      %v4937 = vpop.f32.mrb[0].mxu0
      %v4938 = vadd.f32 %v4679, %v4937
      %v4939 = vpop.f32.mrb[0].mxu0
      %v4940 = vpop.f32.mrb[0].mxu0
      %v4941 = vadd.f32 %v4679, %v4940
      %v4942 = vpop.f32.mrb[0].mxu0
      %4943 = vdwg.mxu0
      %v4944 = vmax.f32 %v4818, 0.0
      %v4945 = vmax.f32 %v4821, 0.0
      %v4946 = vmax.f32 %v4826, 0.0
      %v4947 = vmax.f32 %v4829, 0.0
      %v4948 = vmax.f32 %v4834, 0.0
      %v4949 = vmax.f32 %v4837, 0.0
      %v4950 = vmax.f32 %v4842, 0.0
      %v4951 = vmax.f32 %v4845, 0.0
      %v4952 = vmax.f32 %v4850, 0.0
      %v4953 = vmax.f32 %v4853, 0.0
      %v4954 = vmax.f32 %v4858, 0.0
      %v4955 = vmax.f32 %v4861, 0.0
      %v4956 = vmax.f32 %v4866, 0.0
      %v4957 = vmax.f32 %v4869, 0.0
      %v4958 = vmax.f32 %v4874, 0.0
      %v4959 = vmax.f32 %v4877, 0.0
      %v4960 = vmax.f32 %v4882, 0.0
      %v4961 = vmax.f32 %v4885, 0.0
      %v4962 = vmax.f32 %v4890, 0.0
      %v4963 = vmax.f32 %v4893, 0.0
      %v4964 = vmax.f32 %v4898, 0.0
      %v4965 = vmax.f32 %v4901, 0.0
      %v4966 = vmax.f32 %v4906, 0.0
      %v4967 = vmax.f32 %v4909, 0.0
      %v4968 = vmax.f32 %v4914, 0.0
      %v4969 = vmax.f32 %v4917, 0.0
      %v4970 = vmax.f32 %v4922, 0.0
      %v4971 = vmax.f32 %v4925, 0.0
      %v4972 = vmax.f32 %v4930, 0.0
      %v4973 = vmax.f32 %v4933, 0.0
      %v4974 = vmax.f32 %v4938, 0.0
      %v4975 = vmax.f32 %v4941, 0.0
      %v4976 = vpack.c.bf16 %v4945, %v4944
      %v4977 = vpack.c.bf16 %v4947, %v4946
      %v4978 = vpack.c.bf16 %v4949, %v4948
      %v4979 = vpack.c.bf16 %v4951, %v4950
      %v4980 = vpack.c.bf16 %v4953, %v4952
      %v4981 = vpack.c.bf16 %v4955, %v4954
      %v4982 = vpack.c.bf16 %v4957, %v4956
      %v4983 = vpack.c.bf16 %v4959, %v4958
      %v4984 = vpack.c.bf16 %v4961, %v4960
      %v4985 = vpack.c.bf16 %v4963, %v4962
      %v4986 = vpack.c.bf16 %v4965, %v4964
      %v4987 = vpack.c.bf16 %v4967, %v4966
      %v4988 = vpack.c.bf16 %v4969, %v4968
      %v4989 = vpack.c.bf16 %v4971, %v4970
      %v4990 = vpack.c.bf16 %v4973, %v4972
      %v4991 = vpack.c.bf16 %v4975, %v4974
      %vm4992 = vcmask 257024
      %4993 = vst.msk [vmem:[#allocation4] sm:$0xf] %vm4992, 0
      %4994 = vst.msk [vmem:[#allocation4 + $0x4] sm:$0xf] %vm4992, 0
      %vm4995 = vcmask 253952
      %4996 = vst.msk [vmem:[#allocation4 + $0x8] sm:$0x1] %vm4995, 0
      %s4997 = scalar_lea.vmem [#allocation4], 204
      %4998 = vst.msk [vmem:[%s4997] sm:$0xf] %vm4992, 0
      %4999 = vst.msk [vmem:[%s4997 + $0x4] sm:$0xf] %vm4992, 0
      %5000 = vst.msk [vmem:[%s4997 + $0x8] sm:$0x1] %vm4995, 0
      %vm5001 = vcmask 253952
      %vm5002 = vmand %vm5001, %vm436
      %v5003 = vld [vmem:[#allocation4] sm:$0x1]
      %v5004 = vsel %vm5002, 0, %v5003
      %5005 = vst [vmem:[#allocation4] sm:$0x1] %v5004
      %v5006 = vld [vmem:[#allocation4 + $0xc] sm:$0x1]
      %v5007 = vsel %vm5002, 0, %v5006
      %5008 = vst [vmem:[#allocation4 + $0xc] sm:$0x1] %v5007
      %v5009 = vld [vmem:[#allocation4 + $0x18] sm:$0x1]
      %v5010 = vsel %vm5002, 0, %v5009
      %5011 = vst [vmem:[#allocation4 + $0x18] sm:$0x1] %v5010
      %v5012 = vld [vmem:[#allocation4 + $0x24] sm:$0x1]
      %v5013 = vsel %vm5002, 0, %v5012
      %5014 = vst [vmem:[#allocation4 + $0x24] sm:$0x1] %v5013
      %v5015 = vld [vmem:[#allocation4 + $0x30] sm:$0x1]
      %v5016 = vsel %vm5002, 0, %v5015
      %5017 = vst [vmem:[#allocation4 + $0x30] sm:$0x1] %v5016
      %v5018 = vld [vmem:[#allocation4 + $0x3c] sm:$0x1]
      %v5019 = vsel %vm5002, 0, %v5018
      %5020 = vst [vmem:[#allocation4 + $0x3c] sm:$0x1] %v5019
      %v5021 = vld [vmem:[#allocation4 + $0x48] sm:$0x1]
      %v5022 = vsel %vm5002, 0, %v5021
      %5023 = vst [vmem:[#allocation4 + $0x48] sm:$0x1] %v5022
      %v5024 = vld [vmem:[#allocation4 + $0x54] sm:$0x1]
      %v5025 = vsel %vm5002, 0, %v5024
      %5026 = vst [vmem:[#allocation4 + $0x54] sm:$0x1] %v5025
      %v5027 = vld [vmem:[#allocation4 + $0x60] sm:$0x1]
      %v5028 = vsel %vm5002, 0, %v5027
      %5029 = vst [vmem:[#allocation4 + $0x60] sm:$0x1] %v5028
      %v5030 = vld [vmem:[#allocation4 + $0x6c] sm:$0x1]
      %v5031 = vsel %vm5002, 0, %v5030
      %5032 = vst [vmem:[#allocation4 + $0x6c] sm:$0x1] %v5031
      %v5033 = vld [vmem:[#allocation4 + $0x78] sm:$0x1]
      %v5034 = vsel %vm5002, 0, %v5033
      %5035 = vst [vmem:[#allocation4 + $0x78] sm:$0x1] %v5034
      %v5036 = vld [vmem:[#allocation4 + $0x84] sm:$0x1]
      %v5037 = vsel %vm5002, 0, %v5036
      %5038 = vst [vmem:[#allocation4 + $0x84] sm:$0x1] %v5037
      %v5039 = vld [vmem:[#allocation4 + $0x90] sm:$0x1]
      %v5040 = vsel %vm5002, 0, %v5039
      %5041 = vst [vmem:[#allocation4 + $0x90] sm:$0x1] %v5040
      %v5042 = vld [vmem:[#allocation4 + $0x9c] sm:$0x1]
      %v5043 = vsel %vm5002, 0, %v5042
      %5044 = vst [vmem:[#allocation4 + $0x9c] sm:$0x1] %v5043
      %v5045 = vld [vmem:[#allocation4 + $0xa8] sm:$0x1]
      %v5046 = vsel %vm5002, 0, %v5045
      %5047 = vst [vmem:[#allocation4 + $0xa8] sm:$0x1] %v5046
      %v5048 = vld [vmem:[#allocation4 + $0xb4] sm:$0x1]
      %v5049 = vsel %vm5002, 0, %v5048
      %5050 = vst [vmem:[#allocation4 + $0xb4] sm:$0x1] %v5049
      %v5051 = vld [vmem:[#allocation4 + $0xc0] sm:$0x1]
      %v5052 = vsel %vm5002, 0, %v5051
      %5053 = vst [vmem:[#allocation4 + $0xc0] sm:$0x1] %v5052
      %v5054 = vld [vmem:[#allocation4 + $0xcc] sm:$0x1]
      %v5055 = vsel %vm5002, 0, %v5054
      %5056 = vst [vmem:[#allocation4 + $0xcc] sm:$0x1] %v5055
      %vm5057 = vmand %vm5001, %vm492
      %v5058 = vld [vmem:[#allocation4 + $0x8] sm:$0x1]
      %v5059 = vsel %vm5057, 0, %v5058
      %5060 = vst [vmem:[#allocation4 + $0x8] sm:$0x1] %v5059
      %v5061 = vld [vmem:[#allocation4 + $0x14] sm:$0x1]
      %v5062 = vsel %vm5057, 0, %v5061
      %5063 = vst [vmem:[#allocation4 + $0x14] sm:$0x1] %v5062
      %v5064 = vld [vmem:[#allocation4 + $0x20] sm:$0x1]
      %v5065 = vsel %vm5057, 0, %v5064
      %5066 = vst [vmem:[#allocation4 + $0x20] sm:$0x1] %v5065
      %v5067 = vld [vmem:[#allocation4 + $0x2c] sm:$0x1]
      %v5068 = vsel %vm5057, 0, %v5067
      %5069 = vst [vmem:[#allocation4 + $0x2c] sm:$0x1] %v5068
      %v5070 = vld [vmem:[#allocation4 + $0x38] sm:$0x1]
      %v5071 = vsel %vm5057, 0, %v5070
      %5072 = vst [vmem:[#allocation4 + $0x38] sm:$0x1] %v5071
      %v5073 = vld [vmem:[#allocation4 + $0x44] sm:$0x1]
      %v5074 = vsel %vm5057, 0, %v5073
      %5075 = vst [vmem:[#allocation4 + $0x44] sm:$0x1] %v5074
      %v5076 = vld [vmem:[#allocation4 + $0x50] sm:$0x1]
      %v5077 = vsel %vm5057, 0, %v5076
      %5078 = vst [vmem:[#allocation4 + $0x50] sm:$0x1] %v5077
      %v5079 = vld [vmem:[#allocation4 + $0x5c] sm:$0x1]
      %v5080 = vsel %vm5057, 0, %v5079
      %5081 = vst [vmem:[#allocation4 + $0x5c] sm:$0x1] %v5080
      %v5082 = vld [vmem:[#allocation4 + $0x68] sm:$0x1]
      %v5083 = vsel %vm5057, 0, %v5082
      %5084 = vst [vmem:[#allocation4 + $0x68] sm:$0x1] %v5083
      %v5085 = vld [vmem:[#allocation4 + $0x74] sm:$0x1]
      %v5086 = vsel %vm5057, 0, %v5085
      %5087 = vst [vmem:[#allocation4 + $0x74] sm:$0x1] %v5086
      %v5088 = vld [vmem:[#allocation4 + $0x80] sm:$0x1]
      %v5089 = vsel %vm5057, 0, %v5088
      %5090 = vst [vmem:[#allocation4 + $0x80] sm:$0x1] %v5089
      %v5091 = vld [vmem:[#allocation4 + $0x8c] sm:$0x1]
      %v5092 = vsel %vm5057, 0, %v5091
      %5093 = vst [vmem:[#allocation4 + $0x8c] sm:$0x1] %v5092
      %v5094 = vld [vmem:[#allocation4 + $0x98] sm:$0x1]
      %v5095 = vsel %vm5057, 0, %v5094
      %5096 = vst [vmem:[#allocation4 + $0x98] sm:$0x1] %v5095
      %v5097 = vld [vmem:[#allocation4 + $0xa4] sm:$0x1]
      %v5098 = vsel %vm5057, 0, %v5097
      %5099 = vst [vmem:[#allocation4 + $0xa4] sm:$0x1] %v5098
      %v5100 = vld [vmem:[#allocation4 + $0xb0] sm:$0x1]
      %v5101 = vsel %vm5057, 0, %v5100
      %5102 = vst [vmem:[#allocation4 + $0xb0] sm:$0x1] %v5101
      %v5103 = vld [vmem:[#allocation4 + $0xbc] sm:$0x1]
      %v5104 = vsel %vm5057, 0, %v5103
      %5105 = vst [vmem:[#allocation4 + $0xbc] sm:$0x1] %v5104
      %v5106 = vld [vmem:[#allocation4 + $0xc8] sm:$0x1]
      %v5107 = vsel %vm5057, 0, %v5106
      %5108 = vst [vmem:[#allocation4 + $0xc8] sm:$0x1] %v5107
      %v5109 = vld [vmem:[#allocation4 + $0xd4] sm:$0x1]
      %v5110 = vsel %vm5057, 0, %v5109
      %5111 = vst [vmem:[#allocation4 + $0xd4] sm:$0x1] %v5110
      %v5128 = vunpack.c.l.b16 %v4976
      %v5129 = vunpack.c.h.b16 %v4976
      %v5130 = vunpack.c.l.b16 %v4977
      %v5131 = vunpack.c.h.b16 %v4977
      %v5132 = vunpack.c.l.b16 %v4978
      %v5133 = vunpack.c.h.b16 %v4978
      %v5134 = vunpack.c.l.b16 %v4979
      %v5135 = vunpack.c.h.b16 %v4979
      %v5136 = vunpack.c.l.b16 %v4980
      %v5137 = vunpack.c.h.b16 %v4980
      %v5138 = vunpack.c.l.b16 %v4981
      %v5139 = vunpack.c.h.b16 %v4981
      %v5140 = vunpack.c.l.b16 %v4982
      %v5141 = vunpack.c.h.b16 %v4982
      %v5142 = vunpack.c.l.b16 %v4983
      %v5143 = vunpack.c.h.b16 %v4983
      %v5144 = vunpack.c.l.b16 %v4984
      %v5145 = vunpack.c.h.b16 %v4984
      %v5146 = vunpack.c.l.b16 %v4985
      %v5147 = vunpack.c.h.b16 %v4985
      %v5148 = vunpack.c.l.b16 %v4986
      %v5149 = vunpack.c.h.b16 %v4986
      %v5150 = vunpack.c.l.b16 %v4987
      %v5151 = vunpack.c.h.b16 %v4987
      %v5152 = vunpack.c.l.b16 %v4988
      %v5153 = vunpack.c.h.b16 %v4988
      %v5154 = vunpack.c.l.b16 %v4989
      %v5155 = vunpack.c.h.b16 %v4989
      %v5156 = vunpack.c.l.b16 %v4990
      %v5157 = vunpack.c.h.b16 %v4990
      %v5158 = vunpack.c.l.b16 %v4991
      %v5159 = vunpack.c.h.b16 %v4991
      %v5160 = vpack.c.b16 %v5128, %v5128
      %v5161 = vpack.c.b16 %v5129, %v5129
      %v5162 = vpack.c.b16 %v5130, %v5130
      %v5163 = vpack.c.b16 %v5131, %v5131
      %v5164 = vpack.c.b16 %v5132, %v5132
      %v5165 = vpack.c.b16 %v5133, %v5133
      %v5166 = vpack.c.b16 %v5134, %v5134
      %v5167 = vpack.c.b16 %v5135, %v5135
      %v5168 = vpack.c.b16 %v5136, %v5136
      %v5169 = vpack.c.b16 %v5137, %v5137
      %v5170 = vpack.c.b16 %v5138, %v5138
      %v5171 = vpack.c.b16 %v5139, %v5139
      %v5172 = vpack.c.b16 %v5140, %v5140
      %v5173 = vpack.c.b16 %v5141, %v5141
      %v5174 = vpack.c.b16 %v5142, %v5142
      %v5175 = vpack.c.b16 %v5143, %v5143
      %v5176 = vpack.c.b16 %v5144, %v5144
      %v5177 = vpack.c.b16 %v5145, %v5145
      %v5178 = vpack.c.b16 %v5146, %v5146
      %v5179 = vpack.c.b16 %v5147, %v5147
      %v5180 = vpack.c.b16 %v5148, %v5148
      %v5181 = vpack.c.b16 %v5149, %v5149
      %v5182 = vpack.c.b16 %v5150, %v5150
      %v5183 = vpack.c.b16 %v5151, %v5151
      %v5184 = vpack.c.b16 %v5152, %v5152
      %v5185 = vpack.c.b16 %v5153, %v5153
      %v5186 = vpack.c.b16 %v5154, %v5154
      %v5187 = vpack.c.b16 %v5155, %v5155
      %v5188 = vpack.c.b16 %v5156, %v5156
      %v5189 = vpack.c.b16 %v5157, %v5157
      %v5190 = vpack.c.b16 %v5158, %v5158
      %v5191 = vpack.c.b16 %v5159, %v5159
      %v5193 = vshrl.u32 %v5160, 16
      %v5195 = vrot.slane %v5193, 7
      %v5196 = vshll.u32 %v5160, 16
      %v5198 = vor.u32 %v5195, %v5196
      %v5199 = vrot.slane %v5195, 4
      %v5201 = vshrl.u32 %v5161, 16
      %v5203 = vrot.slane %v5201, 7
      %v5204 = vshll.u32 %v5161, 16
      %v5206 = vor.u32 %v5203, %v5204
      %v5207 = vsel %vm629, %v5199, %v5206
      %v5208 = vrot.slane %v5203, 4
      %v5210 = vshrl.u32 %v5162, 16
      %v5212 = vrot.slane %v5210, 7
      %v5213 = vshll.u32 %v5162, 16
      %v5215 = vor.u32 %v5212, %v5213
      %v5216 = vrot.slane %v5212, 4
      %v5218 = vshrl.u32 %v5163, 16
      %v5220 = vrot.slane %v5218, 7
      %v5221 = vshll.u32 %v5163, 16
      %v5223 = vor.u32 %v5220, %v5221
      %v5224 = vsel %vm629, %v5216, %v5223
      %v5225 = vrot.slane %v5220, 4
      %v5227 = vshrl.u32 %v5164, 16
      %v5229 = vrot.slane %v5227, 7
      %v5230 = vshll.u32 %v5164, 16
      %v5232 = vor.u32 %v5229, %v5230
      %v5233 = vrot.slane %v5229, 4
      %v5235 = vshrl.u32 %v5165, 16
      %v5237 = vrot.slane %v5235, 7
      %v5238 = vshll.u32 %v5165, 16
      %v5240 = vor.u32 %v5237, %v5238
      %v5241 = vsel %vm629, %v5233, %v5240
      %v5242 = vrot.slane %v5237, 4
      %v5244 = vshrl.u32 %v5166, 16
      %v5246 = vrot.slane %v5244, 7
      %v5247 = vshll.u32 %v5166, 16
      %v5249 = vor.u32 %v5246, %v5247
      %v5250 = vrot.slane %v5246, 4
      %v5252 = vshrl.u32 %v5167, 16
      %v5254 = vrot.slane %v5252, 7
      %v5255 = vshll.u32 %v5167, 16
      %v5257 = vor.u32 %v5254, %v5255
      %v5258 = vsel %vm629, %v5250, %v5257
      %v5259 = vrot.slane %v5254, 4
      %v5261 = vshrl.u32 %v5168, 16
      %v5263 = vrot.slane %v5261, 7
      %v5264 = vshll.u32 %v5168, 16
      %v5266 = vor.u32 %v5263, %v5264
      %v5267 = vrot.slane %v5263, 4
      %v5269 = vshrl.u32 %v5169, 16
      %v5271 = vrot.slane %v5269, 7
      %v5272 = vshll.u32 %v5169, 16
      %v5274 = vor.u32 %v5271, %v5272
      %v5275 = vsel %vm629, %v5267, %v5274
      %v5276 = vrot.slane %v5271, 4
      %v5278 = vshrl.u32 %v5170, 16
      %v5280 = vrot.slane %v5278, 7
      %v5281 = vshll.u32 %v5170, 16
      %v5283 = vor.u32 %v5280, %v5281
      %v5284 = vrot.slane %v5280, 4
      %v5286 = vshrl.u32 %v5171, 16
      %v5288 = vrot.slane %v5286, 7
      %v5289 = vshll.u32 %v5171, 16
      %v5291 = vor.u32 %v5288, %v5289
      %v5292 = vsel %vm629, %v5284, %v5291
      %v5293 = vrot.slane %v5288, 4
      %v5295 = vshrl.u32 %v5172, 16
      %v5297 = vrot.slane %v5295, 7
      %v5298 = vshll.u32 %v5172, 16
      %v5300 = vor.u32 %v5297, %v5298
      %v5301 = vrot.slane %v5297, 4
      %v5303 = vshrl.u32 %v5173, 16
      %v5305 = vrot.slane %v5303, 7
      %v5306 = vshll.u32 %v5173, 16
      %v5308 = vor.u32 %v5305, %v5306
      %v5309 = vsel %vm629, %v5301, %v5308
      %v5310 = vrot.slane %v5305, 4
      %v5312 = vshrl.u32 %v5174, 16
      %v5314 = vrot.slane %v5312, 7
      %v5315 = vshll.u32 %v5174, 16
      %v5317 = vor.u32 %v5314, %v5315
      %v5318 = vrot.slane %v5314, 4
      %v5320 = vshrl.u32 %v5175, 16
      %v5322 = vrot.slane %v5320, 7
      %v5323 = vshll.u32 %v5175, 16
      %v5325 = vor.u32 %v5322, %v5323
      %v5326 = vsel %vm629, %v5318, %v5325
      %v5327 = vrot.slane %v5322, 4
      %v5329 = vshrl.u32 %v5176, 16
      %v5331 = vrot.slane %v5329, 7
      %v5332 = vshll.u32 %v5176, 16
      %v5334 = vor.u32 %v5331, %v5332
      %v5335 = vrot.slane %v5331, 4
      %v5337 = vshrl.u32 %v5177, 16
      %v5339 = vrot.slane %v5337, 7
      %v5340 = vshll.u32 %v5177, 16
      %v5342 = vor.u32 %v5339, %v5340
      %v5343 = vsel %vm629, %v5335, %v5342
      %v5344 = vrot.slane %v5339, 4
      %v5346 = vshrl.u32 %v5178, 16
      %v5348 = vrot.slane %v5346, 7
      %v5349 = vshll.u32 %v5178, 16
      %v5351 = vor.u32 %v5348, %v5349
      %v5352 = vrot.slane %v5348, 4
      %v5354 = vshrl.u32 %v5179, 16
      %v5356 = vrot.slane %v5354, 7
      %v5357 = vshll.u32 %v5179, 16
      %v5359 = vor.u32 %v5356, %v5357
      %v5360 = vsel %vm629, %v5352, %v5359
      %v5361 = vrot.slane %v5356, 4
      %v5363 = vshrl.u32 %v5180, 16
      %v5365 = vrot.slane %v5363, 7
      %v5366 = vshll.u32 %v5180, 16
      %v5368 = vor.u32 %v5365, %v5366
      %v5369 = vrot.slane %v5365, 4
      %v5371 = vshrl.u32 %v5181, 16
      %v5373 = vrot.slane %v5371, 7
      %v5374 = vshll.u32 %v5181, 16
      %v5376 = vor.u32 %v5373, %v5374
      %v5377 = vsel %vm629, %v5369, %v5376
      %v5378 = vrot.slane %v5373, 4
      %v5380 = vshrl.u32 %v5182, 16
      %v5382 = vrot.slane %v5380, 7
      %v5383 = vshll.u32 %v5182, 16
      %v5385 = vor.u32 %v5382, %v5383
      %v5386 = vrot.slane %v5382, 4
      %v5388 = vshrl.u32 %v5183, 16
      %v5390 = vrot.slane %v5388, 7
      %v5391 = vshll.u32 %v5183, 16
      %v5393 = vor.u32 %v5390, %v5391
      %v5394 = vsel %vm629, %v5386, %v5393
      %v5395 = vrot.slane %v5390, 4
      %v5397 = vshrl.u32 %v5184, 16
      %v5399 = vrot.slane %v5397, 7
      %v5400 = vshll.u32 %v5184, 16
      %v5402 = vor.u32 %v5399, %v5400
      %v5403 = vrot.slane %v5399, 4
      %v5405 = vshrl.u32 %v5185, 16
      %v5407 = vrot.slane %v5405, 7
      %v5408 = vshll.u32 %v5185, 16
      %v5410 = vor.u32 %v5407, %v5408
      %v5411 = vsel %vm629, %v5403, %v5410
      %v5412 = vrot.slane %v5407, 4
      %v5414 = vshrl.u32 %v5186, 16
      %v5416 = vrot.slane %v5414, 7
      %v5417 = vshll.u32 %v5186, 16
      %v5419 = vor.u32 %v5416, %v5417
      %v5420 = vrot.slane %v5416, 4
      %v5422 = vshrl.u32 %v5187, 16
      %v5424 = vrot.slane %v5422, 7
      %v5425 = vshll.u32 %v5187, 16
      %v5427 = vor.u32 %v5424, %v5425
      %v5428 = vsel %vm629, %v5420, %v5427
      %v5429 = vrot.slane %v5424, 4
      %v5431 = vshrl.u32 %v5188, 16
      %v5433 = vrot.slane %v5431, 7
      %v5434 = vshll.u32 %v5188, 16
      %v5436 = vor.u32 %v5433, %v5434
      %v5437 = vrot.slane %v5433, 4
      %v5439 = vshrl.u32 %v5189, 16
      %v5441 = vrot.slane %v5439, 7
      %v5442 = vshll.u32 %v5189, 16
      %v5444 = vor.u32 %v5441, %v5442
      %v5445 = vsel %vm629, %v5437, %v5444
      %v5446 = vrot.slane %v5441, 4
      %v5448 = vshrl.u32 %v5190, 16
      %v5450 = vrot.slane %v5448, 7
      %v5451 = vshll.u32 %v5190, 16
      %v5453 = vor.u32 %v5450, %v5451
      %v5454 = vrot.slane %v5450, 4
      %v5456 = vshrl.u32 %v5191, 16
      %v5458 = vrot.slane %v5456, 7
      %v5459 = vshll.u32 %v5191, 16
      %v5461 = vor.u32 %v5458, %v5459
      %v5462 = vsel %vm629, %v5454, %v5461
      %v5463 = vrot.slane %v5458, 4
      %s5512 = scalar_lea.vmem [#allocation4], 12
      %vm5513 = vcmask 257024
      %vm5514 = vmand %vm5513, %vm492
      %v5515 = vld [vmem:[%s5512] sm:$0xf]
      %v5516 = vsel %vm5514, %v5198, %v5515
      %5517 = vst [vmem:[%s5512] sm:$0xf] %v5516
      %5518 = vst.msk [vmem:[%s5512 + $0x4] sm:$0xf] %vm4992, %v5207
      %v5519 = vld [vmem:[%s5512 + $0x8] sm:$0x1]
      %v5520 = vsel %vm5002, %v5208, %v5519
      %5521 = vst [vmem:[%s5512 + $0x8] sm:$0x1] %v5520
      %v5522 = vld [vmem:[%s5512 + $0xc] sm:$0xf]
      %v5523 = vsel %vm5514, %v5215, %v5522
      %5524 = vst [vmem:[%s5512 + $0xc] sm:$0xf] %v5523
      %5525 = vst.msk [vmem:[%s5512 + $0x10] sm:$0xf] %vm4992, %v5224
      %v5526 = vld [vmem:[%s5512 + $0x14] sm:$0x1]
      %v5527 = vsel %vm5002, %v5225, %v5526
      %5528 = vst [vmem:[%s5512 + $0x14] sm:$0x1] %v5527
      %v5529 = vld [vmem:[%s5512 + $0x18] sm:$0xf]
      %v5530 = vsel %vm5514, %v5232, %v5529
      %5531 = vst [vmem:[%s5512 + $0x18] sm:$0xf] %v5530
      %5532 = vst.msk [vmem:[%s5512 + $0x1c] sm:$0xf] %vm4992, %v5241
      %v5533 = vld [vmem:[%s5512 + $0x20] sm:$0x1]
      %v5534 = vsel %vm5002, %v5242, %v5533
      %5535 = vst [vmem:[%s5512 + $0x20] sm:$0x1] %v5534
      %v5536 = vld [vmem:[%s5512 + $0x24] sm:$0xf]
      %v5537 = vsel %vm5514, %v5249, %v5536
      %5538 = vst [vmem:[%s5512 + $0x24] sm:$0xf] %v5537
      %5539 = vst.msk [vmem:[%s5512 + $0x28] sm:$0xf] %vm4992, %v5258
      %v5540 = vld [vmem:[%s5512 + $0x2c] sm:$0x1]
      %v5541 = vsel %vm5002, %v5259, %v5540
      %5542 = vst [vmem:[%s5512 + $0x2c] sm:$0x1] %v5541
      %v5543 = vld [vmem:[%s5512 + $0x30] sm:$0xf]
      %v5544 = vsel %vm5514, %v5266, %v5543
      %5545 = vst [vmem:[%s5512 + $0x30] sm:$0xf] %v5544
      %5546 = vst.msk [vmem:[%s5512 + $0x34] sm:$0xf] %vm4992, %v5275
      %v5547 = vld [vmem:[%s5512 + $0x38] sm:$0x1]
      %v5548 = vsel %vm5002, %v5276, %v5547
      %5549 = vst [vmem:[%s5512 + $0x38] sm:$0x1] %v5548
      %v5550 = vld [vmem:[%s5512 + $0x3c] sm:$0xf]
      %v5551 = vsel %vm5514, %v5283, %v5550
      %5552 = vst [vmem:[%s5512 + $0x3c] sm:$0xf] %v5551
      %5553 = vst.msk [vmem:[%s5512 + $0x40] sm:$0xf] %vm4992, %v5292
      %v5554 = vld [vmem:[%s5512 + $0x44] sm:$0x1]
      %v5555 = vsel %vm5002, %v5293, %v5554
      %5556 = vst [vmem:[%s5512 + $0x44] sm:$0x1] %v5555
      %v5557 = vld [vmem:[%s5512 + $0x48] sm:$0xf]
      %v5558 = vsel %vm5514, %v5300, %v5557
      %5559 = vst [vmem:[%s5512 + $0x48] sm:$0xf] %v5558
      %5560 = vst.msk [vmem:[%s5512 + $0x4c] sm:$0xf] %vm4992, %v5309
      %v5561 = vld [vmem:[%s5512 + $0x50] sm:$0x1]
      %v5562 = vsel %vm5002, %v5310, %v5561
      %5563 = vst [vmem:[%s5512 + $0x50] sm:$0x1] %v5562
      %v5564 = vld [vmem:[%s5512 + $0x54] sm:$0xf]
      %v5565 = vsel %vm5514, %v5317, %v5564
      %5566 = vst [vmem:[%s5512 + $0x54] sm:$0xf] %v5565
      %5567 = vst.msk [vmem:[%s5512 + $0x58] sm:$0xf] %vm4992, %v5326
      %v5568 = vld [vmem:[%s5512 + $0x5c] sm:$0x1]
      %v5569 = vsel %vm5002, %v5327, %v5568
      %5570 = vst [vmem:[%s5512 + $0x5c] sm:$0x1] %v5569
      %v5571 = vld [vmem:[%s5512 + $0x60] sm:$0xf]
      %v5572 = vsel %vm5514, %v5334, %v5571
      %5573 = vst [vmem:[%s5512 + $0x60] sm:$0xf] %v5572
      %5574 = vst.msk [vmem:[%s5512 + $0x64] sm:$0xf] %vm4992, %v5343
      %v5575 = vld [vmem:[%s5512 + $0x68] sm:$0x1]
      %v5576 = vsel %vm5002, %v5344, %v5575
      %5577 = vst [vmem:[%s5512 + $0x68] sm:$0x1] %v5576
      %v5578 = vld [vmem:[%s5512 + $0x6c] sm:$0xf]
      %v5579 = vsel %vm5514, %v5351, %v5578
      %5580 = vst [vmem:[%s5512 + $0x6c] sm:$0xf] %v5579
      %5581 = vst.msk [vmem:[%s5512 + $0x70] sm:$0xf] %vm4992, %v5360
      %v5582 = vld [vmem:[%s5512 + $0x74] sm:$0x1]
      %v5583 = vsel %vm5002, %v5361, %v5582
      %5584 = vst [vmem:[%s5512 + $0x74] sm:$0x1] %v5583
      %v5585 = vld [vmem:[%s5512 + $0x78] sm:$0xf]
      %v5586 = vsel %vm5514, %v5368, %v5585
      %5587 = vst [vmem:[%s5512 + $0x78] sm:$0xf] %v5586
      %5588 = vst.msk [vmem:[%s5512 + $0x7c] sm:$0xf] %vm4992, %v5377
      %v5589 = vld [vmem:[%s5512 + $0x80] sm:$0x1]
      %v5590 = vsel %vm5002, %v5378, %v5589
      %5591 = vst [vmem:[%s5512 + $0x80] sm:$0x1] %v5590
      %v5592 = vld [vmem:[%s5512 + $0x84] sm:$0xf]
      %v5593 = vsel %vm5514, %v5385, %v5592
      %5594 = vst [vmem:[%s5512 + $0x84] sm:$0xf] %v5593
      %5595 = vst.msk [vmem:[%s5512 + $0x88] sm:$0xf] %vm4992, %v5394
      %v5596 = vld [vmem:[%s5512 + $0x8c] sm:$0x1]
      %v5597 = vsel %vm5002, %v5395, %v5596
      %5598 = vst [vmem:[%s5512 + $0x8c] sm:$0x1] %v5597
      %v5599 = vld [vmem:[%s5512 + $0x90] sm:$0xf]
      %v5600 = vsel %vm5514, %v5402, %v5599
      %5601 = vst [vmem:[%s5512 + $0x90] sm:$0xf] %v5600
      %5602 = vst.msk [vmem:[%s5512 + $0x94] sm:$0xf] %vm4992, %v5411
      %v5603 = vld [vmem:[%s5512 + $0x98] sm:$0x1]
      %v5604 = vsel %vm5002, %v5412, %v5603
      %5605 = vst [vmem:[%s5512 + $0x98] sm:$0x1] %v5604
      %v5606 = vld [vmem:[%s5512 + $0x9c] sm:$0xf]
      %v5607 = vsel %vm5514, %v5419, %v5606
      %5608 = vst [vmem:[%s5512 + $0x9c] sm:$0xf] %v5607
      %5609 = vst.msk [vmem:[%s5512 + $0xa0] sm:$0xf] %vm4992, %v5428
      %v5610 = vld [vmem:[%s5512 + $0xa4] sm:$0x1]
      %v5611 = vsel %vm5002, %v5429, %v5610
      %5612 = vst [vmem:[%s5512 + $0xa4] sm:$0x1] %v5611
      %v5613 = vld [vmem:[%s5512 + $0xa8] sm:$0xf]
      %v5614 = vsel %vm5514, %v5436, %v5613
      %5615 = vst [vmem:[%s5512 + $0xa8] sm:$0xf] %v5614
      %5616 = vst.msk [vmem:[%s5512 + $0xac] sm:$0xf] %vm4992, %v5445
      %v5617 = vld [vmem:[%s5512 + $0xb0] sm:$0x1]
      %v5618 = vsel %vm5002, %v5446, %v5617
      %5619 = vst [vmem:[%s5512 + $0xb0] sm:$0x1] %v5618
      %v5620 = vld [vmem:[%s5512 + $0xb4] sm:$0xf]
      %v5621 = vsel %vm5514, %v5453, %v5620
      %5622 = vst [vmem:[%s5512 + $0xb4] sm:$0xf] %v5621
      %5623 = vst.msk [vmem:[%s5512 + $0xb8] sm:$0xf] %vm4992, %v5462
      %v5624 = vld [vmem:[%s5512 + $0xbc] sm:$0x1]
      %v5625 = vsel %vm5002, %v5463, %v5624
      %5626 = vst [vmem:[%s5512 + $0xbc] sm:$0x1] %v5625
      %v5627 = vld [vmem:[#allocation4] sm:$0xf]
      %v5628 = vld [vmem:[#allocation4 + $0x4] sm:$0xf]
      %v5629 = vld [vmem:[#allocation4 + $0x8] sm:$0x1]
      %v5630 = vld [vmem:[#allocation4 + $0xc] sm:$0xf]
      %v5631 = vld [vmem:[#allocation4 + $0x10] sm:$0xf]
      %v5632 = vld [vmem:[#allocation4 + $0x14] sm:$0x1]
      %v5633 = vld [vmem:[#allocation4 + $0x18] sm:$0xf]
      %v5634 = vld [vmem:[#allocation4 + $0x1c] sm:$0xf]
      %v5635 = vld [vmem:[#allocation4 + $0x20] sm:$0x1]
      %v5636 = vld [vmem:[#allocation4 + $0x24] sm:$0xf]
      %v5637 = vld [vmem:[#allocation4 + $0x28] sm:$0xf]
      %v5638 = vld [vmem:[#allocation4 + $0x2c] sm:$0x1]
      %v5639 = vld [vmem:[#allocation4 + $0x30] sm:$0xf]
      %v5640 = vld [vmem:[#allocation4 + $0x34] sm:$0xf]
      %v5641 = vld [vmem:[#allocation4 + $0x38] sm:$0x1]
      %v5642 = vld [vmem:[#allocation4 + $0x3c] sm:$0xf]
      %v5643 = vld [vmem:[#allocation4 + $0x40] sm:$0xf]
      %v5644 = vld [vmem:[#allocation4 + $0x44] sm:$0x1]
      %v5645 = vld [vmem:[#allocation4 + $0x48] sm:$0xf]
      %v5646 = vld [vmem:[#allocation4 + $0x4c] sm:$0xf]
      %v5647 = vld [vmem:[#allocation4 + $0x50] sm:$0x1]
      %v5648 = vld [vmem:[#allocation4 + $0x54] sm:$0xf]
      %v5649 = vld [vmem:[#allocation4 + $0x58] sm:$0xf]
      %v5650 = vld [vmem:[#allocation4 + $0x5c] sm:$0x1]
      %v5651 = vld [vmem:[#allocation4 + $0x60] sm:$0xf]
      %v5652 = vld [vmem:[#allocation4 + $0x64] sm:$0xf]
      %v5653 = vld [vmem:[#allocation4 + $0x68] sm:$0x1]
      %v5654 = vld [vmem:[#allocation4 + $0x6c] sm:$0xf]
      %v5655 = vld [vmem:[#allocation4 + $0x70] sm:$0xf]
      %v5656 = vld [vmem:[#allocation4 + $0x74] sm:$0x1]
      %v5657 = vld [vmem:[#allocation4 + $0x78] sm:$0xf]
      %v5658 = vld [vmem:[#allocation4 + $0x7c] sm:$0xf]
      %v5659 = vld [vmem:[#allocation4 + $0x80] sm:$0x1]
      %v5660 = vld [vmem:[#allocation4 + $0x84] sm:$0xf]
      %v5661 = vld [vmem:[#allocation4 + $0x88] sm:$0xf]
      %v5662 = vld [vmem:[#allocation4 + $0x8c] sm:$0x1]
      %v5663 = vld [vmem:[#allocation4 + $0x90] sm:$0xf]
      %v5664 = vld [vmem:[#allocation4 + $0x94] sm:$0xf]
      %v5665 = vld [vmem:[#allocation4 + $0x98] sm:$0x1]
      %v5666 = vld [vmem:[#allocation4 + $0x9c] sm:$0xf]
      %v5667 = vld [vmem:[#allocation4 + $0xa0] sm:$0xf]
      %v5668 = vld [vmem:[#allocation4 + $0xa4] sm:$0x1]
      %v5669 = vld [vmem:[#allocation4 + $0xa8] sm:$0xf]
      %v5670 = vld [vmem:[#allocation4 + $0xac] sm:$0xf]
      %v5671 = vld [vmem:[#allocation4 + $0xb0] sm:$0x1]
      %v5672 = vld [vmem:[#allocation4 + $0xb4] sm:$0xf]
      %v5673 = vld [vmem:[#allocation4 + $0xb8] sm:$0xf]
      %v5674 = vld [vmem:[#allocation4 + $0xbc] sm:$0x1]
      %v5675 = vld [vmem:[#allocation4 + $0xc0] sm:$0xf]
      %v5676 = vld [vmem:[#allocation4 + $0xc4] sm:$0xf]
      %v5677 = vld [vmem:[#allocation4 + $0xc8] sm:$0x1]
      %v5678 = vld [vmem:[#allocation4 + $0xcc] sm:$0xf]
      %v5679 = vld [vmem:[#allocation4 + $0xd0] sm:$0xf]
      %v5680 = vld [vmem:[#allocation4 + $0xd4] sm:$0x1]
      %v5682 = vshrl.u32 %v5627, 16
      %v5684 = vrot.slane %v5682, 4
      %v5685 = vshll.u32 %v5627, 16
      %v5687 = vrot.slane %v5685, 5
      %v5688 = vor.u32 %v5684, %v5687
      %v5689 = vrot.slane %v5688, 4
      %v5691 = vshll.u32 %v5628, 16
      %v5693 = vrot.slane %v5691, 5
      %v5694 = vsel %vm1121, %v5689, %v5693
      %v5695 = vshrl.u32 %v5628, 16
      %v5697 = vrot.slane %v5695, 4
      %v5698 = vor.u32 %v5697, %v5693
      %v5699 = vrot.slane %v5698, 4
      %v5701 = vshll.u32 %v5629, 16
      %v5703 = vrot.slane %v5701, 5
      %v5704 = vsel %vm1121, %v5699, %v5703
      %v5706 = vshrl.u32 %v5630, 16
      %v5708 = vrot.slane %v5706, 4
      %v5709 = vshll.u32 %v5630, 16
      %v5711 = vrot.slane %v5709, 5
      %v5712 = vor.u32 %v5708, %v5711
      %v5713 = vrot.slane %v5712, 4
      %v5715 = vshll.u32 %v5631, 16
      %v5717 = vrot.slane %v5715, 5
      %v5718 = vsel %vm1121, %v5713, %v5717
      %v5719 = vshrl.u32 %v5631, 16
      %v5721 = vrot.slane %v5719, 4
      %v5722 = vor.u32 %v5721, %v5717
      %v5723 = vrot.slane %v5722, 4
      %v5725 = vshll.u32 %v5632, 16
      %v5727 = vrot.slane %v5725, 5
      %v5728 = vsel %vm1121, %v5723, %v5727
      %v5730 = vshrl.u32 %v5633, 16
      %v5732 = vrot.slane %v5730, 4
      %v5733 = vshll.u32 %v5633, 16
      %v5735 = vrot.slane %v5733, 5
      %v5736 = vor.u32 %v5732, %v5735
      %v5737 = vrot.slane %v5736, 4
      %v5739 = vshll.u32 %v5634, 16
      %v5741 = vrot.slane %v5739, 5
      %v5742 = vsel %vm1121, %v5737, %v5741
      %v5743 = vshrl.u32 %v5634, 16
      %v5745 = vrot.slane %v5743, 4
      %v5746 = vor.u32 %v5745, %v5741
      %v5747 = vrot.slane %v5746, 4
      %v5749 = vshll.u32 %v5635, 16
      %v5751 = vrot.slane %v5749, 5
      %v5752 = vsel %vm1121, %v5747, %v5751
      %v5754 = vshrl.u32 %v5636, 16
      %v5756 = vrot.slane %v5754, 4
      %v5757 = vshll.u32 %v5636, 16
      %v5759 = vrot.slane %v5757, 5
      %v5760 = vor.u32 %v5756, %v5759
      %v5761 = vrot.slane %v5760, 4
      %v5763 = vshll.u32 %v5637, 16
      %v5765 = vrot.slane %v5763, 5
      %v5766 = vsel %vm1121, %v5761, %v5765
      %v5767 = vshrl.u32 %v5637, 16
      %v5769 = vrot.slane %v5767, 4
      %v5770 = vor.u32 %v5769, %v5765
      %v5771 = vrot.slane %v5770, 4
      %v5773 = vshll.u32 %v5638, 16
      %v5775 = vrot.slane %v5773, 5
      %v5776 = vsel %vm1121, %v5771, %v5775
      %v5778 = vshrl.u32 %v5639, 16
      %v5780 = vrot.slane %v5778, 4
      %v5781 = vshll.u32 %v5639, 16
      %v5783 = vrot.slane %v5781, 5
      %v5784 = vor.u32 %v5780, %v5783
      %v5785 = vrot.slane %v5784, 4
      %v5787 = vshll.u32 %v5640, 16
      %v5789 = vrot.slane %v5787, 5
      %v5790 = vsel %vm1121, %v5785, %v5789
      %v5791 = vshrl.u32 %v5640, 16
      %v5793 = vrot.slane %v5791, 4
      %v5794 = vor.u32 %v5793, %v5789
      %v5795 = vrot.slane %v5794, 4
      %v5797 = vshll.u32 %v5641, 16
      %v5799 = vrot.slane %v5797, 5
      %v5800 = vsel %vm1121, %v5795, %v5799
      %v5802 = vshrl.u32 %v5642, 16
      %v5804 = vrot.slane %v5802, 4
      %v5805 = vshll.u32 %v5642, 16
      %v5807 = vrot.slane %v5805, 5
      %v5808 = vor.u32 %v5804, %v5807
      %v5809 = vrot.slane %v5808, 4
      %v5811 = vshll.u32 %v5643, 16
      %v5813 = vrot.slane %v5811, 5
      %v5814 = vsel %vm1121, %v5809, %v5813
      %v5815 = vshrl.u32 %v5643, 16
      %v5817 = vrot.slane %v5815, 4
      %v5818 = vor.u32 %v5817, %v5813
      %v5819 = vrot.slane %v5818, 4
      %v5821 = vshll.u32 %v5644, 16
      %v5823 = vrot.slane %v5821, 5
      %v5824 = vsel %vm1121, %v5819, %v5823
      %v5826 = vshrl.u32 %v5645, 16
      %v5828 = vrot.slane %v5826, 4
      %v5829 = vshll.u32 %v5645, 16
      %v5831 = vrot.slane %v5829, 5
      %v5832 = vor.u32 %v5828, %v5831
      %v5833 = vrot.slane %v5832, 4
      %v5835 = vshll.u32 %v5646, 16
      %v5837 = vrot.slane %v5835, 5
      %v5838 = vsel %vm1121, %v5833, %v5837
      %v5839 = vshrl.u32 %v5646, 16
      %v5841 = vrot.slane %v5839, 4
      %v5842 = vor.u32 %v5841, %v5837
      %v5843 = vrot.slane %v5842, 4
      %v5845 = vshll.u32 %v5647, 16
      %v5847 = vrot.slane %v5845, 5
      %v5848 = vsel %vm1121, %v5843, %v5847
      %v5850 = vshrl.u32 %v5648, 16
      %v5852 = vrot.slane %v5850, 4
      %v5853 = vshll.u32 %v5648, 16
      %v5855 = vrot.slane %v5853, 5
      %v5856 = vor.u32 %v5852, %v5855
      %v5857 = vrot.slane %v5856, 4
      %v5859 = vshll.u32 %v5649, 16
      %v5861 = vrot.slane %v5859, 5
      %v5862 = vsel %vm1121, %v5857, %v5861
      %v5863 = vshrl.u32 %v5649, 16
      %v5865 = vrot.slane %v5863, 4
      %v5866 = vor.u32 %v5865, %v5861
      %v5867 = vrot.slane %v5866, 4
      %v5869 = vshll.u32 %v5650, 16
      %v5871 = vrot.slane %v5869, 5
      %v5872 = vsel %vm1121, %v5867, %v5871
      %v5874 = vshrl.u32 %v5651, 16
      %v5876 = vrot.slane %v5874, 4
      %v5877 = vshll.u32 %v5651, 16
      %v5879 = vrot.slane %v5877, 5
      %v5880 = vor.u32 %v5876, %v5879
      %v5881 = vrot.slane %v5880, 4
      %v5883 = vshll.u32 %v5652, 16
      %v5885 = vrot.slane %v5883, 5
      %v5886 = vsel %vm1121, %v5881, %v5885
      %v5887 = vshrl.u32 %v5652, 16
      %v5889 = vrot.slane %v5887, 4
      %v5890 = vor.u32 %v5889, %v5885
      %v5891 = vrot.slane %v5890, 4
      %v5893 = vshll.u32 %v5653, 16
      %v5895 = vrot.slane %v5893, 5
      %v5896 = vsel %vm1121, %v5891, %v5895
      %v5898 = vshrl.u32 %v5654, 16
      %v5900 = vrot.slane %v5898, 4
      %v5901 = vshll.u32 %v5654, 16
      %v5903 = vrot.slane %v5901, 5
      %v5904 = vor.u32 %v5900, %v5903
      %v5905 = vrot.slane %v5904, 4
      %v5907 = vshll.u32 %v5655, 16
      %v5909 = vrot.slane %v5907, 5
      %v5910 = vsel %vm1121, %v5905, %v5909
      %v5911 = vshrl.u32 %v5655, 16
      %v5913 = vrot.slane %v5911, 4
      %v5914 = vor.u32 %v5913, %v5909
      %v5915 = vrot.slane %v5914, 4
      %v5917 = vshll.u32 %v5656, 16
      %v5919 = vrot.slane %v5917, 5
      %v5920 = vsel %vm1121, %v5915, %v5919
      %v5922 = vshrl.u32 %v5657, 16
      %v5924 = vrot.slane %v5922, 4
      %v5925 = vshll.u32 %v5657, 16
      %v5927 = vrot.slane %v5925, 5
      %v5928 = vor.u32 %v5924, %v5927
      %v5929 = vrot.slane %v5928, 4
      %v5931 = vshll.u32 %v5658, 16
      %v5933 = vrot.slane %v5931, 5
      %v5934 = vsel %vm1121, %v5929, %v5933
      %v5935 = vshrl.u32 %v5658, 16
      %v5937 = vrot.slane %v5935, 4
      %v5938 = vor.u32 %v5937, %v5933
      %v5939 = vrot.slane %v5938, 4
      %v5941 = vshll.u32 %v5659, 16
      %v5943 = vrot.slane %v5941, 5
      %v5944 = vsel %vm1121, %v5939, %v5943
      %v5946 = vshrl.u32 %v5660, 16
      %v5948 = vrot.slane %v5946, 4
      %v5949 = vshll.u32 %v5660, 16
      %v5951 = vrot.slane %v5949, 5
      %v5952 = vor.u32 %v5948, %v5951
      %v5953 = vrot.slane %v5952, 4
      %v5955 = vshll.u32 %v5661, 16
      %v5957 = vrot.slane %v5955, 5
      %v5958 = vsel %vm1121, %v5953, %v5957
      %v5959 = vshrl.u32 %v5661, 16
      %v5961 = vrot.slane %v5959, 4
      %v5962 = vor.u32 %v5961, %v5957
      %v5963 = vrot.slane %v5962, 4
      %v5965 = vshll.u32 %v5662, 16
      %v5967 = vrot.slane %v5965, 5
      %v5968 = vsel %vm1121, %v5963, %v5967
      %v5970 = vshrl.u32 %v5663, 16
      %v5972 = vrot.slane %v5970, 4
      %v5973 = vshll.u32 %v5663, 16
      %v5975 = vrot.slane %v5973, 5
      %v5976 = vor.u32 %v5972, %v5975
      %v5977 = vrot.slane %v5976, 4
      %v5979 = vshll.u32 %v5664, 16
      %v5981 = vrot.slane %v5979, 5
      %v5982 = vsel %vm1121, %v5977, %v5981
      %v5983 = vshrl.u32 %v5664, 16
      %v5985 = vrot.slane %v5983, 4
      %v5986 = vor.u32 %v5985, %v5981
      %v5987 = vrot.slane %v5986, 4
      %v5989 = vshll.u32 %v5665, 16
      %v5991 = vrot.slane %v5989, 5
      %v5992 = vsel %vm1121, %v5987, %v5991
      %v5994 = vshrl.u32 %v5666, 16
      %v5996 = vrot.slane %v5994, 4
      %v5997 = vshll.u32 %v5666, 16
      %v5999 = vrot.slane %v5997, 5
      %v6000 = vor.u32 %v5996, %v5999
      %v6001 = vrot.slane %v6000, 4
      %v6003 = vshll.u32 %v5667, 16
      %v6005 = vrot.slane %v6003, 5
      %v6006 = vsel %vm1121, %v6001, %v6005
      %v6007 = vshrl.u32 %v5667, 16
      %v6009 = vrot.slane %v6007, 4
      %v6010 = vor.u32 %v6009, %v6005
      %v6011 = vrot.slane %v6010, 4
      %v6013 = vshll.u32 %v5668, 16
      %v6015 = vrot.slane %v6013, 5
      %v6016 = vsel %vm1121, %v6011, %v6015
      %v6018 = vshrl.u32 %v5669, 16
      %v6020 = vrot.slane %v6018, 4
      %v6021 = vshll.u32 %v5669, 16
      %v6023 = vrot.slane %v6021, 5
      %v6024 = vor.u32 %v6020, %v6023
      %v6025 = vrot.slane %v6024, 4
      %v6027 = vshll.u32 %v5670, 16
      %v6029 = vrot.slane %v6027, 5
      %v6030 = vsel %vm1121, %v6025, %v6029
      %v6031 = vshrl.u32 %v5670, 16
      %v6033 = vrot.slane %v6031, 4
      %v6034 = vor.u32 %v6033, %v6029
      %v6035 = vrot.slane %v6034, 4
      %v6037 = vshll.u32 %v5671, 16
      %v6039 = vrot.slane %v6037, 5
      %v6040 = vsel %vm1121, %v6035, %v6039
      %v6042 = vshrl.u32 %v5672, 16
      %v6044 = vrot.slane %v6042, 4
      %v6045 = vshll.u32 %v5672, 16
      %v6047 = vrot.slane %v6045, 5
      %v6048 = vor.u32 %v6044, %v6047
      %v6049 = vrot.slane %v6048, 4
      %v6051 = vshll.u32 %v5673, 16
      %v6053 = vrot.slane %v6051, 5
      %v6054 = vsel %vm1121, %v6049, %v6053
      %v6055 = vshrl.u32 %v5673, 16
      %v6057 = vrot.slane %v6055, 4
      %v6058 = vor.u32 %v6057, %v6053
      %v6059 = vrot.slane %v6058, 4
      %v6061 = vshll.u32 %v5674, 16
      %v6063 = vrot.slane %v6061, 5
      %v6064 = vsel %vm1121, %v6059, %v6063
      %v6113 = vrot.slane %v5627, 5
      %v6114 = vrot.slane %v6113, 4
      %v6115 = vrot.slane %v5628, 5
      %v6116 = vsel %vm1556, %v6114, %v6115
      %v6117 = vrot.slane %v6115, 4
      %v6118 = vrot.slane %v5629, 5
      %v6119 = vsel %vm1556, %v6117, %v6118
      %v6120 = vrot.slane %v5630, 5
      %v6121 = vrot.slane %v6120, 4
      %v6122 = vrot.slane %v5631, 5
      %v6123 = vsel %vm1556, %v6121, %v6122
      %v6124 = vrot.slane %v6122, 4
      %v6125 = vrot.slane %v5632, 5
      %v6126 = vsel %vm1556, %v6124, %v6125
      %v6127 = vrot.slane %v5633, 5
      %v6128 = vrot.slane %v6127, 4
      %v6129 = vrot.slane %v5634, 5
      %v6130 = vsel %vm1556, %v6128, %v6129
      %v6131 = vrot.slane %v6129, 4
      %v6132 = vrot.slane %v5635, 5
      %v6133 = vsel %vm1556, %v6131, %v6132
      %v6134 = vrot.slane %v5636, 5
      %v6135 = vrot.slane %v6134, 4
      %v6136 = vrot.slane %v5637, 5
      %v6137 = vsel %vm1556, %v6135, %v6136
      %v6138 = vrot.slane %v6136, 4
      %v6139 = vrot.slane %v5638, 5
      %v6140 = vsel %vm1556, %v6138, %v6139
      %v6141 = vrot.slane %v5639, 5
      %v6142 = vrot.slane %v6141, 4
      %v6143 = vrot.slane %v5640, 5
      %v6144 = vsel %vm1556, %v6142, %v6143
      %v6145 = vrot.slane %v6143, 4
      %v6146 = vrot.slane %v5641, 5
      %v6147 = vsel %vm1556, %v6145, %v6146
      %v6148 = vrot.slane %v5642, 5
      %v6149 = vrot.slane %v6148, 4
      %v6150 = vrot.slane %v5643, 5
      %v6151 = vsel %vm1556, %v6149, %v6150
      %v6152 = vrot.slane %v6150, 4
      %v6153 = vrot.slane %v5644, 5
      %v6154 = vsel %vm1556, %v6152, %v6153
      %v6155 = vrot.slane %v5645, 5
      %v6156 = vrot.slane %v6155, 4
      %v6157 = vrot.slane %v5646, 5
      %v6158 = vsel %vm1556, %v6156, %v6157
      %v6159 = vrot.slane %v6157, 4
      %v6160 = vrot.slane %v5647, 5
      %v6161 = vsel %vm1556, %v6159, %v6160
      %v6162 = vrot.slane %v5648, 5
      %v6163 = vrot.slane %v6162, 4
      %v6164 = vrot.slane %v5649, 5
      %v6165 = vsel %vm1556, %v6163, %v6164
      %v6166 = vrot.slane %v6164, 4
      %v6167 = vrot.slane %v5650, 5
      %v6168 = vsel %vm1556, %v6166, %v6167
      %v6169 = vrot.slane %v5651, 5
      %v6170 = vrot.slane %v6169, 4
      %v6171 = vrot.slane %v5652, 5
      %v6172 = vsel %vm1556, %v6170, %v6171
      %v6173 = vrot.slane %v6171, 4
      %v6174 = vrot.slane %v5653, 5
      %v6175 = vsel %vm1556, %v6173, %v6174
      %v6176 = vrot.slane %v5654, 5
      %v6177 = vrot.slane %v6176, 4
      %v6178 = vrot.slane %v5655, 5
      %v6179 = vsel %vm1556, %v6177, %v6178
      %v6180 = vrot.slane %v6178, 4
      %v6181 = vrot.slane %v5656, 5
      %v6182 = vsel %vm1556, %v6180, %v6181
      %v6183 = vrot.slane %v5657, 5
      %v6184 = vrot.slane %v6183, 4
      %v6185 = vrot.slane %v5658, 5
      %v6186 = vsel %vm1556, %v6184, %v6185
      %v6187 = vrot.slane %v6185, 4
      %v6188 = vrot.slane %v5659, 5
      %v6189 = vsel %vm1556, %v6187, %v6188
      %v6190 = vrot.slane %v5660, 5
      %v6191 = vrot.slane %v6190, 4
      %v6192 = vrot.slane %v5661, 5
      %v6193 = vsel %vm1556, %v6191, %v6192
      %v6194 = vrot.slane %v6192, 4
      %v6195 = vrot.slane %v5662, 5
      %v6196 = vsel %vm1556, %v6194, %v6195
      %v6197 = vrot.slane %v5663, 5
      %v6198 = vrot.slane %v6197, 4
      %v6199 = vrot.slane %v5664, 5
      %v6200 = vsel %vm1556, %v6198, %v6199
      %v6201 = vrot.slane %v6199, 4
      %v6202 = vrot.slane %v5665, 5
      %v6203 = vsel %vm1556, %v6201, %v6202
      %v6204 = vrot.slane %v5666, 5
      %v6205 = vrot.slane %v6204, 4
      %v6206 = vrot.slane %v5667, 5
      %v6207 = vsel %vm1556, %v6205, %v6206
      %v6208 = vrot.slane %v6206, 4
      %v6209 = vrot.slane %v5668, 5
      %v6210 = vsel %vm1556, %v6208, %v6209
      %v6211 = vrot.slane %v5669, 5
      %v6212 = vrot.slane %v6211, 4
      %v6213 = vrot.slane %v5670, 5
      %v6214 = vsel %vm1556, %v6212, %v6213
      %v6215 = vrot.slane %v6213, 4
      %v6216 = vrot.slane %v5671, 5
      %v6217 = vsel %vm1556, %v6215, %v6216
      %v6218 = vrot.slane %v5672, 5
      %v6219 = vrot.slane %v6218, 4
      %v6220 = vrot.slane %v5673, 5
      %v6221 = vsel %vm1556, %v6219, %v6220
      %v6222 = vrot.slane %v6220, 4
      %v6223 = vrot.slane %v5674, 5
      %v6224 = vsel %vm1556, %v6222, %v6223
      %v6226 = vshrl.u32 %v5675, 16
      %v6228 = vrot.slane %v6226, 4
      %v6229 = vshll.u32 %v5675, 16
      %v6231 = vrot.slane %v6229, 5
      %v6232 = vor.u32 %v6228, %v6231
      %v6233 = vrot.slane %v6232, 4
      %v6235 = vshll.u32 %v5676, 16
      %v6237 = vrot.slane %v6235, 5
      %v6238 = vsel %vm1121, %v6233, %v6237
      %v6239 = vshrl.u32 %v5676, 16
      %v6241 = vrot.slane %v6239, 4
      %v6242 = vor.u32 %v6241, %v6237
      %v6243 = vrot.slane %v6242, 4
      %v6245 = vshll.u32 %v5677, 16
      %v6247 = vrot.slane %v6245, 5
      %v6248 = vsel %vm1121, %v6243, %v6247
      %v6252 = vrot.slane %v5675, 5
      %v6253 = vrot.slane %v6252, 4
      %v6254 = vrot.slane %v5676, 5
      %v6255 = vsel %vm1556, %v6253, %v6254
      %v6256 = vrot.slane %v6254, 4
      %v6257 = vrot.slane %v5677, 5
      %v6258 = vsel %vm1556, %v6256, %v6257
      %v6260 = vshrl.u32 %v5678, 16
      %v6262 = vrot.slane %v6260, 4
      %v6263 = vshll.u32 %v5678, 16
      %v6265 = vrot.slane %v6263, 5
      %v6266 = vor.u32 %v6262, %v6265
      %v6267 = vrot.slane %v6266, 4
      %v6269 = vshll.u32 %v5679, 16
      %v6271 = vrot.slane %v6269, 5
      %v6272 = vsel %vm1121, %v6267, %v6271
      %v6273 = vshrl.u32 %v5679, 16
      %v6275 = vrot.slane %v6273, 4
      %v6276 = vor.u32 %v6275, %v6271
      %v6277 = vrot.slane %v6276, 4
      %v6279 = vshll.u32 %v5680, 16
      %v6281 = vrot.slane %v6279, 5
      %v6282 = vsel %vm1121, %v6277, %v6281
      %v6286 = vrot.slane %v5678, 5
      %v6287 = vrot.slane %v6286, 4
      %v6288 = vrot.slane %v5679, 5
      %v6289 = vsel %vm1556, %v6287, %v6288
      %v6290 = vrot.slane %v6288, 4
      %v6291 = vrot.slane %v5680, 5
      %v6292 = vsel %vm1556, %v6290, %v6291
      %v6293 = vunpack.c.l.b16 %v5627
      %v6294 = vunpack.c.l.b16 %v5628
      %v6295 = vunpack.c.l.b16 %v5630
      %v6296 = vunpack.c.l.b16 %v5631
      %v6297 = vunpack.c.l.b16 %v5633
      %v6298 = vunpack.c.l.b16 %v5634
      %v6299 = vunpack.c.l.b16 %v5636
      %v6300 = vunpack.c.l.b16 %v5637
      %v6301 = vunpack.c.l.b16 %v5639
      %v6302 = vunpack.c.l.b16 %v5640
      %v6303 = vunpack.c.l.b16 %v5642
      %v6304 = vunpack.c.l.b16 %v5643
      %v6305 = vunpack.c.l.b16 %v5645
      %v6306 = vunpack.c.l.b16 %v5646
      %v6307 = vunpack.c.l.b16 %v5648
      %v6308 = vunpack.c.l.b16 %v5649
      %v6309 = vunpack.c.l.b16 %v5651
      %v6310 = vunpack.c.l.b16 %v5652
      %v6311 = vunpack.c.l.b16 %v5654
      %v6312 = vunpack.c.l.b16 %v5655
      %v6313 = vunpack.c.l.b16 %v5657
      %v6314 = vunpack.c.l.b16 %v5658
      %v6315 = vunpack.c.l.b16 %v5660
      %v6316 = vunpack.c.l.b16 %v5661
      %v6317 = vunpack.c.l.b16 %v5663
      %v6318 = vunpack.c.l.b16 %v5664
      %v6319 = vunpack.c.l.b16 %v5666
      %v6320 = vunpack.c.l.b16 %v5667
      %v6321 = vunpack.c.l.b16 %v5669
      %v6322 = vunpack.c.l.b16 %v5670
      %v6323 = vunpack.c.l.b16 %v5672
      %v6324 = vunpack.c.l.b16 %v5673
      %v6325 = vpack.c.b16 %v6294, %v6293
      %v6326 = vpack.c.b16 %v6296, %v6295
      %v6327 = vpack.c.b16 %v6298, %v6297
      %v6328 = vpack.c.b16 %v6300, %v6299
      %v6329 = vpack.c.b16 %v6302, %v6301
      %v6330 = vpack.c.b16 %v6304, %v6303
      %v6331 = vpack.c.b16 %v6306, %v6305
      %v6332 = vpack.c.b16 %v6308, %v6307
      %v6333 = vpack.c.b16 %v6310, %v6309
      %v6334 = vpack.c.b16 %v6312, %v6311
      %v6335 = vpack.c.b16 %v6314, %v6313
      %v6336 = vpack.c.b16 %v6316, %v6315
      %v6337 = vpack.c.b16 %v6318, %v6317
      %v6338 = vpack.c.b16 %v6320, %v6319
      %v6339 = vpack.c.b16 %v6322, %v6321
      %v6340 = vpack.c.b16 %v6324, %v6323
      %v6341 = vunpack.c.l.b16 %v5694
      %v6342 = vunpack.c.l.b16 %v5704
      %v6343 = vunpack.c.l.b16 %v5718
      %v6344 = vunpack.c.l.b16 %v5728
      %v6345 = vunpack.c.l.b16 %v5742
      %v6346 = vunpack.c.l.b16 %v5752
      %v6347 = vunpack.c.l.b16 %v5766
      %v6348 = vunpack.c.l.b16 %v5776
      %v6349 = vunpack.c.l.b16 %v5790
      %v6350 = vunpack.c.l.b16 %v5800
      %v6351 = vunpack.c.l.b16 %v5814
      %v6352 = vunpack.c.l.b16 %v5824
      %v6353 = vunpack.c.l.b16 %v5838
      %v6354 = vunpack.c.l.b16 %v5848
      %v6355 = vunpack.c.l.b16 %v5862
      %v6356 = vunpack.c.l.b16 %v5872
      %v6357 = vunpack.c.l.b16 %v5886
      %v6358 = vunpack.c.l.b16 %v5896
      %v6359 = vunpack.c.l.b16 %v5910
      %v6360 = vunpack.c.l.b16 %v5920
      %v6361 = vunpack.c.l.b16 %v5934
      %v6362 = vunpack.c.l.b16 %v5944
      %v6363 = vunpack.c.l.b16 %v5958
      %v6364 = vunpack.c.l.b16 %v5968
      %v6365 = vunpack.c.l.b16 %v5982
      %v6366 = vunpack.c.l.b16 %v5992
      %v6367 = vunpack.c.l.b16 %v6006
      %v6368 = vunpack.c.l.b16 %v6016
      %v6369 = vunpack.c.l.b16 %v6030
      %v6370 = vunpack.c.l.b16 %v6040
      %v6371 = vunpack.c.l.b16 %v6054
      %v6372 = vunpack.c.l.b16 %v6064
      %v6373 = vpack.c.b16 %v6342, %v6341
      %v6374 = vpack.c.b16 %v6344, %v6343
      %v6375 = vpack.c.b16 %v6346, %v6345
      %v6376 = vpack.c.b16 %v6348, %v6347
      %v6377 = vpack.c.b16 %v6350, %v6349
      %v6378 = vpack.c.b16 %v6352, %v6351
      %v6379 = vpack.c.b16 %v6354, %v6353
      %v6380 = vpack.c.b16 %v6356, %v6355
      %v6381 = vpack.c.b16 %v6358, %v6357
      %v6382 = vpack.c.b16 %v6360, %v6359
      %v6383 = vpack.c.b16 %v6362, %v6361
      %v6384 = vpack.c.b16 %v6364, %v6363
      %v6385 = vpack.c.b16 %v6366, %v6365
      %v6386 = vpack.c.b16 %v6368, %v6367
      %v6387 = vpack.c.b16 %v6370, %v6369
      %v6388 = vpack.c.b16 %v6372, %v6371
      %6389 = vrot.lane.b32.xlu0 %v6373, 32
      %v6390 = vpop.permute.xlu0 %6389
      %6391 = vrot.lane.b32.xlu0 %v6374, 32
      %v6392 = vpop.permute.xlu0 %6391
      %6393 = vrot.lane.b32.xlu0 %v6375, 32
      %v6394 = vpop.permute.xlu0 %6393
      %6395 = vrot.lane.b32.xlu0 %v6376, 32
      %v6396 = vpop.permute.xlu0 %6395
      %6397 = vrot.lane.b32.xlu0 %v6377, 32
      %v6398 = vpop.permute.xlu0 %6397
      %6399 = vrot.lane.b32.xlu0 %v6378, 32
      %v6400 = vpop.permute.xlu0 %6399
      %6401 = vrot.lane.b32.xlu0 %v6379, 32
      %v6402 = vpop.permute.xlu0 %6401
      %6403 = vrot.lane.b32.xlu0 %v6380, 32
      %v6404 = vpop.permute.xlu0 %6403
      %6405 = vrot.lane.b32.xlu0 %v6381, 32
      %v6406 = vpop.permute.xlu0 %6405
      %6407 = vrot.lane.b32.xlu0 %v6382, 32
      %v6408 = vpop.permute.xlu0 %6407
      %6409 = vrot.lane.b32.xlu0 %v6383, 32
      %v6410 = vpop.permute.xlu0 %6409
      %6411 = vrot.lane.b32.xlu0 %v6384, 32
      %v6412 = vpop.permute.xlu0 %6411
      %6413 = vrot.lane.b32.xlu0 %v6385, 32
      %v6414 = vpop.permute.xlu0 %6413
      %6415 = vrot.lane.b32.xlu0 %v6386, 32
      %v6416 = vpop.permute.xlu0 %6415
      %6417 = vrot.lane.b32.xlu0 %v6387, 32
      %v6418 = vpop.permute.xlu0 %6417
      %6419 = vrot.lane.b32.xlu0 %v6388, 32
      %v6420 = vpop.permute.xlu0 %6419
      %v6421 = vunpack.c.l.b16 %v6116
      %v6422 = vunpack.c.l.b16 %v6119
      %v6423 = vunpack.c.l.b16 %v6123
      %v6424 = vunpack.c.l.b16 %v6126
      %v6425 = vunpack.c.l.b16 %v6130
      %v6426 = vunpack.c.l.b16 %v6133
      %v6427 = vunpack.c.l.b16 %v6137
      %v6428 = vunpack.c.l.b16 %v6140
      %v6429 = vunpack.c.l.b16 %v6144
      %v6430 = vunpack.c.l.b16 %v6147
      %v6431 = vunpack.c.l.b16 %v6151
      %v6432 = vunpack.c.l.b16 %v6154
      %v6433 = vunpack.c.l.b16 %v6158
      %v6434 = vunpack.c.l.b16 %v6161
      %v6435 = vunpack.c.l.b16 %v6165
      %v6436 = vunpack.c.l.b16 %v6168
      %v6437 = vunpack.c.l.b16 %v6172
      %v6438 = vunpack.c.l.b16 %v6175
      %v6439 = vunpack.c.l.b16 %v6179
      %v6440 = vunpack.c.l.b16 %v6182
      %v6441 = vunpack.c.l.b16 %v6186
      %v6442 = vunpack.c.l.b16 %v6189
      %v6443 = vunpack.c.l.b16 %v6193
      %v6444 = vunpack.c.l.b16 %v6196
      %v6445 = vunpack.c.l.b16 %v6200
      %v6446 = vunpack.c.l.b16 %v6203
      %v6447 = vunpack.c.l.b16 %v6207
      %v6448 = vunpack.c.l.b16 %v6210
      %v6449 = vunpack.c.l.b16 %v6214
      %v6450 = vunpack.c.l.b16 %v6217
      %v6451 = vunpack.c.l.b16 %v6221
      %v6452 = vunpack.c.l.b16 %v6224
      %v6453 = vpack.c.b16 %v6422, %v6421
      %v6454 = vpack.c.b16 %v6424, %v6423
      %v6455 = vpack.c.b16 %v6426, %v6425
      %v6456 = vpack.c.b16 %v6428, %v6427
      %v6457 = vpack.c.b16 %v6430, %v6429
      %v6458 = vpack.c.b16 %v6432, %v6431
      %v6459 = vpack.c.b16 %v6434, %v6433
      %v6460 = vpack.c.b16 %v6436, %v6435
      %v6461 = vpack.c.b16 %v6438, %v6437
      %v6462 = vpack.c.b16 %v6440, %v6439
      %v6463 = vpack.c.b16 %v6442, %v6441
      %v6464 = vpack.c.b16 %v6444, %v6443
      %v6465 = vpack.c.b16 %v6446, %v6445
      %v6466 = vpack.c.b16 %v6448, %v6447
      %v6467 = vpack.c.b16 %v6450, %v6449
      %v6468 = vpack.c.b16 %v6452, %v6451
      %6469 = vrot.lane.b32.xlu0 %v6453, 64
      %v6470 = vpop.permute.xlu0 %6469
      %6471 = vrot.lane.b32.xlu0 %v6454, 64
      %v6472 = vpop.permute.xlu0 %6471
      %6473 = vrot.lane.b32.xlu0 %v6455, 64
      %v6474 = vpop.permute.xlu0 %6473
      %6475 = vrot.lane.b32.xlu0 %v6456, 64
      %v6476 = vpop.permute.xlu0 %6475
      %6477 = vrot.lane.b32.xlu0 %v6457, 64
      %v6478 = vpop.permute.xlu0 %6477
      %6479 = vrot.lane.b32.xlu0 %v6458, 64
      %v6480 = vpop.permute.xlu0 %6479
      %6481 = vrot.lane.b32.xlu0 %v6459, 64
      %v6482 = vpop.permute.xlu0 %6481
      %6483 = vrot.lane.b32.xlu0 %v6460, 64
      %v6484 = vpop.permute.xlu0 %6483
      %6485 = vrot.lane.b32.xlu0 %v6461, 64
      %v6486 = vpop.permute.xlu0 %6485
      %6487 = vrot.lane.b32.xlu0 %v6462, 64
      %v6488 = vpop.permute.xlu0 %6487
      %6489 = vrot.lane.b32.xlu0 %v6463, 64
      %v6490 = vpop.permute.xlu0 %6489
      %6491 = vrot.lane.b32.xlu0 %v6464, 64
      %v6492 = vpop.permute.xlu0 %6491
      %6493 = vrot.lane.b32.xlu0 %v6465, 64
      %v6494 = vpop.permute.xlu0 %6493
      %6495 = vrot.lane.b32.xlu0 %v6466, 64
      %v6496 = vpop.permute.xlu0 %6495
      %6497 = vrot.lane.b32.xlu0 %v6467, 64
      %v6498 = vpop.permute.xlu0 %6497
      %6499 = vrot.lane.b32.xlu0 %v6468, 64
      %v6500 = vpop.permute.xlu0 %6499
      %v6501 = vunpack.c.l.b16 %v5675
      %v6502 = vunpack.c.l.b16 %v5676
      %v6503 = vpack.c.b16 %v6502, %v6501
      %6504 = vrot.lane.b32.xlu0 %v6326, 96
      %v6505 = vpop.permute.xlu0 %6504
      %6506 = vrot.lane.b32.xlu0 %v6327, 96
      %v6507 = vpop.permute.xlu0 %6506
      %6508 = vrot.lane.b32.xlu0 %v6328, 96
      %v6509 = vpop.permute.xlu0 %6508
      %6510 = vrot.lane.b32.xlu0 %v6329, 96
      %v6511 = vpop.permute.xlu0 %6510
      %6512 = vrot.lane.b32.xlu0 %v6330, 96
      %v6513 = vpop.permute.xlu0 %6512
      %6514 = vrot.lane.b32.xlu0 %v6331, 96
      %v6515 = vpop.permute.xlu0 %6514
      %6516 = vrot.lane.b32.xlu0 %v6332, 96
      %v6517 = vpop.permute.xlu0 %6516
      %6518 = vrot.lane.b32.xlu0 %v6333, 96
      %v6519 = vpop.permute.xlu0 %6518
      %6520 = vrot.lane.b32.xlu0 %v6334, 96
      %v6521 = vpop.permute.xlu0 %6520
      %6522 = vrot.lane.b32.xlu0 %v6335, 96
      %v6523 = vpop.permute.xlu0 %6522
      %6524 = vrot.lane.b32.xlu0 %v6336, 96
      %v6525 = vpop.permute.xlu0 %6524
      %6526 = vrot.lane.b32.xlu0 %v6337, 96
      %v6527 = vpop.permute.xlu0 %6526
      %6528 = vrot.lane.b32.xlu0 %v6338, 96
      %v6529 = vpop.permute.xlu0 %6528
      %6530 = vrot.lane.b32.xlu0 %v6339, 96
      %v6531 = vpop.permute.xlu0 %6530
      %6532 = vrot.lane.b32.xlu0 %v6340, 96
      %v6533 = vpop.permute.xlu0 %6532
      %6534 = vrot.lane.b32.xlu0 %v6503, 96
      %v6535 = vpop.permute.xlu0 %6534
      %v6536 = vunpack.c.l.b16 %v6238
      %v6537 = vunpack.c.l.b16 %v6248
      %v6538 = vpack.c.b16 %v6537, %v6536
      %v6539 = vunpack.c.l.b16 %v6255
      %v6540 = vunpack.c.l.b16 %v6258
      %v6541 = vpack.c.b16 %v6540, %v6539
      %6542 = vrot.lane.b32.xlu0 %v6454, 32
      %v6543 = vpop.permute.xlu0 %6542
      %6544 = vrot.lane.b32.xlu0 %v6455, 32
      %v6545 = vpop.permute.xlu0 %6544
      %6546 = vrot.lane.b32.xlu0 %v6456, 32
      %v6547 = vpop.permute.xlu0 %6546
      %6548 = vrot.lane.b32.xlu0 %v6457, 32
      %v6549 = vpop.permute.xlu0 %6548
      %6550 = vrot.lane.b32.xlu0 %v6458, 32
      %v6551 = vpop.permute.xlu0 %6550
      %6552 = vrot.lane.b32.xlu0 %v6459, 32
      %v6553 = vpop.permute.xlu0 %6552
      %6554 = vrot.lane.b32.xlu0 %v6460, 32
      %v6555 = vpop.permute.xlu0 %6554
      %6556 = vrot.lane.b32.xlu0 %v6461, 32
      %v6557 = vpop.permute.xlu0 %6556
      %6558 = vrot.lane.b32.xlu0 %v6462, 32
      %v6559 = vpop.permute.xlu0 %6558
      %6560 = vrot.lane.b32.xlu0 %v6463, 32
      %v6561 = vpop.permute.xlu0 %6560
      %6562 = vrot.lane.b32.xlu0 %v6464, 32
      %v6563 = vpop.permute.xlu0 %6562
      %6564 = vrot.lane.b32.xlu0 %v6465, 32
      %v6565 = vpop.permute.xlu0 %6564
      %6566 = vrot.lane.b32.xlu0 %v6466, 32
      %v6567 = vpop.permute.xlu0 %6566
      %6568 = vrot.lane.b32.xlu0 %v6467, 32
      %v6569 = vpop.permute.xlu0 %6568
      %6570 = vrot.lane.b32.xlu0 %v6468, 32
      %v6571 = vpop.permute.xlu0 %6570
      %6572 = vrot.lane.b32.xlu0 %v6541, 32
      %v6573 = vpop.permute.xlu0 %6572
      %v6574 = vunpack.c.l.b16 %v5678
      %v6575 = vunpack.c.l.b16 %v5679
      %v6576 = vpack.c.b16 %v6575, %v6574
      %6577 = vrot.lane.b32.xlu0 %v6327, 64
      %v6578 = vpop.permute.xlu0 %6577
      %6579 = vrot.lane.b32.xlu0 %v6328, 64
      %v6580 = vpop.permute.xlu0 %6579
      %6581 = vrot.lane.b32.xlu0 %v6329, 64
      %v6582 = vpop.permute.xlu0 %6581
      %6583 = vrot.lane.b32.xlu0 %v6330, 64
      %v6584 = vpop.permute.xlu0 %6583
      %6585 = vrot.lane.b32.xlu0 %v6331, 64
      %v6586 = vpop.permute.xlu0 %6585
      %6587 = vrot.lane.b32.xlu0 %v6332, 64
      %v6588 = vpop.permute.xlu0 %6587
      %6589 = vrot.lane.b32.xlu0 %v6333, 64
      %v6590 = vpop.permute.xlu0 %6589
      %6591 = vrot.lane.b32.xlu0 %v6334, 64
      %v6592 = vpop.permute.xlu0 %6591
      %6593 = vrot.lane.b32.xlu0 %v6335, 64
      %v6594 = vpop.permute.xlu0 %6593
      %6595 = vrot.lane.b32.xlu0 %v6336, 64
      %v6596 = vpop.permute.xlu0 %6595
      %6597 = vrot.lane.b32.xlu0 %v6337, 64
      %v6598 = vpop.permute.xlu0 %6597
      %6599 = vrot.lane.b32.xlu0 %v6338, 64
      %v6600 = vpop.permute.xlu0 %6599
      %6601 = vrot.lane.b32.xlu0 %v6339, 64
      %v6602 = vpop.permute.xlu0 %6601
      %6603 = vrot.lane.b32.xlu0 %v6340, 64
      %v6604 = vpop.permute.xlu0 %6603
      %6605 = vrot.lane.b32.xlu0 %v6503, 64
      %v6606 = vpop.permute.xlu0 %6605
      %6607 = vrot.lane.b32.xlu0 %v6576, 64
      %v6608 = vpop.permute.xlu0 %6607
      %v6609 = vunpack.c.l.b16 %v6272
      %v6610 = vunpack.c.l.b16 %v6282
      %v6611 = vpack.c.b16 %v6610, %v6609
      %6612 = vrot.lane.b32.xlu0 %v6375, 96
      %v6613 = vpop.permute.xlu0 %6612
      %6614 = vrot.lane.b32.xlu0 %v6376, 96
      %v6615 = vpop.permute.xlu0 %6614
      %6616 = vrot.lane.b32.xlu0 %v6377, 96
      %v6617 = vpop.permute.xlu0 %6616
      %6618 = vrot.lane.b32.xlu0 %v6378, 96
      %v6619 = vpop.permute.xlu0 %6618
      %6620 = vrot.lane.b32.xlu0 %v6379, 96
      %v6621 = vpop.permute.xlu0 %6620
      %6622 = vrot.lane.b32.xlu0 %v6380, 96
      %v6623 = vpop.permute.xlu0 %6622
      %6624 = vrot.lane.b32.xlu0 %v6381, 96
      %v6625 = vpop.permute.xlu0 %6624
      %6626 = vrot.lane.b32.xlu0 %v6382, 96
      %v6627 = vpop.permute.xlu0 %6626
      %6628 = vrot.lane.b32.xlu0 %v6383, 96
      %v6629 = vpop.permute.xlu0 %6628
      %6630 = vrot.lane.b32.xlu0 %v6384, 96
      %v6631 = vpop.permute.xlu0 %6630
      %6632 = vrot.lane.b32.xlu0 %v6385, 96
      %v6633 = vpop.permute.xlu0 %6632
      %6634 = vrot.lane.b32.xlu0 %v6386, 96
      %v6635 = vpop.permute.xlu0 %6634
      %6636 = vrot.lane.b32.xlu0 %v6387, 96
      %v6637 = vpop.permute.xlu0 %6636
      %6638 = vrot.lane.b32.xlu0 %v6388, 96
      %v6639 = vpop.permute.xlu0 %6638
      %6640 = vrot.lane.b32.xlu0 %v6538, 96
      %v6641 = vpop.permute.xlu0 %6640
      %6642 = vrot.lane.b32.xlu0 %v6611, 96
      %v6643 = vpop.permute.xlu0 %6642
      %v6644 = vunpack.c.l.b16 %v6289
      %v6645 = vunpack.c.l.b16 %v6292
      %v6646 = vpack.c.b16 %v6645, %v6644
      %v6649 = vsel %vm4442, %v6325, %v6390
      %v6652 = vsel %vm4442, %v6326, %v6392
      %v6655 = vsel %vm4442, %v6327, %v6394
      %v6658 = vsel %vm4442, %v6328, %v6396
      %v6661 = vsel %vm4442, %v6329, %v6398
      %v6664 = vsel %vm4442, %v6330, %v6400
      %v6667 = vsel %vm4442, %v6331, %v6402
      %v6670 = vsel %vm4442, %v6332, %v6404
      %v6673 = vsel %vm4442, %v6333, %v6406
      %v6676 = vsel %vm4442, %v6334, %v6408
      %v6679 = vsel %vm4442, %v6335, %v6410
      %v6682 = vsel %vm4442, %v6336, %v6412
      %v6685 = vsel %vm4442, %v6337, %v6414
      %v6688 = vsel %vm4442, %v6338, %v6416
      %v6691 = vsel %vm4442, %v6339, %v6418
      %v6694 = vsel %vm4442, %v6340, %v6420
      %v6696 = vsel %vm4508, %v6649, %v6470
      %v6698 = vsel %vm4508, %v6652, %v6472
      %v6700 = vsel %vm4508, %v6655, %v6474
      %v6702 = vsel %vm4508, %v6658, %v6476
      %v6704 = vsel %vm4508, %v6661, %v6478
      %v6706 = vsel %vm4508, %v6664, %v6480
      %v6708 = vsel %vm4508, %v6667, %v6482
      %v6710 = vsel %vm4508, %v6670, %v6484
      %v6712 = vsel %vm4508, %v6673, %v6486
      %v6714 = vsel %vm4508, %v6676, %v6488
      %v6716 = vsel %vm4508, %v6679, %v6490
      %v6718 = vsel %vm4508, %v6682, %v6492
      %v6720 = vsel %vm4508, %v6685, %v6494
      %v6722 = vsel %vm4508, %v6688, %v6496
      %v6724 = vsel %vm4508, %v6691, %v6498
      %v6726 = vsel %vm4508, %v6694, %v6500
      %v6728 = vsel %vm4574, %v6696, %v6505
      %v6731 = vsel %vm4574, %v6698, %v6507
      %v6734 = vsel %vm4574, %v6700, %v6509
      %v6737 = vsel %vm4574, %v6702, %v6511
      %v6740 = vsel %vm4574, %v6704, %v6513
      %v6743 = vsel %vm4574, %v6706, %v6515
      %v6746 = vsel %vm4574, %v6708, %v6517
      %v6749 = vsel %vm4574, %v6710, %v6519
      %v6752 = vsel %vm4574, %v6712, %v6521
      %v6755 = vsel %vm4574, %v6714, %v6523
      %v6758 = vsel %vm4574, %v6716, %v6525
      %v6761 = vsel %vm4574, %v6718, %v6527
      %v6764 = vsel %vm4574, %v6720, %v6529
      %v6767 = vsel %vm4574, %v6722, %v6531
      %v6770 = vsel %vm4574, %v6724, %v6533
      %v6773 = vsel %vm4574, %v6726, %v6535
      %v6777 = vsel %vm4442, %v6374, %v6543
      %v6780 = vsel %vm4442, %v6375, %v6545
      %v6783 = vsel %vm4442, %v6376, %v6547
      %v6786 = vsel %vm4442, %v6377, %v6549
      %v6789 = vsel %vm4442, %v6378, %v6551
      %v6792 = vsel %vm4442, %v6379, %v6553
      %v6795 = vsel %vm4442, %v6380, %v6555
      %v6798 = vsel %vm4442, %v6381, %v6557
      %v6801 = vsel %vm4442, %v6382, %v6559
      %v6804 = vsel %vm4442, %v6383, %v6561
      %v6807 = vsel %vm4442, %v6384, %v6563
      %v6810 = vsel %vm4442, %v6385, %v6565
      %v6813 = vsel %vm4442, %v6386, %v6567
      %v6816 = vsel %vm4442, %v6387, %v6569
      %v6819 = vsel %vm4442, %v6388, %v6571
      %v6822 = vsel %vm4442, %v6538, %v6573
      %v6824 = vsel %vm4508, %v6777, %v6578
      %v6826 = vsel %vm4508, %v6780, %v6580
      %v6828 = vsel %vm4508, %v6783, %v6582
      %v6830 = vsel %vm4508, %v6786, %v6584
      %v6832 = vsel %vm4508, %v6789, %v6586
      %v6834 = vsel %vm4508, %v6792, %v6588
      %v6836 = vsel %vm4508, %v6795, %v6590
      %v6838 = vsel %vm4508, %v6798, %v6592
      %v6840 = vsel %vm4508, %v6801, %v6594
      %v6842 = vsel %vm4508, %v6804, %v6596
      %v6844 = vsel %vm4508, %v6807, %v6598
      %v6846 = vsel %vm4508, %v6810, %v6600
      %v6848 = vsel %vm4508, %v6813, %v6602
      %v6850 = vsel %vm4508, %v6816, %v6604
      %v6852 = vsel %vm4508, %v6819, %v6606
      %v6854 = vsel %vm4508, %v6822, %v6608
      %v6856 = vsel %vm4574, %v6824, %v6613
      %v6859 = vsel %vm4574, %v6826, %v6615
      %v6862 = vsel %vm4574, %v6828, %v6617
      %v6865 = vsel %vm4574, %v6830, %v6619
      %v6868 = vsel %vm4574, %v6832, %v6621
      %v6871 = vsel %vm4574, %v6834, %v6623
      %v6874 = vsel %vm4574, %v6836, %v6625
      %v6877 = vsel %vm4574, %v6838, %v6627
      %v6880 = vsel %vm4574, %v6840, %v6629
      %v6883 = vsel %vm4574, %v6842, %v6631
      %v6886 = vsel %vm4574, %v6844, %v6633
      %v6889 = vsel %vm4574, %v6846, %v6635
      %v6892 = vsel %vm4574, %v6848, %v6637
      %v6895 = vsel %vm4574, %v6850, %v6639
      %v6898 = vsel %vm4574, %v6852, %v6641
      %v6901 = vsel %vm4574, %v6854, %v6643
      %v6903 = vld [vmem:[%s5] sm:$0xf]
      %v6904 = vld [vmem:[%s5 + $0x4] sm:$0xf]
      %v6905 = vld [vmem:[%s5 + $0x8] sm:$0xf]
      %v6906 = vld [vmem:[%s5 + $0xc] sm:$0xf]
      %v6907 = vld [vmem:[%s5 + $0x10] sm:$0xf]
      %v6908 = vld [vmem:[%s5 + $0x14] sm:$0xf]
      %v6909 = vld [vmem:[%s5 + $0x18] sm:$0xf]
      %v6910 = vld [vmem:[%s5 + $0x1c] sm:$0xf]
      %v6911 = vld [vmem:[%s5 + $0x20] sm:$0xf]
      %v6912 = vld [vmem:[%s5 + $0x24] sm:$0xf]
      %v6913 = vld [vmem:[%s5 + $0x28] sm:$0xf]
      %v6914 = vld [vmem:[%s5 + $0x2c] sm:$0xf]
      %v6915 = vld [vmem:[%s5 + $0x30] sm:$0xf]
      %v6916 = vld [vmem:[%s5 + $0x34] sm:$0xf]
      %v6917 = vld [vmem:[%s5 + $0x38] sm:$0xf]
      %v6918 = vld [vmem:[%s5 + $0x3c] sm:$0xf]
      %v6919 = vld [vmem:[%s5 + $0x40] sm:$0xf]
      %v6920 = vld [vmem:[%s5 + $0x44] sm:$0xf]
      %v6921 = vld [vmem:[%s5 + $0x48] sm:$0xf]
      %v6922 = vld [vmem:[%s5 + $0x4c] sm:$0xf]
      %v6923 = vld [vmem:[%s5 + $0x50] sm:$0xf]
      %v6924 = vld [vmem:[%s5 + $0x54] sm:$0xf]
      %v6925 = vld [vmem:[%s5 + $0x58] sm:$0xf]
      %v6926 = vld [vmem:[%s5 + $0x5c] sm:$0xf]
      %v6927 = vld [vmem:[%s5 + $0x60] sm:$0xf]
      %v6928 = vld [vmem:[%s5 + $0x64] sm:$0xf]
      %v6929 = vld [vmem:[%s5 + $0x68] sm:$0xf]
      %v6930 = vld [vmem:[%s5 + $0x6c] sm:$0xf]
      %v6931 = vld [vmem:[%s5 + $0x70] sm:$0xf]
      %v6932 = vld [vmem:[%s5 + $0x74] sm:$0xf]
      %v6933 = vld [vmem:[%s5 + $0x78] sm:$0xf]
      %v6934 = vld [vmem:[%s5 + $0x7c] sm:$0xf]
      %v6935 = vld [vmem:[%s5 + $0x80] sm:$0xf]
      %v6936 = vld [vmem:[%s5 + $0x84] sm:$0xf]
      %v6937 = vld [vmem:[%s5 + $0x88] sm:$0xf]
      %v6938 = vld [vmem:[%s5 + $0x8c] sm:$0xf]
      %v6939 = vld [vmem:[%s6] sm:$0x1]
      %v6941 = vlaneseq
      %v6942 = vshrl.u32 %v6941, 7
      %v6943 = vsub.s32 0, %v6942
      %v6944 = vrot.slane %v6939, %v6943
      %v6982 = vunpack.c.l.b16 %v6903
      %v6983 = vunpack.c.l.b16 %v6904
      %v6984 = vunpack.c.l.b16 %v6905
      %v6985 = vunpack.c.l.b16 %v6906
      %v6986 = vunpack.c.l.b16 %v6907
      %v6987 = vunpack.c.l.b16 %v6908
      %v6988 = vunpack.c.l.b16 %v6909
      %v6989 = vunpack.c.l.b16 %v6910
      %v6990 = vunpack.c.l.b16 %v6911
      %v6991 = vunpack.c.l.b16 %v6912
      %v6992 = vunpack.c.l.b16 %v6913
      %v6993 = vunpack.c.l.b16 %v6914
      %v6994 = vunpack.c.l.b16 %v6915
      %v6995 = vunpack.c.l.b16 %v6916
      %v6996 = vunpack.c.l.b16 %v6917
      %v6997 = vunpack.c.l.b16 %v6918
      %v6998 = vunpack.c.l.b16 %v6919
      %v6999 = vunpack.c.l.b16 %v6920
      %v7000 = vunpack.c.l.b16 %v6921
      %v7001 = vunpack.c.l.b16 %v6922
      %v7002 = vunpack.c.l.b16 %v6923
      %v7003 = vunpack.c.l.b16 %v6924
      %v7004 = vunpack.c.l.b16 %v6925
      %v7005 = vunpack.c.l.b16 %v6926
      %v7006 = vunpack.c.l.b16 %v6927
      %v7007 = vunpack.c.l.b16 %v6928
      %v7008 = vunpack.c.l.b16 %v6929
      %v7009 = vunpack.c.l.b16 %v6930
      %v7010 = vunpack.c.l.b16 %v6931
      %v7011 = vunpack.c.l.b16 %v6932
      %v7012 = vunpack.c.l.b16 %v6933
      %v7013 = vunpack.c.l.b16 %v6934
      %v7014 = vunpack.c.l.b16 %v6935
      %v7015 = vunpack.c.l.b16 %v6936
      %v7016 = vunpack.c.l.b16 %v6937
      %v7017 = vunpack.c.l.b16 %v6938
      %v7018 = vpack.c.b16 %v6983, %v6982
      %v7019 = vpack.c.b16 %v6985, %v6984
      %v7020 = vpack.c.b16 %v6987, %v6986
      %v7021 = vpack.c.b16 %v6989, %v6988
      %v7022 = vpack.c.b16 %v6991, %v6990
      %v7023 = vpack.c.b16 %v6993, %v6992
      %v7024 = vpack.c.b16 %v6995, %v6994
      %v7025 = vpack.c.b16 %v6997, %v6996
      %v7026 = vpack.c.b16 %v6999, %v6998
      %v7027 = vpack.c.b16 %v7001, %v7000
      %v7028 = vpack.c.b16 %v7003, %v7002
      %v7029 = vpack.c.b16 %v7005, %v7004
      %v7030 = vpack.c.b16 %v7007, %v7006
      %v7031 = vpack.c.b16 %v7009, %v7008
      %v7032 = vpack.c.b16 %v7011, %v7010
      %v7033 = vpack.c.b16 %v7013, %v7012
      %v7034 = vpack.c.b16 %v7015, %v7014
      %v7035 = vpack.c.b16 %v7017, %v7016
      %v7055 = vsel %vm4442, %v6455, 0
      %v7058 = vsel %vm4442, %v6456, 0
      %v7061 = vsel %vm4442, %v6457, 0
      %v7064 = vsel %vm4442, %v6458, 0
      %v7067 = vsel %vm4442, %v6459, 0
      %v7070 = vsel %vm4442, %v6460, 0
      %v7073 = vsel %vm4442, %v6461, 0
      %v7076 = vsel %vm4442, %v6462, 0
      %v7079 = vsel %vm4442, %v6463, 0
      %v7082 = vsel %vm4442, %v6464, 0
      %v7085 = vsel %vm4442, %v6465, 0
      %v7088 = vsel %vm4442, %v6466, 0
      %v7091 = vsel %vm4442, %v6467, 0
      %v7094 = vsel %vm4442, %v6468, 0
      %v7097 = vsel %vm4442, %v6541, 0
      %v7100 = vsel %vm4442, %v6646, 0
      %7102 = vmatprep.subr.bf16.mxu0 0
      %7103 = vmatpush1.bf16.msra.mxu0 %v7018
      %7104 = vmatprep.subr.bf16.mxu0 0
      %7105 = vmatpush1.bf16.msra.mxu0 %v7019
      %7106 = vmatprep.subr.bf16.mxu0 0
      %7107 = vmatpush1.bf16.msra.mxu0 %v7020
      %7108 = vmatprep.subr.bf16.mxu0 0
      %7109 = vmatpush1.bf16.msra.mxu0 %v7021
      %7110 = vmatprep.subr.bf16.mxu0 0
      %7111 = vmatpush1.bf16.msra.mxu0 %v7022
      %7112 = vmatprep.subr.bf16.mxu0 0
      %7113 = vmatpush1.bf16.msra.mxu0 %v7023
      %7114 = vmatprep.subr.bf16.mxu0 0
      %7115 = vmatpush1.bf16.msra.mxu0 %v7024
      %7116 = vmatprep.subr.bf16.mxu0 0
      %7117 = vmatpush1.bf16.msra.mxu0 %v7025
      %7118 = vmatprep.subr.bf16.mxu0 0
      %7119 = vmatpush1.bf16.msra.mxu0 %v7026
      %7120 = vmatprep.subr.bf16.mxu0 0
      %7121 = vmatpush1.bf16.msra.mxu0 %v7027
      %7122 = vmatprep.subr.bf16.mxu0 0
      %7123 = vmatpush1.bf16.msra.mxu0 %v7028
      %7124 = vmatprep.subr.bf16.mxu0 0
      %7125 = vmatpush1.bf16.msra.mxu0 %v7029
      %7126 = vmatprep.subr.bf16.mxu0 0
      %7127 = vmatpush1.bf16.msra.mxu0 %v7030
      %7128 = vmatprep.subr.bf16.mxu0 0
      %7129 = vmatpush1.bf16.msra.mxu0 %v7031
      %7130 = vmatprep.subr.bf16.mxu0 0
      %7131 = vmatpush1.bf16.msra.mxu0 %v7032
      %7132 = vmatprep.subr.bf16.mxu0 0
      %7133 = vmatpush1.bf16.msra.mxu0 %v7033
      %7134 = vmatprep.mubr.bf16.mxu0 %v6856
      %7135 = vmatmul.mubr.bf16.gmra.mrb[0].mxu0 %v6728
      %v7136 = vpop.f32.mrb[0].mxu0
      %v7137 = vadd.f32 %v6944, %v7136
      %v7138 = vpop.f32.mrb[0].mxu0
      %v7139 = vpop.f32.mrb[0].mxu0
      %v7140 = vadd.f32 %v6944, %v7139
      %v7141 = vpop.f32.mrb[0].mxu0
      %7142 = vmatprep.mubr.bf16.mxu0 %v6859
      %7143 = vmatmul.mubr.bf16.gmra.mrb[0].mxu0 %v6731
      %v7144 = vpop.f32.mrb[0].mxu0
      %v7145 = vadd.f32 %v6944, %v7144
      %v7146 = vpop.f32.mrb[0].mxu0
      %v7147 = vpop.f32.mrb[0].mxu0
      %v7148 = vadd.f32 %v6944, %v7147
      %v7149 = vpop.f32.mrb[0].mxu0
      %7150 = vmatprep.mubr.bf16.mxu0 %v6862
      %7151 = vmatmul.mubr.bf16.gmra.mrb[0].mxu0 %v6734
      %v7152 = vpop.f32.mrb[0].mxu0
      %v7153 = vadd.f32 %v6944, %v7152
      %v7154 = vpop.f32.mrb[0].mxu0
      %v7155 = vpop.f32.mrb[0].mxu0
      %v7156 = vadd.f32 %v6944, %v7155
      %v7157 = vpop.f32.mrb[0].mxu0
      %7158 = vmatprep.mubr.bf16.mxu0 %v6865
      %7159 = vmatmul.mubr.bf16.gmra.mrb[0].mxu0 %v6737
      %v7160 = vpop.f32.mrb[0].mxu0
      %v7161 = vadd.f32 %v6944, %v7160
      %v7162 = vpop.f32.mrb[0].mxu0
      %v7163 = vpop.f32.mrb[0].mxu0
      %v7164 = vadd.f32 %v6944, %v7163
      %v7165 = vpop.f32.mrb[0].mxu0
      %7166 = vmatprep.mubr.bf16.mxu0 %v6868
      %7167 = vmatmul.mubr.bf16.gmra.mrb[0].mxu0 %v6740
      %v7168 = vpop.f32.mrb[0].mxu0
      %v7169 = vadd.f32 %v6944, %v7168
      %v7170 = vpop.f32.mrb[0].mxu0
      %v7171 = vpop.f32.mrb[0].mxu0
      %v7172 = vadd.f32 %v6944, %v7171
      %v7173 = vpop.f32.mrb[0].mxu0
      %7174 = vmatprep.mubr.bf16.mxu0 %v6871
      %7175 = vmatmul.mubr.bf16.gmra.mrb[0].mxu0 %v6743
      %v7176 = vpop.f32.mrb[0].mxu0
      %v7177 = vadd.f32 %v6944, %v7176
      %v7178 = vpop.f32.mrb[0].mxu0
      %v7179 = vpop.f32.mrb[0].mxu0
      %v7180 = vadd.f32 %v6944, %v7179
      %v7181 = vpop.f32.mrb[0].mxu0
      %7182 = vmatprep.mubr.bf16.mxu0 %v6874
      %7183 = vmatmul.mubr.bf16.gmra.mrb[0].mxu0 %v6746
      %v7184 = vpop.f32.mrb[0].mxu0
      %v7185 = vadd.f32 %v6944, %v7184
      %v7186 = vpop.f32.mrb[0].mxu0
      %v7187 = vpop.f32.mrb[0].mxu0
      %v7188 = vadd.f32 %v6944, %v7187
      %v7189 = vpop.f32.mrb[0].mxu0
      %7190 = vmatprep.mubr.bf16.mxu0 %v6877
      %7191 = vmatmul.mubr.bf16.gmra.mrb[0].mxu0 %v6749
      %v7192 = vpop.f32.mrb[0].mxu0
      %v7193 = vadd.f32 %v6944, %v7192
      %v7194 = vpop.f32.mrb[0].mxu0
      %v7195 = vpop.f32.mrb[0].mxu0
      %v7196 = vadd.f32 %v6944, %v7195
      %v7197 = vpop.f32.mrb[0].mxu0
      %7198 = vmatprep.mubr.bf16.mxu0 %v6880
      %7199 = vmatmul.mubr.bf16.gmra.mrb[0].mxu0 %v6752
      %v7200 = vpop.f32.mrb[0].mxu0
      %v7201 = vadd.f32 %v6944, %v7200
      %v7202 = vpop.f32.mrb[0].mxu0
      %v7203 = vpop.f32.mrb[0].mxu0
      %v7204 = vadd.f32 %v6944, %v7203
      %v7205 = vpop.f32.mrb[0].mxu0
      %7206 = vmatprep.mubr.bf16.mxu0 %v6883
      %7207 = vmatmul.mubr.bf16.gmra.mrb[0].mxu0 %v6755
      %v7208 = vpop.f32.mrb[0].mxu0
      %v7209 = vadd.f32 %v6944, %v7208
      %v7210 = vpop.f32.mrb[0].mxu0
      %v7211 = vpop.f32.mrb[0].mxu0
      %v7212 = vadd.f32 %v6944, %v7211
      %v7213 = vpop.f32.mrb[0].mxu0
      %7214 = vmatprep.mubr.bf16.mxu0 %v6886
      %7215 = vmatmul.mubr.bf16.gmra.mrb[0].mxu0 %v6758
      %v7216 = vpop.f32.mrb[0].mxu0
      %v7217 = vadd.f32 %v6944, %v7216
      %v7218 = vpop.f32.mrb[0].mxu0
      %v7219 = vpop.f32.mrb[0].mxu0
      %v7220 = vadd.f32 %v6944, %v7219
      %v7221 = vpop.f32.mrb[0].mxu0
      %7222 = vmatprep.mubr.bf16.mxu0 %v6889
      %7223 = vmatmul.mubr.bf16.gmra.mrb[0].mxu0 %v6761
      %v7224 = vpop.f32.mrb[0].mxu0
      %v7225 = vadd.f32 %v6944, %v7224
      %v7226 = vpop.f32.mrb[0].mxu0
      %v7227 = vpop.f32.mrb[0].mxu0
      %v7228 = vadd.f32 %v6944, %v7227
      %v7229 = vpop.f32.mrb[0].mxu0
      %7230 = vmatprep.mubr.bf16.mxu0 %v6892
      %7231 = vmatmul.mubr.bf16.gmra.mrb[0].mxu0 %v6764
      %v7232 = vpop.f32.mrb[0].mxu0
      %v7233 = vadd.f32 %v6944, %v7232
      %v7234 = vpop.f32.mrb[0].mxu0
      %v7235 = vpop.f32.mrb[0].mxu0
      %v7236 = vadd.f32 %v6944, %v7235
      %v7237 = vpop.f32.mrb[0].mxu0
      %7238 = vmatprep.mubr.bf16.mxu0 %v6895
      %7239 = vmatmul.mubr.bf16.gmra.mrb[0].mxu0 %v6767
      %v7240 = vpop.f32.mrb[0].mxu0
      %v7241 = vadd.f32 %v6944, %v7240
      %v7242 = vpop.f32.mrb[0].mxu0
      %v7243 = vpop.f32.mrb[0].mxu0
      %v7244 = vadd.f32 %v6944, %v7243
      %v7245 = vpop.f32.mrb[0].mxu0
      %7246 = vmatprep.mubr.bf16.mxu0 %v6898
      %7247 = vmatmul.mubr.bf16.gmra.mrb[0].mxu0 %v6770
      %v7248 = vpop.f32.mrb[0].mxu0
      %v7249 = vadd.f32 %v6944, %v7248
      %v7250 = vpop.f32.mrb[0].mxu0
      %v7251 = vpop.f32.mrb[0].mxu0
      %v7252 = vadd.f32 %v6944, %v7251
      %v7253 = vpop.f32.mrb[0].mxu0
      %7254 = vmatprep.mubr.bf16.mxu0 %v6901
      %7255 = vmatmul.mubr.bf16.gmra.mrb[0].mxu0 %v6773
      %v7256 = vpop.f32.mrb[0].mxu0
      %v7257 = vadd.f32 %v6944, %v7256
      %v7258 = vpop.f32.mrb[0].mxu0
      %v7259 = vpop.f32.mrb[0].mxu0
      %v7260 = vadd.f32 %v6944, %v7259
      %v7261 = vpop.f32.mrb[0].mxu0
      %7262 = vdwg.mxu0
      %7263 = vmatprep.subr.bf16.mxu0 0
      %7264 = vmatpush1.bf16.msra.mxu0 %v7034
      %7265 = vmatprep.subr.bf16.mxu0 0
      %7266 = vmatpush1.bf16.msra.mxu0 %v7035
      %7267 = vmatprep.subr.bf16.mxu0 0
      %7268 = vmatpush1.bf16.msra.mxu0 0
      %7269 = vmatprep.subr.bf16.mxu0 0
      %7270 = vmatpush1.bf16.msra.mxu0 0
      %7271 = vmatprep.subr.bf16.mxu0 0
      %7272 = vmatpush1.bf16.msra.mxu0 0
      %7273 = vmatprep.subr.bf16.mxu0 0
      %7274 = vmatpush1.bf16.msra.mxu0 0
      %7275 = vmatprep.subr.bf16.mxu0 0
      %7276 = vmatpush1.bf16.msra.mxu0 0
      %7277 = vmatprep.subr.bf16.mxu0 0
      %7278 = vmatpush1.bf16.msra.mxu0 0
      %7279 = vmatprep.subr.bf16.mxu0 0
      %7280 = vmatpush1.bf16.msra.mxu0 0
      %7281 = vmatprep.subr.bf16.mxu0 0
      %7282 = vmatpush1.bf16.msra.mxu0 0
      %7283 = vmatprep.subr.bf16.mxu0 0
      %7284 = vmatpush1.bf16.msra.mxu0 0
      %7285 = vmatprep.subr.bf16.mxu0 0
      %7286 = vmatpush1.bf16.msra.mxu0 0
      %7287 = vmatprep.subr.bf16.mxu0 0
      %7288 = vmatpush1.bf16.msra.mxu0 0
      %7289 = vmatprep.subr.bf16.mxu0 0
      %7290 = vmatpush1.bf16.msra.mxu0 0
      %7291 = vmatprep.subr.bf16.mxu0 0
      %7292 = vmatpush1.bf16.msra.mxu0 0
      %7293 = vmatprep.subr.bf16.mxu0 0
      %7294 = vmatpush1.bf16.msra.mxu0 0
      %7295 = vmatprep.mubr.bf16.mxu0 0
      %7296 = vmatmul.mubr.bf16.gmra.mrb[0].mxu0 %v7055
      %v7297 = vpop.f32.mrb[0].mxu0
      %v7298 = vadd.f32 %v7137, %v7297
      %v7299 = vpop.f32.mrb[0].mxu0
      %v7300 = vpop.f32.mrb[0].mxu0
      %v7301 = vadd.f32 %v7140, %v7300
      %v7302 = vpop.f32.mrb[0].mxu0
      %7303 = vmatprep.mubr.bf16.mxu0 0
      %7304 = vmatmul.mubr.bf16.gmra.mrb[0].mxu0 %v7058
      %v7305 = vpop.f32.mrb[0].mxu0
      %v7306 = vadd.f32 %v7145, %v7305
      %v7307 = vpop.f32.mrb[0].mxu0
      %v7308 = vpop.f32.mrb[0].mxu0
      %v7309 = vadd.f32 %v7148, %v7308
      %v7310 = vpop.f32.mrb[0].mxu0
      %7311 = vmatprep.mubr.bf16.mxu0 0
      %7312 = vmatmul.mubr.bf16.gmra.mrb[0].mxu0 %v7061
      %v7313 = vpop.f32.mrb[0].mxu0
      %v7314 = vadd.f32 %v7153, %v7313
      %v7315 = vpop.f32.mrb[0].mxu0
      %v7316 = vpop.f32.mrb[0].mxu0
      %v7317 = vadd.f32 %v7156, %v7316
      %v7318 = vpop.f32.mrb[0].mxu0
      %7319 = vmatprep.mubr.bf16.mxu0 0
      %7320 = vmatmul.mubr.bf16.gmra.mrb[0].mxu0 %v7064
      %v7321 = vpop.f32.mrb[0].mxu0
      %v7322 = vadd.f32 %v7161, %v7321
      %v7323 = vpop.f32.mrb[0].mxu0
      %v7324 = vpop.f32.mrb[0].mxu0
      %v7325 = vadd.f32 %v7164, %v7324
      %v7326 = vpop.f32.mrb[0].mxu0
      %7327 = vmatprep.mubr.bf16.mxu0 0
      %7328 = vmatmul.mubr.bf16.gmra.mrb[0].mxu0 %v7067
      %v7329 = vpop.f32.mrb[0].mxu0
      %v7330 = vadd.f32 %v7169, %v7329
      %v7331 = vpop.f32.mrb[0].mxu0
      %v7332 = vpop.f32.mrb[0].mxu0
      %v7333 = vadd.f32 %v7172, %v7332
      %v7334 = vpop.f32.mrb[0].mxu0
      %7335 = vmatprep.mubr.bf16.mxu0 0
      %7336 = vmatmul.mubr.bf16.gmra.mrb[0].mxu0 %v7070
      %v7337 = vpop.f32.mrb[0].mxu0
      %v7338 = vadd.f32 %v7177, %v7337
      %v7339 = vpop.f32.mrb[0].mxu0
      %v7340 = vpop.f32.mrb[0].mxu0
      %v7341 = vadd.f32 %v7180, %v7340
      %v7342 = vpop.f32.mrb[0].mxu0
      %7343 = vmatprep.mubr.bf16.mxu0 0
      %7344 = vmatmul.mubr.bf16.gmra.mrb[0].mxu0 %v7073
      %v7345 = vpop.f32.mrb[0].mxu0
      %v7346 = vadd.f32 %v7185, %v7345
      %v7347 = vpop.f32.mrb[0].mxu0
      %v7348 = vpop.f32.mrb[0].mxu0
      %v7349 = vadd.f32 %v7188, %v7348
      %v7350 = vpop.f32.mrb[0].mxu0
      %7351 = vmatprep.mubr.bf16.mxu0 0
      %7352 = vmatmul.mubr.bf16.gmra.mrb[0].mxu0 %v7076
      %v7353 = vpop.f32.mrb[0].mxu0
      %v7354 = vadd.f32 %v7193, %v7353
      %v7355 = vpop.f32.mrb[0].mxu0
      %v7356 = vpop.f32.mrb[0].mxu0
      %v7357 = vadd.f32 %v7196, %v7356
      %v7358 = vpop.f32.mrb[0].mxu0
      %7359 = vmatprep.mubr.bf16.mxu0 0
      %7360 = vmatmul.mubr.bf16.gmra.mrb[0].mxu0 %v7079
      %v7361 = vpop.f32.mrb[0].mxu0
      %v7362 = vadd.f32 %v7201, %v7361
      %v7363 = vpop.f32.mrb[0].mxu0
      %v7364 = vpop.f32.mrb[0].mxu0
      %v7365 = vadd.f32 %v7204, %v7364
      %v7366 = vpop.f32.mrb[0].mxu0
      %7367 = vmatprep.mubr.bf16.mxu0 0
      %7368 = vmatmul.mubr.bf16.gmra.mrb[0].mxu0 %v7082
      %v7369 = vpop.f32.mrb[0].mxu0
      %v7370 = vadd.f32 %v7209, %v7369
      %v7371 = vpop.f32.mrb[0].mxu0
      %v7372 = vpop.f32.mrb[0].mxu0
      %v7373 = vadd.f32 %v7212, %v7372
      %v7374 = vpop.f32.mrb[0].mxu0
      %7375 = vmatprep.mubr.bf16.mxu0 0
      %7376 = vmatmul.mubr.bf16.gmra.mrb[0].mxu0 %v7085
      %v7377 = vpop.f32.mrb[0].mxu0
      %v7378 = vadd.f32 %v7217, %v7377
      %v7379 = vpop.f32.mrb[0].mxu0
      %v7380 = vpop.f32.mrb[0].mxu0
      %v7381 = vadd.f32 %v7220, %v7380
      %v7382 = vpop.f32.mrb[0].mxu0
      %7383 = vmatprep.mubr.bf16.mxu0 0
      %7384 = vmatmul.mubr.bf16.gmra.mrb[0].mxu0 %v7088
      %v7385 = vpop.f32.mrb[0].mxu0
      %v7386 = vadd.f32 %v7225, %v7385
      %v7387 = vpop.f32.mrb[0].mxu0
      %v7388 = vpop.f32.mrb[0].mxu0
      %v7389 = vadd.f32 %v7228, %v7388
      %v7390 = vpop.f32.mrb[0].mxu0
      %7391 = vmatprep.mubr.bf16.mxu0 0
      %7392 = vmatmul.mubr.bf16.gmra.mrb[0].mxu0 %v7091
      %v7393 = vpop.f32.mrb[0].mxu0
      %v7394 = vadd.f32 %v7233, %v7393
      %v7395 = vpop.f32.mrb[0].mxu0
      %v7396 = vpop.f32.mrb[0].mxu0
      %v7397 = vadd.f32 %v7236, %v7396
      %v7398 = vpop.f32.mrb[0].mxu0
      %7399 = vmatprep.mubr.bf16.mxu0 0
      %7400 = vmatmul.mubr.bf16.gmra.mrb[0].mxu0 %v7094
      %v7401 = vpop.f32.mrb[0].mxu0
      %v7402 = vadd.f32 %v7241, %v7401
      %v7403 = vpop.f32.mrb[0].mxu0
      %v7404 = vpop.f32.mrb[0].mxu0
      %v7405 = vadd.f32 %v7244, %v7404
      %v7406 = vpop.f32.mrb[0].mxu0
      %7407 = vmatprep.mubr.bf16.mxu0 0
      %7408 = vmatmul.mubr.bf16.gmra.mrb[0].mxu0 %v7097
      %v7409 = vpop.f32.mrb[0].mxu0
      %v7410 = vadd.f32 %v7249, %v7409
      %v7411 = vpop.f32.mrb[0].mxu0
      %v7412 = vpop.f32.mrb[0].mxu0
      %v7413 = vadd.f32 %v7252, %v7412
      %v7414 = vpop.f32.mrb[0].mxu0
      %7415 = vmatprep.mubr.bf16.mxu0 0
      %7416 = vmatmul.mubr.bf16.gmra.mrb[0].mxu0 %v7100
      %v7417 = vpop.f32.mrb[0].mxu0
      %v7418 = vadd.f32 %v7257, %v7417
      %v7419 = vpop.f32.mrb[0].mxu0
      %v7420 = vpop.f32.mrb[0].mxu0
      %v7421 = vadd.f32 %v7260, %v7420
      %v7422 = vpop.f32.mrb[0].mxu0
      %7423 = vdwg.mxu0
      %v7424 = vmax.f32 %v7298, 0.0
      %v7425 = vmax.f32 %v7301, 0.0
      %v7426 = vmax.f32 %v7306, 0.0
      %v7427 = vmax.f32 %v7309, 0.0
      %v7428 = vmax.f32 %v7314, 0.0
      %v7429 = vmax.f32 %v7317, 0.0
      %v7430 = vmax.f32 %v7322, 0.0
      %v7431 = vmax.f32 %v7325, 0.0
      %v7432 = vmax.f32 %v7330, 0.0
      %v7433 = vmax.f32 %v7333, 0.0
      %v7434 = vmax.f32 %v7338, 0.0
      %v7435 = vmax.f32 %v7341, 0.0
      %v7436 = vmax.f32 %v7346, 0.0
      %v7437 = vmax.f32 %v7349, 0.0
      %v7438 = vmax.f32 %v7354, 0.0
      %v7439 = vmax.f32 %v7357, 0.0
      %v7440 = vmax.f32 %v7362, 0.0
      %v7441 = vmax.f32 %v7365, 0.0
      %v7442 = vmax.f32 %v7370, 0.0
      %v7443 = vmax.f32 %v7373, 0.0
      %v7444 = vmax.f32 %v7378, 0.0
      %v7445 = vmax.f32 %v7381, 0.0
      %v7446 = vmax.f32 %v7386, 0.0
      %v7447 = vmax.f32 %v7389, 0.0
      %v7448 = vmax.f32 %v7394, 0.0
      %v7449 = vmax.f32 %v7397, 0.0
      %v7450 = vmax.f32 %v7402, 0.0
      %v7451 = vmax.f32 %v7405, 0.0
      %v7452 = vmax.f32 %v7410, 0.0
      %v7453 = vmax.f32 %v7413, 0.0
      %v7454 = vmax.f32 %v7418, 0.0
      %v7455 = vmax.f32 %v7421, 0.0
      %v7456 = vpack.c.bf16 %v7425, %v7424
      %v7457 = vpack.c.bf16 %v7427, %v7426
      %v7458 = vpack.c.bf16 %v7429, %v7428
      %v7459 = vpack.c.bf16 %v7431, %v7430
      %v7460 = vpack.c.bf16 %v7433, %v7432
      %v7461 = vpack.c.bf16 %v7435, %v7434
      %v7462 = vpack.c.bf16 %v7437, %v7436
      %v7463 = vpack.c.bf16 %v7439, %v7438
      %v7464 = vpack.c.bf16 %v7441, %v7440
      %v7465 = vpack.c.bf16 %v7443, %v7442
      %v7466 = vpack.c.bf16 %v7445, %v7444
      %v7467 = vpack.c.bf16 %v7447, %v7446
      %v7468 = vpack.c.bf16 %v7449, %v7448
      %v7469 = vpack.c.bf16 %v7451, %v7450
      %v7470 = vpack.c.bf16 %v7453, %v7452
      %v7471 = vpack.c.bf16 %v7455, %v7454
      %vm7472 = vcmask 519168
      %7473 = vst.msk [vmem:[#allocation5] sm:$0xf] %vm7472, 0
      %7474 = vst.msk [vmem:[#allocation5 + $0x4] sm:$0xf] %vm7472, 0
      %vm7475 = vcmask 516096
      %7476 = vst.msk [vmem:[#allocation5 + $0x8] sm:$0x1] %vm7475, 0
      %s7477 = scalar_lea.vmem [#allocation5], 204
      %7478 = vst.msk [vmem:[%s7477] sm:$0xf] %vm7472, 0
      %7479 = vst.msk [vmem:[%s7477 + $0x4] sm:$0xf] %vm7472, 0
      %7480 = vst.msk [vmem:[%s7477 + $0x8] sm:$0x1] %vm7475, 0
      %vm7481 = vcmask 516096
      %vm7482 = vmand %vm7481, %vm436
      %v7483 = vld [vmem:[#allocation5] sm:$0x1]
      %v7484 = vsel %vm7482, 0, %v7483
      %7485 = vst [vmem:[#allocation5] sm:$0x1] %v7484
      %v7486 = vld [vmem:[#allocation5 + $0xc] sm:$0x1]
      %v7487 = vsel %vm7482, 0, %v7486
      %7488 = vst [vmem:[#allocation5 + $0xc] sm:$0x1] %v7487
      %v7489 = vld [vmem:[#allocation5 + $0x18] sm:$0x1]
      %v7490 = vsel %vm7482, 0, %v7489
      %7491 = vst [vmem:[#allocation5 + $0x18] sm:$0x1] %v7490
      %v7492 = vld [vmem:[#allocation5 + $0x24] sm:$0x1]
      %v7493 = vsel %vm7482, 0, %v7492
      %7494 = vst [vmem:[#allocation5 + $0x24] sm:$0x1] %v7493
      %v7495 = vld [vmem:[#allocation5 + $0x30] sm:$0x1]
      %v7496 = vsel %vm7482, 0, %v7495
      %7497 = vst [vmem:[#allocation5 + $0x30] sm:$0x1] %v7496
      %v7498 = vld [vmem:[#allocation5 + $0x3c] sm:$0x1]
      %v7499 = vsel %vm7482, 0, %v7498
      %7500 = vst [vmem:[#allocation5 + $0x3c] sm:$0x1] %v7499
      %v7501 = vld [vmem:[#allocation5 + $0x48] sm:$0x1]
      %v7502 = vsel %vm7482, 0, %v7501
      %7503 = vst [vmem:[#allocation5 + $0x48] sm:$0x1] %v7502
      %v7504 = vld [vmem:[#allocation5 + $0x54] sm:$0x1]
      %v7505 = vsel %vm7482, 0, %v7504
      %7506 = vst [vmem:[#allocation5 + $0x54] sm:$0x1] %v7505
      %v7507 = vld [vmem:[#allocation5 + $0x60] sm:$0x1]
      %v7508 = vsel %vm7482, 0, %v7507
      %7509 = vst [vmem:[#allocation5 + $0x60] sm:$0x1] %v7508
      %v7510 = vld [vmem:[#allocation5 + $0x6c] sm:$0x1]
      %v7511 = vsel %vm7482, 0, %v7510
      %7512 = vst [vmem:[#allocation5 + $0x6c] sm:$0x1] %v7511
      %v7513 = vld [vmem:[#allocation5 + $0x78] sm:$0x1]
      %v7514 = vsel %vm7482, 0, %v7513
      %7515 = vst [vmem:[#allocation5 + $0x78] sm:$0x1] %v7514
      %v7516 = vld [vmem:[#allocation5 + $0x84] sm:$0x1]
      %v7517 = vsel %vm7482, 0, %v7516
      %7518 = vst [vmem:[#allocation5 + $0x84] sm:$0x1] %v7517
      %v7519 = vld [vmem:[#allocation5 + $0x90] sm:$0x1]
      %v7520 = vsel %vm7482, 0, %v7519
      %7521 = vst [vmem:[#allocation5 + $0x90] sm:$0x1] %v7520
      %v7522 = vld [vmem:[#allocation5 + $0x9c] sm:$0x1]
      %v7523 = vsel %vm7482, 0, %v7522
      %7524 = vst [vmem:[#allocation5 + $0x9c] sm:$0x1] %v7523
      %v7525 = vld [vmem:[#allocation5 + $0xa8] sm:$0x1]
      %v7526 = vsel %vm7482, 0, %v7525
      %7527 = vst [vmem:[#allocation5 + $0xa8] sm:$0x1] %v7526
      %v7528 = vld [vmem:[#allocation5 + $0xb4] sm:$0x1]
      %v7529 = vsel %vm7482, 0, %v7528
      %7530 = vst [vmem:[#allocation5 + $0xb4] sm:$0x1] %v7529
      %v7531 = vld [vmem:[#allocation5 + $0xc0] sm:$0x1]
      %v7532 = vsel %vm7482, 0, %v7531
      %7533 = vst [vmem:[#allocation5 + $0xc0] sm:$0x1] %v7532
      %v7534 = vld [vmem:[#allocation5 + $0xcc] sm:$0x1]
      %v7535 = vsel %vm7482, 0, %v7534
      %7536 = vst [vmem:[#allocation5 + $0xcc] sm:$0x1] %v7535
      %vm7537 = vmand %vm7481, %vm492
      %v7538 = vld [vmem:[#allocation5 + $0x8] sm:$0x1]
      %v7539 = vsel %vm7537, 0, %v7538
      %7540 = vst [vmem:[#allocation5 + $0x8] sm:$0x1] %v7539
      %v7541 = vld [vmem:[#allocation5 + $0x14] sm:$0x1]
      %v7542 = vsel %vm7537, 0, %v7541
      %7543 = vst [vmem:[#allocation5 + $0x14] sm:$0x1] %v7542
      %v7544 = vld [vmem:[#allocation5 + $0x20] sm:$0x1]
      %v7545 = vsel %vm7537, 0, %v7544
      %7546 = vst [vmem:[#allocation5 + $0x20] sm:$0x1] %v7545
      %v7547 = vld [vmem:[#allocation5 + $0x2c] sm:$0x1]
      %v7548 = vsel %vm7537, 0, %v7547
      %7549 = vst [vmem:[#allocation5 + $0x2c] sm:$0x1] %v7548
      %v7550 = vld [vmem:[#allocation5 + $0x38] sm:$0x1]
      %v7551 = vsel %vm7537, 0, %v7550
      %7552 = vst [vmem:[#allocation5 + $0x38] sm:$0x1] %v7551
      %v7553 = vld [vmem:[#allocation5 + $0x44] sm:$0x1]
      %v7554 = vsel %vm7537, 0, %v7553
      %7555 = vst [vmem:[#allocation5 + $0x44] sm:$0x1] %v7554
      %v7556 = vld [vmem:[#allocation5 + $0x50] sm:$0x1]
      %v7557 = vsel %vm7537, 0, %v7556
      %7558 = vst [vmem:[#allocation5 + $0x50] sm:$0x1] %v7557
      %v7559 = vld [vmem:[#allocation5 + $0x5c] sm:$0x1]
      %v7560 = vsel %vm7537, 0, %v7559
      %7561 = vst [vmem:[#allocation5 + $0x5c] sm:$0x1] %v7560
      %v7562 = vld [vmem:[#allocation5 + $0x68] sm:$0x1]
      %v7563 = vsel %vm7537, 0, %v7562
      %7564 = vst [vmem:[#allocation5 + $0x68] sm:$0x1] %v7563
      %v7565 = vld [vmem:[#allocation5 + $0x74] sm:$0x1]
      %v7566 = vsel %vm7537, 0, %v7565
      %7567 = vst [vmem:[#allocation5 + $0x74] sm:$0x1] %v7566
      %v7568 = vld [vmem:[#allocation5 + $0x80] sm:$0x1]
      %v7569 = vsel %vm7537, 0, %v7568
      %7570 = vst [vmem:[#allocation5 + $0x80] sm:$0x1] %v7569
      %v7571 = vld [vmem:[#allocation5 + $0x8c] sm:$0x1]
      %v7572 = vsel %vm7537, 0, %v7571
      %7573 = vst [vmem:[#allocation5 + $0x8c] sm:$0x1] %v7572
      %v7574 = vld [vmem:[#allocation5 + $0x98] sm:$0x1]
      %v7575 = vsel %vm7537, 0, %v7574
      %7576 = vst [vmem:[#allocation5 + $0x98] sm:$0x1] %v7575
      %v7577 = vld [vmem:[#allocation5 + $0xa4] sm:$0x1]
      %v7578 = vsel %vm7537, 0, %v7577
      %7579 = vst [vmem:[#allocation5 + $0xa4] sm:$0x1] %v7578
      %v7580 = vld [vmem:[#allocation5 + $0xb0] sm:$0x1]
      %v7581 = vsel %vm7537, 0, %v7580
      %7582 = vst [vmem:[#allocation5 + $0xb0] sm:$0x1] %v7581
      %v7583 = vld [vmem:[#allocation5 + $0xbc] sm:$0x1]
      %v7584 = vsel %vm7537, 0, %v7583
      %7585 = vst [vmem:[#allocation5 + $0xbc] sm:$0x1] %v7584
      %v7586 = vld [vmem:[#allocation5 + $0xc8] sm:$0x1]
      %v7587 = vsel %vm7537, 0, %v7586
      %7588 = vst [vmem:[#allocation5 + $0xc8] sm:$0x1] %v7587
      %v7589 = vld [vmem:[#allocation5 + $0xd4] sm:$0x1]
      %v7590 = vsel %vm7537, 0, %v7589
      %7591 = vst [vmem:[#allocation5 + $0xd4] sm:$0x1] %v7590
      %v7608 = vunpack.c.l.b16 %v7456
      %v7609 = vunpack.c.h.b16 %v7456
      %v7610 = vunpack.c.l.b16 %v7457
      %v7611 = vunpack.c.h.b16 %v7457
      %v7612 = vunpack.c.l.b16 %v7458
      %v7613 = vunpack.c.h.b16 %v7458
      %v7614 = vunpack.c.l.b16 %v7459
      %v7615 = vunpack.c.h.b16 %v7459
      %v7616 = vunpack.c.l.b16 %v7460
      %v7617 = vunpack.c.h.b16 %v7460
      %v7618 = vunpack.c.l.b16 %v7461
      %v7619 = vunpack.c.h.b16 %v7461
      %v7620 = vunpack.c.l.b16 %v7462
      %v7621 = vunpack.c.h.b16 %v7462
      %v7622 = vunpack.c.l.b16 %v7463
      %v7623 = vunpack.c.h.b16 %v7463
      %v7624 = vunpack.c.l.b16 %v7464
      %v7625 = vunpack.c.h.b16 %v7464
      %v7626 = vunpack.c.l.b16 %v7465
      %v7627 = vunpack.c.h.b16 %v7465
      %v7628 = vunpack.c.l.b16 %v7466
      %v7629 = vunpack.c.h.b16 %v7466
      %v7630 = vunpack.c.l.b16 %v7467
      %v7631 = vunpack.c.h.b16 %v7467
      %v7632 = vunpack.c.l.b16 %v7468
      %v7633 = vunpack.c.h.b16 %v7468
      %v7634 = vunpack.c.l.b16 %v7469
      %v7635 = vunpack.c.h.b16 %v7469
      %v7636 = vunpack.c.l.b16 %v7470
      %v7637 = vunpack.c.h.b16 %v7470
      %v7638 = vunpack.c.l.b16 %v7471
      %v7639 = vunpack.c.h.b16 %v7471
      %v7640 = vpack.c.b16 %v7608, %v7608
      %v7641 = vpack.c.b16 %v7609, %v7609
      %v7642 = vpack.c.b16 %v7610, %v7610
      %v7643 = vpack.c.b16 %v7611, %v7611
      %v7644 = vpack.c.b16 %v7612, %v7612
      %v7645 = vpack.c.b16 %v7613, %v7613
      %v7646 = vpack.c.b16 %v7614, %v7614
      %v7647 = vpack.c.b16 %v7615, %v7615
      %v7648 = vpack.c.b16 %v7616, %v7616
      %v7649 = vpack.c.b16 %v7617, %v7617
      %v7650 = vpack.c.b16 %v7618, %v7618
      %v7651 = vpack.c.b16 %v7619, %v7619
      %v7652 = vpack.c.b16 %v7620, %v7620
      %v7653 = vpack.c.b16 %v7621, %v7621
      %v7654 = vpack.c.b16 %v7622, %v7622
      %v7655 = vpack.c.b16 %v7623, %v7623
      %v7656 = vpack.c.b16 %v7624, %v7624
      %v7657 = vpack.c.b16 %v7625, %v7625
      %v7658 = vpack.c.b16 %v7626, %v7626
      %v7659 = vpack.c.b16 %v7627, %v7627
      %v7660 = vpack.c.b16 %v7628, %v7628
      %v7661 = vpack.c.b16 %v7629, %v7629
      %v7662 = vpack.c.b16 %v7630, %v7630
      %v7663 = vpack.c.b16 %v7631, %v7631
      %v7664 = vpack.c.b16 %v7632, %v7632
      %v7665 = vpack.c.b16 %v7633, %v7633
      %v7666 = vpack.c.b16 %v7634, %v7634
      %v7667 = vpack.c.b16 %v7635, %v7635
      %v7668 = vpack.c.b16 %v7636, %v7636
      %v7669 = vpack.c.b16 %v7637, %v7637
      %v7670 = vpack.c.b16 %v7638, %v7638
      %v7671 = vpack.c.b16 %v7639, %v7639
      %v7673 = vshrl.u32 %v7640, 16
      %v7675 = vrot.slane %v7673, 7
      %v7676 = vshll.u32 %v7640, 16
      %v7678 = vor.u32 %v7675, %v7676
      %v7679 = vrot.slane %v7675, 4
      %v7681 = vshrl.u32 %v7641, 16
      %v7683 = vrot.slane %v7681, 7
      %v7684 = vshll.u32 %v7641, 16
      %v7686 = vor.u32 %v7683, %v7684
      %v7687 = vsel %vm629, %v7679, %v7686
      %v7688 = vrot.slane %v7683, 4
      %v7690 = vshrl.u32 %v7642, 16
      %v7692 = vrot.slane %v7690, 7
      %v7693 = vshll.u32 %v7642, 16
      %v7695 = vor.u32 %v7692, %v7693
      %v7696 = vrot.slane %v7692, 4
      %v7698 = vshrl.u32 %v7643, 16
      %v7700 = vrot.slane %v7698, 7
      %v7701 = vshll.u32 %v7643, 16
      %v7703 = vor.u32 %v7700, %v7701
      %v7704 = vsel %vm629, %v7696, %v7703
      %v7705 = vrot.slane %v7700, 4
      %v7707 = vshrl.u32 %v7644, 16
      %v7709 = vrot.slane %v7707, 7
      %v7710 = vshll.u32 %v7644, 16
      %v7712 = vor.u32 %v7709, %v7710
      %v7713 = vrot.slane %v7709, 4
      %v7715 = vshrl.u32 %v7645, 16
      %v7717 = vrot.slane %v7715, 7
      %v7718 = vshll.u32 %v7645, 16
      %v7720 = vor.u32 %v7717, %v7718
      %v7721 = vsel %vm629, %v7713, %v7720
      %v7722 = vrot.slane %v7717, 4
      %v7724 = vshrl.u32 %v7646, 16
      %v7726 = vrot.slane %v7724, 7
      %v7727 = vshll.u32 %v7646, 16
      %v7729 = vor.u32 %v7726, %v7727
      %v7730 = vrot.slane %v7726, 4
      %v7732 = vshrl.u32 %v7647, 16
      %v7734 = vrot.slane %v7732, 7
      %v7735 = vshll.u32 %v7647, 16
      %v7737 = vor.u32 %v7734, %v7735
      %v7738 = vsel %vm629, %v7730, %v7737
      %v7739 = vrot.slane %v7734, 4
      %v7741 = vshrl.u32 %v7648, 16
      %v7743 = vrot.slane %v7741, 7
      %v7744 = vshll.u32 %v7648, 16
      %v7746 = vor.u32 %v7743, %v7744
      %v7747 = vrot.slane %v7743, 4
      %v7749 = vshrl.u32 %v7649, 16
      %v7751 = vrot.slane %v7749, 7
      %v7752 = vshll.u32 %v7649, 16
      %v7754 = vor.u32 %v7751, %v7752
      %v7755 = vsel %vm629, %v7747, %v7754
      %v7756 = vrot.slane %v7751, 4
      %v7758 = vshrl.u32 %v7650, 16
      %v7760 = vrot.slane %v7758, 7
      %v7761 = vshll.u32 %v7650, 16
      %v7763 = vor.u32 %v7760, %v7761
      %v7764 = vrot.slane %v7760, 4
      %v7766 = vshrl.u32 %v7651, 16
      %v7768 = vrot.slane %v7766, 7
      %v7769 = vshll.u32 %v7651, 16
      %v7771 = vor.u32 %v7768, %v7769
      %v7772 = vsel %vm629, %v7764, %v7771
      %v7773 = vrot.slane %v7768, 4
      %v7775 = vshrl.u32 %v7652, 16
      %v7777 = vrot.slane %v7775, 7
      %v7778 = vshll.u32 %v7652, 16
      %v7780 = vor.u32 %v7777, %v7778
      %v7781 = vrot.slane %v7777, 4
      %v7783 = vshrl.u32 %v7653, 16
      %v7785 = vrot.slane %v7783, 7
      %v7786 = vshll.u32 %v7653, 16
      %v7788 = vor.u32 %v7785, %v7786
      %v7789 = vsel %vm629, %v7781, %v7788
      %v7790 = vrot.slane %v7785, 4
      %v7792 = vshrl.u32 %v7654, 16
      %v7794 = vrot.slane %v7792, 7
      %v7795 = vshll.u32 %v7654, 16
      %v7797 = vor.u32 %v7794, %v7795
      %v7798 = vrot.slane %v7794, 4
      %v7800 = vshrl.u32 %v7655, 16
      %v7802 = vrot.slane %v7800, 7
      %v7803 = vshll.u32 %v7655, 16
      %v7805 = vor.u32 %v7802, %v7803
      %v7806 = vsel %vm629, %v7798, %v7805
      %v7807 = vrot.slane %v7802, 4
      %v7809 = vshrl.u32 %v7656, 16
      %v7811 = vrot.slane %v7809, 7
      %v7812 = vshll.u32 %v7656, 16
      %v7814 = vor.u32 %v7811, %v7812
      %v7815 = vrot.slane %v7811, 4
      %v7817 = vshrl.u32 %v7657, 16
      %v7819 = vrot.slane %v7817, 7
      %v7820 = vshll.u32 %v7657, 16
      %v7822 = vor.u32 %v7819, %v7820
      %v7823 = vsel %vm629, %v7815, %v7822
      %v7824 = vrot.slane %v7819, 4
      %v7826 = vshrl.u32 %v7658, 16
      %v7828 = vrot.slane %v7826, 7
      %v7829 = vshll.u32 %v7658, 16
      %v7831 = vor.u32 %v7828, %v7829
      %v7832 = vrot.slane %v7828, 4
      %v7834 = vshrl.u32 %v7659, 16
      %v7836 = vrot.slane %v7834, 7
      %v7837 = vshll.u32 %v7659, 16
      %v7839 = vor.u32 %v7836, %v7837
      %v7840 = vsel %vm629, %v7832, %v7839
      %v7841 = vrot.slane %v7836, 4
      %v7843 = vshrl.u32 %v7660, 16
      %v7845 = vrot.slane %v7843, 7
      %v7846 = vshll.u32 %v7660, 16
      %v7848 = vor.u32 %v7845, %v7846
      %v7849 = vrot.slane %v7845, 4
      %v7851 = vshrl.u32 %v7661, 16
      %v7853 = vrot.slane %v7851, 7
      %v7854 = vshll.u32 %v7661, 16
      %v7856 = vor.u32 %v7853, %v7854
      %v7857 = vsel %vm629, %v7849, %v7856
      %v7858 = vrot.slane %v7853, 4
      %v7860 = vshrl.u32 %v7662, 16
      %v7862 = vrot.slane %v7860, 7
      %v7863 = vshll.u32 %v7662, 16
      %v7865 = vor.u32 %v7862, %v7863
      %v7866 = vrot.slane %v7862, 4
      %v7868 = vshrl.u32 %v7663, 16
      %v7870 = vrot.slane %v7868, 7
      %v7871 = vshll.u32 %v7663, 16
      %v7873 = vor.u32 %v7870, %v7871
      %v7874 = vsel %vm629, %v7866, %v7873
      %v7875 = vrot.slane %v7870, 4
      %v7877 = vshrl.u32 %v7664, 16
      %v7879 = vrot.slane %v7877, 7
      %v7880 = vshll.u32 %v7664, 16
      %v7882 = vor.u32 %v7879, %v7880
      %v7883 = vrot.slane %v7879, 4
      %v7885 = vshrl.u32 %v7665, 16
      %v7887 = vrot.slane %v7885, 7
      %v7888 = vshll.u32 %v7665, 16
      %v7890 = vor.u32 %v7887, %v7888
      %v7891 = vsel %vm629, %v7883, %v7890
      %v7892 = vrot.slane %v7887, 4
      %v7894 = vshrl.u32 %v7666, 16
      %v7896 = vrot.slane %v7894, 7
      %v7897 = vshll.u32 %v7666, 16
      %v7899 = vor.u32 %v7896, %v7897
      %v7900 = vrot.slane %v7896, 4
      %v7902 = vshrl.u32 %v7667, 16
      %v7904 = vrot.slane %v7902, 7
      %v7905 = vshll.u32 %v7667, 16
      %v7907 = vor.u32 %v7904, %v7905
      %v7908 = vsel %vm629, %v7900, %v7907
      %v7909 = vrot.slane %v7904, 4
      %v7911 = vshrl.u32 %v7668, 16
      %v7913 = vrot.slane %v7911, 7
      %v7914 = vshll.u32 %v7668, 16
      %v7916 = vor.u32 %v7913, %v7914
      %v7917 = vrot.slane %v7913, 4
      %v7919 = vshrl.u32 %v7669, 16
      %v7921 = vrot.slane %v7919, 7
      %v7922 = vshll.u32 %v7669, 16
      %v7924 = vor.u32 %v7921, %v7922
      %v7925 = vsel %vm629, %v7917, %v7924
      %v7926 = vrot.slane %v7921, 4
      %v7928 = vshrl.u32 %v7670, 16
      %v7930 = vrot.slane %v7928, 7
      %v7931 = vshll.u32 %v7670, 16
      %v7933 = vor.u32 %v7930, %v7931
      %v7934 = vrot.slane %v7930, 4
      %v7936 = vshrl.u32 %v7671, 16
      %v7938 = vrot.slane %v7936, 7
      %v7939 = vshll.u32 %v7671, 16
      %v7941 = vor.u32 %v7938, %v7939
      %v7942 = vsel %vm629, %v7934, %v7941
      %v7943 = vrot.slane %v7938, 4
      %s7992 = scalar_lea.vmem [#allocation5], 12
      %vm7993 = vcmask 519168
      %vm7994 = vmand %vm7993, %vm492
      %v7995 = vld [vmem:[%s7992] sm:$0xf]
      %v7996 = vsel %vm7994, %v7678, %v7995
      %7997 = vst [vmem:[%s7992] sm:$0xf] %v7996
      %7998 = vst.msk [vmem:[%s7992 + $0x4] sm:$0xf] %vm7472, %v7687
      %v7999 = vld [vmem:[%s7992 + $0x8] sm:$0x1]
      %v8000 = vsel %vm7482, %v7688, %v7999
      %8001 = vst [vmem:[%s7992 + $0x8] sm:$0x1] %v8000
      %v8002 = vld [vmem:[%s7992 + $0xc] sm:$0xf]
      %v8003 = vsel %vm7994, %v7695, %v8002
      %8004 = vst [vmem:[%s7992 + $0xc] sm:$0xf] %v8003
      %8005 = vst.msk [vmem:[%s7992 + $0x10] sm:$0xf] %vm7472, %v7704
      %v8006 = vld [vmem:[%s7992 + $0x14] sm:$0x1]
      %v8007 = vsel %vm7482, %v7705, %v8006
      %8008 = vst [vmem:[%s7992 + $0x14] sm:$0x1] %v8007
      %v8009 = vld [vmem:[%s7992 + $0x18] sm:$0xf]
      %v8010 = vsel %vm7994, %v7712, %v8009
      %8011 = vst [vmem:[%s7992 + $0x18] sm:$0xf] %v8010
      %8012 = vst.msk [vmem:[%s7992 + $0x1c] sm:$0xf] %vm7472, %v7721
      %v8013 = vld [vmem:[%s7992 + $0x20] sm:$0x1]
      %v8014 = vsel %vm7482, %v7722, %v8013
      %8015 = vst [vmem:[%s7992 + $0x20] sm:$0x1] %v8014
      %v8016 = vld [vmem:[%s7992 + $0x24] sm:$0xf]
      %v8017 = vsel %vm7994, %v7729, %v8016
      %8018 = vst [vmem:[%s7992 + $0x24] sm:$0xf] %v8017
      %8019 = vst.msk [vmem:[%s7992 + $0x28] sm:$0xf] %vm7472, %v7738
      %v8020 = vld [vmem:[%s7992 + $0x2c] sm:$0x1]
      %v8021 = vsel %vm7482, %v7739, %v8020
      %8022 = vst [vmem:[%s7992 + $0x2c] sm:$0x1] %v8021
      %v8023 = vld [vmem:[%s7992 + $0x30] sm:$0xf]
      %v8024 = vsel %vm7994, %v7746, %v8023
      %8025 = vst [vmem:[%s7992 + $0x30] sm:$0xf] %v8024
      %8026 = vst.msk [vmem:[%s7992 + $0x34] sm:$0xf] %vm7472, %v7755
      %v8027 = vld [vmem:[%s7992 + $0x38] sm:$0x1]
      %v8028 = vsel %vm7482, %v7756, %v8027
      %8029 = vst [vmem:[%s7992 + $0x38] sm:$0x1] %v8028
      %v8030 = vld [vmem:[%s7992 + $0x3c] sm:$0xf]
      %v8031 = vsel %vm7994, %v7763, %v8030
      %8032 = vst [vmem:[%s7992 + $0x3c] sm:$0xf] %v8031
      %8033 = vst.msk [vmem:[%s7992 + $0x40] sm:$0xf] %vm7472, %v7772
      %v8034 = vld [vmem:[%s7992 + $0x44] sm:$0x1]
      %v8035 = vsel %vm7482, %v7773, %v8034
      %8036 = vst [vmem:[%s7992 + $0x44] sm:$0x1] %v8035
      %v8037 = vld [vmem:[%s7992 + $0x48] sm:$0xf]
      %v8038 = vsel %vm7994, %v7780, %v8037
      %8039 = vst [vmem:[%s7992 + $0x48] sm:$0xf] %v8038
      %8040 = vst.msk [vmem:[%s7992 + $0x4c] sm:$0xf] %vm7472, %v7789
      %v8041 = vld [vmem:[%s7992 + $0x50] sm:$0x1]
      %v8042 = vsel %vm7482, %v7790, %v8041
      %8043 = vst [vmem:[%s7992 + $0x50] sm:$0x1] %v8042
      %v8044 = vld [vmem:[%s7992 + $0x54] sm:$0xf]
      %v8045 = vsel %vm7994, %v7797, %v8044
      %8046 = vst [vmem:[%s7992 + $0x54] sm:$0xf] %v8045
      %8047 = vst.msk [vmem:[%s7992 + $0x58] sm:$0xf] %vm7472, %v7806
      %v8048 = vld [vmem:[%s7992 + $0x5c] sm:$0x1]
      %v8049 = vsel %vm7482, %v7807, %v8048
      %8050 = vst [vmem:[%s7992 + $0x5c] sm:$0x1] %v8049
      %v8051 = vld [vmem:[%s7992 + $0x60] sm:$0xf]
      %v8052 = vsel %vm7994, %v7814, %v8051
      %8053 = vst [vmem:[%s7992 + $0x60] sm:$0xf] %v8052
      %8054 = vst.msk [vmem:[%s7992 + $0x64] sm:$0xf] %vm7472, %v7823
      %v8055 = vld [vmem:[%s7992 + $0x68] sm:$0x1]
      %v8056 = vsel %vm7482, %v7824, %v8055
      %8057 = vst [vmem:[%s7992 + $0x68] sm:$0x1] %v8056
      %v8058 = vld [vmem:[%s7992 + $0x6c] sm:$0xf]
      %v8059 = vsel %vm7994, %v7831, %v8058
      %8060 = vst [vmem:[%s7992 + $0x6c] sm:$0xf] %v8059
      %8061 = vst.msk [vmem:[%s7992 + $0x70] sm:$0xf] %vm7472, %v7840
      %v8062 = vld [vmem:[%s7992 + $0x74] sm:$0x1]
      %v8063 = vsel %vm7482, %v7841, %v8062
      %8064 = vst [vmem:[%s7992 + $0x74] sm:$0x1] %v8063
      %v8065 = vld [vmem:[%s7992 + $0x78] sm:$0xf]
      %v8066 = vsel %vm7994, %v7848, %v8065
      %8067 = vst [vmem:[%s7992 + $0x78] sm:$0xf] %v8066
      %8068 = vst.msk [vmem:[%s7992 + $0x7c] sm:$0xf] %vm7472, %v7857
      %v8069 = vld [vmem:[%s7992 + $0x80] sm:$0x1]
      %v8070 = vsel %vm7482, %v7858, %v8069
      %8071 = vst [vmem:[%s7992 + $0x80] sm:$0x1] %v8070
      %v8072 = vld [vmem:[%s7992 + $0x84] sm:$0xf]
      %v8073 = vsel %vm7994, %v7865, %v8072
      %8074 = vst [vmem:[%s7992 + $0x84] sm:$0xf] %v8073
      %8075 = vst.msk [vmem:[%s7992 + $0x88] sm:$0xf] %vm7472, %v7874
      %v8076 = vld [vmem:[%s7992 + $0x8c] sm:$0x1]
      %v8077 = vsel %vm7482, %v7875, %v8076
      %8078 = vst [vmem:[%s7992 + $0x8c] sm:$0x1] %v8077
      %v8079 = vld [vmem:[%s7992 + $0x90] sm:$0xf]
      %v8080 = vsel %vm7994, %v7882, %v8079
      %8081 = vst [vmem:[%s7992 + $0x90] sm:$0xf] %v8080
      %8082 = vst.msk [vmem:[%s7992 + $0x94] sm:$0xf] %vm7472, %v7891
      %v8083 = vld [vmem:[%s7992 + $0x98] sm:$0x1]
      %v8084 = vsel %vm7482, %v7892, %v8083
      %8085 = vst [vmem:[%s7992 + $0x98] sm:$0x1] %v8084
      %v8086 = vld [vmem:[%s7992 + $0x9c] sm:$0xf]
      %v8087 = vsel %vm7994, %v7899, %v8086
      %8088 = vst [vmem:[%s7992 + $0x9c] sm:$0xf] %v8087
      %8089 = vst.msk [vmem:[%s7992 + $0xa0] sm:$0xf] %vm7472, %v7908
      %v8090 = vld [vmem:[%s7992 + $0xa4] sm:$0x1]
      %v8091 = vsel %vm7482, %v7909, %v8090
      %8092 = vst [vmem:[%s7992 + $0xa4] sm:$0x1] %v8091
      %v8093 = vld [vmem:[%s7992 + $0xa8] sm:$0xf]
      %v8094 = vsel %vm7994, %v7916, %v8093
      %8095 = vst [vmem:[%s7992 + $0xa8] sm:$0xf] %v8094
      %8096 = vst.msk [vmem:[%s7992 + $0xac] sm:$0xf] %vm7472, %v7925
      %v8097 = vld [vmem:[%s7992 + $0xb0] sm:$0x1]
      %v8098 = vsel %vm7482, %v7926, %v8097
      %8099 = vst [vmem:[%s7992 + $0xb0] sm:$0x1] %v8098
      %v8100 = vld [vmem:[%s7992 + $0xb4] sm:$0xf]
      %v8101 = vsel %vm7994, %v7933, %v8100
      %8102 = vst [vmem:[%s7992 + $0xb4] sm:$0xf] %v8101
      %8103 = vst.msk [vmem:[%s7992 + $0xb8] sm:$0xf] %vm7472, %v7942
      %v8104 = vld [vmem:[%s7992 + $0xbc] sm:$0x1]
      %v8105 = vsel %vm7482, %v7943, %v8104
      %8106 = vst [vmem:[%s7992 + $0xbc] sm:$0x1] %v8105
      %v8107 = vld [vmem:[#allocation5] sm:$0xf]
      %v8108 = vld [vmem:[#allocation5 + $0x4] sm:$0xf]
      %v8109 = vld [vmem:[#allocation5 + $0x8] sm:$0x1]
      %v8110 = vld [vmem:[#allocation5 + $0xc] sm:$0xf]
      %v8111 = vld [vmem:[#allocation5 + $0x10] sm:$0xf]
      %v8112 = vld [vmem:[#allocation5 + $0x14] sm:$0x1]
      %v8113 = vld [vmem:[#allocation5 + $0x18] sm:$0xf]
      %v8114 = vld [vmem:[#allocation5 + $0x1c] sm:$0xf]
      %v8115 = vld [vmem:[#allocation5 + $0x20] sm:$0x1]
      %v8116 = vld [vmem:[#allocation5 + $0x24] sm:$0xf]
      %v8117 = vld [vmem:[#allocation5 + $0x28] sm:$0xf]
      %v8118 = vld [vmem:[#allocation5 + $0x2c] sm:$0x1]
      %v8119 = vld [vmem:[#allocation5 + $0x30] sm:$0xf]
      %v8120 = vld [vmem:[#allocation5 + $0x34] sm:$0xf]
      %v8121 = vld [vmem:[#allocation5 + $0x38] sm:$0x1]
      %v8122 = vld [vmem:[#allocation5 + $0x3c] sm:$0xf]
      %v8123 = vld [vmem:[#allocation5 + $0x40] sm:$0xf]
      %v8124 = vld [vmem:[#allocation5 + $0x44] sm:$0x1]
      %v8125 = vld [vmem:[#allocation5 + $0x48] sm:$0xf]
      %v8126 = vld [vmem:[#allocation5 + $0x4c] sm:$0xf]
      %v8127 = vld [vmem:[#allocation5 + $0x50] sm:$0x1]
      %v8128 = vld [vmem:[#allocation5 + $0x54] sm:$0xf]
      %v8129 = vld [vmem:[#allocation5 + $0x58] sm:$0xf]
      %v8130 = vld [vmem:[#allocation5 + $0x5c] sm:$0x1]
      %v8131 = vld [vmem:[#allocation5 + $0x60] sm:$0xf]
      %v8132 = vld [vmem:[#allocation5 + $0x64] sm:$0xf]
      %v8133 = vld [vmem:[#allocation5 + $0x68] sm:$0x1]
      %v8134 = vld [vmem:[#allocation5 + $0x6c] sm:$0xf]
      %v8135 = vld [vmem:[#allocation5 + $0x70] sm:$0xf]
      %v8136 = vld [vmem:[#allocation5 + $0x74] sm:$0x1]
      %v8137 = vld [vmem:[#allocation5 + $0x78] sm:$0xf]
      %v8138 = vld [vmem:[#allocation5 + $0x7c] sm:$0xf]
      %v8139 = vld [vmem:[#allocation5 + $0x80] sm:$0x1]
      %v8140 = vld [vmem:[#allocation5 + $0x84] sm:$0xf]
      %v8141 = vld [vmem:[#allocation5 + $0x88] sm:$0xf]
      %v8142 = vld [vmem:[#allocation5 + $0x8c] sm:$0x1]
      %v8143 = vld [vmem:[#allocation5 + $0x90] sm:$0xf]
      %v8144 = vld [vmem:[#allocation5 + $0x94] sm:$0xf]
      %v8145 = vld [vmem:[#allocation5 + $0x98] sm:$0x1]
      %v8146 = vld [vmem:[#allocation5 + $0x9c] sm:$0xf]
      %v8147 = vld [vmem:[#allocation5 + $0xa0] sm:$0xf]
      %v8148 = vld [vmem:[#allocation5 + $0xa4] sm:$0x1]
      %v8149 = vld [vmem:[#allocation5 + $0xa8] sm:$0xf]
      %v8150 = vld [vmem:[#allocation5 + $0xac] sm:$0xf]
      %v8151 = vld [vmem:[#allocation5 + $0xb0] sm:$0x1]
      %v8152 = vld [vmem:[#allocation5 + $0xb4] sm:$0xf]
      %v8153 = vld [vmem:[#allocation5 + $0xb8] sm:$0xf]
      %v8154 = vld [vmem:[#allocation5 + $0xbc] sm:$0x1]
      %v8155 = vld [vmem:[#allocation5 + $0xc0] sm:$0xf]
      %v8156 = vld [vmem:[#allocation5 + $0xc4] sm:$0xf]
      %v8157 = vld [vmem:[#allocation5 + $0xc8] sm:$0x1]
      %v8158 = vld [vmem:[#allocation5 + $0xcc] sm:$0xf]
      %v8159 = vld [vmem:[#allocation5 + $0xd0] sm:$0xf]
      %v8160 = vld [vmem:[#allocation5 + $0xd4] sm:$0x1]
      %v8162 = vshrl.u32 %v8107, 16
      %v8164 = vrot.slane %v8162, 4
      %v8165 = vshll.u32 %v8107, 16
      %v8167 = vrot.slane %v8165, 5
      %v8168 = vor.u32 %v8164, %v8167
      %v8169 = vrot.slane %v8168, 4
      %v8171 = vshll.u32 %v8108, 16
      %v8173 = vrot.slane %v8171, 5
      %v8174 = vsel %vm1121, %v8169, %v8173
      %v8175 = vshrl.u32 %v8108, 16
      %v8177 = vrot.slane %v8175, 4
      %v8178 = vor.u32 %v8177, %v8173
      %v8179 = vrot.slane %v8178, 4
      %v8181 = vshll.u32 %v8109, 16
      %v8183 = vrot.slane %v8181, 5
      %v8184 = vsel %vm1121, %v8179, %v8183
      %v8186 = vshrl.u32 %v8110, 16
      %v8188 = vrot.slane %v8186, 4
      %v8189 = vshll.u32 %v8110, 16
      %v8191 = vrot.slane %v8189, 5
      %v8192 = vor.u32 %v8188, %v8191
      %v8193 = vrot.slane %v8192, 4
      %v8195 = vshll.u32 %v8111, 16
      %v8197 = vrot.slane %v8195, 5
      %v8198 = vsel %vm1121, %v8193, %v8197
      %v8199 = vshrl.u32 %v8111, 16
      %v8201 = vrot.slane %v8199, 4
      %v8202 = vor.u32 %v8201, %v8197
      %v8203 = vrot.slane %v8202, 4
      %v8205 = vshll.u32 %v8112, 16
      %v8207 = vrot.slane %v8205, 5
      %v8208 = vsel %vm1121, %v8203, %v8207
      %v8210 = vshrl.u32 %v8113, 16
      %v8212 = vrot.slane %v8210, 4
      %v8213 = vshll.u32 %v8113, 16
      %v8215 = vrot.slane %v8213, 5
      %v8216 = vor.u32 %v8212, %v8215
      %v8217 = vrot.slane %v8216, 4
      %v8219 = vshll.u32 %v8114, 16
      %v8221 = vrot.slane %v8219, 5
      %v8222 = vsel %vm1121, %v8217, %v8221
      %v8223 = vshrl.u32 %v8114, 16
      %v8225 = vrot.slane %v8223, 4
      %v8226 = vor.u32 %v8225, %v8221
      %v8227 = vrot.slane %v8226, 4
      %v8229 = vshll.u32 %v8115, 16
      %v8231 = vrot.slane %v8229, 5
      %v8232 = vsel %vm1121, %v8227, %v8231
      %v8234 = vshrl.u32 %v8116, 16
      %v8236 = vrot.slane %v8234, 4
      %v8237 = vshll.u32 %v8116, 16
      %v8239 = vrot.slane %v8237, 5
      %v8240 = vor.u32 %v8236, %v8239
      %v8241 = vrot.slane %v8240, 4
      %v8243 = vshll.u32 %v8117, 16
      %v8245 = vrot.slane %v8243, 5
      %v8246 = vsel %vm1121, %v8241, %v8245
      %v8247 = vshrl.u32 %v8117, 16
      %v8249 = vrot.slane %v8247, 4
      %v8250 = vor.u32 %v8249, %v8245
      %v8251 = vrot.slane %v8250, 4
      %v8253 = vshll.u32 %v8118, 16
      %v8255 = vrot.slane %v8253, 5
      %v8256 = vsel %vm1121, %v8251, %v8255
      %v8258 = vshrl.u32 %v8119, 16
      %v8260 = vrot.slane %v8258, 4
      %v8261 = vshll.u32 %v8119, 16
      %v8263 = vrot.slane %v8261, 5
      %v8264 = vor.u32 %v8260, %v8263
      %v8265 = vrot.slane %v8264, 4
      %v8267 = vshll.u32 %v8120, 16
      %v8269 = vrot.slane %v8267, 5
      %v8270 = vsel %vm1121, %v8265, %v8269
      %v8271 = vshrl.u32 %v8120, 16
      %v8273 = vrot.slane %v8271, 4
      %v8274 = vor.u32 %v8273, %v8269
      %v8275 = vrot.slane %v8274, 4
      %v8277 = vshll.u32 %v8121, 16
      %v8279 = vrot.slane %v8277, 5
      %v8280 = vsel %vm1121, %v8275, %v8279
      %v8282 = vshrl.u32 %v8122, 16
      %v8284 = vrot.slane %v8282, 4
      %v8285 = vshll.u32 %v8122, 16
      %v8287 = vrot.slane %v8285, 5
      %v8288 = vor.u32 %v8284, %v8287
      %v8289 = vrot.slane %v8288, 4
      %v8291 = vshll.u32 %v8123, 16
      %v8293 = vrot.slane %v8291, 5
      %v8294 = vsel %vm1121, %v8289, %v8293
      %v8295 = vshrl.u32 %v8123, 16
      %v8297 = vrot.slane %v8295, 4
      %v8298 = vor.u32 %v8297, %v8293
      %v8299 = vrot.slane %v8298, 4
      %v8301 = vshll.u32 %v8124, 16
      %v8303 = vrot.slane %v8301, 5
      %v8304 = vsel %vm1121, %v8299, %v8303
      %v8306 = vshrl.u32 %v8125, 16
      %v8308 = vrot.slane %v8306, 4
      %v8309 = vshll.u32 %v8125, 16
      %v8311 = vrot.slane %v8309, 5
      %v8312 = vor.u32 %v8308, %v8311
      %v8313 = vrot.slane %v8312, 4
      %v8315 = vshll.u32 %v8126, 16
      %v8317 = vrot.slane %v8315, 5
      %v8318 = vsel %vm1121, %v8313, %v8317
      %v8319 = vshrl.u32 %v8126, 16
      %v8321 = vrot.slane %v8319, 4
      %v8322 = vor.u32 %v8321, %v8317
      %v8323 = vrot.slane %v8322, 4
      %v8325 = vshll.u32 %v8127, 16
      %v8327 = vrot.slane %v8325, 5
      %v8328 = vsel %vm1121, %v8323, %v8327
      %v8330 = vshrl.u32 %v8128, 16
      %v8332 = vrot.slane %v8330, 4
      %v8333 = vshll.u32 %v8128, 16
      %v8335 = vrot.slane %v8333, 5
      %v8336 = vor.u32 %v8332, %v8335
      %v8337 = vrot.slane %v8336, 4
      %v8339 = vshll.u32 %v8129, 16
      %v8341 = vrot.slane %v8339, 5
      %v8342 = vsel %vm1121, %v8337, %v8341
      %v8343 = vshrl.u32 %v8129, 16
      %v8345 = vrot.slane %v8343, 4
      %v8346 = vor.u32 %v8345, %v8341
      %v8347 = vrot.slane %v8346, 4
      %v8349 = vshll.u32 %v8130, 16
      %v8351 = vrot.slane %v8349, 5
      %v8352 = vsel %vm1121, %v8347, %v8351
      %v8354 = vshrl.u32 %v8131, 16
      %v8356 = vrot.slane %v8354, 4
      %v8357 = vshll.u32 %v8131, 16
      %v8359 = vrot.slane %v8357, 5
      %v8360 = vor.u32 %v8356, %v8359
      %v8361 = vrot.slane %v8360, 4
      %v8363 = vshll.u32 %v8132, 16
      %v8365 = vrot.slane %v8363, 5
      %v8366 = vsel %vm1121, %v8361, %v8365
      %v8367 = vshrl.u32 %v8132, 16
      %v8369 = vrot.slane %v8367, 4
      %v8370 = vor.u32 %v8369, %v8365
      %v8371 = vrot.slane %v8370, 4
      %v8373 = vshll.u32 %v8133, 16
      %v8375 = vrot.slane %v8373, 5
      %v8376 = vsel %vm1121, %v8371, %v8375
      %v8378 = vshrl.u32 %v8134, 16
      %v8380 = vrot.slane %v8378, 4
      %v8381 = vshll.u32 %v8134, 16
      %v8383 = vrot.slane %v8381, 5
      %v8384 = vor.u32 %v8380, %v8383
      %v8385 = vrot.slane %v8384, 4
      %v8387 = vshll.u32 %v8135, 16
      %v8389 = vrot.slane %v8387, 5
      %v8390 = vsel %vm1121, %v8385, %v8389
      %v8391 = vshrl.u32 %v8135, 16
      %v8393 = vrot.slane %v8391, 4
      %v8394 = vor.u32 %v8393, %v8389
      %v8395 = vrot.slane %v8394, 4
      %v8397 = vshll.u32 %v8136, 16
      %v8399 = vrot.slane %v8397, 5
      %v8400 = vsel %vm1121, %v8395, %v8399
      %v8402 = vshrl.u32 %v8137, 16
      %v8404 = vrot.slane %v8402, 4
      %v8405 = vshll.u32 %v8137, 16
      %v8407 = vrot.slane %v8405, 5
      %v8408 = vor.u32 %v8404, %v8407
      %v8409 = vrot.slane %v8408, 4
      %v8411 = vshll.u32 %v8138, 16
      %v8413 = vrot.slane %v8411, 5
      %v8414 = vsel %vm1121, %v8409, %v8413
      %v8415 = vshrl.u32 %v8138, 16
      %v8417 = vrot.slane %v8415, 4
      %v8418 = vor.u32 %v8417, %v8413
      %v8419 = vrot.slane %v8418, 4
      %v8421 = vshll.u32 %v8139, 16
      %v8423 = vrot.slane %v8421, 5
      %v8424 = vsel %vm1121, %v8419, %v8423
      %v8426 = vshrl.u32 %v8140, 16
      %v8428 = vrot.slane %v8426, 4
      %v8429 = vshll.u32 %v8140, 16
      %v8431 = vrot.slane %v8429, 5
      %v8432 = vor.u32 %v8428, %v8431
      %v8433 = vrot.slane %v8432, 4
      %v8435 = vshll.u32 %v8141, 16
      %v8437 = vrot.slane %v8435, 5
      %v8438 = vsel %vm1121, %v8433, %v8437
      %v8439 = vshrl.u32 %v8141, 16
      %v8441 = vrot.slane %v8439, 4
      %v8442 = vor.u32 %v8441, %v8437
      %v8443 = vrot.slane %v8442, 4
      %v8445 = vshll.u32 %v8142, 16
      %v8447 = vrot.slane %v8445, 5
      %v8448 = vsel %vm1121, %v8443, %v8447
      %v8450 = vshrl.u32 %v8143, 16
      %v8452 = vrot.slane %v8450, 4
      %v8453 = vshll.u32 %v8143, 16
      %v8455 = vrot.slane %v8453, 5
      %v8456 = vor.u32 %v8452, %v8455
      %v8457 = vrot.slane %v8456, 4
      %v8459 = vshll.u32 %v8144, 16
      %v8461 = vrot.slane %v8459, 5
      %v8462 = vsel %vm1121, %v8457, %v8461
      %v8463 = vshrl.u32 %v8144, 16
      %v8465 = vrot.slane %v8463, 4
      %v8466 = vor.u32 %v8465, %v8461
      %v8467 = vrot.slane %v8466, 4
      %v8469 = vshll.u32 %v8145, 16
      %v8471 = vrot.slane %v8469, 5
      %v8472 = vsel %vm1121, %v8467, %v8471
      %v8474 = vshrl.u32 %v8146, 16
      %v8476 = vrot.slane %v8474, 4
      %v8477 = vshll.u32 %v8146, 16
      %v8479 = vrot.slane %v8477, 5
      %v8480 = vor.u32 %v8476, %v8479
      %v8481 = vrot.slane %v8480, 4
      %v8483 = vshll.u32 %v8147, 16
      %v8485 = vrot.slane %v8483, 5
      %v8486 = vsel %vm1121, %v8481, %v8485
      %v8487 = vshrl.u32 %v8147, 16
      %v8489 = vrot.slane %v8487, 4
      %v8490 = vor.u32 %v8489, %v8485
      %v8491 = vrot.slane %v8490, 4
      %v8493 = vshll.u32 %v8148, 16
      %v8495 = vrot.slane %v8493, 5
      %v8496 = vsel %vm1121, %v8491, %v8495
      %v8498 = vshrl.u32 %v8149, 16
      %v8500 = vrot.slane %v8498, 4
      %v8501 = vshll.u32 %v8149, 16
      %v8503 = vrot.slane %v8501, 5
      %v8504 = vor.u32 %v8500, %v8503
      %v8505 = vrot.slane %v8504, 4
      %v8507 = vshll.u32 %v8150, 16
      %v8509 = vrot.slane %v8507, 5
      %v8510 = vsel %vm1121, %v8505, %v8509
      %v8511 = vshrl.u32 %v8150, 16
      %v8513 = vrot.slane %v8511, 4
      %v8514 = vor.u32 %v8513, %v8509
      %v8515 = vrot.slane %v8514, 4
      %v8517 = vshll.u32 %v8151, 16
      %v8519 = vrot.slane %v8517, 5
      %v8520 = vsel %vm1121, %v8515, %v8519
      %v8522 = vshrl.u32 %v8152, 16
      %v8524 = vrot.slane %v8522, 4
      %v8525 = vshll.u32 %v8152, 16
      %v8527 = vrot.slane %v8525, 5
      %v8528 = vor.u32 %v8524, %v8527
      %v8529 = vrot.slane %v8528, 4
      %v8531 = vshll.u32 %v8153, 16
      %v8533 = vrot.slane %v8531, 5
      %v8534 = vsel %vm1121, %v8529, %v8533
      %v8535 = vshrl.u32 %v8153, 16
      %v8537 = vrot.slane %v8535, 4
      %v8538 = vor.u32 %v8537, %v8533
      %v8539 = vrot.slane %v8538, 4
      %v8541 = vshll.u32 %v8154, 16
      %v8543 = vrot.slane %v8541, 5
      %v8544 = vsel %vm1121, %v8539, %v8543
      %v8593 = vrot.slane %v8107, 5
      %v8594 = vrot.slane %v8593, 4
      %v8595 = vrot.slane %v8108, 5
      %v8596 = vsel %vm1556, %v8594, %v8595
      %v8597 = vrot.slane %v8595, 4
      %v8598 = vrot.slane %v8109, 5
      %v8599 = vsel %vm1556, %v8597, %v8598
      %v8600 = vrot.slane %v8110, 5
      %v8601 = vrot.slane %v8600, 4
      %v8602 = vrot.slane %v8111, 5
      %v8603 = vsel %vm1556, %v8601, %v8602
      %v8604 = vrot.slane %v8602, 4
      %v8605 = vrot.slane %v8112, 5
      %v8606 = vsel %vm1556, %v8604, %v8605
      %v8607 = vrot.slane %v8113, 5
      %v8608 = vrot.slane %v8607, 4
      %v8609 = vrot.slane %v8114, 5
      %v8610 = vsel %vm1556, %v8608, %v8609
      %v8611 = vrot.slane %v8609, 4
      %v8612 = vrot.slane %v8115, 5
      %v8613 = vsel %vm1556, %v8611, %v8612
      %v8614 = vrot.slane %v8116, 5
      %v8615 = vrot.slane %v8614, 4
      %v8616 = vrot.slane %v8117, 5
      %v8617 = vsel %vm1556, %v8615, %v8616
      %v8618 = vrot.slane %v8616, 4
      %v8619 = vrot.slane %v8118, 5
      %v8620 = vsel %vm1556, %v8618, %v8619
      %v8621 = vrot.slane %v8119, 5
      %v8622 = vrot.slane %v8621, 4
      %v8623 = vrot.slane %v8120, 5
      %v8624 = vsel %vm1556, %v8622, %v8623
      %v8625 = vrot.slane %v8623, 4
      %v8626 = vrot.slane %v8121, 5
      %v8627 = vsel %vm1556, %v8625, %v8626
      %v8628 = vrot.slane %v8122, 5
      %v8629 = vrot.slane %v8628, 4
      %v8630 = vrot.slane %v8123, 5
      %v8631 = vsel %vm1556, %v8629, %v8630
      %v8632 = vrot.slane %v8630, 4
      %v8633 = vrot.slane %v8124, 5
      %v8634 = vsel %vm1556, %v8632, %v8633
      %v8635 = vrot.slane %v8125, 5
      %v8636 = vrot.slane %v8635, 4
      %v8637 = vrot.slane %v8126, 5
      %v8638 = vsel %vm1556, %v8636, %v8637
      %v8639 = vrot.slane %v8637, 4
      %v8640 = vrot.slane %v8127, 5
      %v8641 = vsel %vm1556, %v8639, %v8640
      %v8642 = vrot.slane %v8128, 5
      %v8643 = vrot.slane %v8642, 4
      %v8644 = vrot.slane %v8129, 5
      %v8645 = vsel %vm1556, %v8643, %v8644
      %v8646 = vrot.slane %v8644, 4
      %v8647 = vrot.slane %v8130, 5
      %v8648 = vsel %vm1556, %v8646, %v8647
      %v8649 = vrot.slane %v8131, 5
      %v8650 = vrot.slane %v8649, 4
      %v8651 = vrot.slane %v8132, 5
      %v8652 = vsel %vm1556, %v8650, %v8651
      %v8653 = vrot.slane %v8651, 4
      %v8654 = vrot.slane %v8133, 5
      %v8655 = vsel %vm1556, %v8653, %v8654
      %v8656 = vrot.slane %v8134, 5
      %v8657 = vrot.slane %v8656, 4
      %v8658 = vrot.slane %v8135, 5
      %v8659 = vsel %vm1556, %v8657, %v8658
      %v8660 = vrot.slane %v8658, 4
      %v8661 = vrot.slane %v8136, 5
      %v8662 = vsel %vm1556, %v8660, %v8661
      %v8663 = vrot.slane %v8137, 5
      %v8664 = vrot.slane %v8663, 4
      %v8665 = vrot.slane %v8138, 5
      %v8666 = vsel %vm1556, %v8664, %v8665
      %v8667 = vrot.slane %v8665, 4
      %v8668 = vrot.slane %v8139, 5
      %v8669 = vsel %vm1556, %v8667, %v8668
      %v8670 = vrot.slane %v8140, 5
      %v8671 = vrot.slane %v8670, 4
      %v8672 = vrot.slane %v8141, 5
      %v8673 = vsel %vm1556, %v8671, %v8672
      %v8674 = vrot.slane %v8672, 4
      %v8675 = vrot.slane %v8142, 5
      %v8676 = vsel %vm1556, %v8674, %v8675
      %v8677 = vrot.slane %v8143, 5
      %v8678 = vrot.slane %v8677, 4
      %v8679 = vrot.slane %v8144, 5
      %v8680 = vsel %vm1556, %v8678, %v8679
      %v8681 = vrot.slane %v8679, 4
      %v8682 = vrot.slane %v8145, 5
      %v8683 = vsel %vm1556, %v8681, %v8682
      %v8684 = vrot.slane %v8146, 5
      %v8685 = vrot.slane %v8684, 4
      %v8686 = vrot.slane %v8147, 5
      %v8687 = vsel %vm1556, %v8685, %v8686
      %v8688 = vrot.slane %v8686, 4
      %v8689 = vrot.slane %v8148, 5
      %v8690 = vsel %vm1556, %v8688, %v8689
      %v8691 = vrot.slane %v8149, 5
      %v8692 = vrot.slane %v8691, 4
      %v8693 = vrot.slane %v8150, 5
      %v8694 = vsel %vm1556, %v8692, %v8693
      %v8695 = vrot.slane %v8693, 4
      %v8696 = vrot.slane %v8151, 5
      %v8697 = vsel %vm1556, %v8695, %v8696
      %v8698 = vrot.slane %v8152, 5
      %v8699 = vrot.slane %v8698, 4
      %v8700 = vrot.slane %v8153, 5
      %v8701 = vsel %vm1556, %v8699, %v8700
      %v8702 = vrot.slane %v8700, 4
      %v8703 = vrot.slane %v8154, 5
      %v8704 = vsel %vm1556, %v8702, %v8703
      %v8706 = vshrl.u32 %v8155, 16
      %v8708 = vrot.slane %v8706, 4
      %v8709 = vshll.u32 %v8155, 16
      %v8711 = vrot.slane %v8709, 5
      %v8712 = vor.u32 %v8708, %v8711
      %v8713 = vrot.slane %v8712, 4
      %v8715 = vshll.u32 %v8156, 16
      %v8717 = vrot.slane %v8715, 5
      %v8718 = vsel %vm1121, %v8713, %v8717
      %v8719 = vshrl.u32 %v8156, 16
      %v8721 = vrot.slane %v8719, 4
      %v8722 = vor.u32 %v8721, %v8717
      %v8723 = vrot.slane %v8722, 4
      %v8725 = vshll.u32 %v8157, 16
      %v8727 = vrot.slane %v8725, 5
      %v8728 = vsel %vm1121, %v8723, %v8727
      %v8732 = vrot.slane %v8155, 5
      %v8733 = vrot.slane %v8732, 4
      %v8734 = vrot.slane %v8156, 5
      %v8735 = vsel %vm1556, %v8733, %v8734
      %v8736 = vrot.slane %v8734, 4
      %v8737 = vrot.slane %v8157, 5
      %v8738 = vsel %vm1556, %v8736, %v8737
      %v8740 = vshrl.u32 %v8158, 16
      %v8742 = vrot.slane %v8740, 4
      %v8743 = vshll.u32 %v8158, 16
      %v8745 = vrot.slane %v8743, 5
      %v8746 = vor.u32 %v8742, %v8745
      %v8747 = vrot.slane %v8746, 4
      %v8749 = vshll.u32 %v8159, 16
      %v8751 = vrot.slane %v8749, 5
      %v8752 = vsel %vm1121, %v8747, %v8751
      %v8753 = vshrl.u32 %v8159, 16
      %v8755 = vrot.slane %v8753, 4
      %v8756 = vor.u32 %v8755, %v8751
      %v8757 = vrot.slane %v8756, 4
      %v8759 = vshll.u32 %v8160, 16
      %v8761 = vrot.slane %v8759, 5
      %v8762 = vsel %vm1121, %v8757, %v8761
      %v8766 = vrot.slane %v8158, 5
      %v8767 = vrot.slane %v8766, 4
      %v8768 = vrot.slane %v8159, 5
      %v8769 = vsel %vm1556, %v8767, %v8768
      %v8770 = vrot.slane %v8768, 4
      %v8771 = vrot.slane %v8160, 5
      %v8772 = vsel %vm1556, %v8770, %v8771
      %v8773 = vunpack.c.l.b16 %v8107
      %v8774 = vunpack.c.l.b16 %v8108
      %v8775 = vunpack.c.l.b16 %v8110
      %v8776 = vunpack.c.l.b16 %v8111
      %v8777 = vunpack.c.l.b16 %v8113
      %v8778 = vunpack.c.l.b16 %v8114
      %v8779 = vunpack.c.l.b16 %v8116
      %v8780 = vunpack.c.l.b16 %v8117
      %v8781 = vunpack.c.l.b16 %v8119
      %v8782 = vunpack.c.l.b16 %v8120
      %v8783 = vunpack.c.l.b16 %v8122
      %v8784 = vunpack.c.l.b16 %v8123
      %v8785 = vunpack.c.l.b16 %v8125
      %v8786 = vunpack.c.l.b16 %v8126
      %v8787 = vunpack.c.l.b16 %v8128
      %v8788 = vunpack.c.l.b16 %v8129
      %v8789 = vunpack.c.l.b16 %v8131
      %v8790 = vunpack.c.l.b16 %v8132
      %v8791 = vunpack.c.l.b16 %v8134
      %v8792 = vunpack.c.l.b16 %v8135
      %v8793 = vunpack.c.l.b16 %v8137
      %v8794 = vunpack.c.l.b16 %v8138
      %v8795 = vunpack.c.l.b16 %v8140
      %v8796 = vunpack.c.l.b16 %v8141
      %v8797 = vunpack.c.l.b16 %v8143
      %v8798 = vunpack.c.l.b16 %v8144
      %v8799 = vunpack.c.l.b16 %v8146
      %v8800 = vunpack.c.l.b16 %v8147
      %v8801 = vunpack.c.l.b16 %v8149
      %v8802 = vunpack.c.l.b16 %v8150
      %v8803 = vunpack.c.l.b16 %v8152
      %v8804 = vunpack.c.l.b16 %v8153
      %v8805 = vpack.c.b16 %v8774, %v8773
      %v8806 = vpack.c.b16 %v8776, %v8775
      %v8807 = vpack.c.b16 %v8778, %v8777
      %v8808 = vpack.c.b16 %v8780, %v8779
      %v8809 = vpack.c.b16 %v8782, %v8781
      %v8810 = vpack.c.b16 %v8784, %v8783
      %v8811 = vpack.c.b16 %v8786, %v8785
      %v8812 = vpack.c.b16 %v8788, %v8787
      %v8813 = vpack.c.b16 %v8790, %v8789
      %v8814 = vpack.c.b16 %v8792, %v8791
      %v8815 = vpack.c.b16 %v8794, %v8793
      %v8816 = vpack.c.b16 %v8796, %v8795
      %v8817 = vpack.c.b16 %v8798, %v8797
      %v8818 = vpack.c.b16 %v8800, %v8799
      %v8819 = vpack.c.b16 %v8802, %v8801
      %v8820 = vpack.c.b16 %v8804, %v8803
      %v8821 = vunpack.c.l.b16 %v8174
      %v8822 = vunpack.c.l.b16 %v8184
      %v8823 = vunpack.c.l.b16 %v8198
      %v8824 = vunpack.c.l.b16 %v8208
      %v8825 = vunpack.c.l.b16 %v8222
      %v8826 = vunpack.c.l.b16 %v8232
      %v8827 = vunpack.c.l.b16 %v8246
      %v8828 = vunpack.c.l.b16 %v8256
      %v8829 = vunpack.c.l.b16 %v8270
      %v8830 = vunpack.c.l.b16 %v8280
      %v8831 = vunpack.c.l.b16 %v8294
      %v8832 = vunpack.c.l.b16 %v8304
      %v8833 = vunpack.c.l.b16 %v8318
      %v8834 = vunpack.c.l.b16 %v8328
      %v8835 = vunpack.c.l.b16 %v8342
      %v8836 = vunpack.c.l.b16 %v8352
      %v8837 = vunpack.c.l.b16 %v8366
      %v8838 = vunpack.c.l.b16 %v8376
      %v8839 = vunpack.c.l.b16 %v8390
      %v8840 = vunpack.c.l.b16 %v8400
      %v8841 = vunpack.c.l.b16 %v8414
      %v8842 = vunpack.c.l.b16 %v8424
      %v8843 = vunpack.c.l.b16 %v8438
      %v8844 = vunpack.c.l.b16 %v8448
      %v8845 = vunpack.c.l.b16 %v8462
      %v8846 = vunpack.c.l.b16 %v8472
      %v8847 = vunpack.c.l.b16 %v8486
      %v8848 = vunpack.c.l.b16 %v8496
      %v8849 = vunpack.c.l.b16 %v8510
      %v8850 = vunpack.c.l.b16 %v8520
      %v8851 = vunpack.c.l.b16 %v8534
      %v8852 = vunpack.c.l.b16 %v8544
      %v8853 = vpack.c.b16 %v8822, %v8821
      %v8854 = vpack.c.b16 %v8824, %v8823
      %v8855 = vpack.c.b16 %v8826, %v8825
      %v8856 = vpack.c.b16 %v8828, %v8827
      %v8857 = vpack.c.b16 %v8830, %v8829
      %v8858 = vpack.c.b16 %v8832, %v8831
      %v8859 = vpack.c.b16 %v8834, %v8833
      %v8860 = vpack.c.b16 %v8836, %v8835
      %v8861 = vpack.c.b16 %v8838, %v8837
      %v8862 = vpack.c.b16 %v8840, %v8839
      %v8863 = vpack.c.b16 %v8842, %v8841
      %v8864 = vpack.c.b16 %v8844, %v8843
      %v8865 = vpack.c.b16 %v8846, %v8845
      %v8866 = vpack.c.b16 %v8848, %v8847
      %v8867 = vpack.c.b16 %v8850, %v8849
      %v8868 = vpack.c.b16 %v8852, %v8851
      %8869 = vrot.lane.b32.xlu0 %v8853, 64
      %v8870 = vpop.permute.xlu0 %8869
      %8871 = vrot.lane.b32.xlu0 %v8854, 64
      %v8872 = vpop.permute.xlu0 %8871
      %8873 = vrot.lane.b32.xlu0 %v8855, 64
      %v8874 = vpop.permute.xlu0 %8873
      %8875 = vrot.lane.b32.xlu0 %v8856, 64
      %v8876 = vpop.permute.xlu0 %8875
      %8877 = vrot.lane.b32.xlu0 %v8857, 64
      %v8878 = vpop.permute.xlu0 %8877
      %8879 = vrot.lane.b32.xlu0 %v8858, 64
      %v8880 = vpop.permute.xlu0 %8879
      %8881 = vrot.lane.b32.xlu0 %v8859, 64
      %v8882 = vpop.permute.xlu0 %8881
      %8883 = vrot.lane.b32.xlu0 %v8860, 64
      %v8884 = vpop.permute.xlu0 %8883
      %8885 = vrot.lane.b32.xlu0 %v8861, 64
      %v8886 = vpop.permute.xlu0 %8885
      %8887 = vrot.lane.b32.xlu0 %v8862, 64
      %v8888 = vpop.permute.xlu0 %8887
      %8889 = vrot.lane.b32.xlu0 %v8863, 64
      %v8890 = vpop.permute.xlu0 %8889
      %8891 = vrot.lane.b32.xlu0 %v8864, 64
      %v8892 = vpop.permute.xlu0 %8891
      %8893 = vrot.lane.b32.xlu0 %v8865, 64
      %v8894 = vpop.permute.xlu0 %8893
      %8895 = vrot.lane.b32.xlu0 %v8866, 64
      %v8896 = vpop.permute.xlu0 %8895
      %8897 = vrot.lane.b32.xlu0 %v8867, 64
      %v8898 = vpop.permute.xlu0 %8897
      %8899 = vrot.lane.b32.xlu0 %v8868, 64
      %v8900 = vpop.permute.xlu0 %8899
      %v8901 = vunpack.c.l.b16 %v8596
      %v8902 = vunpack.c.l.b16 %v8599
      %v8903 = vunpack.c.l.b16 %v8603
      %v8904 = vunpack.c.l.b16 %v8606
      %v8905 = vunpack.c.l.b16 %v8610
      %v8906 = vunpack.c.l.b16 %v8613
      %v8907 = vunpack.c.l.b16 %v8617
      %v8908 = vunpack.c.l.b16 %v8620
      %v8909 = vunpack.c.l.b16 %v8624
      %v8910 = vunpack.c.l.b16 %v8627
      %v8911 = vunpack.c.l.b16 %v8631
      %v8912 = vunpack.c.l.b16 %v8634
      %v8913 = vunpack.c.l.b16 %v8638
      %v8914 = vunpack.c.l.b16 %v8641
      %v8915 = vunpack.c.l.b16 %v8645
      %v8916 = vunpack.c.l.b16 %v8648
      %v8917 = vunpack.c.l.b16 %v8652
      %v8918 = vunpack.c.l.b16 %v8655
      %v8919 = vunpack.c.l.b16 %v8659
      %v8920 = vunpack.c.l.b16 %v8662
      %v8921 = vunpack.c.l.b16 %v8666
      %v8922 = vunpack.c.l.b16 %v8669
      %v8923 = vunpack.c.l.b16 %v8673
      %v8924 = vunpack.c.l.b16 %v8676
      %v8925 = vunpack.c.l.b16 %v8680
      %v8926 = vunpack.c.l.b16 %v8683
      %v8927 = vunpack.c.l.b16 %v8687
      %v8928 = vunpack.c.l.b16 %v8690
      %v8929 = vunpack.c.l.b16 %v8694
      %v8930 = vunpack.c.l.b16 %v8697
      %v8931 = vunpack.c.l.b16 %v8701
      %v8932 = vunpack.c.l.b16 %v8704
      %v8933 = vpack.c.b16 %v8902, %v8901
      %v8934 = vpack.c.b16 %v8904, %v8903
      %v8935 = vpack.c.b16 %v8906, %v8905
      %v8936 = vpack.c.b16 %v8908, %v8907
      %v8937 = vpack.c.b16 %v8910, %v8909
      %v8938 = vpack.c.b16 %v8912, %v8911
      %v8939 = vpack.c.b16 %v8914, %v8913
      %v8940 = vpack.c.b16 %v8916, %v8915
      %v8941 = vpack.c.b16 %v8918, %v8917
      %v8942 = vpack.c.b16 %v8920, %v8919
      %v8943 = vpack.c.b16 %v8922, %v8921
      %v8944 = vpack.c.b16 %v8924, %v8923
      %v8945 = vpack.c.b16 %v8926, %v8925
      %v8946 = vpack.c.b16 %v8928, %v8927
      %v8947 = vpack.c.b16 %v8930, %v8929
      %v8948 = vpack.c.b16 %v8932, %v8931
      %v8949 = vunpack.c.l.b16 %v8155
      %v8950 = vunpack.c.l.b16 %v8156
      %v8951 = vpack.c.b16 %v8950, %v8949
      %8952 = vrot.lane.b32.xlu0 %v8806, 64
      %v8953 = vpop.permute.xlu0 %8952
      %8954 = vrot.lane.b32.xlu0 %v8807, 64
      %v8955 = vpop.permute.xlu0 %8954
      %8956 = vrot.lane.b32.xlu0 %v8808, 64
      %v8957 = vpop.permute.xlu0 %8956
      %8958 = vrot.lane.b32.xlu0 %v8809, 64
      %v8959 = vpop.permute.xlu0 %8958
      %8960 = vrot.lane.b32.xlu0 %v8810, 64
      %v8961 = vpop.permute.xlu0 %8960
      %8962 = vrot.lane.b32.xlu0 %v8811, 64
      %v8963 = vpop.permute.xlu0 %8962
      %8964 = vrot.lane.b32.xlu0 %v8812, 64
      %v8965 = vpop.permute.xlu0 %8964
      %8966 = vrot.lane.b32.xlu0 %v8813, 64
      %v8967 = vpop.permute.xlu0 %8966
      %8968 = vrot.lane.b32.xlu0 %v8814, 64
      %v8969 = vpop.permute.xlu0 %8968
      %8970 = vrot.lane.b32.xlu0 %v8815, 64
      %v8971 = vpop.permute.xlu0 %8970
      %8972 = vrot.lane.b32.xlu0 %v8816, 64
      %v8973 = vpop.permute.xlu0 %8972
      %8974 = vrot.lane.b32.xlu0 %v8817, 64
      %v8975 = vpop.permute.xlu0 %8974
      %8976 = vrot.lane.b32.xlu0 %v8818, 64
      %v8977 = vpop.permute.xlu0 %8976
      %8978 = vrot.lane.b32.xlu0 %v8819, 64
      %v8979 = vpop.permute.xlu0 %8978
      %8980 = vrot.lane.b32.xlu0 %v8820, 64
      %v8981 = vpop.permute.xlu0 %8980
      %8982 = vrot.lane.b32.xlu0 %v8951, 64
      %v8983 = vpop.permute.xlu0 %8982
      %v8984 = vunpack.c.l.b16 %v8718
      %v8985 = vunpack.c.l.b16 %v8728
      %v8986 = vpack.c.b16 %v8985, %v8984
      %v8987 = vunpack.c.l.b16 %v8735
      %v8988 = vunpack.c.l.b16 %v8738
      %v8989 = vpack.c.b16 %v8988, %v8987
      %8990 = vrot.lane.b32.xlu0 %v8934, 64
      %v8991 = vpop.permute.xlu0 %8990
      %8992 = vrot.lane.b32.xlu0 %v8935, 64
      %v8993 = vpop.permute.xlu0 %8992
      %8994 = vrot.lane.b32.xlu0 %v8936, 64
      %v8995 = vpop.permute.xlu0 %8994
      %8996 = vrot.lane.b32.xlu0 %v8937, 64
      %v8997 = vpop.permute.xlu0 %8996
      %8998 = vrot.lane.b32.xlu0 %v8938, 64
      %v8999 = vpop.permute.xlu0 %8998
      %9000 = vrot.lane.b32.xlu0 %v8939, 64
      %v9001 = vpop.permute.xlu0 %9000
      %9002 = vrot.lane.b32.xlu0 %v8940, 64
      %v9003 = vpop.permute.xlu0 %9002
      %9004 = vrot.lane.b32.xlu0 %v8941, 64
      %v9005 = vpop.permute.xlu0 %9004
      %9006 = vrot.lane.b32.xlu0 %v8942, 64
      %v9007 = vpop.permute.xlu0 %9006
      %9008 = vrot.lane.b32.xlu0 %v8943, 64
      %v9009 = vpop.permute.xlu0 %9008
      %9010 = vrot.lane.b32.xlu0 %v8944, 64
      %v9011 = vpop.permute.xlu0 %9010
      %9012 = vrot.lane.b32.xlu0 %v8945, 64
      %v9013 = vpop.permute.xlu0 %9012
      %9014 = vrot.lane.b32.xlu0 %v8946, 64
      %v9015 = vpop.permute.xlu0 %9014
      %9016 = vrot.lane.b32.xlu0 %v8947, 64
      %v9017 = vpop.permute.xlu0 %9016
      %9018 = vrot.lane.b32.xlu0 %v8948, 64
      %v9019 = vpop.permute.xlu0 %9018
      %9020 = vrot.lane.b32.xlu0 %v8989, 64
      %v9021 = vpop.permute.xlu0 %9020
      %v9022 = vunpack.c.l.b16 %v8158
      %v9023 = vunpack.c.l.b16 %v8159
      %v9024 = vpack.c.b16 %v9023, %v9022
      %v9025 = vunpack.c.l.b16 %v8752
      %v9026 = vunpack.c.l.b16 %v8762
      %v9027 = vpack.c.b16 %v9026, %v9025
      %9028 = vrot.lane.b32.xlu0 %v8986, 64
      %v9029 = vpop.permute.xlu0 %9028
      %9030 = vrot.lane.b32.xlu0 %v9027, 64
      %v9031 = vpop.permute.xlu0 %9030
      %v9032 = vunpack.c.l.b16 %v8769
      %v9033 = vunpack.c.l.b16 %v8772
      %v9034 = vpack.c.b16 %v9033, %v9032
      %v9037 = vsel %vm4508, %v8805, %v8870
      %v9041 = vsel %vm4508, %v8806, %v8872
      %v9045 = vsel %vm4508, %v8807, %v8874
      %v9049 = vsel %vm4508, %v8808, %v8876
      %v9053 = vsel %vm4508, %v8809, %v8878
      %v9057 = vsel %vm4508, %v8810, %v8880
      %v9061 = vsel %vm4508, %v8811, %v8882
      %v9065 = vsel %vm4508, %v8812, %v8884
      %v9069 = vsel %vm4508, %v8813, %v8886
      %v9073 = vsel %vm4508, %v8814, %v8888
      %v9077 = vsel %vm4508, %v8815, %v8890
      %v9081 = vsel %vm4508, %v8816, %v8892
      %v9085 = vsel %vm4508, %v8817, %v8894
      %v9089 = vsel %vm4508, %v8818, %v8896
      %v9093 = vsel %vm4508, %v8819, %v8898
      %v9097 = vsel %vm4508, %v8820, %v8900
      %v9101 = vsel %vm4508, %v8933, %v8953
      %v9105 = vsel %vm4508, %v8934, %v8955
      %v9109 = vsel %vm4508, %v8935, %v8957
      %v9113 = vsel %vm4508, %v8936, %v8959
      %v9117 = vsel %vm4508, %v8937, %v8961
      %v9121 = vsel %vm4508, %v8938, %v8963
      %v9125 = vsel %vm4508, %v8939, %v8965
      %v9129 = vsel %vm4508, %v8940, %v8967
      %v9133 = vsel %vm4508, %v8941, %v8969
      %v9137 = vsel %vm4508, %v8942, %v8971
      %v9141 = vsel %vm4508, %v8943, %v8973
      %v9145 = vsel %vm4508, %v8944, %v8975
      %v9149 = vsel %vm4508, %v8945, %v8977
      %v9153 = vsel %vm4508, %v8946, %v8979
      %v9157 = vsel %vm4508, %v8947, %v8981
      %v9161 = vsel %vm4508, %v8948, %v8983
      %v9165 = vsel %vm4508, %v8854, %v8991
      %v9169 = vsel %vm4508, %v8855, %v8993
      %v9173 = vsel %vm4508, %v8856, %v8995
      %v9177 = vsel %vm4508, %v8857, %v8997
      %v9181 = vsel %vm4508, %v8858, %v8999
      %v9185 = vsel %vm4508, %v8859, %v9001
      %v9189 = vsel %vm4508, %v8860, %v9003
      %v9193 = vsel %vm4508, %v8861, %v9005
      %v9197 = vsel %vm4508, %v8862, %v9007
      %v9201 = vsel %vm4508, %v8863, %v9009
      %v9205 = vsel %vm4508, %v8864, %v9011
      %v9209 = vsel %vm4508, %v8865, %v9013
      %v9213 = vsel %vm4508, %v8866, %v9015
      %v9217 = vsel %vm4508, %v8867, %v9017
      %v9221 = vsel %vm4508, %v8868, %v9019
      %v9225 = vsel %vm4508, %v8986, %v9021
      %v9229 = vsel %vm4508, %v8951, %v9029
      %v9233 = vsel %vm4508, %v9024, %v9031
      %v9235 = vld [vmem:[%s7] sm:$0xf]
      %v9236 = vld [vmem:[%s7 + $0x4] sm:$0xf]
      %v9237 = vld [vmem:[%s7 + $0x8] sm:$0xf]
      %v9238 = vld [vmem:[%s7 + $0xc] sm:$0xf]
      %v9239 = vld [vmem:[%s7 + $0x10] sm:$0xf]
      %v9240 = vld [vmem:[%s7 + $0x14] sm:$0xf]
      %v9241 = vld [vmem:[%s7 + $0x18] sm:$0xf]
      %v9242 = vld [vmem:[%s7 + $0x1c] sm:$0xf]
      %v9243 = vld [vmem:[%s7 + $0x20] sm:$0xf]
      %v9244 = vld [vmem:[%s7 + $0x24] sm:$0xf]
      %v9245 = vld [vmem:[%s7 + $0x28] sm:$0xf]
      %v9246 = vld [vmem:[%s7 + $0x2c] sm:$0xf]
      %v9247 = vld [vmem:[%s7 + $0x30] sm:$0xf]
      %v9248 = vld [vmem:[%s7 + $0x34] sm:$0xf]
      %v9249 = vld [vmem:[%s7 + $0x38] sm:$0xf]
      %v9250 = vld [vmem:[%s7 + $0x3c] sm:$0xf]
      %v9251 = vld [vmem:[%s7 + $0x40] sm:$0xf]
      %v9252 = vld [vmem:[%s7 + $0x44] sm:$0xf]
      %v9253 = vld [vmem:[%s7 + $0x48] sm:$0xf]
      %v9254 = vld [vmem:[%s7 + $0x4c] sm:$0xf]
      %v9255 = vld [vmem:[%s7 + $0x50] sm:$0xf]
      %v9256 = vld [vmem:[%s7 + $0x54] sm:$0xf]
      %v9257 = vld [vmem:[%s7 + $0x58] sm:$0xf]
      %v9258 = vld [vmem:[%s7 + $0x5c] sm:$0xf]
      %v9259 = vld [vmem:[%s7 + $0x60] sm:$0xf]
      %v9260 = vld [vmem:[%s7 + $0x64] sm:$0xf]
      %v9261 = vld [vmem:[%s7 + $0x68] sm:$0xf]
      %v9262 = vld [vmem:[%s7 + $0x6c] sm:$0xf]
      %v9263 = vld [vmem:[%s7 + $0x70] sm:$0xf]
      %v9264 = vld [vmem:[%s7 + $0x74] sm:$0xf]
      %v9265 = vld [vmem:[%s7 + $0x78] sm:$0xf]
      %v9266 = vld [vmem:[%s7 + $0x7c] sm:$0xf]
      %v9267 = vld [vmem:[%s7 + $0x80] sm:$0xf]
      %v9268 = vld [vmem:[%s7 + $0x84] sm:$0xf]
      %v9269 = vld [vmem:[%s7 + $0x88] sm:$0xf]
      %v9270 = vld [vmem:[%s7 + $0x8c] sm:$0xf]
      %v9271 = vld [vmem:[%s7 + $0x90] sm:$0xf]
      %v9272 = vld [vmem:[%s7 + $0x94] sm:$0xf]
      %v9273 = vld [vmem:[%s7 + $0x98] sm:$0xf]
      %v9274 = vld [vmem:[%s7 + $0x9c] sm:$0xf]
      %v9275 = vld [vmem:[%s7 + $0xa0] sm:$0xf]
      %v9276 = vld [vmem:[%s7 + $0xa4] sm:$0xf]
      %v9277 = vld [vmem:[%s7 + $0xa8] sm:$0xf]
      %v9278 = vld [vmem:[%s7 + $0xac] sm:$0xf]
      %v9279 = vld [vmem:[%s7 + $0xb0] sm:$0xf]
      %v9280 = vld [vmem:[%s7 + $0xb4] sm:$0xf]
      %v9281 = vld [vmem:[%s7 + $0xb8] sm:$0xf]
      %v9282 = vld [vmem:[%s7 + $0xbc] sm:$0xf]
      %v9283 = vld [vmem:[%s7 + $0xc0] sm:$0xf]
      %v9284 = vld [vmem:[%s7 + $0xc4] sm:$0xf]
      %v9285 = vld [vmem:[%s7 + $0xc8] sm:$0xf]
      %v9286 = vld [vmem:[%s7 + $0xcc] sm:$0xf]
      %v9287 = vld [vmem:[%s7 + $0xd0] sm:$0xf]
      %v9288 = vld [vmem:[%s7 + $0xd4] sm:$0xf]
      %v9289 = vld [vmem:[%s7 + $0xd8] sm:$0xf]
      %v9290 = vld [vmem:[%s7 + $0xdc] sm:$0xf]
      %v9291 = vld [vmem:[%s7 + $0xe0] sm:$0xf]
      %v9292 = vld [vmem:[%s7 + $0xe4] sm:$0xf]
      %v9293 = vld [vmem:[%s7 + $0xe8] sm:$0xf]
      %v9294 = vld [vmem:[%s7 + $0xec] sm:$0xf]
      %v9295 = vld [vmem:[%s7 + $0xf0] sm:$0xf]
      %v9296 = vld [vmem:[%s7 + $0xf4] sm:$0xf]
      %v9297 = vld [vmem:[%s7 + $0xf8] sm:$0xf]
      %v9298 = vld [vmem:[%s7 + $0xfc] sm:$0xf]
      %v9299 = vld [vmem:[%s7 + $0x100] sm:$0xf]
      %v9300 = vld [vmem:[%s7 + $0x104] sm:$0xf]
      %v9301 = vld [vmem:[%s7 + $0x108] sm:$0xf]
      %v9302 = vld [vmem:[%s7 + $0x10c] sm:$0xf]
      %v9303 = vld [vmem:[%s7 + $0x110] sm:$0xf]
      %v9304 = vld [vmem:[%s7 + $0x114] sm:$0xf]
      %v9305 = vld [vmem:[%s7 + $0x118] sm:$0xf]
      %v9306 = vld [vmem:[%s7 + $0x11c] sm:$0xf]
      %v9307 = vld [vmem:[%s8] sm:$0x1]
      %v9309 = vlaneseq
      %v9310 = vshrl.u32 %v9309, 7
      %v9311 = vsub.s32 0, %v9310
      %v9312 = vrot.slane %v9307, %v9311
      %v9386 = vunpack.c.l.b16 %v9235
      %v9387 = vunpack.c.l.b16 %v9236
      %v9388 = vunpack.c.l.b16 %v9237
      %v9389 = vunpack.c.l.b16 %v9238
      %v9390 = vunpack.c.l.b16 %v9239
      %v9391 = vunpack.c.l.b16 %v9240
      %v9392 = vunpack.c.l.b16 %v9241
      %v9393 = vunpack.c.l.b16 %v9242
      %v9394 = vunpack.c.l.b16 %v9243
      %v9395 = vunpack.c.l.b16 %v9244
      %v9396 = vunpack.c.l.b16 %v9245
      %v9397 = vunpack.c.l.b16 %v9246
      %v9398 = vunpack.c.l.b16 %v9247
      %v9399 = vunpack.c.l.b16 %v9248
      %v9400 = vunpack.c.l.b16 %v9249
      %v9401 = vunpack.c.l.b16 %v9250
      %v9402 = vunpack.c.l.b16 %v9251
      %v9403 = vunpack.c.l.b16 %v9252
      %v9404 = vunpack.c.l.b16 %v9253
      %v9405 = vunpack.c.l.b16 %v9254
      %v9406 = vunpack.c.l.b16 %v9255
      %v9407 = vunpack.c.l.b16 %v9256
      %v9408 = vunpack.c.l.b16 %v9257
      %v9409 = vunpack.c.l.b16 %v9258
      %v9410 = vunpack.c.l.b16 %v9259
      %v9411 = vunpack.c.l.b16 %v9260
      %v9412 = vunpack.c.l.b16 %v9261
      %v9413 = vunpack.c.l.b16 %v9262
      %v9414 = vunpack.c.l.b16 %v9263
      %v9415 = vunpack.c.l.b16 %v9264
      %v9416 = vunpack.c.l.b16 %v9265
      %v9417 = vunpack.c.l.b16 %v9266
      %v9418 = vunpack.c.l.b16 %v9267
      %v9419 = vunpack.c.l.b16 %v9268
      %v9420 = vunpack.c.l.b16 %v9269
      %v9421 = vunpack.c.l.b16 %v9270
      %v9422 = vunpack.c.l.b16 %v9271
      %v9423 = vunpack.c.l.b16 %v9272
      %v9424 = vunpack.c.l.b16 %v9273
      %v9425 = vunpack.c.l.b16 %v9274
      %v9426 = vunpack.c.l.b16 %v9275
      %v9427 = vunpack.c.l.b16 %v9276
      %v9428 = vunpack.c.l.b16 %v9277
      %v9429 = vunpack.c.l.b16 %v9278
      %v9430 = vunpack.c.l.b16 %v9279
      %v9431 = vunpack.c.l.b16 %v9280
      %v9432 = vunpack.c.l.b16 %v9281
      %v9433 = vunpack.c.l.b16 %v9282
      %v9434 = vunpack.c.l.b16 %v9283
      %v9435 = vunpack.c.l.b16 %v9284
      %v9436 = vunpack.c.l.b16 %v9285
      %v9437 = vunpack.c.l.b16 %v9286
      %v9438 = vunpack.c.l.b16 %v9287
      %v9439 = vunpack.c.l.b16 %v9288
      %v9440 = vunpack.c.l.b16 %v9289
      %v9441 = vunpack.c.l.b16 %v9290
      %v9442 = vunpack.c.l.b16 %v9291
      %v9443 = vunpack.c.l.b16 %v9292
      %v9444 = vunpack.c.l.b16 %v9293
      %v9445 = vunpack.c.l.b16 %v9294
      %v9446 = vunpack.c.l.b16 %v9295
      %v9447 = vunpack.c.l.b16 %v9296
      %v9448 = vunpack.c.l.b16 %v9297
      %v9449 = vunpack.c.l.b16 %v9298
      %v9450 = vunpack.c.l.b16 %v9299
      %v9451 = vunpack.c.l.b16 %v9300
      %v9452 = vunpack.c.l.b16 %v9301
      %v9453 = vunpack.c.l.b16 %v9302
      %v9454 = vunpack.c.l.b16 %v9303
      %v9455 = vunpack.c.l.b16 %v9304
      %v9456 = vunpack.c.l.b16 %v9305
      %v9457 = vunpack.c.l.b16 %v9306
      %v9458 = vpack.c.b16 %v9387, %v9386
      %v9459 = vpack.c.b16 %v9389, %v9388
      %v9460 = vpack.c.b16 %v9391, %v9390
      %v9461 = vpack.c.b16 %v9393, %v9392
      %v9462 = vpack.c.b16 %v9395, %v9394
      %v9463 = vpack.c.b16 %v9397, %v9396
      %v9464 = vpack.c.b16 %v9399, %v9398
      %v9465 = vpack.c.b16 %v9401, %v9400
      %v9466 = vpack.c.b16 %v9403, %v9402
      %v9467 = vpack.c.b16 %v9405, %v9404
      %v9468 = vpack.c.b16 %v9407, %v9406
      %v9469 = vpack.c.b16 %v9409, %v9408
      %v9470 = vpack.c.b16 %v9411, %v9410
      %v9471 = vpack.c.b16 %v9413, %v9412
      %v9472 = vpack.c.b16 %v9415, %v9414
      %v9473 = vpack.c.b16 %v9417, %v9416
      %v9474 = vpack.c.b16 %v9419, %v9418
      %v9475 = vpack.c.b16 %v9421, %v9420
      %v9476 = vpack.c.b16 %v9423, %v9422
      %v9477 = vpack.c.b16 %v9425, %v9424
      %v9478 = vpack.c.b16 %v9427, %v9426
      %v9479 = vpack.c.b16 %v9429, %v9428
      %v9480 = vpack.c.b16 %v9431, %v9430
      %v9481 = vpack.c.b16 %v9433, %v9432
      %v9482 = vpack.c.b16 %v9435, %v9434
      %v9483 = vpack.c.b16 %v9437, %v9436
      %v9484 = vpack.c.b16 %v9439, %v9438
      %v9485 = vpack.c.b16 %v9441, %v9440
      %v9486 = vpack.c.b16 %v9443, %v9442
      %v9487 = vpack.c.b16 %v9445, %v9444
      %v9488 = vpack.c.b16 %v9447, %v9446
      %v9489 = vpack.c.b16 %v9449, %v9448
      %v9490 = vpack.c.b16 %v9451, %v9450
      %v9491 = vpack.c.b16 %v9453, %v9452
      %v9492 = vpack.c.b16 %v9455, %v9454
      %v9493 = vpack.c.b16 %v9457, %v9456
      %v9530 = vsel %vm4508, %v8935, 0
      %v9532 = vsel %vm4508, %v8936, 0
      %v9534 = vsel %vm4508, %v8937, 0
      %v9536 = vsel %vm4508, %v8938, 0
      %v9538 = vsel %vm4508, %v8939, 0
      %v9540 = vsel %vm4508, %v8940, 0
      %v9542 = vsel %vm4508, %v8941, 0
      %v9544 = vsel %vm4508, %v8942, 0
      %v9546 = vsel %vm4508, %v8943, 0
      %v9548 = vsel %vm4508, %v8944, 0
      %v9550 = vsel %vm4508, %v8945, 0
      %v9552 = vsel %vm4508, %v8946, 0
      %v9554 = vsel %vm4508, %v8947, 0
      %v9556 = vsel %vm4508, %v8948, 0
      %v9559 = vsel %vm4508, %v8989, 0
      %v9562 = vsel %vm4508, %v9034, 0
      %9564 = vmatprep.subr.bf16.mxu0 0
      %9565 = vmatpush1.bf16.msra.mxu0 %v9458
      %9566 = vmatprep.subr.bf16.mxu0 0
      %9567 = vmatpush1.bf16.msra.mxu0 %v9459
      %9568 = vmatprep.subr.bf16.mxu0 0
      %9569 = vmatpush1.bf16.msra.mxu0 %v9460
      %9570 = vmatprep.subr.bf16.mxu0 0
      %9571 = vmatpush1.bf16.msra.mxu0 %v9461
      %9572 = vmatprep.subr.bf16.mxu0 0
      %9573 = vmatpush1.bf16.msra.mxu0 %v9462
      %9574 = vmatprep.subr.bf16.mxu0 0
      %9575 = vmatpush1.bf16.msra.mxu0 %v9463
      %9576 = vmatprep.subr.bf16.mxu0 0
      %9577 = vmatpush1.bf16.msra.mxu0 %v9464
      %9578 = vmatprep.subr.bf16.mxu0 0
      %9579 = vmatpush1.bf16.msra.mxu0 %v9465
      %9580 = vmatprep.subr.bf16.mxu0 0
      %9581 = vmatpush1.bf16.msra.mxu0 %v9466
      %9582 = vmatprep.subr.bf16.mxu0 0
      %9583 = vmatpush1.bf16.msra.mxu0 %v9467
      %9584 = vmatprep.subr.bf16.mxu0 0
      %9585 = vmatpush1.bf16.msra.mxu0 %v9468
      %9586 = vmatprep.subr.bf16.mxu0 0
      %9587 = vmatpush1.bf16.msra.mxu0 %v9469
      %9588 = vmatprep.subr.bf16.mxu0 0
      %9589 = vmatpush1.bf16.msra.mxu0 %v9470
      %9590 = vmatprep.subr.bf16.mxu0 0
      %9591 = vmatpush1.bf16.msra.mxu0 %v9471
      %9592 = vmatprep.subr.bf16.mxu0 0
      %9593 = vmatpush1.bf16.msra.mxu0 %v9472
      %9594 = vmatprep.subr.bf16.mxu0 0
      %9595 = vmatpush1.bf16.msra.mxu0 %v9473
      %9596 = vmatprep.mubr.bf16.mxu0 %v9101
      %9597 = vmatmul.mubr.bf16.gmra.mrb[0].mxu0 %v9037
      %v9598 = vpop.f32.mrb[0].mxu0
      %v9599 = vadd.f32 %v9312, %v9598
      %v9600 = vpop.f32.mrb[0].mxu0
      %v9601 = vpop.f32.mrb[0].mxu0
      %v9602 = vadd.f32 %v9312, %v9601
      %v9603 = vpop.f32.mrb[0].mxu0
      %9604 = vmatprep.mubr.bf16.mxu0 %v9105
      %9605 = vmatmul.mubr.bf16.gmra.mrb[0].mxu0 %v9041
      %v9606 = vpop.f32.mrb[0].mxu0
      %v9607 = vadd.f32 %v9312, %v9606
      %v9608 = vpop.f32.mrb[0].mxu0
      %v9609 = vpop.f32.mrb[0].mxu0
      %v9610 = vadd.f32 %v9312, %v9609
      %v9611 = vpop.f32.mrb[0].mxu0
      %9612 = vmatprep.mubr.bf16.mxu0 %v9109
      %9613 = vmatmul.mubr.bf16.gmra.mrb[0].mxu0 %v9045
      %v9614 = vpop.f32.mrb[0].mxu0
      %v9615 = vadd.f32 %v9312, %v9614
      %v9616 = vpop.f32.mrb[0].mxu0
      %v9617 = vpop.f32.mrb[0].mxu0
      %v9618 = vadd.f32 %v9312, %v9617
      %v9619 = vpop.f32.mrb[0].mxu0
      %9620 = vmatprep.mubr.bf16.mxu0 %v9113
      %9621 = vmatmul.mubr.bf16.gmra.mrb[0].mxu0 %v9049
      %v9622 = vpop.f32.mrb[0].mxu0
      %v9623 = vadd.f32 %v9312, %v9622
      %v9624 = vpop.f32.mrb[0].mxu0
      %v9625 = vpop.f32.mrb[0].mxu0
      %v9626 = vadd.f32 %v9312, %v9625
      %v9627 = vpop.f32.mrb[0].mxu0
      %9628 = vmatprep.mubr.bf16.mxu0 %v9117
      %9629 = vmatmul.mubr.bf16.gmra.mrb[0].mxu0 %v9053
      %v9630 = vpop.f32.mrb[0].mxu0
      %v9631 = vadd.f32 %v9312, %v9630
      %v9632 = vpop.f32.mrb[0].mxu0
      %v9633 = vpop.f32.mrb[0].mxu0
      %v9634 = vadd.f32 %v9312, %v9633
      %v9635 = vpop.f32.mrb[0].mxu0
      %9636 = vmatprep.mubr.bf16.mxu0 %v9121
      %9637 = vmatmul.mubr.bf16.gmra.mrb[0].mxu0 %v9057
      %v9638 = vpop.f32.mrb[0].mxu0
      %v9639 = vadd.f32 %v9312, %v9638
      %v9640 = vpop.f32.mrb[0].mxu0
      %v9641 = vpop.f32.mrb[0].mxu0
      %v9642 = vadd.f32 %v9312, %v9641
      %v9643 = vpop.f32.mrb[0].mxu0
      %9644 = vmatprep.mubr.bf16.mxu0 %v9125
      %9645 = vmatmul.mubr.bf16.gmra.mrb[0].mxu0 %v9061
      %v9646 = vpop.f32.mrb[0].mxu0
      %v9647 = vadd.f32 %v9312, %v9646
      %v9648 = vpop.f32.mrb[0].mxu0
      %v9649 = vpop.f32.mrb[0].mxu0
      %v9650 = vadd.f32 %v9312, %v9649
      %v9651 = vpop.f32.mrb[0].mxu0
      %9652 = vmatprep.mubr.bf16.mxu0 %v9129
      %9653 = vmatmul.mubr.bf16.gmra.mrb[0].mxu0 %v9065
      %v9654 = vpop.f32.mrb[0].mxu0
      %v9655 = vadd.f32 %v9312, %v9654
      %v9656 = vpop.f32.mrb[0].mxu0
      %v9657 = vpop.f32.mrb[0].mxu0
      %v9658 = vadd.f32 %v9312, %v9657
      %v9659 = vpop.f32.mrb[0].mxu0
      %9660 = vmatprep.mubr.bf16.mxu0 %v9133
      %9661 = vmatmul.mubr.bf16.gmra.mrb[0].mxu0 %v9069
      %v9662 = vpop.f32.mrb[0].mxu0
      %v9663 = vadd.f32 %v9312, %v9662
      %v9664 = vpop.f32.mrb[0].mxu0
      %v9665 = vpop.f32.mrb[0].mxu0
      %v9666 = vadd.f32 %v9312, %v9665
      %v9667 = vpop.f32.mrb[0].mxu0
      %9668 = vmatprep.mubr.bf16.mxu0 %v9137
      %9669 = vmatmul.mubr.bf16.gmra.mrb[0].mxu0 %v9073
      %v9670 = vpop.f32.mrb[0].mxu0
      %v9671 = vadd.f32 %v9312, %v9670
      %v9672 = vpop.f32.mrb[0].mxu0
      %v9673 = vpop.f32.mrb[0].mxu0
      %v9674 = vadd.f32 %v9312, %v9673
      %v9675 = vpop.f32.mrb[0].mxu0
      %9676 = vmatprep.mubr.bf16.mxu0 %v9141
      %9677 = vmatmul.mubr.bf16.gmra.mrb[0].mxu0 %v9077
      %v9678 = vpop.f32.mrb[0].mxu0
      %v9679 = vadd.f32 %v9312, %v9678
      %v9680 = vpop.f32.mrb[0].mxu0
      %v9681 = vpop.f32.mrb[0].mxu0
      %v9682 = vadd.f32 %v9312, %v9681
      %v9683 = vpop.f32.mrb[0].mxu0
      %9684 = vmatprep.mubr.bf16.mxu0 %v9145
      %9685 = vmatmul.mubr.bf16.gmra.mrb[0].mxu0 %v9081
      %v9686 = vpop.f32.mrb[0].mxu0
      %v9687 = vadd.f32 %v9312, %v9686
      %v9688 = vpop.f32.mrb[0].mxu0
      %v9689 = vpop.f32.mrb[0].mxu0
      %v9690 = vadd.f32 %v9312, %v9689
      %v9691 = vpop.f32.mrb[0].mxu0
      %9692 = vmatprep.mubr.bf16.mxu0 %v9149
      %9693 = vmatmul.mubr.bf16.gmra.mrb[0].mxu0 %v9085
      %v9694 = vpop.f32.mrb[0].mxu0
      %v9695 = vadd.f32 %v9312, %v9694
      %v9696 = vpop.f32.mrb[0].mxu0
      %v9697 = vpop.f32.mrb[0].mxu0
      %v9698 = vadd.f32 %v9312, %v9697
      %v9699 = vpop.f32.mrb[0].mxu0
      %9700 = vmatprep.mubr.bf16.mxu0 %v9153
      %9701 = vmatmul.mubr.bf16.gmra.mrb[0].mxu0 %v9089
      %v9702 = vpop.f32.mrb[0].mxu0
      %v9703 = vadd.f32 %v9312, %v9702
      %v9704 = vpop.f32.mrb[0].mxu0
      %v9705 = vpop.f32.mrb[0].mxu0
      %v9706 = vadd.f32 %v9312, %v9705
      %v9707 = vpop.f32.mrb[0].mxu0
      %9708 = vmatprep.mubr.bf16.mxu0 %v9157
      %9709 = vmatmul.mubr.bf16.gmra.mrb[0].mxu0 %v9093
      %v9710 = vpop.f32.mrb[0].mxu0
      %v9711 = vadd.f32 %v9312, %v9710
      %v9712 = vpop.f32.mrb[0].mxu0
      %v9713 = vpop.f32.mrb[0].mxu0
      %v9714 = vadd.f32 %v9312, %v9713
      %v9715 = vpop.f32.mrb[0].mxu0
      %9716 = vmatprep.mubr.bf16.mxu0 %v9161
      %9717 = vmatmul.mubr.bf16.gmra.mrb[0].mxu0 %v9097
      %v9718 = vpop.f32.mrb[0].mxu0
      %v9719 = vadd.f32 %v9312, %v9718
      %v9720 = vpop.f32.mrb[0].mxu0
      %v9721 = vpop.f32.mrb[0].mxu0
      %v9722 = vadd.f32 %v9312, %v9721
      %v9723 = vpop.f32.mrb[0].mxu0
      %9724 = vdwg.mxu0
      %9725 = vmatprep.subr.bf16.mxu0 0
      %9726 = vmatpush1.bf16.msra.mxu0 %v9474
      %9727 = vmatprep.subr.bf16.mxu0 0
      %9728 = vmatpush1.bf16.msra.mxu0 %v9475
      %9729 = vmatprep.subr.bf16.mxu0 0
      %9730 = vmatpush1.bf16.msra.mxu0 %v9476
      %9731 = vmatprep.subr.bf16.mxu0 0
      %9732 = vmatpush1.bf16.msra.mxu0 %v9477
      %9733 = vmatprep.subr.bf16.mxu0 0
      %9734 = vmatpush1.bf16.msra.mxu0 %v9478
      %9735 = vmatprep.subr.bf16.mxu0 0
      %9736 = vmatpush1.bf16.msra.mxu0 %v9479
      %9737 = vmatprep.subr.bf16.mxu0 0
      %9738 = vmatpush1.bf16.msra.mxu0 %v9480
      %9739 = vmatprep.subr.bf16.mxu0 0
      %9740 = vmatpush1.bf16.msra.mxu0 %v9481
      %9741 = vmatprep.subr.bf16.mxu0 0
      %9742 = vmatpush1.bf16.msra.mxu0 %v9482
      %9743 = vmatprep.subr.bf16.mxu0 0
      %9744 = vmatpush1.bf16.msra.mxu0 %v9483
      %9745 = vmatprep.subr.bf16.mxu0 0
      %9746 = vmatpush1.bf16.msra.mxu0 %v9484
      %9747 = vmatprep.subr.bf16.mxu0 0
      %9748 = vmatpush1.bf16.msra.mxu0 %v9485
      %9749 = vmatprep.subr.bf16.mxu0 0
      %9750 = vmatpush1.bf16.msra.mxu0 %v9486
      %9751 = vmatprep.subr.bf16.mxu0 0
      %9752 = vmatpush1.bf16.msra.mxu0 %v9487
      %9753 = vmatprep.subr.bf16.mxu0 0
      %9754 = vmatpush1.bf16.msra.mxu0 %v9488
      %9755 = vmatprep.subr.bf16.mxu0 0
      %9756 = vmatpush1.bf16.msra.mxu0 %v9489
      %9757 = vmatprep.mubr.bf16.mxu0 %v9045
      %9758 = vmatmul.mubr.bf16.gmra.mrb[0].mxu0 %v9165
      %v9759 = vpop.f32.mrb[0].mxu0
      %v9760 = vadd.f32 %v9599, %v9759
      %v9761 = vpop.f32.mrb[0].mxu0
      %v9762 = vpop.f32.mrb[0].mxu0
      %v9763 = vadd.f32 %v9602, %v9762
      %v9764 = vpop.f32.mrb[0].mxu0
      %9765 = vmatprep.mubr.bf16.mxu0 %v9049
      %9766 = vmatmul.mubr.bf16.gmra.mrb[0].mxu0 %v9169
      %v9767 = vpop.f32.mrb[0].mxu0
      %v9768 = vadd.f32 %v9607, %v9767
      %v9769 = vpop.f32.mrb[0].mxu0
      %v9770 = vpop.f32.mrb[0].mxu0
      %v9771 = vadd.f32 %v9610, %v9770
      %v9772 = vpop.f32.mrb[0].mxu0
      %9773 = vmatprep.mubr.bf16.mxu0 %v9053
      %9774 = vmatmul.mubr.bf16.gmra.mrb[0].mxu0 %v9173
      %v9775 = vpop.f32.mrb[0].mxu0
      %v9776 = vadd.f32 %v9615, %v9775
      %v9777 = vpop.f32.mrb[0].mxu0
      %v9778 = vpop.f32.mrb[0].mxu0
      %v9779 = vadd.f32 %v9618, %v9778
      %v9780 = vpop.f32.mrb[0].mxu0
      %9781 = vmatprep.mubr.bf16.mxu0 %v9057
      %9782 = vmatmul.mubr.bf16.gmra.mrb[0].mxu0 %v9177
      %v9783 = vpop.f32.mrb[0].mxu0
      %v9784 = vadd.f32 %v9623, %v9783
      %v9785 = vpop.f32.mrb[0].mxu0
      %v9786 = vpop.f32.mrb[0].mxu0
      %v9787 = vadd.f32 %v9626, %v9786
      %v9788 = vpop.f32.mrb[0].mxu0
      %9789 = vmatprep.mubr.bf16.mxu0 %v9061
      %9790 = vmatmul.mubr.bf16.gmra.mrb[0].mxu0 %v9181
      %v9791 = vpop.f32.mrb[0].mxu0
      %v9792 = vadd.f32 %v9631, %v9791
      %v9793 = vpop.f32.mrb[0].mxu0
      %v9794 = vpop.f32.mrb[0].mxu0
      %v9795 = vadd.f32 %v9634, %v9794
      %v9796 = vpop.f32.mrb[0].mxu0
      %9797 = vmatprep.mubr.bf16.mxu0 %v9065
      %9798 = vmatmul.mubr.bf16.gmra.mrb[0].mxu0 %v9185
      %v9799 = vpop.f32.mrb[0].mxu0
      %v9800 = vadd.f32 %v9639, %v9799
      %v9801 = vpop.f32.mrb[0].mxu0
      %v9802 = vpop.f32.mrb[0].mxu0
      %v9803 = vadd.f32 %v9642, %v9802
      %v9804 = vpop.f32.mrb[0].mxu0
      %9805 = vmatprep.mubr.bf16.mxu0 %v9069
      %9806 = vmatmul.mubr.bf16.gmra.mrb[0].mxu0 %v9189
      %v9807 = vpop.f32.mrb[0].mxu0
      %v9808 = vadd.f32 %v9647, %v9807
      %v9809 = vpop.f32.mrb[0].mxu0
      %v9810 = vpop.f32.mrb[0].mxu0
      %v9811 = vadd.f32 %v9650, %v9810
      %v9812 = vpop.f32.mrb[0].mxu0
      %9813 = vmatprep.mubr.bf16.mxu0 %v9073
      %9814 = vmatmul.mubr.bf16.gmra.mrb[0].mxu0 %v9193
      %v9815 = vpop.f32.mrb[0].mxu0
      %v9816 = vadd.f32 %v9655, %v9815
      %v9817 = vpop.f32.mrb[0].mxu0
      %v9818 = vpop.f32.mrb[0].mxu0
      %v9819 = vadd.f32 %v9658, %v9818
      %v9820 = vpop.f32.mrb[0].mxu0
      %9821 = vmatprep.mubr.bf16.mxu0 %v9077
      %9822 = vmatmul.mubr.bf16.gmra.mrb[0].mxu0 %v9197
      %v9823 = vpop.f32.mrb[0].mxu0
      %v9824 = vadd.f32 %v9663, %v9823
      %v9825 = vpop.f32.mrb[0].mxu0
      %v9826 = vpop.f32.mrb[0].mxu0
      %v9827 = vadd.f32 %v9666, %v9826
      %v9828 = vpop.f32.mrb[0].mxu0
      %9829 = vmatprep.mubr.bf16.mxu0 %v9081
      %9830 = vmatmul.mubr.bf16.gmra.mrb[0].mxu0 %v9201
      %v9831 = vpop.f32.mrb[0].mxu0
      %v9832 = vadd.f32 %v9671, %v9831
      %v9833 = vpop.f32.mrb[0].mxu0
      %v9834 = vpop.f32.mrb[0].mxu0
      %v9835 = vadd.f32 %v9674, %v9834
      %v9836 = vpop.f32.mrb[0].mxu0
      %9837 = vmatprep.mubr.bf16.mxu0 %v9085
      %9838 = vmatmul.mubr.bf16.gmra.mrb[0].mxu0 %v9205
      %v9839 = vpop.f32.mrb[0].mxu0
      %v9840 = vadd.f32 %v9679, %v9839
      %v9841 = vpop.f32.mrb[0].mxu0
      %v9842 = vpop.f32.mrb[0].mxu0
      %v9843 = vadd.f32 %v9682, %v9842
      %v9844 = vpop.f32.mrb[0].mxu0
      %9845 = vmatprep.mubr.bf16.mxu0 %v9089
      %9846 = vmatmul.mubr.bf16.gmra.mrb[0].mxu0 %v9209
      %v9847 = vpop.f32.mrb[0].mxu0
      %v9848 = vadd.f32 %v9687, %v9847
      %v9849 = vpop.f32.mrb[0].mxu0
      %v9850 = vpop.f32.mrb[0].mxu0
      %v9851 = vadd.f32 %v9690, %v9850
      %v9852 = vpop.f32.mrb[0].mxu0
      %9853 = vmatprep.mubr.bf16.mxu0 %v9093
      %9854 = vmatmul.mubr.bf16.gmra.mrb[0].mxu0 %v9213
      %v9855 = vpop.f32.mrb[0].mxu0
      %v9856 = vadd.f32 %v9695, %v9855
      %v9857 = vpop.f32.mrb[0].mxu0
      %v9858 = vpop.f32.mrb[0].mxu0
      %v9859 = vadd.f32 %v9698, %v9858
      %v9860 = vpop.f32.mrb[0].mxu0
      %9861 = vmatprep.mubr.bf16.mxu0 %v9097
      %9862 = vmatmul.mubr.bf16.gmra.mrb[0].mxu0 %v9217
      %v9863 = vpop.f32.mrb[0].mxu0
      %v9864 = vadd.f32 %v9703, %v9863
      %v9865 = vpop.f32.mrb[0].mxu0
      %v9866 = vpop.f32.mrb[0].mxu0
      %v9867 = vadd.f32 %v9706, %v9866
      %v9868 = vpop.f32.mrb[0].mxu0
      %9869 = vmatprep.mubr.bf16.mxu0 %v9229
      %9870 = vmatmul.mubr.bf16.gmra.mrb[0].mxu0 %v9221
      %v9871 = vpop.f32.mrb[0].mxu0
      %v9872 = vadd.f32 %v9711, %v9871
      %v9873 = vpop.f32.mrb[0].mxu0
      %v9874 = vpop.f32.mrb[0].mxu0
      %v9875 = vadd.f32 %v9714, %v9874
      %v9876 = vpop.f32.mrb[0].mxu0
      %9877 = vmatprep.mubr.bf16.mxu0 %v9233
      %9878 = vmatmul.mubr.bf16.gmra.mrb[0].mxu0 %v9225
      %v9879 = vpop.f32.mrb[0].mxu0
      %v9880 = vadd.f32 %v9719, %v9879
      %v9881 = vpop.f32.mrb[0].mxu0
      %v9882 = vpop.f32.mrb[0].mxu0
      %v9883 = vadd.f32 %v9722, %v9882
      %v9884 = vpop.f32.mrb[0].mxu0
      %9885 = vdwg.mxu0
      %9886 = vmatprep.subr.bf16.mxu0 0
      %9887 = vmatpush1.bf16.msra.mxu0 %v9490
      %9888 = vmatprep.subr.bf16.mxu0 0
      %9889 = vmatpush1.bf16.msra.mxu0 %v9491
      %9890 = vmatprep.subr.bf16.mxu0 0
      %9891 = vmatpush1.bf16.msra.mxu0 %v9492
      %9892 = vmatprep.subr.bf16.mxu0 0
      %9893 = vmatpush1.bf16.msra.mxu0 %v9493
      %9894 = vmatprep.subr.bf16.mxu0 0
      %9895 = vmatpush1.bf16.msra.mxu0 0
      %9896 = vmatprep.subr.bf16.mxu0 0
      %9897 = vmatpush1.bf16.msra.mxu0 0
      %9898 = vmatprep.subr.bf16.mxu0 0
      %9899 = vmatpush1.bf16.msra.mxu0 0
      %9900 = vmatprep.subr.bf16.mxu0 0
      %9901 = vmatpush1.bf16.msra.mxu0 0
      %9902 = vmatprep.subr.bf16.mxu0 0
      %9903 = vmatpush1.bf16.msra.mxu0 0
      %9904 = vmatprep.subr.bf16.mxu0 0
      %9905 = vmatpush1.bf16.msra.mxu0 0
      %9906 = vmatprep.subr.bf16.mxu0 0
      %9907 = vmatpush1.bf16.msra.mxu0 0
      %9908 = vmatprep.subr.bf16.mxu0 0
      %9909 = vmatpush1.bf16.msra.mxu0 0
      %9910 = vmatprep.subr.bf16.mxu0 0
      %9911 = vmatpush1.bf16.msra.mxu0 0
      %9912 = vmatprep.subr.bf16.mxu0 0
      %9913 = vmatpush1.bf16.msra.mxu0 0
      %9914 = vmatprep.subr.bf16.mxu0 0
      %9915 = vmatpush1.bf16.msra.mxu0 0
      %9916 = vmatprep.subr.bf16.mxu0 0
      %9917 = vmatpush1.bf16.msra.mxu0 0
      %9918 = vmatprep.mubr.bf16.mxu0 0
      %9919 = vmatmul.mubr.bf16.gmra.mrb[0].mxu0 %v9530
      %v9920 = vpop.f32.mrb[0].mxu0
      %v9921 = vadd.f32 %v9760, %v9920
      %v9922 = vpop.f32.mrb[0].mxu0
      %v9923 = vpop.f32.mrb[0].mxu0
      %v9924 = vadd.f32 %v9763, %v9923
      %v9925 = vpop.f32.mrb[0].mxu0
      %9926 = vmatprep.mubr.bf16.mxu0 0
      %9927 = vmatmul.mubr.bf16.gmra.mrb[0].mxu0 %v9532
      %v9928 = vpop.f32.mrb[0].mxu0
      %v9929 = vadd.f32 %v9768, %v9928
      %v9930 = vpop.f32.mrb[0].mxu0
      %v9931 = vpop.f32.mrb[0].mxu0
      %v9932 = vadd.f32 %v9771, %v9931
      %v9933 = vpop.f32.mrb[0].mxu0
      %9934 = vmatprep.mubr.bf16.mxu0 0
      %9935 = vmatmul.mubr.bf16.gmra.mrb[0].mxu0 %v9534
      %v9936 = vpop.f32.mrb[0].mxu0
      %v9937 = vadd.f32 %v9776, %v9936
      %v9938 = vpop.f32.mrb[0].mxu0
      %v9939 = vpop.f32.mrb[0].mxu0
      %v9940 = vadd.f32 %v9779, %v9939
      %v9941 = vpop.f32.mrb[0].mxu0
      %9942 = vmatprep.mubr.bf16.mxu0 0
      %9943 = vmatmul.mubr.bf16.gmra.mrb[0].mxu0 %v9536
      %v9944 = vpop.f32.mrb[0].mxu0
      %v9945 = vadd.f32 %v9784, %v9944
      %v9946 = vpop.f32.mrb[0].mxu0
      %v9947 = vpop.f32.mrb[0].mxu0
      %v9948 = vadd.f32 %v9787, %v9947
      %v9949 = vpop.f32.mrb[0].mxu0
      %9950 = vmatprep.mubr.bf16.mxu0 0
      %9951 = vmatmul.mubr.bf16.gmra.mrb[0].mxu0 %v9538
      %v9952 = vpop.f32.mrb[0].mxu0
      %v9953 = vadd.f32 %v9792, %v9952
      %v9954 = vpop.f32.mrb[0].mxu0
      %v9955 = vpop.f32.mrb[0].mxu0
      %v9956 = vadd.f32 %v9795, %v9955
      %v9957 = vpop.f32.mrb[0].mxu0
      %9958 = vmatprep.mubr.bf16.mxu0 0
      %9959 = vmatmul.mubr.bf16.gmra.mrb[0].mxu0 %v9540
      %v9960 = vpop.f32.mrb[0].mxu0
      %v9961 = vadd.f32 %v9800, %v9960
      %v9962 = vpop.f32.mrb[0].mxu0
      %v9963 = vpop.f32.mrb[0].mxu0
      %v9964 = vadd.f32 %v9803, %v9963
      %v9965 = vpop.f32.mrb[0].mxu0
      %9966 = vmatprep.mubr.bf16.mxu0 0
      %9967 = vmatmul.mubr.bf16.gmra.mrb[0].mxu0 %v9542
      %v9968 = vpop.f32.mrb[0].mxu0
      %v9969 = vadd.f32 %v9808, %v9968
      %v9970 = vpop.f32.mrb[0].mxu0
      %v9971 = vpop.f32.mrb[0].mxu0
      %v9972 = vadd.f32 %v9811, %v9971
      %v9973 = vpop.f32.mrb[0].mxu0
      %9974 = vmatprep.mubr.bf16.mxu0 0
      %9975 = vmatmul.mubr.bf16.gmra.mrb[0].mxu0 %v9544
      %v9976 = vpop.f32.mrb[0].mxu0
      %v9977 = vadd.f32 %v9816, %v9976
      %v9978 = vpop.f32.mrb[0].mxu0
      %v9979 = vpop.f32.mrb[0].mxu0
      %v9980 = vadd.f32 %v9819, %v9979
      %v9981 = vpop.f32.mrb[0].mxu0
      %9982 = vmatprep.mubr.bf16.mxu0 0
      %9983 = vmatmul.mubr.bf16.gmra.mrb[0].mxu0 %v9546
      %v9984 = vpop.f32.mrb[0].mxu0
      %v9985 = vadd.f32 %v9824, %v9984
      %v9986 = vpop.f32.mrb[0].mxu0
      %v9987 = vpop.f32.mrb[0].mxu0
      %v9988 = vadd.f32 %v9827, %v9987
      %v9989 = vpop.f32.mrb[0].mxu0
      %9990 = vmatprep.mubr.bf16.mxu0 0
      %9991 = vmatmul.mubr.bf16.gmra.mrb[0].mxu0 %v9548
      %v9992 = vpop.f32.mrb[0].mxu0
      %v9993 = vadd.f32 %v9832, %v9992
      %v9994 = vpop.f32.mrb[0].mxu0
      %v9995 = vpop.f32.mrb[0].mxu0
      %v9996 = vadd.f32 %v9835, %v9995
      %v9997 = vpop.f32.mrb[0].mxu0
      %9998 = vmatprep.mubr.bf16.mxu0 0
      %9999 = vmatmul.mubr.bf16.gmra.mrb[0].mxu0 %v9550
      %v10000 = vpop.f32.mrb[0].mxu0
      %v10001 = vadd.f32 %v9840, %v10000
      %v10002 = vpop.f32.mrb[0].mxu0
      %v10003 = vpop.f32.mrb[0].mxu0
      %v10004 = vadd.f32 %v9843, %v10003
      %v10005 = vpop.f32.mrb[0].mxu0
      %10006 = vmatprep.mubr.bf16.mxu0 0
      %10007 = vmatmul.mubr.bf16.gmra.mrb[0].mxu0 %v9552
      %v10008 = vpop.f32.mrb[0].mxu0
      %v10009 = vadd.f32 %v9848, %v10008
      %v10010 = vpop.f32.mrb[0].mxu0
      %v10011 = vpop.f32.mrb[0].mxu0
      %v10012 = vadd.f32 %v9851, %v10011
      %v10013 = vpop.f32.mrb[0].mxu0
      %10014 = vmatprep.mubr.bf16.mxu0 0
      %10015 = vmatmul.mubr.bf16.gmra.mrb[0].mxu0 %v9554
      %v10016 = vpop.f32.mrb[0].mxu0
      %v10017 = vadd.f32 %v9856, %v10016
      %v10018 = vpop.f32.mrb[0].mxu0
      %v10019 = vpop.f32.mrb[0].mxu0
      %v10020 = vadd.f32 %v9859, %v10019
      %v10021 = vpop.f32.mrb[0].mxu0
      %10022 = vmatprep.mubr.bf16.mxu0 0
      %10023 = vmatmul.mubr.bf16.gmra.mrb[0].mxu0 %v9556
      %v10024 = vpop.f32.mrb[0].mxu0
      %v10025 = vadd.f32 %v9864, %v10024
      %v10026 = vpop.f32.mrb[0].mxu0
      %v10027 = vpop.f32.mrb[0].mxu0
      %v10028 = vadd.f32 %v9867, %v10027
      %v10029 = vpop.f32.mrb[0].mxu0
      %10030 = vmatprep.mubr.bf16.mxu0 0
      %10031 = vmatmul.mubr.bf16.gmra.mrb[0].mxu0 %v9559
      %v10032 = vpop.f32.mrb[0].mxu0
      %v10033 = vadd.f32 %v9872, %v10032
      %v10034 = vpop.f32.mrb[0].mxu0
      %v10035 = vpop.f32.mrb[0].mxu0
      %v10036 = vadd.f32 %v9875, %v10035
      %v10037 = vpop.f32.mrb[0].mxu0
      %10038 = vmatprep.mubr.bf16.mxu0 0
      %10039 = vmatmul.mubr.bf16.gmra.mrb[0].mxu0 %v9562
      %v10040 = vpop.f32.mrb[0].mxu0
      %v10041 = vadd.f32 %v9880, %v10040
      %v10042 = vpop.f32.mrb[0].mxu0
      %v10043 = vpop.f32.mrb[0].mxu0
      %v10044 = vadd.f32 %v9883, %v10043
      %v10045 = vpop.f32.mrb[0].mxu0
      %10046 = vdwg.mxu0
      %v10047 = vmax.f32 %v9921, 0.0
      %v10048 = vmax.f32 %v9924, 0.0
      %v10049 = vmax.f32 %v9929, 0.0
      %v10050 = vmax.f32 %v9932, 0.0
      %v10051 = vmax.f32 %v9937, 0.0
      %v10052 = vmax.f32 %v9940, 0.0
      %v10053 = vmax.f32 %v9945, 0.0
      %v10054 = vmax.f32 %v9948, 0.0
      %v10055 = vmax.f32 %v9953, 0.0
      %v10056 = vmax.f32 %v9956, 0.0
      %v10057 = vmax.f32 %v9961, 0.0
      %v10058 = vmax.f32 %v9964, 0.0
      %v10059 = vmax.f32 %v9969, 0.0
      %v10060 = vmax.f32 %v9972, 0.0
      %v10061 = vmax.f32 %v9977, 0.0
      %v10062 = vmax.f32 %v9980, 0.0
      %v10063 = vmax.f32 %v9985, 0.0
      %v10064 = vmax.f32 %v9988, 0.0
      %v10065 = vmax.f32 %v9993, 0.0
      %v10066 = vmax.f32 %v9996, 0.0
      %v10067 = vmax.f32 %v10001, 0.0
      %v10068 = vmax.f32 %v10004, 0.0
      %v10069 = vmax.f32 %v10009, 0.0
      %v10070 = vmax.f32 %v10012, 0.0
      %v10071 = vmax.f32 %v10017, 0.0
      %v10072 = vmax.f32 %v10020, 0.0
      %v10073 = vmax.f32 %v10025, 0.0
      %v10074 = vmax.f32 %v10028, 0.0
      %v10075 = vmax.f32 %v10033, 0.0
      %v10076 = vmax.f32 %v10036, 0.0
      %v10077 = vmax.f32 %v10041, 0.0
      %v10078 = vmax.f32 %v10044, 0.0
      %v10079 = vpack.c.bf16 %v10048, %v10047
      %v10080 = vpack.c.bf16 %v10050, %v10049
      %v10081 = vpack.c.bf16 %v10052, %v10051
      %v10082 = vpack.c.bf16 %v10054, %v10053
      %v10083 = vpack.c.bf16 %v10056, %v10055
      %v10084 = vpack.c.bf16 %v10058, %v10057
      %v10085 = vpack.c.bf16 %v10060, %v10059
      %v10086 = vpack.c.bf16 %v10062, %v10061
      %v10087 = vpack.c.bf16 %v10064, %v10063
      %v10088 = vpack.c.bf16 %v10066, %v10065
      %v10089 = vpack.c.bf16 %v10068, %v10067
      %v10090 = vpack.c.bf16 %v10070, %v10069
      %v10091 = vpack.c.bf16 %v10072, %v10071
      %v10092 = vpack.c.bf16 %v10074, %v10073
      %v10093 = vpack.c.bf16 %v10076, %v10075
      %v10094 = vpack.c.bf16 %v10078, %v10077
      %v10095 = vld [vmem:[%s9] sm:$0xf]
      %v10096 = vld [vmem:[%s9 + $0x4] sm:$0xf]
      %v10097 = vld [vmem:[%s9 + $0x8] sm:$0xf]
      %v10098 = vld [vmem:[%s9 + $0xc] sm:$0xf]
      %v10099 = vld [vmem:[%s9 + $0x10] sm:$0xf]
      %v10100 = vld [vmem:[%s9 + $0x14] sm:$0xf]
      %v10101 = vld [vmem:[%s9 + $0x18] sm:$0xf]
      %v10102 = vld [vmem:[%s9 + $0x1c] sm:$0xf]
      %v10103 = vld [vmem:[%s9 + $0x20] sm:$0xf]
      %v10104 = vld [vmem:[%s9 + $0x24] sm:$0xf]
      %v10105 = vld [vmem:[%s9 + $0x28] sm:$0xf]
      %v10106 = vld [vmem:[%s9 + $0x2c] sm:$0xf]
      %v10107 = vld [vmem:[%s9 + $0x30] sm:$0xf]
      %v10108 = vld [vmem:[%s9 + $0x34] sm:$0xf]
      %v10109 = vld [vmem:[%s9 + $0x38] sm:$0xf]
      %v10110 = vld [vmem:[%s9 + $0x3c] sm:$0xf]
      %v10111 = vld [vmem:[%s10] sm:$0x1]
      %v10113 = vlaneseq
      %v10114 = vshrl.u32 %v10113, 7
      %v10115 = vsub.s32 0, %v10114
      %v10116 = vrot.slane %v10111, %v10115
      %v10134 = vunpack.c.l.b16 %v10095
      %v10135 = vunpack.c.l.b16 %v10096
      %v10136 = vunpack.c.l.b16 %v10097
      %v10137 = vunpack.c.l.b16 %v10098
      %v10138 = vunpack.c.l.b16 %v10099
      %v10139 = vunpack.c.l.b16 %v10100
      %v10140 = vunpack.c.l.b16 %v10101
      %v10141 = vunpack.c.l.b16 %v10102
      %v10142 = vunpack.c.l.b16 %v10103
      %v10143 = vunpack.c.l.b16 %v10104
      %v10144 = vunpack.c.l.b16 %v10105
      %v10145 = vunpack.c.l.b16 %v10106
      %v10146 = vunpack.c.l.b16 %v10107
      %v10147 = vunpack.c.l.b16 %v10108
      %v10148 = vunpack.c.l.b16 %v10109
      %v10149 = vunpack.c.l.b16 %v10110
      %v10150 = vpack.c.b16 %v10135, %v10134
      %v10151 = vpack.c.b16 %v10137, %v10136
      %v10152 = vpack.c.b16 %v10139, %v10138
      %v10153 = vpack.c.b16 %v10141, %v10140
      %v10154 = vpack.c.b16 %v10143, %v10142
      %v10155 = vpack.c.b16 %v10145, %v10144
      %v10156 = vpack.c.b16 %v10147, %v10146
      %v10157 = vpack.c.b16 %v10149, %v10148
      %10166 = vmatprep.subr.bf16.mxu0 0
      %10167 = vmatpush1.bf16.msra.mxu0 %v10150
      %10168 = vmatprep.subr.bf16.mxu0 0
      %10169 = vmatpush1.bf16.msra.mxu0 %v10151
      %10170 = vmatprep.subr.bf16.mxu0 0
      %10171 = vmatpush1.bf16.msra.mxu0 %v10152
      %10172 = vmatprep.subr.bf16.mxu0 0
      %10173 = vmatpush1.bf16.msra.mxu0 %v10153
      %10174 = vmatprep.subr.bf16.mxu0 0
      %10175 = vmatpush1.bf16.msra.mxu0 %v10154
      %10176 = vmatprep.subr.bf16.mxu0 0
      %10177 = vmatpush1.bf16.msra.mxu0 %v10155
      %10178 = vmatprep.subr.bf16.mxu0 0
      %10179 = vmatpush1.bf16.msra.mxu0 %v10156
      %10180 = vmatprep.subr.bf16.mxu0 0
      %10181 = vmatpush1.bf16.msra.mxu0 %v10157
      %10182 = vmatprep.subr.bf16.mxu0 0
      %10183 = vmatpush1.bf16.msra.mxu0 0
      %10184 = vmatprep.subr.bf16.mxu0 0
      %10185 = vmatpush1.bf16.msra.mxu0 0
      %10186 = vmatprep.subr.bf16.mxu0 0
      %10187 = vmatpush1.bf16.msra.mxu0 0
      %10188 = vmatprep.subr.bf16.mxu0 0
      %10189 = vmatpush1.bf16.msra.mxu0 0
      %10190 = vmatprep.subr.bf16.mxu0 0
      %10191 = vmatpush1.bf16.msra.mxu0 0
      %10192 = vmatprep.subr.bf16.mxu0 0
      %10193 = vmatpush1.bf16.msra.mxu0 0
      %10194 = vmatprep.subr.bf16.mxu0 0
      %10195 = vmatpush1.bf16.msra.mxu0 0
      %10196 = vmatprep.subr.bf16.mxu0 0
      %10197 = vmatpush1.bf16.msra.mxu0 0
      %10198 = vmatprep.mubr.bf16.mxu0 0
      %10199 = vmatmul.mubr.bf16.gmra.mrb[0].mxu0 %v10079
      %v10200 = vpop.f32.mrb[0].mxu0
      %v10201 = vadd.f32 %v10116, %v10200
      %v10202 = vpop.f32.mrb[0].mxu0
      %v10203 = vpop.f32.mrb[0].mxu0
      %v10204 = vadd.f32 %v10116, %v10203
      %v10205 = vpop.f32.mrb[0].mxu0
      %10206 = vmatprep.mubr.bf16.mxu0 0
      %10207 = vmatmul.mubr.bf16.gmra.mrb[0].mxu0 %v10080
      %v10208 = vpop.f32.mrb[0].mxu0
      %v10209 = vadd.f32 %v10116, %v10208
      %v10210 = vpop.f32.mrb[0].mxu0
      %v10211 = vpop.f32.mrb[0].mxu0
      %v10212 = vadd.f32 %v10116, %v10211
      %v10213 = vpop.f32.mrb[0].mxu0
      %10214 = vmatprep.mubr.bf16.mxu0 0
      %10215 = vmatmul.mubr.bf16.gmra.mrb[0].mxu0 %v10081
      %v10216 = vpop.f32.mrb[0].mxu0
      %v10217 = vadd.f32 %v10116, %v10216
      %v10218 = vpop.f32.mrb[0].mxu0
      %v10219 = vpop.f32.mrb[0].mxu0
      %v10220 = vadd.f32 %v10116, %v10219
      %v10221 = vpop.f32.mrb[0].mxu0
      %10222 = vmatprep.mubr.bf16.mxu0 0
      %10223 = vmatmul.mubr.bf16.gmra.mrb[0].mxu0 %v10082
      %v10224 = vpop.f32.mrb[0].mxu0
      %v10225 = vadd.f32 %v10116, %v10224
      %v10226 = vpop.f32.mrb[0].mxu0
      %v10227 = vpop.f32.mrb[0].mxu0
      %v10228 = vadd.f32 %v10116, %v10227
      %v10229 = vpop.f32.mrb[0].mxu0
      %10230 = vmatprep.mubr.bf16.mxu0 0
      %10231 = vmatmul.mubr.bf16.gmra.mrb[0].mxu0 %v10083
      %v10232 = vpop.f32.mrb[0].mxu0
      %v10233 = vadd.f32 %v10116, %v10232
      %v10234 = vpop.f32.mrb[0].mxu0
      %v10235 = vpop.f32.mrb[0].mxu0
      %v10236 = vadd.f32 %v10116, %v10235
      %v10237 = vpop.f32.mrb[0].mxu0
      %10238 = vmatprep.mubr.bf16.mxu0 0
      %10239 = vmatmul.mubr.bf16.gmra.mrb[0].mxu0 %v10084
      %v10240 = vpop.f32.mrb[0].mxu0
      %v10241 = vadd.f32 %v10116, %v10240
      %v10242 = vpop.f32.mrb[0].mxu0
      %v10243 = vpop.f32.mrb[0].mxu0
      %v10244 = vadd.f32 %v10116, %v10243
      %v10245 = vpop.f32.mrb[0].mxu0
      %10246 = vmatprep.mubr.bf16.mxu0 0
      %10247 = vmatmul.mubr.bf16.gmra.mrb[0].mxu0 %v10085
      %v10248 = vpop.f32.mrb[0].mxu0
      %v10249 = vadd.f32 %v10116, %v10248
      %v10250 = vpop.f32.mrb[0].mxu0
      %v10251 = vpop.f32.mrb[0].mxu0
      %v10252 = vadd.f32 %v10116, %v10251
      %v10253 = vpop.f32.mrb[0].mxu0
      %10254 = vmatprep.mubr.bf16.mxu0 0
      %10255 = vmatmul.mubr.bf16.gmra.mrb[0].mxu0 %v10086
      %v10256 = vpop.f32.mrb[0].mxu0
      %v10257 = vadd.f32 %v10116, %v10256
      %v10258 = vpop.f32.mrb[0].mxu0
      %v10259 = vpop.f32.mrb[0].mxu0
      %v10260 = vadd.f32 %v10116, %v10259
      %v10261 = vpop.f32.mrb[0].mxu0
      %10262 = vmatprep.mubr.bf16.mxu0 0
      %10263 = vmatmul.mubr.bf16.gmra.mrb[0].mxu0 %v10087
      %v10264 = vpop.f32.mrb[0].mxu0
      %v10265 = vadd.f32 %v10116, %v10264
      %v10266 = vpop.f32.mrb[0].mxu0
      %v10267 = vpop.f32.mrb[0].mxu0
      %v10268 = vadd.f32 %v10116, %v10267
      %v10269 = vpop.f32.mrb[0].mxu0
      %10270 = vmatprep.mubr.bf16.mxu0 0
      %10271 = vmatmul.mubr.bf16.gmra.mrb[0].mxu0 %v10088
      %v10272 = vpop.f32.mrb[0].mxu0
      %v10273 = vadd.f32 %v10116, %v10272
      %v10274 = vpop.f32.mrb[0].mxu0
      %v10275 = vpop.f32.mrb[0].mxu0
      %v10276 = vadd.f32 %v10116, %v10275
      %v10277 = vpop.f32.mrb[0].mxu0
      %10278 = vmatprep.mubr.bf16.mxu0 0
      %10279 = vmatmul.mubr.bf16.gmra.mrb[0].mxu0 %v10089
      %v10280 = vpop.f32.mrb[0].mxu0
      %v10281 = vadd.f32 %v10116, %v10280
      %v10282 = vpop.f32.mrb[0].mxu0
      %v10283 = vpop.f32.mrb[0].mxu0
      %v10284 = vadd.f32 %v10116, %v10283
      %v10285 = vpop.f32.mrb[0].mxu0
      %10286 = vmatprep.mubr.bf16.mxu0 0
      %10287 = vmatmul.mubr.bf16.gmra.mrb[0].mxu0 %v10090
      %v10288 = vpop.f32.mrb[0].mxu0
      %v10289 = vadd.f32 %v10116, %v10288
      %v10290 = vpop.f32.mrb[0].mxu0
      %v10291 = vpop.f32.mrb[0].mxu0
      %v10292 = vadd.f32 %v10116, %v10291
      %v10293 = vpop.f32.mrb[0].mxu0
      %10294 = vmatprep.mubr.bf16.mxu0 0
      %10295 = vmatmul.mubr.bf16.gmra.mrb[0].mxu0 %v10091
      %v10296 = vpop.f32.mrb[0].mxu0
      %v10297 = vadd.f32 %v10116, %v10296
      %v10298 = vpop.f32.mrb[0].mxu0
      %v10299 = vpop.f32.mrb[0].mxu0
      %v10300 = vadd.f32 %v10116, %v10299
      %v10301 = vpop.f32.mrb[0].mxu0
      %10302 = vmatprep.mubr.bf16.mxu0 0
      %10303 = vmatmul.mubr.bf16.gmra.mrb[0].mxu0 %v10092
      %v10304 = vpop.f32.mrb[0].mxu0
      %v10305 = vadd.f32 %v10116, %v10304
      %v10306 = vpop.f32.mrb[0].mxu0
      %v10307 = vpop.f32.mrb[0].mxu0
      %v10308 = vadd.f32 %v10116, %v10307
      %v10309 = vpop.f32.mrb[0].mxu0
      %10310 = vmatprep.mubr.bf16.mxu0 0
      %10311 = vmatmul.mubr.bf16.gmra.mrb[0].mxu0 %v10093
      %v10312 = vpop.f32.mrb[0].mxu0
      %v10313 = vadd.f32 %v10116, %v10312
      %v10314 = vpop.f32.mrb[0].mxu0
      %v10315 = vpop.f32.mrb[0].mxu0
      %v10316 = vadd.f32 %v10116, %v10315
      %v10317 = vpop.f32.mrb[0].mxu0
      %10318 = vmatprep.mubr.bf16.mxu0 0
      %10319 = vmatmul.mubr.bf16.gmra.mrb[0].mxu0 %v10094
      %v10320 = vpop.f32.mrb[0].mxu0
      %v10321 = vadd.f32 %v10116, %v10320
      %v10322 = vpop.f32.mrb[0].mxu0
      %v10323 = vpop.f32.mrb[0].mxu0
      %v10324 = vadd.f32 %v10116, %v10323
      %v10325 = vpop.f32.mrb[0].mxu0
      %10326 = vdwg.mxu0
      %10327 = vxpose.xlu0.b32.start [1/16] %v10201, 128
      %10328 = vxpose.xlu0.b32.cont [2/16] %v10204, 128
      %10329 = vxpose.xlu0.b32.cont [3/16] %v10209, 128
      %10330 = vxpose.xlu0.b32.cont [4/16] %v10212, 128
      %10331 = vxpose.xlu0.b32.cont [5/16] %v10217, 128
      %10332 = vxpose.xlu0.b32.cont [6/16] %v10220, 128
      %10333 = vxpose.xlu0.b32.cont [7/16] %v10225, 128
      %10334 = vxpose.xlu0.b32.cont [8/16] %v10228, 128
      %10335 = vxpose.xlu0.b32.cont [9/16] %v10233, 128
      %10336 = vxpose.xlu0.b32.cont [10/16] %v10236, 128
      %10337 = vxpose.xlu0.b32.cont [11/16] %v10241, 128
      %10338 = vxpose.xlu0.b32.cont [12/16] %v10244, 128
      %10339 = vxpose.xlu0.b32.cont [13/16] %v10249, 128
      %10340 = vxpose.xlu0.b32.cont [14/16] %v10252, 128
      %10341 = vxpose.xlu0.b32.cont [15/16] %v10257, 128
      %10342 = vxpose.xlu0.b32.end [16/16] %v10260, 128
      %v10343 = vpop.trf.xlu0
      %v10344 = vpop.trf.xlu0
      %v10345 = vpop.trf.xlu0
      %v10346 = vpop.trf.xlu0
      %v10347 = vpop.trf.xlu0
      %v10348 = vpop.trf.xlu0
      %v10349 = vpop.trf.xlu0
      %v10350 = vpop.trf.xlu0
      %v10351 = vpop.trf.xlu0
      %v10352 = vpop.trf.xlu0
      %v10353 = vpop.trf.xlu0
      %v10354 = vpop.trf.xlu0
      %v10355 = vpop.trf.xlu0
      %v10356 = vpop.trf.xlu0
      %v10357 = vpop.trf.xlu0
      %v10358 = vpop.trf.xlu0
      %10359 = vxpose.xlu0.b32.start [1/16] %v10265, 128
      %10360 = vxpose.xlu0.b32.cont [2/16] %v10268, 128
      %10361 = vxpose.xlu0.b32.cont [3/16] %v10273, 128
      %10362 = vxpose.xlu0.b32.cont [4/16] %v10276, 128
      %10363 = vxpose.xlu0.b32.cont [5/16] %v10281, 128
      %10364 = vxpose.xlu0.b32.cont [6/16] %v10284, 128
      %10365 = vxpose.xlu0.b32.cont [7/16] %v10289, 128
      %10366 = vxpose.xlu0.b32.cont [8/16] %v10292, 128
      %10367 = vxpose.xlu0.b32.cont [9/16] %v10297, 128
      %10368 = vxpose.xlu0.b32.cont [10/16] %v10300, 128
      %10369 = vxpose.xlu0.b32.cont [11/16] %v10305, 128
      %10370 = vxpose.xlu0.b32.cont [12/16] %v10308, 128
      %10371 = vxpose.xlu0.b32.cont [13/16] %v10313, 128
      %10372 = vxpose.xlu0.b32.cont [14/16] %v10316, 128
      %10373 = vxpose.xlu0.b32.cont [15/16] %v10321, 128
      %10374 = vxpose.xlu0.b32.end [16/16] %v10324, 128
      %v10375 = vpop.trf.xlu0
      %v10376 = vpop.trf.xlu0
      %v10377 = vpop.trf.xlu0
      %v10378 = vpop.trf.xlu0
      %v10379 = vpop.trf.xlu0
      %v10380 = vpop.trf.xlu0
      %v10381 = vpop.trf.xlu0
      %v10382 = vpop.trf.xlu0
      %v10383 = vpop.trf.xlu0
      %v10384 = vpop.trf.xlu0
      %v10385 = vpop.trf.xlu0
      %v10386 = vpop.trf.xlu0
      %v10387 = vpop.trf.xlu0
      %v10388 = vpop.trf.xlu0
      %v10389 = vpop.trf.xlu0
      %v10390 = vpop.trf.xlu0
      %10391 = vst [vmem:[%s386] sm:$0xff] %v10343
      %10392 = vst [vmem:[%s386 + $0x8] sm:$0xff] %v10375
      %p10393 = scmp.lt.s32.totalorder %s22, 1
      %s10394 = scalar_select %p10393, %s22, 1
      %s10395 = smul.addr %s10394, 2
      %s10396 = smul.addr %s10395, 8
      %s10397 = scalar_lea.vmem %s11, %s10396
      // Predicated region
      $region65: #{mini_yolov8_forward.1} parent=63 // pred_check
        %p10398 = pneg %p276
      $region66: #{mini_yolov8_forward.1} parent=63 // pred_check_branch
        %10400 = sbr.rel (%p10398) target = $region68
      $region67: #{mini_yolov8_forward.1} parent=63 // pred_region
        _
      $region68: #{mini_yolov8_forward.1} parent=63 // pred_fallthru
        _
    $region64: #{mini_yolov8_forward.1} parent=5 // pred_fallthru
      _
    %p10401 = scmp.le.s32.totalorder 2, %s17
    // Predicated region
    $region69: #{mini_yolov8_forward.1} parent=5 // pred_check
      %p10402 = pneg %p10401
    $region70: #{mini_yolov8_forward.1} parent=5 // pred_check_branch
      %10404 = sbr.rel (%p10402) target = $region72
    $region71: #{mini_yolov8_forward.1} parent=5 // pred_region
      %s10405 = ssub.s32 %s17, 2
      // Predicated region
      $region73: #{mini_yolov8_forward.1} parent=71 // pred_check
        %p10406 = pneg %p282
      $region74: #{mini_yolov8_forward.1} parent=71 // pred_check_branch
        %10408 = sbr.rel (%p10406) target = $region76
      $region75: #{mini_yolov8_forward.1} parent=71 // pred_region
        %p10409 = scmp.lt.s32.totalorder %s23, 1
        %s10410 = scalar_select %p10409, %s23, 1
        %s10411 = smul.addr %s10410, 2
        %s10412 = smul.addr %s10411, 8
        %s10413 = scalar_lea.vmem %s11, %s10412
      $region76: #{mini_yolov8_forward.1} parent=71 // pred_fallthru
        _
    $region72: #{mini_yolov8_forward.1} parent=5 // pred_fallthru
      _
  $region6: #{mini_yolov8_forward.1} parent=0 // loop_footer
    %s21 = sadd.s32 1, %s17
  $region7: #{mini_yolov8_forward.1} parent=0 // loop_footer_branch
    %16 = sbr.rel target = $region3
  $region8: #{mini_yolov8_forward.1} parent=0 // loop_exit
    _

</llo_original>
